<compile_context>
chip_gen: v7x
topology: tpu7x:2x2x1
jax: 0.10.0
libtpu: 0.0.40
codegen_flags: <defaults>
</compile_context>

<pallas_src>
import functools

import jax
import jax.numpy as jnp
from jax.experimental import pallas as pl
from jax.experimental.pallas import tpu as pltpu

# Matmul-operand dtype for the MXU (accumulation & epilogue stay f32).
MXU_DTYPE = jnp.bfloat16


# ---------------------------------------------------------------------------
# Pallas kernels
# ---------------------------------------------------------------------------

def _edge_conv_kernel(x_ref, w_ref, s_ref, b_ref, o_ref):
    """EdgeConv tile: (k, TM, 2C) edge features -> (TM, Coutp) max-over-k features.

    The k axis is folded into the matmul M dimension (one MXU pass of M = k*TM
    rows); the max over k is then a cheap vreg-wise VPU maximum across the
    leading axis.  BN is pre-folded into per-channel scale/bias; LeakyReLU(0.2)
    epilogue runs in f32 on the accumulator.
    """
    k, tm, cin = x_ref.shape
    coutp = o_ref.shape[-1]
    x = x_ref[...].reshape(k * tm, cin)                      # layout-preserving
    y = jnp.dot(x, w_ref[...], preferred_element_type=jnp.float32)
    y = y * s_ref[...] + b_ref[...]
    y = jnp.where(y > 0.0, y, 0.2 * y)                       # LeakyReLU(0.2)
    o_ref[...] = jnp.max(y.reshape(k, tm, coutp), axis=0)    # max over neighbors


def _pool_head_kernel(x_ref, w5_ref, s5_ref, b5_ref,
                      wl1a_ref, wl1b_ref, s6_ref, b6_ref,
                      wl2c_ref, s7c_ref, b7c_ref,
                      wl3_ref, b3_ref,
                      wtq_ref, btq_ref,
                      o_ref, *, b, n_pad, n_valid, oc_pad):
    """conv5 + BN + LeakyReLU + global max/avg pool + full MLP head, fused.

    x_ref: (B*Npad, 512) concatenated per-point features (channels-last).
    o_ref: (B, oc_pad + 128): lanes [0:oc_pad) = class logits (padded),
           lanes [oc_pad:oc_pad+128) = [translation(3) | quaternion(4) | pad].
    All intermediates ([B,E], [B,512], [B,384]) stay in vregs/VMEM.
    """
    e = w5_ref.shape[-1]

    def mm(a, w):
        return jnp.dot(a.astype(w.dtype), w, preferred_element_type=jnp.float32)

    # conv5 over every point in one M = B*Npad matmul.
    y = mm(x_ref[...], w5_ref[...])
    y = y * s5_ref[...] + b5_ref[...]
    y = jnp.where(y > 0.0, y, 0.2 * y)
    y = y.reshape(b, n_pad, e)

    if n_valid < n_pad:                                      # static branch
        row = jax.lax.broadcasted_iota(jnp.int32, (b, n_pad, e), 1)
        valid = row < n_valid
        ymax = jnp.max(jnp.where(valid, y, -jnp.inf), axis=1)
        ysum = jnp.sum(jnp.where(valid, y, 0.0), axis=1)
    else:
        ymax = jnp.max(y, axis=1)
        ysum = jnp.sum(y, axis=1)
    yavg = ysum * (1.0 / n_valid)

    # linear1 (bias=False) on cat([max, avg]) done as two half-matmuls so no
    # in-kernel lane concatenation / relayout is needed.  Then bn6 + LeakyReLU.
    h = mm(ymax, wl1a_ref[...]) + mm(yavg, wl1b_ref[...])
    h = h * s6_ref[...] + b6_ref[...]
    h = jnp.where(h > 0.0, h, 0.2 * h)

    # linear2 (256) and linear2_2 (128) share input h -> one (512, 384) matmul.
    hc = mm(h, wl2c_ref[...]) * s7c_ref[...] + b7c_ref[...]
    hc = jnp.where(hc > 0.0, hc, 0.2 * hc)
    h1 = hc[:, :256]          # linear2 branch (width fixed by the module)
    h2 = hc[:, 256:]          # linear2_2 branch (width 128)

    # Final heads: padded to 128 lanes -> unmasked full-lane stores.
    o_ref[:, :oc_pad] = mm(h1, wl3_ref[...]) + b3_ref[...]
    o_ref[:, oc_pad:] = mm(h2, wtq_ref[...]) + btq_ref[...]


# ---------------------------------------------------------------------------
# Pallas wrappers
# ---------------------------------------------------------------------------

def edge_conv(feat, w, scale, bias, *, tm=64):
    """feat: [k, R, 2C] (R = B*N) -> [R, Cout] = max_k LeakyReLU(BN(feat @ w)).

    Output channels are zero-padded to a multiple of 128 so the kernel writes
    full-lane stores; the wrapper slices back to Cout right away.
    """
    k, r, cin = feat.shape
    cout = w.shape[1]
    coutp = ((cout + 127) // 128) * 128
    rp = ((r + tm - 1) // tm) * tm
    if rp != r:
        feat = jnp.pad(feat, ((0, 0), (0, rp - r), (0, 0)))
    if coutp != cout:
        w = jnp.pad(w, ((0, 0), (0, coutp - cout)))
        scale = jnp.pad(scale, (0, coutp - cout))
        bias = jnp.pad(bias, (0, coutp - cout))
    feat = feat.astype(MXU_DTYPE)
    w = w.astype(MXU_DTYPE)

    cost = pl.CostEstimate(
        flops=2 * k * rp * cin * coutp,
        transcendentals=0,
        bytes_accessed=(feat.size * feat.dtype.itemsize
                        + w.size * w.dtype.itemsize + rp * coutp * 4))

    out = pl.pallas_call(
        _edge_conv_kernel,
        out_shape=jax.ShapeDtypeStruct((rp, coutp), jnp.float32),
        grid=(rp // tm,),
        in_specs=[
            pl.BlockSpec((k, tm, cin), lambda i: (0, i, 0)),
            pl.BlockSpec((cin, coutp), lambda i: (0, 0)),
            pl.BlockSpec((1, coutp), lambda i: (0, 0)),
            pl.BlockSpec((1, coutp), lambda i: (0, 0)),
        ],
        out_specs=pl.BlockSpec((tm, coutp), lambda i: (i, 0)),
        compiler_params=pltpu.CompilerParams(
            dimension_semantics=("parallel",)),
        cost_estimate=cost,
    )(feat, w, scale.reshape(1, coutp), bias.reshape(1, coutp))
    # Padded rows / padded channels carry garbage; slice immediately.
    return out[:r, :cout]


def pool_head(xcat, params):
    """xcat: [B, N, 512] -> (class logits [B, OC], translation [B, 3], raw quat [B, 4]).

    One fused pallas_call for conv5 + max/avg pool + the whole MLP head; all head
    weights (~1 MiB f32, less in bf16) stay resident in VMEM, no HBM round-trips
    for the tiny [B, *] intermediates.
    """
    b, n, c = xcat.shape
    e = params["w5"].shape[1]
    output_channels = params["wl3"].shape[1]
    oc_pad = ((output_channels + 127) // 128) * 128

    n_pad = ((n + 7) // 8) * 8
    if n_pad != n:
        xcat = jnp.pad(xcat, ((0, 0), (0, n_pad - n), (0, 0)))
    x_flat = xcat.reshape(b * n_pad, c).astype(MXU_DTYPE)

    # linear1 split into max- and avg-branch halves (shared epilogue bn6).
    wl1a = params["wl1"][:e, :].astype(MXU_DTYPE)                       # (E, 512)
    wl1b = params["wl1"][e:, :].astype(MXU_DTYPE)                       # (E, 512)
    # linear2 | linear2_2 fused (shared input h).
    wl2c = jnp.concatenate([params["wl2"], params["wl22"]], axis=1)     # (512, 384)
    s7c = jnp.concatenate([params["s7"], params["s72"]]).reshape(1, -1)
    b7c = jnp.concatenate([params["b7"], params["b72"]]).reshape(1, -1)
    # linear3 padded to a lane-dense output.
    wl3p = jnp.pad(params["wl3"], ((0, 0), (0, oc_pad - output_channels)))
    b3p = jnp.pad(params["b_l3"], (0, oc_pad - output_channels)).reshape(1, -1)
    # translation (3) + quaternion (4) fused and padded to 128 lanes.
    wtq = jnp.concatenate([params["wtr"], params["wq"]], axis=1)        # (128, 7)
    wtqp = jnp.pad(wtq, ((0, 0), (0, 128 - 7)))
    btqp = jnp.pad(jnp.concatenate([params["b_tr"], params["b_q"]]),
                   (0, 128 - 7)).reshape(1, -1)

    w5 = params["w5"].astype(MXU_DTYPE)
    wl2c = wl2c.astype(MXU_DTYPE)
    wl3p = wl3p.astype(MXU_DTYPE)
    wtqp = wtqp.astype(MXU_DTYPE)
    d2c = wl2c.shape[1]                                                 # 384

    flops = 2 * (b * n_pad * c * e + b * 2 * e * 512 + b * 512 * d2c
                 + b * 256 * oc_pad + b * 128 * 128)
    bytes_accessed = (x_flat.size * x_flat.dtype.itemsize
                      + (w5.size + wl1a.size + wl1b.size + wl2c.size
                         + wl3p.size + wtqp.size) * w5.dtype.itemsize
                      + b * (oc_pad + 128) * 4)

    kern = functools.partial(_pool_head_kernel, b=b, n_pad=n_pad, n_valid=n,
                             oc_pad=oc_pad)
    full = lambda shape: pl.BlockSpec(shape, lambda i: (0,) * len(shape))

    out = pl.pallas_call(
        kern,
        out_shape=jax.ShapeDtypeStruct((b, oc_pad + 128), jnp.float32),
        grid=(1,),
        in_specs=[
            full((b * n_pad, c)),
            full((c, e)), full((1, e)), full((1, e)),
            full((e, 512)), full((e, 512)), full((1, 512)), full((1, 512)),
            full((512, d2c)), full((1, d2c)), full((1, d2c)),
            full((256, oc_pad)), full((1, oc_pad)),
            full((128, 128)), full((1, 128)),
        ],
        out_specs=full((b, oc_pad + 128)),
        compiler_params=pltpu.CompilerParams(
            dimension_semantics=("arbitrary",)),
        cost_estimate=pl.CostEstimate(flops=flops, transcendentals=0,
                                      bytes_accessed=bytes_accessed),
    )(x_flat, w5, params["s5"].reshape(1, e), params["b5"].reshape(1, e),
      wl1a, wl1b, params["s6"].reshape(1, 512), params["b6"].reshape(1, 512),
      wl2c, s7c, b7c, wl3p, b3p, wtqp, btqp)

    cls = out[:, :output_channels]
    tr = out[:, oc_pad:oc_pad + 3]
    q = out[:, oc_pad + 3:oc_pad + 7]
    return cls, tr, q


# ---------------------------------------------------------------------------
# JAX glue: kNN graph features, gripper transform, parameter folding
# ---------------------------------------------------------------------------

def graph_feature(x, k):
    """x: [B, N, C] channels-last -> edge features [k, B*N, 2C] (= get_graph_feature).

    # TODO(synk): at production sizes (N~1024, k~20) this materializes the
    # k-expanded edge tensor in HBM; move the gather into the EdgeConv kernel via
    # PrefetchScalarGridSpec(idx) to avoid the write/re-read round-trip.
    """
    b, n, c = x.shape
    inner = -2.0 * jnp.einsum('bnc,bmc->bnm', x, x)
    xx = jnp.sum(x * x, axis=-1)                               # [B, N]
    pdist = -xx[:, :, None] - inner - xx[:, None, :]           # -||xi - xj||^2
    idx = jax.lax.top_k(pdist, k)[1]                           # [B, N, k]
    neigh = jax.vmap(lambda pts, ids: pts[ids])(x, idx)        # [B, N, k, C]
    center = jnp.broadcast_to(x[:, :, None, :], neigh.shape)
    edge = jnp.concatenate([neigh - center, center], axis=-1)  # [B, N, k, 2C]
    return jnp.transpose(edge, (2, 0, 1, 3)).reshape(k, b * n, 2 * c)


# TODO(synk): utils.transform_gripper_pc_old loads configs/panda.npy; we use a
# fixed synthetic set of 6 gripper control points instead of the file.
GRIPPER_CONTROL_POINTS = jnp.array(
    [[0.00, 0.00, 0.00],
     [0.00, 0.00, 0.06],
     [0.04, 0.00, 0.06],
     [-0.04, 0.00, 0.06],
     [0.04, 0.00, 0.10],
     [-0.04, 0.00, 0.10]], dtype=jnp.float32)


def _quat_to_rot(q):
    w, x, y, z = q[..., 0], q[..., 1], q[..., 2], q[..., 3]
    return jnp.stack([
        jnp.stack([1 - 2 * (y * y + z * z), 2 * (x * y - w * z), 2 * (x * z + w * y)], -1),
        jnp.stack([2 * (x * y + w * z), 1 - 2 * (x * x + z * z), 2 * (y * z - w * x)], -1),
        jnp.stack([2 * (x * z - w * y), 2 * (y * z + w * x), 1 - 2 * (x * x + y * y)], -1),
    ], axis=-2)


def transform_gripper_pc(quat, trans):
    q = quat / jnp.maximum(jnp.linalg.norm(quat, axis=-1, keepdims=True), 1e-12)
    rot = _quat_to_rot(q)                                       # [B, 3, 3]
    return jnp.einsum('bij,nj->bni', rot, GRIPPER_CONTROL_POINTS) + trans[:, None, :]


def fold_bn(gamma, beta, mean, var, lin_bias=None, eps=1e-5):
    scale = gamma / jnp.sqrt(var + eps)
    bias = beta - mean * scale
    if lin_bias is not None:
        bias = bias + lin_bias * scale
    return scale, bias


def init_params(key, emb_dims=64, output_channels=40):
    ks = iter(jax.random.split(key, 64))

    def w(shape, s=0.1):
        return s * jax.random.normal(next(ks), shape, jnp.float32)

    def bn(c):
        gamma = 1.0 + 0.1 * jax.random.normal(next(ks), (c,), jnp.float32)
        beta = 0.1 * jax.random.normal(next(ks), (c,), jnp.float32)
        return gamma, beta, jnp.zeros((c,), jnp.float32), jnp.ones((c,), jnp.float32)

    p = {}
    # conv1..conv4 (bias=False) + BatchNorm2d folded.
    for name, cin, cout in [("1", 6, 64), ("2", 128, 64), ("3", 128, 128), ("4", 256, 256)]:
        p["w" + name] = w((cin, cout))
        p["s" + name], p["b" + name] = fold_bn(*bn(cout))
    p["w5"] = w((512, emb_dims))
    p["s5"], p["b5"] = fold_bn(*bn(emb_dims))

    p["wl1"] = w((2 * emb_dims, 512))                 # linear1, bias=False
    p["s6"], p["b6"] = fold_bn(*bn(512))

    p["wl2"] = w((512, 256))                          # linear2 (+bias) + bn7
    p["s7"], p["b7"] = fold_bn(*bn(256), lin_bias=w((256,)))
    p["wl3"] = w((256, output_channels))              # linear3 (+bias)
    p["b_l3"] = w((output_channels,))

    p["wl22"] = w((512, 128))                         # linear2_2 (+bias) + bn7_2
    p["s72"], p["b72"] = fold_bn(*bn(128), lin_bias=w((128,)))
    p["wtr"] = w((128, 3))                            # translation (+bias)
    p["b_tr"] = w((3,))
    p["wq"] = w((128, 4))                             # quaternion (+bias)
    p["b_q"] = w((4,))
    return p


# ---------------------------------------------------------------------------
# Forward pass
# ---------------------------------------------------------------------------

def evaluate_grasp(params, x, k):
    """x: [B, N, 3] merged (object + gripper) point cloud, channels-LAST."""
    b, n, _ = x.shape

    def edge_layer(xc, name):
        feat = graph_feature(xc, k)                                  # [k, B*N, 2C]
        out = edge_conv(feat, params["w" + name],
                        params["s" + name], params["b" + name])      # [B*N, Cout]
        return out.reshape(b, n, -1)                                 # [B, N, Cout]

    x1 = edge_layer(x, "1")
    x2 = edge_layer(x1, "2")
    x3 = edge_layer(x2, "3")
    x4 = edge_layer(x3, "4")
    xcat = jnp.concatenate([x1, x2, x3, x4], axis=-1)                # [B, N, 512]

    # dp1 / dp2 / dp2_2: dropout in eval mode -> identity.
    cls, tr, q = pool_head(xcat, params)
    quat = q / jnp.maximum(jnp.linalg.norm(q, axis=-1, keepdims=True), 1e-12)
    return cls, tr, quat


def grasp_evaluator2_forward(params, quat, trans, pc, *, k):
    """quat: [B,4], trans: [B,3], pc: [B,Npc,3] -> (class logits, translation, quaternion)."""
    gripper_pc = transform_gripper_pc(quat, trans)                   # [B, 6, 3]
    merged = jnp.concatenate([pc, gripper_pc], axis=1)               # [B, N, 3]
    return evaluate_grasp(params, merged, k)


if __name__ == "__main__":
    key = jax.random.PRNGKey(0)
    k_params, k_quat, k_trans, k_pc = jax.random.split(key, 4)

    B, N_PC, K, EMB, NUM_CLS = 2, 58, 8, 64, 40     # 58 + 6 gripper points = 64 total
    params = init_params(k_params, emb_dims=EMB, output_channels=NUM_CLS)

    quat = jax.random.normal(k_quat, (B, 4), jnp.float32)
    trans = 0.1 * jax.random.normal(k_trans, (B, 3), jnp.float32)
    pc = jax.random.normal(k_pc, (B, N_PC, 3), jnp.float32)

    fwd = jax.jit(functools.partial(grasp_evaluator2_forward, k=K))
    cls_out, t_out, q_out = fwd(params, quat, trans, pc)
    jax.block_until_ready((cls_out, t_out, q_out))

    assert cls_out.shape == (B, NUM_CLS)
    assert t_out.shape == (B, 3)
    assert q_out.shape == (B, 4)
    assert bool(jnp.all(jnp.isfinite(cls_out)))
    assert bool(jnp.all(jnp.isfinite(t_out)))
    assert bool(jnp.all(jnp.isfinite(q_out)))
    print("KERNEL_OK")
</pallas_src>

<mosaic_0001>
module attributes {stable_mosaic.version = 11 : i64} {
  func.func @_edge_conv_kernel(%arg0: i32, %arg1: memref<8x64x6xbf16, #tpu.memory_space<vmem>>, %arg2: memref<6x128xbf16, #tpu.memory_space<vmem>>, %arg3: memref<1x128xf32, #tpu.memory_space<vmem>>, %arg4: memref<1x128xf32, #tpu.memory_space<vmem>>, %arg5: memref<64x128xf32, #tpu.memory_space<vmem>>) attributes {dimension_semantics = [#tpu.dimension_semantics<parallel>], iteration_bounds = array<i64: 2>, scalar_prefetch = 0 : i64, scratch_operands = 0 : i64, tpu.core_type = #tpu.core_type<tc>, window_params = [{transform_indices = @transform_0, window_bounds = array<i64: 8, 64, 6>}, {pipeline_mode = #tpu.pipeline_mode<synchronous>, transform_indices = @transform_1, window_bounds = array<i64: 6, 128>}, {pipeline_mode = #tpu.pipeline_mode<synchronous>, transform_indices = @transform_2, window_bounds = array<i64: 1, 128>}, {pipeline_mode = #tpu.pipeline_mode<synchronous>, transform_indices = @transform_3, window_bounds = array<i64: 1, 128>}, {transform_indices = @transform_4, window_bounds = array<i64: 64, 128>}]} {
    %c0 = arith.constant 0 : index
    %c0_0 = arith.constant 0 : index
    %c0_1 = arith.constant 0 : index
    %0 = vector.load %arg1[%c0, %c0_0, %c0_1] : memref<8x64x6xbf16, #tpu.memory_space<vmem>>, vector<8x64x6xbf16>
    %1 = vector.shape_cast %0 : vector<8x64x6xbf16> to vector<512x6xbf16>
    %c0_2 = arith.constant 0 : index
    %c0_3 = arith.constant 0 : index
    %2 = vector.load %arg2[%c0_2, %c0_3] : memref<6x128xbf16, #tpu.memory_space<vmem>>, vector<6x128xbf16>
    %cst = arith.constant dense<0.000000e+00> : vector<512x128xf32>
    %3 = tpu.matmul %1, %2, %cst {dimension_numbers = #tpu.dot_dimension_numbers<[1], [0], [0], [1], [0, 0, 1, 1], [], []>} : vector<512x6xbf16>, vector<6x128xbf16>, vector<512x128xf32> -> vector<512x128xf32>
    %c0_4 = arith.constant 0 : index
    %c0_5 = arith.constant 0 : index
    %4 = vector.load %arg3[%c0_4, %c0_5] : memref<1x128xf32, #tpu.memory_space<vmem>>, vector<1x128xf32>
    %5 = vector.broadcast %4 : vector<1x128xf32> to vector<512x128xf32>
    %6 = arith.mulf %3, %5 : vector<512x128xf32>
    %c0_6 = arith.constant 0 : index
    %c0_7 = arith.constant 0 : index
    %7 = vector.load %arg4[%c0_6, %c0_7] : memref<1x128xf32, #tpu.memory_space<vmem>>, vector<1x128xf32>
    %8 = vector.broadcast %7 : vector<1x128xf32> to vector<512x128xf32>
    %9 = arith.addf %6, %8 : vector<512x128xf32>
    %cst_8 = arith.constant 0.000000e+00 : f32
    %10 = vector.broadcast %cst_8 : f32 to vector<512x128xf32>
    %11 = arith.cmpf ogt, %9, %10 : vector<512x128xf32>
    %cst_9 = arith.constant 2.000000e-01 : f32
    %12 = vector.broadcast %cst_9 : f32 to vector<512x128xf32>
    %13 = arith.mulf %12, %9 : vector<512x128xf32>
    %14 = arith.select %11, %9, %13 : vector<512x128xi1>, vector<512x128xf32>
    %15 = vector.shape_cast %14 : vector<512x128xf32> to vector<8x64x128xf32>
    %cst_10 = arith.constant dense<0xFF800000> : vector<64x128xf32>
    %16 = vector.multi_reduction <maximumf>, %15, %cst_10 [0] : vector<8x64x128xf32> to vector<64x128xf32>
    %c0_11 = arith.constant 0 : index
    %c0_12 = arith.constant 0 : index
    %17 = vector.load %arg5[%c0_11, %c0_12] : memref<64x128xf32, #tpu.memory_space<vmem>>, vector<64x128xf32>
    tpu.vector_store %arg5[%c0_11, %c0_12], %16 {strides = array<i32>} : memref<64x128xf32, #tpu.memory_space<vmem>>, vector<64x128xf32>,
    return
  }
  func.func @transform_0(%arg0: i32) -> (i32, i32, i32) {
    %c0_i32 = arith.constant 0 : i32
    %c0_i32_0 = arith.constant 0 : i32
    %c0_i32_1 = arith.constant 0 : i32
    return %c0_i32, %arg0, %c0_i32_0 : i32, i32, i32
  }
  func.func @transform_1(%arg0: i32) -> (i32, i32) {
    %c0_i32 = arith.constant 0 : i32
    %c0_i32_0 = arith.constant 0 : i32
    %c0_i32_1 = arith.constant 0 : i32
    return %c0_i32, %c0_i32_0 : i32, i32
  }
  func.func @transform_2(%arg0: i32) -> (i32, i32) {
    %c0_i32 = arith.constant 0 : i32
    %c0_i32_0 = arith.constant 0 : i32
    %c0_i32_1 = arith.constant 0 : i32
    return %c0_i32, %c0_i32_0 : i32, i32
  }
  func.func @transform_3(%arg0: i32) -> (i32, i32) {
    %c0_i32 = arith.constant 0 : i32
    %c0_i32_0 = arith.constant 0 : i32
    %c0_i32_1 = arith.constant 0 : i32
    return %c0_i32, %c0_i32_0 : i32, i32
  }
  func.func @transform_4(%arg0: i32) -> (i32, i32) {
    %c0_i32 = arith.constant 0 : i32
    %c0_i32_0 = arith.constant 0 : i32
    return %arg0, %c0_i32 : i32, i32
  }
}

module attributes {stable_mosaic.version = 11 : i64} {
  func.func @_edge_conv_kernel(%arg0: i32, %arg1: memref<8x64x128xbf16, #tpu.memory_space<vmem>>, %arg2: memref<128x128xbf16, #tpu.memory_space<vmem>>, %arg3: memref<1x128xf32, #tpu.memory_space<vmem>>, %arg4: memref<1x128xf32, #tpu.memory_space<vmem>>, %arg5: memref<64x128xf32, #tpu.memory_space<vmem>>) attributes {dimension_semantics = [#tpu.dimension_semantics<parallel>], iteration_bounds = array<i64: 2>, scalar_prefetch = 0 : i64, scratch_operands = 0 : i64, tpu.core_type = #tpu.core_type<tc>, window_params = [{transform_indices = @transform_0, window_bounds = array<i64: 8, 64, 128>}, {pipeline_mode = #tpu.pipeline_mode<synchronous>, transform_indices = @transform_1, window_bounds = array<i64: 128, 128>}, {pipeline_mode = #tpu.pipeline_mode<synchronous>, transform_indices = @transform_2, window_bounds = array<i64: 1, 128>}, {pipeline_mode = #tpu.pipeline_mode<synchronous>, transform_indices = @transform_3, window_bounds = array<i64: 1, 128>}, {transform_indices = @transform_4, window_bounds = array<i64: 64, 128>}]} {
    %c0 = arith.constant 0 : index
    %c0_0 = arith.constant 0 : index
    %c0_1 = arith.constant 0 : index
    %0 = vector.load %arg1[%c0, %c0_0, %c0_1] : memref<8x64x128xbf16, #tpu.memory_space<vmem>>, vector<8x64x128xbf16>
    %1 = vector.shape_cast %0 : vector<8x64x128xbf16> to vector<512x128xbf16>
    %c0_2 = arith.constant 0 : index
    %c0_3 = arith.constant 0 : index
    %2 = vector.load %arg2[%c0_2, %c0_3] : memref<128x128xbf16, #tpu.memory_space<vmem>>, vector<128x128xbf16>
    %cst = arith.constant dense<0.000000e+00> : vector<512x128xf32>
    %3 = tpu.matmul %1, %2, %cst {dimension_numbers = #tpu.dot_dimension_numbers<[1], [0], [0], [1], [0, 0, 1, 1], [], []>} : vector<512x128xbf16>, vector<128x128xbf16>, vector<512x128xf32> -> vector<512x128xf32>
    %c0_4 = arith.constant 0 : index
    %c0_5 = arith.constant 0 : index
    %4 = vector.load %arg3[%c0_4, %c0_5] : memref<1x128xf32, #tpu.memory_space<vmem>>, vector<1x128xf32>
    %5 = vector.broadcast %4 : vector<1x128xf32> to vector<512x128xf32>
    %6 = arith.mulf %3, %5 : vector<512x128xf32>
    %c0_6 = arith.constant 0 : index
    %c0_7 = arith.constant 0 : index
    %7 = vector.load %arg4[%c0_6, %c0_7] : memref<1x128xf32, #tpu.memory_space<vmem>>, vector<1x128xf32>
    %8 = vector.broadcast %7 : vector<1x128xf32> to vector<512x128xf32>
    %9 = arith.addf %6, %8 : vector<512x128xf32>
    %cst_8 = arith.constant 0.000000e+00 : f32
    %10 = vector.broadcast %cst_8 : f32 to vector<512x128xf32>
    %11 = arith.cmpf ogt, %9, %10 : vector<512x128xf32>
    %cst_9 = arith.constant 2.000000e-01 : f32
    %12 = vector.broadcast %cst_9 : f32 to vector<512x128xf32>
    %13 = arith.mulf %12, %9 : vector<512x128xf32>
    %14 = arith.select %11, %9, %13 : vector<512x128xi1>, vector<512x128xf32>
    %15 = vector.shape_cast %14 : vector<512x128xf32> to vector<8x64x128xf32>
    %cst_10 = arith.constant dense<0xFF800000> : vector<64x128xf32>
    %16 = vector.multi_reduction <maximumf>, %15, %cst_10 [0] : vector<8x64x128xf32> to vector<64x128xf32>
    %c0_11 = arith.constant 0 : index
    %c0_12 = arith.constant 0 : index
    %17 = vector.load %arg5[%c0_11, %c0_12] : memref<64x128xf32, #tpu.memory_space<vmem>>, vector<64x128xf32>
    tpu.vector_store %arg5[%c0_11, %c0_12], %16 {strides = array<i32>} : memref<64x128xf32, #tpu.memory_space<vmem>>, vector<64x128xf32>,
    return
  }
  func.func @transform_0(%arg0: i32) -> (i32, i32, i32) {
    %c0_i32 = arith.constant 0 : i32
    %c0_i32_0 = arith.constant 0 : i32
    %c0_i32_1 = arith.constant 0 : i32
    return %c0_i32, %arg0, %c0_i32_0 : i32, i32, i32
  }
  func.func @transform_1(%arg0: i32) -> (i32, i32) {
    %c0_i32 = arith.constant 0 : i32
    %c0_i32_0 = arith.constant 0 : i32
    %c0_i32_1 = arith.constant 0 : i32
    return %c0_i32, %c0_i32_0 : i32, i32
  }
  func.func @transform_2(%arg0: i32) -> (i32, i32) {
    %c0_i32 = arith.constant 0 : i32
    %c0_i32_0 = arith.constant 0 : i32
    %c0_i32_1 = arith.constant 0 : i32
    return %c0_i32, %c0_i32_0 : i32, i32
  }
  func.func @transform_3(%arg0: i32) -> (i32, i32) {
    %c0_i32 = arith.constant 0 : i32
    %c0_i32_0 = arith.constant 0 : i32
    %c0_i32_1 = arith.constant 0 : i32
    return %c0_i32, %c0_i32_0 : i32, i32
  }
  func.func @transform_4(%arg0: i32) -> (i32, i32) {
    %c0_i32 = arith.constant 0 : i32
    %c0_i32_0 = arith.constant 0 : i32
    return %arg0, %c0_i32 : i32, i32
  }
}

module attributes {stable_mosaic.version = 11 : i64} {
  func.func @_edge_conv_kernel(%arg0: i32, %arg1: memref<8x64x256xbf16, #tpu.memory_space<vmem>>, %arg2: memref<256x256xbf16, #tpu.memory_space<vmem>>, %arg3: memref<1x256xf32, #tpu.memory_space<vmem>>, %arg4: memref<1x256xf32, #tpu.memory_space<vmem>>, %arg5: memref<64x256xf32, #tpu.memory_space<vmem>>) attributes {dimension_semantics = [#tpu.dimension_semantics<parallel>], iteration_bounds = array<i64: 2>, scalar_prefetch = 0 : i64, scratch_operands = 0 : i64, tpu.core_type = #tpu.core_type<tc>, window_params = [{transform_indices = @transform_0, window_bounds = array<i64: 8, 64, 256>}, {pipeline_mode = #tpu.pipeline_mode<synchronous>, transform_indices = @transform_1, window_bounds = array<i64: 256, 256>}, {pipeline_mode = #tpu.pipeline_mode<synchronous>, transform_indices = @transform_2, window_bounds = array<i64: 1, 256>}, {pipeline_mode = #tpu.pipeline_mode<synchronous>, transform_indices = @transform_3, window_bounds = array<i64: 1, 256>}, {transform_indices = @transform_4, window_bounds = array<i64: 64, 256>}]} {
    %c0 = arith.constant 0 : index
    %c0_0 = arith.constant 0 : index
    %c0_1 = arith.constant 0 : index
    %0 = vector.load %arg1[%c0, %c0_0, %c0_1] : memref<8x64x256xbf16, #tpu.memory_space<vmem>>, vector<8x64x256xbf16>
    %1 = vector.shape_cast %0 : vector<8x64x256xbf16> to vector<512x256xbf16>
    %c0_2 = arith.constant 0 : index
    %c0_3 = arith.constant 0 : index
    %2 = vector.load %arg2[%c0_2, %c0_3] : memref<256x256xbf16, #tpu.memory_space<vmem>>, vector<256x256xbf16>
    %cst = arith.constant dense<0.000000e+00> : vector<512x256xf32>
    %3 = tpu.matmul %1, %2, %cst {dimension_numbers = #tpu.dot_dimension_numbers<[1], [0], [0], [1], [0, 0, 1, 1], [], []>} : vector<512x256xbf16>, vector<256x256xbf16>, vector<512x256xf32> -> vector<512x256xf32>
    %c0_4 = arith.constant 0 : index
    %c0_5 = arith.constant 0 : index
    %4 = vector.load %arg3[%c0_4, %c0_5] : memref<1x256xf32, #tpu.memory_space<vmem>>, vector<1x256xf32>
    %5 = vector.broadcast %4 : vector<1x256xf32> to vector<512x256xf32>
    %6 = arith.mulf %3, %5 : vector<512x256xf32>
    %c0_6 = arith.constant 0 : index
    %c0_7 = arith.constant 0 : index
    %7 = vector.load %arg4[%c0_6, %c0_7] : memref<1x256xf32, #tpu.memory_space<vmem>>, vector<1x256xf32>
    %8 = vector.broadcast %7 : vector<1x256xf32> to vector<512x256xf32>
    %9 = arith.addf %6, %8 : vector<512x256xf32>
    %cst_8 = arith.constant 0.000000e+00 : f32
    %10 = vector.broadcast %cst_8 : f32 to vector<512x256xf32>
    %11 = arith.cmpf ogt, %9, %10 : vector<512x256xf32>
    %cst_9 = arith.constant 2.000000e-01 : f32
    %12 = vector.broadcast %cst_9 : f32 to vector<512x256xf32>
    %13 = arith.mulf %12, %9 : vector<512x256xf32>
    %14 = arith.select %11, %9, %13 : vector<512x256xi1>, vector<512x256xf32>
    %15 = vector.shape_cast %14 : vector<512x256xf32> to vector<8x64x256xf32>
    %cst_10 = arith.constant dense<0xFF800000> : vector<64x256xf32>
    %16 = vector.multi_reduction <maximumf>, %15, %cst_10 [0] : vector<8x64x256xf32> to vector<64x256xf32>
    %c0_11 = arith.constant 0 : index
    %c0_12 = arith.constant 0 : index
    %17 = vector.load %arg5[%c0_11, %c0_12] : memref<64x256xf32, #tpu.memory_space<vmem>>, vector<64x256xf32>
    tpu.vector_store %arg5[%c0_11, %c0_12], %16 {strides = array<i32>} : memref<64x256xf32, #tpu.memory_space<vmem>>, vector<64x256xf32>,
    return
  }
  func.func @transform_0(%arg0: i32) -> (i32, i32, i32) {
    %c0_i32 = arith.constant 0 : i32
    %c0_i32_0 = arith.constant 0 : i32
    %c0_i32_1 = arith.constant 0 : i32
    return %c0_i32, %arg0, %c0_i32_0 : i32, i32, i32
  }
  func.func @transform_1(%arg0: i32) -> (i32, i32) {
    %c0_i32 = arith.constant 0 : i32
    %c0_i32_0 = arith.constant 0 : i32
    %c0_i32_1 = arith.constant 0 : i32
    return %c0_i32, %c0_i32_0 : i32, i32
  }
  func.func @transform_2(%arg0: i32) -> (i32, i32) {
    %c0_i32 = arith.constant 0 : i32
    %c0_i32_0 = arith.constant 0 : i32
    %c0_i32_1 = arith.constant 0 : i32
    return %c0_i32, %c0_i32_0 : i32, i32
  }
  func.func @transform_3(%arg0: i32) -> (i32, i32) {
    %c0_i32 = arith.constant 0 : i32
    %c0_i32_0 = arith.constant 0 : i32
    %c0_i32_1 = arith.constant 0 : i32
    return %c0_i32, %c0_i32_0 : i32, i32
  }
  func.func @transform_4(%arg0: i32) -> (i32, i32) {
    %c0_i32 = arith.constant 0 : i32
    %c0_i32_0 = arith.constant 0 : i32
    return %arg0, %c0_i32 : i32, i32
  }
}

module attributes {stable_mosaic.version = 11 : i64} {
  func.func @_pool_head_kernel(%arg0: i32, %arg1: memref<128x512xbf16, #tpu.memory_space<vmem>>, %arg2: memref<512x64xbf16, #tpu.memory_space<vmem>>, %arg3: memref<1x64xf32, #tpu.memory_space<vmem>>, %arg4: memref<1x64xf32, #tpu.memory_space<vmem>>, %arg5: memref<64x512xbf16, #tpu.memory_space<vmem>>, %arg6: memref<64x512xbf16, #tpu.memory_space<vmem>>, %arg7: memref<1x512xf32, #tpu.memory_space<vmem>>, %arg8: memref<1x512xf32, #tpu.memory_space<vmem>>, %arg9: memref<512x384xbf16, #tpu.memory_space<vmem>>, %arg10: memref<1x384xf32, #tpu.memory_space<vmem>>, %arg11: memref<1x384xf32, #tpu.memory_space<vmem>>, %arg12: memref<256x128xbf16, #tpu.memory_space<vmem>>, %arg13: memref<1x128xf32, #tpu.memory_space<vmem>>, %arg14: memref<128x128xbf16, #tpu.memory_space<vmem>>, %arg15: memref<1x128xf32, #tpu.memory_space<vmem>>, %arg16: memref<2x256xf32, #tpu.memory_space<vmem>>) attributes {dimension_semantics = [#tpu.dimension_semantics<arbitrary>], iteration_bounds = array<i64: 1>, scalar_prefetch = 0 : i64, scratch_operands = 0 : i64, tpu.core_type = #tpu.core_type<tc>, window_params = [{pipeline_mode = #tpu.pipeline_mode<synchronous>, transform_indices = @transform_0, window_bounds = array<i64: 128, 512>}, {pipeline_mode = #tpu.pipeline_mode<synchronous>, transform_indices = @transform_1, window_bounds = array<i64: 512, 64>}, {pipeline_mode = #tpu.pipeline_mode<synchronous>, transform_indices = @transform_2, window_bounds = array<i64: 1, 64>}, {pipeline_mode = #tpu.pipeline_mode<synchronous>, transform_indices = @transform_3, window_bounds = array<i64: 1, 64>}, {pipeline_mode = #tpu.pipeline_mode<synchronous>, transform_indices = @transform_4, window_bounds = array<i64: 64, 512>}, {pipeline_mode = #tpu.pipeline_mode<synchronous>, transform_indices = @transform_5, window_bounds = array<i64: 64, 512>}, {pipeline_mode = #tpu.pipeline_mode<synchronous>, transform_indices = @transform_6, window_bounds = array<i64: 1, 512>}, {pipeline_mode = #tpu.pipeline_mode<synchronous>, transform_indices = @transform_7, window_bounds = array<i64: 1, 512>}, {pipeline_mode = #tpu.pipeline_mode<synchronous>, transform_indices = @transform_8, window_bounds = array<i64: 512, 384>}, {pipeline_mode = #tpu.pipeline_mode<synchronous>, transform_indices = @transform_9, window_bounds = array<i64: 1, 384>}, {pipeline_mode = #tpu.pipeline_mode<synchronous>, transform_indices = @transform_10, window_bounds = array<i64: 1, 384>}, {pipeline_mode = #tpu.pipeline_mode<synchronous>, transform_indices = @transform_11, window_bounds = array<i64: 256, 128>}, {pipeline_mode = #tpu.pipeline_mode<synchronous>, transform_indices = @transform_12, window_bounds = array<i64: 1, 128>}, {pipeline_mode = #tpu.pipeline_mode<synchronous>, transform_indices = @transform_13, window_bounds = array<i64: 128, 128>}, {pipeline_mode = #tpu.pipeline_mode<synchronous>, transform_indices = @transform_14, window_bounds = array<i64: 1, 128>}, {pipeline_mode = #tpu.pipeline_mode<synchronous>, transform_indices = @transform_15, window_bounds = array<i64: 2, 256>}]} {
    %c0 = arith.constant 0 : index
    %c0_0 = arith.constant 0 : index
    %0 = vector.load %arg1[%c0, %c0_0] : memref<128x512xbf16, #tpu.memory_space<vmem>>, vector<128x512xbf16>
    %c0_1 = arith.constant 0 : index
    %c0_2 = arith.constant 0 : index
    %1 = vector.load %arg2[%c0_1, %c0_2] : memref<512x64xbf16, #tpu.memory_space<vmem>>, vector<512x64xbf16>
    %cst = arith.constant dense<0.000000e+00> : vector<128x64xf32>
    %2 = tpu.matmul %0, %1, %cst {dimension_numbers = #tpu.dot_dimension_numbers<[1], [0], [0], [1], [0, 0, 1, 1], [], []>} : vector<128x512xbf16>, vector<512x64xbf16>, vector<128x64xf32> -> vector<128x64xf32>
    %c0_3 = arith.constant 0 : index
    %c0_4 = arith.constant 0 : index
    %3 = vector.load %arg3[%c0_3, %c0_4] : memref<1x64xf32, #tpu.memory_space<vmem>>, vector<1x64xf32>
    %4 = vector.broadcast %3 : vector<1x64xf32> to vector<128x64xf32>
    %5 = arith.mulf %2, %4 : vector<128x64xf32>
    %c0_5 = arith.constant 0 : index
    %c0_6 = arith.constant 0 : index
    %6 = vector.load %arg4[%c0_5, %c0_6] : memref<1x64xf32, #tpu.memory_space<vmem>>, vector<1x64xf32>
    %7 = vector.broadcast %6 : vector<1x64xf32> to vector<128x64xf32>
    %8 = arith.addf %5, %7 : vector<128x64xf32>
    %cst_7 = arith.constant 0.000000e+00 : f32
    %9 = vector.broadcast %cst_7 : f32 to vector<128x64xf32>
    %10 = arith.cmpf ogt, %8, %9 : vector<128x64xf32>
    %cst_8 = arith.constant 2.000000e-01 : f32
    %11 = vector.broadcast %cst_8 : f32 to vector<128x64xf32>
    %12 = arith.mulf %11, %8 : vector<128x64xf32>
    %13 = arith.select %10, %8, %12 : vector<128x64xi1>, vector<128x64xf32>
    %14 = vector.shape_cast %13 : vector<128x64xf32> to vector<2x64x64xf32>
    %cst_9 = arith.constant dense<0xFF800000> : vector<2x64xf32>
    %15 = vector.multi_reduction <maximumf>, %14, %cst_9 [1] : vector<2x64x64xf32> to vector<2x64xf32>
    %cst_10 = arith.constant dense<0.000000e+00> : vector<2x64xf32>
    %16 = vector.multi_reduction <add>, %14, %cst_10 [1] : vector<2x64x64xf32> to vector<2x64xf32>
    %cst_11 = arith.constant 1.562500e-02 : f32
    %17 = vector.broadcast %cst_11 : f32 to vector<2x64xf32>
    %18 = arith.mulf %16, %17 : vector<2x64xf32>
    %c0_12 = arith.constant 0 : index
    %c0_13 = arith.constant 0 : index
    %19 = vector.load %arg5[%c0_12, %c0_13] : memref<64x512xbf16, #tpu.memory_space<vmem>>, vector<64x512xbf16>
    %20 = arith.truncf %15 : vector<2x64xf32> to vector<2x64xbf16>
    %cst_14 = arith.constant dense<0.000000e+00> : vector<2x512xf32>
    %21 = tpu.matmul %20, %19, %cst_14 {dimension_numbers = #tpu.dot_dimension_numbers<[1], [0], [0], [1], [0, 0, 1, 1], [], []>} : vector<2x64xbf16>, vector<64x512xbf16>, vector<2x512xf32> -> vector<2x512xf32>
    %c0_15 = arith.constant 0 : index
    %c0_16 = arith.constant 0 : index
    %22 = vector.load %arg6[%c0_15, %c0_16] : memref<64x512xbf16, #tpu.memory_space<vmem>>, vector<64x512xbf16>
    %23 = arith.truncf %18 : vector<2x64xf32> to vector<2x64xbf16>
    %cst_17 = arith.constant dense<0.000000e+00> : vector<2x512xf32>
    %24 = tpu.matmul %23, %22, %cst_17 {dimension_numbers = #tpu.dot_dimension_numbers<[1], [0], [0], [1], [0, 0, 1, 1], [], []>} : vector<2x64xbf16>, vector<64x512xbf16>, vector<2x512xf32> -> vector<2x512xf32>
    %25 = arith.addf %21, %24 : vector<2x512xf32>
    %c0_18 = arith.constant 0 : index
    %c0_19 = arith.constant 0 : index
    %26 = vector.load %arg7[%c0_18, %c0_19] : memref<1x512xf32, #tpu.memory_space<vmem>>, vector<1x512xf32>
    %27 = vector.broadcast %26 : vector<1x512xf32> to vector<2x512xf32>
    %28 = arith.mulf %25, %27 : vector<2x512xf32>
    %c0_20 = arith.constant 0 : index
    %c0_21 = arith.constant 0 : index
    %29 = vector.load %arg8[%c0_20, %c0_21] : memref<1x512xf32, #tpu.memory_space<vmem>>, vector<1x512xf32>
    %30 = vector.broadcast %29 : vector<1x512xf32> to vector<2x512xf32>
    %31 = arith.addf %28, %30 : vector<2x512xf32>
    %cst_22 = arith.constant 0.000000e+00 : f32
    %32 = vector.broadcast %cst_22 : f32 to vector<2x512xf32>
    %33 = arith.cmpf ogt, %31, %32 : vector<2x512xf32>
    %cst_23 = arith.constant 2.000000e-01 : f32
    %34 = vector.broadcast %cst_23 : f32 to vector<2x512xf32>
    %35 = arith.mulf %34, %31 : vector<2x512xf32>
    %36 = arith.select %33, %31, %35 : vector<2x512xi1>, vector<2x512xf32>
    %c0_24 = arith.constant 0 : index
    %c0_25 = arith.constant 0 : index
    %37 = vector.load %arg9[%c0_24, %c0_25] : memref<512x384xbf16, #tpu.memory_space<vmem>>, vector<512x384xbf16>
    %38 = arith.truncf %36 : vector<2x512xf32> to vector<2x512xbf16>
    %cst_26 = arith.constant dense<0.000000e+00> : vector<2x384xf32>
    %39 = tpu.matmul %38, %37, %cst_26 {dimension_numbers = #tpu.dot_dimension_numbers<[1], [0], [0], [1], [0, 0, 1, 1], [], []>} : vector<2x512xbf16>, vector<512x384xbf16>, vector<2x384xf32> -> vector<2x384xf32>
    %c0_27 = arith.constant 0 : index
    %c0_28 = arith.constant 0 : index
    %40 = vector.load %arg10[%c0_27, %c0_28] : memref<1x384xf32, #tpu.memory_space<vmem>>, vector<1x384xf32>
    %41 = vector.broadcast %40 : vector<1x384xf32> to vector<2x384xf32>
    %42 = arith.mulf %39, %41 : vector<2x384xf32>
    %c0_29 = arith.constant 0 : index
    %c0_30 = arith.constant 0 : index
    %43 = vector.load %arg11[%c0_29, %c0_30] : memref<1x384xf32, #tpu.memory_space<vmem>>, vector<1x384xf32>
    %44 = vector.broadcast %43 : vector<1x384xf32> to vector<2x384xf32>
    %45 = arith.addf %42, %44 : vector<2x384xf32>
    %cst_31 = arith.constant 0.000000e+00 : f32
    %46 = vector.broadcast %cst_31 : f32 to vector<2x384xf32>
    %47 = arith.cmpf ogt, %45, %46 : vector<2x384xf32>
    %cst_32 = arith.constant 2.000000e-01 : f32
    %48 = vector.broadcast %cst_32 : f32 to vector<2x384xf32>
    %49 = arith.mulf %48, %45 : vector<2x384xf32>
    %50 = arith.select %47, %45, %49 : vector<2x384xi1>, vector<2x384xf32>
    %51 = vector.extract_strided_slice %50 {offsets = [0, 0], sizes = [2, 256], strides = [1, 1]} : vector<2x384xf32> to vector<2x256xf32>
    %52 = vector.extract_strided_slice %50 {offsets = [0, 256], sizes = [2, 128], strides = [1, 1]} : vector<2x384xf32> to vector<2x128xf32>
    %c0_33 = arith.constant 0 : index
    %c0_34 = arith.constant 0 : index
    %53 = vector.load %arg12[%c0_33, %c0_34] : memref<256x128xbf16, #tpu.memory_space<vmem>>, vector<256x128xbf16>
    %54 = arith.truncf %51 : vector<2x256xf32> to vector<2x256xbf16>
    %cst_35 = arith.constant dense<0.000000e+00> : vector<2x128xf32>
    %55 = tpu.matmul %54, %53, %cst_35 {dimension_numbers = #tpu.dot_dimension_numbers<[1], [0], [0], [1], [0, 0, 1, 1], [], []>} : vector<2x256xbf16>, vector<256x128xbf16>, vector<2x128xf32> -> vector<2x128xf32>
    %c0_36 = arith.constant 0 : index
    %c0_37 = arith.constant 0 : index
    %56 = vector.load %arg13[%c0_36, %c0_37] : memref<1x128xf32, #tpu.memory_space<vmem>>, vector<1x128xf32>
    %57 = vector.broadcast %56 : vector<1x128xf32> to vector<2x128xf32>
    %58 = arith.addf %55, %57 : vector<2x128xf32>
    %c0_38 = arith.constant 0 : index
    %c0_39 = arith.constant 0 : index
    %59 = vector.load %arg16[%c0_38, %c0_39] : memref<2x256xf32, #tpu.memory_space<vmem>>, vector<2x128xf32>
    tpu.vector_store %arg16[%c0_38, %c0_39], %58 {strides = array<i32>} : memref<2x256xf32, #tpu.memory_space<vmem>>, vector<2x128xf32>,
    %c0_40 = arith.constant 0 : index
    %c0_41 = arith.constant 0 : index
    %60 = vector.load %arg14[%c0_40, %c0_41] : memref<128x128xbf16, #tpu.memory_space<vmem>>, vector<128x128xbf16>
    %61 = arith.truncf %52 : vector<2x128xf32> to vector<2x128xbf16>
    %cst_42 = arith.constant dense<0.000000e+00> : vector<2x128xf32>
    %62 = tpu.matmul %61, %60, %cst_42 {dimension_numbers = #tpu.dot_dimension_numbers<[1], [0], [0], [1], [0, 0, 1, 1], [], []>} : vector<2x128xbf16>, vector<128x128xbf16>, vector<2x128xf32> -> vector<2x128xf32>
    %c0_43 = arith.constant 0 : index
    %c0_44 = arith.constant 0 : index
    %63 = vector.load %arg15[%c0_43, %c0_44] : memref<1x128xf32, #tpu.memory_space<vmem>>, vector<1x128xf32>
    %64 = vector.broadcast %63 : vector<1x128xf32> to vector<2x128xf32>
    %65 = arith.addf %62, %64 : vector<2x128xf32>
    %c0_45 = arith.constant 0 : index
    %c128 = arith.constant 128 : index
    %66 = vector.load %arg16[%c0_45, %c128] : memref<2x256xf32, #tpu.memory_space<vmem>>, vector<2x128xf32>
    tpu.vector_store %arg16[%c0_45, %c128], %65 {strides = array<i32>} : memref<2x256xf32, #tpu.memory_space<vmem>>, vector<2x128xf32>,
    return
  }
  func.func @transform_0(%arg0: i32) -> (i32, i32) {
    %c0_i32 = arith.constant 0 : i32
    %c0_i32_0 = arith.constant 0 : i32
    %c0_i32_1 = arith.constant 0 : i32
    return %c0_i32, %c0_i32_0 : i32, i32
  }
  func.func @transform_1(%arg0: i32) -> (i32, i32) {
    %c0_i32 = arith.constant 0 : i32
    %c0_i32_0 = arith.constant 0 : i32
    %c0_i32_1 = arith.constant 0 : i32
    return %c0_i32, %c0_i32_0 : i32, i32
  }
  func.func @transform_2(%arg0: i32) -> (i32, i32) {
    %c0_i32 = arith.constant 0 : i32
    %c0_i32_0 = arith.constant 0 : i32
    %c0_i32_1 = arith.constant 0 : i32
    return %c0_i32, %c0_i32_0 : i32, i32
  }
  func.func @transform_3(%arg0: i32) -> (i32, i32) {
    %c0_i32 = arith.constant 0 : i32
    %c0_i32_0 = arith.constant 0 : i32
    %c0_i32_1 = arith.constant 0 : i32
    return %c0_i32, %c0_i32_0 : i32, i32
  }
  func.func @transform_4(%arg0: i32) -> (i32, i32) {
    %c0_i32 = arith.constant 0 : i32
    %c0_i32_0 = arith.constant 0 : i32
    %c0_i32_1 = arith.constant 0 : i32
    return %c0_i32, %c0_i32_0 : i32, i32
  }
  func.func @transform_5(%arg0: i32) -> (i32, i32) {
    %c0_i32 = arith.constant 0 : i32
    %c0_i32_0 = arith.constant 0 : i32
    %c0_i32_1 = arith.constant 0 : i32
    return %c0_i32, %c0_i32_0 : i32, i32
  }
  func.func @transform_6(%arg0: i32) -> (i32, i32) {
    %c0_i32 = arith.constant 0 : i32
    %c0_i32_0 = arith.constant 0 : i32
    %c0_i32_1 = arith.constant 0 : i32
    return %c0_i32, %c0_i32_0 : i32, i32
  }
  func.func @transform_7(%arg0: i32) -> (i32, i32) {
    %c0_i32 = arith.constant 0 : i32
    %c0_i32_0 = arith.constant 0 : i32
    %c0_i32_1 = arith.constant 0 : i32
    return %c0_i32, %c0_i32_0 : i32, i32
  }
  func.func @transform_8(%arg0: i32) -> (i32, i32) {
    %c0_i32 = arith.constant 0 : i32
    %c0_i32_0 = arith.constant 0 : i32
    %c0_i32_1 = arith.constant 0 : i32
    return %c0_i32, %c0_i32_0 : i32, i32
  }
  func.func @transform_9(%arg0: i32) -> (i32, i32) {
    %c0_i32 = arith.constant 0 : i32
    %c0_i32_0 = arith.constant 0 : i32
    %c0_i32_1 = arith.constant 0 : i32
    return %c0_i32, %c0_i32_0 : i32, i32
  }
  func.func @transform_10(%arg0: i32) -> (i32, i32) {
    %c0_i32 = arith.constant 0 : i32
    %c0_i32_0 = arith.constant 0 : i32
    %c0_i32_1 = arith.constant 0 : i32
    return %c0_i32, %c0_i32_0 : i32, i32
  }
  func.func @transform_11(%arg0: i32) -> (i32, i32) {
    %c0_i32 = arith.constant 0 : i32
    %c0_i32_0 = arith.constant 0 : i32
    %c0_i32_1 = arith.constant 0 : i32
    return %c0_i32, %c0_i32_0 : i32, i32
  }
  func.func @transform_12(%arg0: i32) -> (i32, i32) {
    %c0_i32 = arith.constant 0 : i32
    %c0_i32_0 = arith.constant 0 : i32
    %c0_i32_1 = arith.constant 0 : i32
    return %c0_i32, %c0_i32_0 : i32, i32
  }
  func.func @transform_13(%arg0: i32) -> (i32, i32) {
    %c0_i32 = arith.constant 0 : i32
    %c0_i32_0 = arith.constant 0 : i32
    %c0_i32_1 = arith.constant 0 : i32
    return %c0_i32, %c0_i32_0 : i32, i32
  }
  func.func @transform_14(%arg0: i32) -> (i32, i32) {
    %c0_i32 = arith.constant 0 : i32
    %c0_i32_0 = arith.constant 0 : i32
    %c0_i32_1 = arith.constant 0 : i32
    return %c0_i32, %c0_i32_0 : i32, i32
  }
  func.func @transform_15(%arg0: i32) -> (i32, i32) {
    %c0_i32 = arith.constant 0 : i32
    %c0_i32_0 = arith.constant 0 : i32
    %c0_i32_1 = arith.constant 0 : i32
    return %c0_i32, %c0_i32_0 : i32, i32
  }
}

</mosaic_0001>

<llo_original>
// kernel: neg.17
$region0: #{neg.17}
  #allocation0 [shape = 's32[1]{0}', space=sflag, size = 0x4, scoped, tag = 'scoped memory for neg.17']
  %s0 = inlined_call_operand.vmem [shape: f32[2,64], index: 0, kind: input, shape index: {}]
  %s1 = inlined_call_operand.vmem [shape: f32[2,64], index: 1, kind: output, shape index: {}]
  %v2 = vld [vmem:[%s0] sm:$0x3]
  %3 = xla_tuple %v2
  %4 = xla_tuple %3
  %v5 = vxor.u32 %v2, 2147483648
  %6 = xla_tuple %v5
  %7 = vst [vmem:[%s1] sm:$0x3] %v5

// kernel: grasp_evaluator2_forward.5
$region0: #{grasp_evaluator2_forward.5}
  #allocation0 [shape = 'u32[]', space=smem, size = 0x4, offset = 0x4, fixed_abs, tag = 'smem constant byte address 0x4 - core index']
  #allocation1 [shape = 'u32[144,128]{1,0:T(1,128)}', space=vmem, size = 0x12000, scoped, tag = 'internal scratch']
  %s0 = inlined_call_operand.vmem [shape: bf16[8,128,6], index: 0, kind: input, shape index: {}]
  %s1 = inlined_call_operand.vmem [shape: bf16[6,128], index: 1, kind: input, shape index: {}]
  %s2 = inlined_call_operand.vmem [shape: f32[1,128], index: 2, kind: input, shape index: {}]
  %s3 = inlined_call_operand.vmem [shape: f32[1,128], index: 3, kind: input, shape index: {}]
  %s4 = inlined_call_operand.vmem [shape: f32[128,128], index: 4, kind: output, shape index: {}]
  %s5 = sld [smem:[#allocation0]]
  $region90: #{grasp_evaluator2_forward.5} parent=0
    _
  %s7 = ssub.s32 1, %s5
  %s8 = scalar_select 0, %s7, %s5
  $region1: #{grasp_evaluator2_forward.5} parent=0
    #allocation2 [shape = 'u8[262144]{0}', space=vmem, size = 0x40000, scoped, tag = 'input window, operand 0']
    loop: start=0, step=1, limit=4
    $region2: #{grasp_evaluator2_forward.5} parent=1 // loop_pre_header
      _
    $region3: #{grasp_evaluator2_forward.5} parent=1 // loop_header
      %s10 = sphi 0, %s14
      %p11 = scmp.ge.s32.totalorder %s10, 4
      %s20 = sphi 0, %s22
      %s23 = sphi 0, %s20
      %s24 = sphi 0, %s23
      %s40 = sphi 0, %s24
      %s44 = sphi 0, %s44
      %s46 = sphi 0, %s44
      %s47 = sphi 0, %s46
      %s61 = sphi 0, %s47
      %s65 = sphi 0, %s65
      %s67 = sphi 0, %s65
      %s68 = sphi 0, %s67
      %s82 = sphi 0, %s68
      %s86 = sphi 0, %s86
      %s88 = sphi 0, %s86
      %s89 = sphi 0, %s88
      %s103 = sphi 0, %s89
      %s109 = sphi 0, %s111
      %s112 = sphi 0, %s109
      %s113 = sphi 0, %s112
      %s129 = sphi 0, %s113
    $region4: #{grasp_evaluator2_forward.5} parent=1 // loop_header_branch
      %13 = sbr.rel (%p11) target = $region8
    $region5: #{grasp_evaluator2_forward.5} parent=1 // loop_body
      %s15 = ssub.s32 %s10, 1
      %s16 = ssub.s32 %s10, 2
      %s17 = sadd.s32 %s10, 1
      %s18 = ssub.s32 %s10, %s17
      %p19 = scmp.eq.s32.totalorder %s18, 0
      %s21 = sadd.s32 %s20, 1
      %s22 = scalar_select %p19, %s20, %s21
      %p25 = pneg %p19
      %p26 = scmp.eq.s32.totalorder %s10, 1
      %p27 = por %p25, %p26
      %p28 = scmp.ne.s32.totalorder %s20, %s23
      %p29 = scmp.eq.s32.totalorder %s10, 0
      %p30 = por %p28, %p29
      %p31 = scmp.ne.s32.totalorder %s20, %s23
      %p32 = scmp.eq.s32.totalorder %s15, 1
      %p33 = por %p31, %p32
      %p34 = scmp.ne.s32.totalorder %s23, %s24
      %p35 = scmp.eq.s32.totalorder %s15, 0
      %p36 = por %p34, %p35
      %p37 = scmp.ne.s32.totalorder %s23, %s24
      %p38 = scmp.eq.s32.totalorder %s16, 1
      %p39 = por %p37, %p38
      %p41 = scmp.ne.s32.totalorder %s24, %s40
      %p42 = scmp.eq.s32.totalorder %s16, 0
      %p43 = por %p41, %p42
      %s45 = sadd.s32 %s44, 1
      %p48 = scmp.eq.s32.totalorder %s10, 1
      %p49 = scmp.ne.s32.totalorder %s44, %s46
      %p50 = scmp.eq.s32.totalorder %s10, 0
      %p51 = por %p49, %p50
      %p52 = scmp.ne.s32.totalorder %s44, %s46
      %p53 = scmp.eq.s32.totalorder %s15, 1
      %p54 = por %p52, %p53
      %p55 = scmp.ne.s32.totalorder %s46, %s47
      %p56 = scmp.eq.s32.totalorder %s15, 0
      %p57 = por %p55, %p56
      %p58 = scmp.ne.s32.totalorder %s46, %s47
      %p59 = scmp.eq.s32.totalorder %s16, 1
      %p60 = por %p58, %p59
      %p62 = scmp.ne.s32.totalorder %s47, %s61
      %p63 = scmp.eq.s32.totalorder %s16, 0
      %p64 = por %p62, %p63
      %s66 = sadd.s32 %s65, 1
      %p69 = scmp.eq.s32.totalorder %s10, 1
      %p70 = scmp.ne.s32.totalorder %s65, %s67
      %p71 = scmp.eq.s32.totalorder %s10, 0
      %p72 = por %p70, %p71
      %p73 = scmp.ne.s32.totalorder %s65, %s67
      %p74 = scmp.eq.s32.totalorder %s15, 1
      %p75 = por %p73, %p74
      %p76 = scmp.ne.s32.totalorder %s67, %s68
      %p77 = scmp.eq.s32.totalorder %s15, 0
      %p78 = por %p76, %p77
      %p79 = scmp.ne.s32.totalorder %s67, %s68
      %p80 = scmp.eq.s32.totalorder %s16, 1
      %p81 = por %p79, %p80
      %p83 = scmp.ne.s32.totalorder %s68, %s82
      %p84 = scmp.eq.s32.totalorder %s16, 0
      %p85 = por %p83, %p84
      %s87 = sadd.s32 %s86, 1
      %p90 = scmp.eq.s32.totalorder %s10, 1
      %p91 = scmp.ne.s32.totalorder %s86, %s88
      %p92 = scmp.eq.s32.totalorder %s10, 0
      %p93 = por %p91, %p92
      %p94 = scmp.ne.s32.totalorder %s86, %s88
      %p95 = scmp.eq.s32.totalorder %s15, 1
      %p96 = por %p94, %p95
      %p97 = scmp.ne.s32.totalorder %s88, %s89
      %p98 = scmp.eq.s32.totalorder %s15, 0
      %p99 = por %p97, %p98
      %p100 = scmp.ne.s32.totalorder %s88, %s89
      %p101 = scmp.eq.s32.totalorder %s16, 1
      %p102 = por %p100, %p101
      %p104 = scmp.ne.s32.totalorder %s89, %s103
      %p105 = scmp.eq.s32.totalorder %s16, 0
      %p106 = por %p104, %p105
      %s107 = ssub.s32 %s10, %s17
      %p108 = scmp.eq.s32.totalorder %s107, 0
      %s110 = sadd.s32 %s109, 1
      %s111 = scalar_select %p108, %s109, %s110
      %p114 = pneg %p108
      %p115 = scmp.eq.s32.totalorder %s10, 1
      %p116 = por %p114, %p115
      %p117 = scmp.ne.s32.totalorder %s109, %s112
      %p118 = scmp.eq.s32.totalorder %s10, 0
      %p119 = por %p117, %p118
      %p120 = scmp.ne.s32.totalorder %s109, %s112
      %p121 = scmp.eq.s32.totalorder %s15, 1
      %p122 = por %p120, %p121
      %p123 = scmp.ne.s32.totalorder %s112, %s113
      %p124 = scmp.eq.s32.totalorder %s15, 0
      %p125 = por %p123, %p124
      %p126 = scmp.ne.s32.totalorder %s112, %s113
      %p127 = scmp.eq.s32.totalorder %s16, 1
      %p128 = por %p126, %p127
      %p130 = scmp.ne.s32.totalorder %s113, %s129
      %p131 = scmp.eq.s32.totalorder %s16, 0
      %p132 = por %p130, %p131
      %p133 = scmp.le.s32.totalorder 1, %s10
      %p134 = scmp.lt.s32.totalorder %s10, 3
      %p135 = pnand %p133, %p134
      %p136 = pneg %p135
      // Predicated region
      $region9: #{grasp_evaluator2_forward.5} parent=5 // pred_check
        _
      $region10: #{grasp_evaluator2_forward.5} parent=5 // pred_check_branch
        %138 = sbr.rel (%p135) target = $region12
      $region11: #{grasp_evaluator2_forward.5} parent=5 // pred_region
        %s139 = ssub.s32 %s10, 1
        // Predicated region
        $region13: #{grasp_evaluator2_forward.5} parent=11 // pred_check
          %p140 = pneg %p57
        $region14: #{grasp_evaluator2_forward.5} parent=11 // pred_check_branch
          %142 = sbr.rel (%p140) target = $region16
        $region15: #{grasp_evaluator2_forward.5} parent=11 // pred_region
          _
        $region16: #{grasp_evaluator2_forward.5} parent=11 // pred_fallthru
          _
        // Predicated region
        $region17: #{grasp_evaluator2_forward.5} parent=11 // pred_check
          %p143 = pneg %p78
        $region18: #{grasp_evaluator2_forward.5} parent=11 // pred_check_branch
          %145 = sbr.rel (%p143) target = $region20
        $region19: #{grasp_evaluator2_forward.5} parent=11 // pred_region
          _
        $region20: #{grasp_evaluator2_forward.5} parent=11 // pred_fallthru
          _
        // Predicated region
        $region21: #{grasp_evaluator2_forward.5} parent=11 // pred_check
          %p146 = pneg %p99
        $region22: #{grasp_evaluator2_forward.5} parent=11 // pred_check_branch
          %148 = sbr.rel (%p146) target = $region24
        $region23: #{grasp_evaluator2_forward.5} parent=11 // pred_region
          _
        $region24: #{grasp_evaluator2_forward.5} parent=11 // pred_fallthru
          _
      $region12: #{grasp_evaluator2_forward.5} parent=5 // pred_fallthru
        _
      %p149 = scmp.lt.s32.totalorder %s10, 2
      // Predicated region
      $region25: #{grasp_evaluator2_forward.5} parent=5 // pred_check
        %p150 = pneg %p149
      $region26: #{grasp_evaluator2_forward.5} parent=5 // pred_check_branch
        %152 = sbr.rel (%p150) target = $region28
      $region27: #{grasp_evaluator2_forward.5} parent=5 // pred_region
        // Predicated region
        $region29: #{grasp_evaluator2_forward.5} parent=27 // pred_check
          %p153 = pneg %p30
        $region30: #{grasp_evaluator2_forward.5} parent=27 // pred_check_branch
          %155 = sbr.rel (%p153) target = $region32
        $region31: #{grasp_evaluator2_forward.5} parent=27 // pred_region
          %s156 = sand.u32 %s20, 1
          %s157 = sand.u32 %s20, 1
          %s158 = smul.addr %s157, 256
          %s159 = scalar_lea.vmem [#allocation2], %s158
          %s160 = smul.u32 8, %s10
          %s161 = smul.addr %s160, 4
          %s162 = scalar_lea.vmem %s0, %s161
          // Predicated region
          $region33: #{grasp_evaluator2_forward.5} parent=31 // pred_check
            _
          $region34: #{grasp_evaluator2_forward.5} parent=31 // pred_check_branch
            %164 = sbr.rel (0) target = $region36
          $region35: #{grasp_evaluator2_forward.5} parent=31 // pred_region
            // Predicated region
            $region37: #{grasp_evaluator2_forward.5} parent=35 // pred_check
              _
            $region38: #{grasp_evaluator2_forward.5} parent=35 // pred_check_branch
              %166 = sbr.rel target = $region40
            $region39: #{grasp_evaluator2_forward.5} parent=35 // pred_region
              // Predicated region
              $region52: #{grasp_evaluator2_forward.5} parent=39 // pred_check
                _
              $region53: #{grasp_evaluator2_forward.5} parent=39 // pred_check_branch
                %307 = sbr.rel (0) target = $region55
              $region54: #{grasp_evaluator2_forward.5} parent=39 // pred_region
                loop: start=0, step=1, limit=1
                $region56: #{grasp_evaluator2_forward.5} parent=54 // loop_pre_header
                  _
                $region57: #{grasp_evaluator2_forward.5} parent=54 // loop_header
                  %s309 = sphi 0, %s313
                  %p310 = scmp.ge.s32.totalorder %s309, 1
                  %s314 = sphi %s162, %s162
                  %s315 = sphi %s159, %s159
                $region58: #{grasp_evaluator2_forward.5} parent=54 // loop_header_branch
                  %312 = sbr.rel (%p310) target = $region62
                $region59: #{grasp_evaluator2_forward.5} parent=54 // loop_body
                  _
                $region60: #{grasp_evaluator2_forward.5} parent=54 // loop_footer
                  %s313 = sadd.s32 1, %s309
                $region61: #{grasp_evaluator2_forward.5} parent=54 // loop_footer_branch
                  %308 = sbr.rel target = $region57
                $region62: #{grasp_evaluator2_forward.5} parent=54 // loop_exit
                  _
                loop: start=0, step=1, limit=1
                $region63: #{grasp_evaluator2_forward.5} parent=54 // loop_pre_header
                  _
                $region64: #{grasp_evaluator2_forward.5} parent=54 // loop_header
                  %s318 = sphi 0, %s322
                  %p319 = scmp.ge.s32.totalorder %s318, 1
                  %s323 = sphi %s162, %s162
                  %s324 = sphi %s159, %s159
                $region65: #{grasp_evaluator2_forward.5} parent=54 // loop_header_branch
                  %321 = sbr.rel (%p319) target = $region69
                $region66: #{grasp_evaluator2_forward.5} parent=54 // loop_body
                  %v325 = vld [vmem:[%s323] sm:$0xf]
                  %326 = vst [vmem:[%s324] sm:$0xf] %v325
                  %v327 = vld [vmem:[%s323 + $0x4] sm:$0xf]
                  %328 = vst [vmem:[%s324 + $0x4] sm:$0xf] %v327
                  %v329 = vld [vmem:[%s323 + $0x8] sm:$0xf]
                  %330 = vst [vmem:[%s324 + $0x8] sm:$0xf] %v329
                  %v331 = vld [vmem:[%s323 + $0xc] sm:$0xf]
                  %332 = vst [vmem:[%s324 + $0xc] sm:$0xf] %v331
                  %v333 = vld [vmem:[%s323 + $0x10] sm:$0xf]
                  %334 = vst [vmem:[%s324 + $0x10] sm:$0xf] %v333
                  %v335 = vld [vmem:[%s323 + $0x14] sm:$0xf]
                  %336 = vst [vmem:[%s324 + $0x14] sm:$0xf] %v335
                  %v337 = vld [vmem:[%s323 + $0x18] sm:$0xf]
                  %338 = vst [vmem:[%s324 + $0x18] sm:$0xf] %v337
                  %v339 = vld [vmem:[%s323 + $0x1c] sm:$0xf]
                  %340 = vst [vmem:[%s324 + $0x1c] sm:$0xf] %v339
                  %v341 = vld [vmem:[%s323 + $0x40] sm:$0xf]
                  %342 = vst [vmem:[%s324 + $0x20] sm:$0xf] %v341
                  %v343 = vld [vmem:[%s323 + $0x44] sm:$0xf]
                  %344 = vst [vmem:[%s324 + $0x24] sm:$0xf] %v343
                  %v345 = vld [vmem:[%s323 + $0x48] sm:$0xf]
                  %346 = vst [vmem:[%s324 + $0x28] sm:$0xf] %v345
                  %v347 = vld [vmem:[%s323 + $0x4c] sm:$0xf]
                  %348 = vst [vmem:[%s324 + $0x2c] sm:$0xf] %v347
                  %v349 = vld [vmem:[%s323 + $0x50] sm:$0xf]
                  %350 = vst [vmem:[%s324 + $0x30] sm:$0xf] %v349
                  %v351 = vld [vmem:[%s323 + $0x54] sm:$0xf]
                  %352 = vst [vmem:[%s324 + $0x34] sm:$0xf] %v351
                  %v353 = vld [vmem:[%s323 + $0x58] sm:$0xf]
                  %354 = vst [vmem:[%s324 + $0x38] sm:$0xf] %v353
                  %v355 = vld [vmem:[%s323 + $0x5c] sm:$0xf]
                  %356 = vst [vmem:[%s324 + $0x3c] sm:$0xf] %v355
                  %v357 = vld [vmem:[%s323 + $0x80] sm:$0xf]
                  %358 = vst [vmem:[%s324 + $0x40] sm:$0xf] %v357
                  %v359 = vld [vmem:[%s323 + $0x84] sm:$0xf]
                  %360 = vst [vmem:[%s324 + $0x44] sm:$0xf] %v359
                  %v361 = vld [vmem:[%s323 + $0x88] sm:$0xf]
                  %362 = vst [vmem:[%s324 + $0x48] sm:$0xf] %v361
                  %v363 = vld [vmem:[%s323 + $0x8c] sm:$0xf]
                  %364 = vst [vmem:[%s324 + $0x4c] sm:$0xf] %v363
                  %v365 = vld [vmem:[%s323 + $0x90] sm:$0xf]
                  %366 = vst [vmem:[%s324 + $0x50] sm:$0xf] %v365
                  %v367 = vld [vmem:[%s323 + $0x94] sm:$0xf]
                  %368 = vst [vmem:[%s324 + $0x54] sm:$0xf] %v367
                  %v369 = vld [vmem:[%s323 + $0x98] sm:$0xf]
                  %370 = vst [vmem:[%s324 + $0x58] sm:$0xf] %v369
                  %v371 = vld [vmem:[%s323 + $0x9c] sm:$0xf]
                  %372 = vst [vmem:[%s324 + $0x5c] sm:$0xf] %v371
                  %v373 = vld [vmem:[%s323 + $0xc0] sm:$0xf]
                  %374 = vst [vmem:[%s324 + $0x60] sm:$0xf] %v373
                  %v375 = vld [vmem:[%s323 + $0xc4] sm:$0xf]
                  %376 = vst [vmem:[%s324 + $0x64] sm:$0xf] %v375
                  %v377 = vld [vmem:[%s323 + $0xc8] sm:$0xf]
                  %378 = vst [vmem:[%s324 + $0x68] sm:$0xf] %v377
                  %v379 = vld [vmem:[%s323 + $0xcc] sm:$0xf]
                  %380 = vst [vmem:[%s324 + $0x6c] sm:$0xf] %v379
                  %v381 = vld [vmem:[%s323 + $0xd0] sm:$0xf]
                  %382 = vst [vmem:[%s324 + $0x70] sm:$0xf] %v381
                  %v383 = vld [vmem:[%s323 + $0xd4] sm:$0xf]
                  %384 = vst [vmem:[%s324 + $0x74] sm:$0xf] %v383
                  %v385 = vld [vmem:[%s323 + $0xd8] sm:$0xf]
                  %386 = vst [vmem:[%s324 + $0x78] sm:$0xf] %v385
                  %v387 = vld [vmem:[%s323 + $0xdc] sm:$0xf]
                  %388 = vst [vmem:[%s324 + $0x7c] sm:$0xf] %v387
                  %v389 = vld [vmem:[%s323 + $0x100] sm:$0xf]
                  %390 = vst [vmem:[%s324 + $0x80] sm:$0xf] %v389
                  %v391 = vld [vmem:[%s323 + $0x104] sm:$0xf]
                  %392 = vst [vmem:[%s324 + $0x84] sm:$0xf] %v391
                  %v393 = vld [vmem:[%s323 + $0x108] sm:$0xf]
                  %394 = vst [vmem:[%s324 + $0x88] sm:$0xf] %v393
                  %v395 = vld [vmem:[%s323 + $0x10c] sm:$0xf]
                  %396 = vst [vmem:[%s324 + $0x8c] sm:$0xf] %v395
                  %v397 = vld [vmem:[%s323 + $0x110] sm:$0xf]
                  %398 = vst [vmem:[%s324 + $0x90] sm:$0xf] %v397
                  %v399 = vld [vmem:[%s323 + $0x114] sm:$0xf]
                  %400 = vst [vmem:[%s324 + $0x94] sm:$0xf] %v399
                  %v401 = vld [vmem:[%s323 + $0x118] sm:$0xf]
                  %402 = vst [vmem:[%s324 + $0x98] sm:$0xf] %v401
                  %v403 = vld [vmem:[%s323 + $0x11c] sm:$0xf]
                  %404 = vst [vmem:[%s324 + $0x9c] sm:$0xf] %v403
                  %v405 = vld [vmem:[%s323 + $0x140] sm:$0xf]
                  %406 = vst [vmem:[%s324 + $0xa0] sm:$0xf] %v405
                  %v407 = vld [vmem:[%s323 + $0x144] sm:$0xf]
                  %408 = vst [vmem:[%s324 + $0xa4] sm:$0xf] %v407
                  %v409 = vld [vmem:[%s323 + $0x148] sm:$0xf]
                  %410 = vst [vmem:[%s324 + $0xa8] sm:$0xf] %v409
                  %v411 = vld [vmem:[%s323 + $0x14c] sm:$0xf]
                  %412 = vst [vmem:[%s324 + $0xac] sm:$0xf] %v411
                  %v413 = vld [vmem:[%s323 + $0x150] sm:$0xf]
                  %414 = vst [vmem:[%s324 + $0xb0] sm:$0xf] %v413
                  %v415 = vld [vmem:[%s323 + $0x154] sm:$0xf]
                  %416 = vst [vmem:[%s324 + $0xb4] sm:$0xf] %v415
                  %v417 = vld [vmem:[%s323 + $0x158] sm:$0xf]
                  %418 = vst [vmem:[%s324 + $0xb8] sm:$0xf] %v417
                  %v419 = vld [vmem:[%s323 + $0x15c] sm:$0xf]
                  %420 = vst [vmem:[%s324 + $0xbc] sm:$0xf] %v419
                  %v421 = vld [vmem:[%s323 + $0x180] sm:$0xf]
                  %422 = vst [vmem:[%s324 + $0xc0] sm:$0xf] %v421
                  %v423 = vld [vmem:[%s323 + $0x184] sm:$0xf]
                  %424 = vst [vmem:[%s324 + $0xc4] sm:$0xf] %v423
                  %v425 = vld [vmem:[%s323 + $0x188] sm:$0xf]
                  %426 = vst [vmem:[%s324 + $0xc8] sm:$0xf] %v425
                  %v427 = vld [vmem:[%s323 + $0x18c] sm:$0xf]
                  %428 = vst [vmem:[%s324 + $0xcc] sm:$0xf] %v427
                  %v429 = vld [vmem:[%s323 + $0x190] sm:$0xf]
                  %430 = vst [vmem:[%s324 + $0xd0] sm:$0xf] %v429
                  %v431 = vld [vmem:[%s323 + $0x194] sm:$0xf]
                  %432 = vst [vmem:[%s324 + $0xd4] sm:$0xf] %v431
                  %v433 = vld [vmem:[%s323 + $0x198] sm:$0xf]
                  %434 = vst [vmem:[%s324 + $0xd8] sm:$0xf] %v433
                  %v435 = vld [vmem:[%s323 + $0x19c] sm:$0xf]
                  %436 = vst [vmem:[%s324 + $0xdc] sm:$0xf] %v435
                  %v437 = vld [vmem:[%s323 + $0x1c0] sm:$0xf]
                  %438 = vst [vmem:[%s324 + $0xe0] sm:$0xf] %v437
                  %v439 = vld [vmem:[%s323 + $0x1c4] sm:$0xf]
                  %440 = vst [vmem:[%s324 + $0xe4] sm:$0xf] %v439
                  %v441 = vld [vmem:[%s323 + $0x1c8] sm:$0xf]
                  %442 = vst [vmem:[%s324 + $0xe8] sm:$0xf] %v441
                  %v443 = vld [vmem:[%s323 + $0x1cc] sm:$0xf]
                  %444 = vst [vmem:[%s324 + $0xec] sm:$0xf] %v443
                  %v445 = vld [vmem:[%s323 + $0x1d0] sm:$0xf]
                  %446 = vst [vmem:[%s324 + $0xf0] sm:$0xf] %v445
                  %v447 = vld [vmem:[%s323 + $0x1d4] sm:$0xf]
                  %448 = vst [vmem:[%s324 + $0xf4] sm:$0xf] %v447
                  %v449 = vld [vmem:[%s323 + $0x1d8] sm:$0xf]
                  %450 = vst [vmem:[%s324 + $0xf8] sm:$0xf] %v449
                  %v451 = vld [vmem:[%s323 + $0x1dc] sm:$0xf]
                  %452 = vst [vmem:[%s324 + $0xfc] sm:$0xf] %v451
                $region67: #{grasp_evaluator2_forward.5} parent=54 // loop_footer
                  %s322 = sadd.s32 1, %s318
                $region68: #{grasp_evaluator2_forward.5} parent=54 // loop_footer_branch
                  %317 = sbr.rel target = $region64
                $region69: #{grasp_evaluator2_forward.5} parent=54 // loop_exit
                  _
              $region55: #{grasp_evaluator2_forward.5} parent=39 // pred_fallthru
                _
            $region40: #{grasp_evaluator2_forward.5} parent=35 // pred_fallthru
              _
            // Predicated region
            $region41: #{grasp_evaluator2_forward.5} parent=35 // pred_check
              _
            $region42: #{grasp_evaluator2_forward.5} parent=35 // pred_check_branch
              %168 = sbr.rel (0) target = $region44
            $region43: #{grasp_evaluator2_forward.5} parent=35 // pred_region
              loop: start=0, step=1, limit=1
              $region45: #{grasp_evaluator2_forward.5} parent=43 // loop_pre_header
                _
              $region46: #{grasp_evaluator2_forward.5} parent=43 // loop_header
                %s171 = sphi 0, %s175
                %p172 = scmp.ge.s32.totalorder %s171, 1
                %s176 = sphi %s162, %s162
                %s177 = sphi %s159, %s159
              $region47: #{grasp_evaluator2_forward.5} parent=43 // loop_header_branch
                %174 = sbr.rel (%p172) target = $region51
              $region48: #{grasp_evaluator2_forward.5} parent=43 // loop_body
                %v178 = vld [vmem:[%s176] sm:$0xf]
                %179 = vst [vmem:[%s177] sm:$0xf] %v178
                %v180 = vld [vmem:[%s176 + $0x4] sm:$0xf]
                %181 = vst [vmem:[%s177 + $0x4] sm:$0xf] %v180
                %v182 = vld [vmem:[%s176 + $0x8] sm:$0xf]
                %183 = vst [vmem:[%s177 + $0x8] sm:$0xf] %v182
                %v184 = vld [vmem:[%s176 + $0xc] sm:$0xf]
                %185 = vst [vmem:[%s177 + $0xc] sm:$0xf] %v184
                %v186 = vld [vmem:[%s176 + $0x10] sm:$0xf]
                %187 = vst [vmem:[%s177 + $0x10] sm:$0xf] %v186
                %v188 = vld [vmem:[%s176 + $0x14] sm:$0xf]
                %189 = vst [vmem:[%s177 + $0x14] sm:$0xf] %v188
                %v190 = vld [vmem:[%s176 + $0x18] sm:$0xf]
                %191 = vst [vmem:[%s177 + $0x18] sm:$0xf] %v190
                %v192 = vld [vmem:[%s176 + $0x1c] sm:$0xf]
                %193 = vst [vmem:[%s177 + $0x1c] sm:$0xf] %v192
                %v194 = vld [vmem:[%s176 + $0x40] sm:$0xf]
                %195 = vst [vmem:[%s177 + $0x20] sm:$0xf] %v194
                %v196 = vld [vmem:[%s176 + $0x44] sm:$0xf]
                %197 = vst [vmem:[%s177 + $0x24] sm:$0xf] %v196
                %v198 = vld [vmem:[%s176 + $0x48] sm:$0xf]
                %199 = vst [vmem:[%s177 + $0x28] sm:$0xf] %v198
                %v200 = vld [vmem:[%s176 + $0x4c] sm:$0xf]
                %201 = vst [vmem:[%s177 + $0x2c] sm:$0xf] %v200
                %v202 = vld [vmem:[%s176 + $0x50] sm:$0xf]
                %203 = vst [vmem:[%s177 + $0x30] sm:$0xf] %v202
                %v204 = vld [vmem:[%s176 + $0x54] sm:$0xf]
                %205 = vst [vmem:[%s177 + $0x34] sm:$0xf] %v204
                %v206 = vld [vmem:[%s176 + $0x58] sm:$0xf]
                %207 = vst [vmem:[%s177 + $0x38] sm:$0xf] %v206
                %v208 = vld [vmem:[%s176 + $0x5c] sm:$0xf]
                %209 = vst [vmem:[%s177 + $0x3c] sm:$0xf] %v208
                %v210 = vld [vmem:[%s176 + $0x80] sm:$0xf]
                %211 = vst [vmem:[%s177 + $0x40] sm:$0xf] %v210
                %v212 = vld [vmem:[%s176 + $0x84] sm:$0xf]
                %213 = vst [vmem:[%s177 + $0x44] sm:$0xf] %v212
                %v214 = vld [vmem:[%s176 + $0x88] sm:$0xf]
                %215 = vst [vmem:[%s177 + $0x48] sm:$0xf] %v214
                %v216 = vld [vmem:[%s176 + $0x8c] sm:$0xf]
                %217 = vst [vmem:[%s177 + $0x4c] sm:$0xf] %v216
                %v218 = vld [vmem:[%s176 + $0x90] sm:$0xf]
                %219 = vst [vmem:[%s177 + $0x50] sm:$0xf] %v218
                %v220 = vld [vmem:[%s176 + $0x94] sm:$0xf]
                %221 = vst [vmem:[%s177 + $0x54] sm:$0xf] %v220
                %v222 = vld [vmem:[%s176 + $0x98] sm:$0xf]
                %223 = vst [vmem:[%s177 + $0x58] sm:$0xf] %v222
                %v224 = vld [vmem:[%s176 + $0x9c] sm:$0xf]
                %225 = vst [vmem:[%s177 + $0x5c] sm:$0xf] %v224
                %v226 = vld [vmem:[%s176 + $0xc0] sm:$0xf]
                %227 = vst [vmem:[%s177 + $0x60] sm:$0xf] %v226
                %v228 = vld [vmem:[%s176 + $0xc4] sm:$0xf]
                %229 = vst [vmem:[%s177 + $0x64] sm:$0xf] %v228
                %v230 = vld [vmem:[%s176 + $0xc8] sm:$0xf]
                %231 = vst [vmem:[%s177 + $0x68] sm:$0xf] %v230
                %v232 = vld [vmem:[%s176 + $0xcc] sm:$0xf]
                %233 = vst [vmem:[%s177 + $0x6c] sm:$0xf] %v232
                %v234 = vld [vmem:[%s176 + $0xd0] sm:$0xf]
                %235 = vst [vmem:[%s177 + $0x70] sm:$0xf] %v234
                %v236 = vld [vmem:[%s176 + $0xd4] sm:$0xf]
                %237 = vst [vmem:[%s177 + $0x74] sm:$0xf] %v236
                %v238 = vld [vmem:[%s176 + $0xd8] sm:$0xf]
                %239 = vst [vmem:[%s177 + $0x78] sm:$0xf] %v238
                %v240 = vld [vmem:[%s176 + $0xdc] sm:$0xf]
                %241 = vst [vmem:[%s177 + $0x7c] sm:$0xf] %v240
                %v242 = vld [vmem:[%s176 + $0x100] sm:$0xf]
                %243 = vst [vmem:[%s177 + $0x80] sm:$0xf] %v242
                %v244 = vld [vmem:[%s176 + $0x104] sm:$0xf]
                %245 = vst [vmem:[%s177 + $0x84] sm:$0xf] %v244
                %v246 = vld [vmem:[%s176 + $0x108] sm:$0xf]
                %247 = vst [vmem:[%s177 + $0x88] sm:$0xf] %v246
                %v248 = vld [vmem:[%s176 + $0x10c] sm:$0xf]
                %249 = vst [vmem:[%s177 + $0x8c] sm:$0xf] %v248
                %v250 = vld [vmem:[%s176 + $0x110] sm:$0xf]
                %251 = vst [vmem:[%s177 + $0x90] sm:$0xf] %v250
                %v252 = vld [vmem:[%s176 + $0x114] sm:$0xf]
                %253 = vst [vmem:[%s177 + $0x94] sm:$0xf] %v252
                %v254 = vld [vmem:[%s176 + $0x118] sm:$0xf]
                %255 = vst [vmem:[%s177 + $0x98] sm:$0xf] %v254
                %v256 = vld [vmem:[%s176 + $0x11c] sm:$0xf]
                %257 = vst [vmem:[%s177 + $0x9c] sm:$0xf] %v256
                %v258 = vld [vmem:[%s176 + $0x140] sm:$0xf]
                %259 = vst [vmem:[%s177 + $0xa0] sm:$0xf] %v258
                %v260 = vld [vmem:[%s176 + $0x144] sm:$0xf]
                %261 = vst [vmem:[%s177 + $0xa4] sm:$0xf] %v260
                %v262 = vld [vmem:[%s176 + $0x148] sm:$0xf]
                %263 = vst [vmem:[%s177 + $0xa8] sm:$0xf] %v262
                %v264 = vld [vmem:[%s176 + $0x14c] sm:$0xf]
                %265 = vst [vmem:[%s177 + $0xac] sm:$0xf] %v264
                %v266 = vld [vmem:[%s176 + $0x150] sm:$0xf]
                %267 = vst [vmem:[%s177 + $0xb0] sm:$0xf] %v266
                %v268 = vld [vmem:[%s176 + $0x154] sm:$0xf]
                %269 = vst [vmem:[%s177 + $0xb4] sm:$0xf] %v268
                %v270 = vld [vmem:[%s176 + $0x158] sm:$0xf]
                %271 = vst [vmem:[%s177 + $0xb8] sm:$0xf] %v270
                %v272 = vld [vmem:[%s176 + $0x15c] sm:$0xf]
                %273 = vst [vmem:[%s177 + $0xbc] sm:$0xf] %v272
                %v274 = vld [vmem:[%s176 + $0x180] sm:$0xf]
                %275 = vst [vmem:[%s177 + $0xc0] sm:$0xf] %v274
                %v276 = vld [vmem:[%s176 + $0x184] sm:$0xf]
                %277 = vst [vmem:[%s177 + $0xc4] sm:$0xf] %v276
                %v278 = vld [vmem:[%s176 + $0x188] sm:$0xf]
                %279 = vst [vmem:[%s177 + $0xc8] sm:$0xf] %v278
                %v280 = vld [vmem:[%s176 + $0x18c] sm:$0xf]
                %281 = vst [vmem:[%s177 + $0xcc] sm:$0xf] %v280
                %v282 = vld [vmem:[%s176 + $0x190] sm:$0xf]
                %283 = vst [vmem:[%s177 + $0xd0] sm:$0xf] %v282
                %v284 = vld [vmem:[%s176 + $0x194] sm:$0xf]
                %285 = vst [vmem:[%s177 + $0xd4] sm:$0xf] %v284
                %v286 = vld [vmem:[%s176 + $0x198] sm:$0xf]
                %287 = vst [vmem:[%s177 + $0xd8] sm:$0xf] %v286
                %v288 = vld [vmem:[%s176 + $0x19c] sm:$0xf]
                %289 = vst [vmem:[%s177 + $0xdc] sm:$0xf] %v288
                %v290 = vld [vmem:[%s176 + $0x1c0] sm:$0xf]
                %291 = vst [vmem:[%s177 + $0xe0] sm:$0xf] %v290
                %v292 = vld [vmem:[%s176 + $0x1c4] sm:$0xf]
                %293 = vst [vmem:[%s177 + $0xe4] sm:$0xf] %v292
                %v294 = vld [vmem:[%s176 + $0x1c8] sm:$0xf]
                %295 = vst [vmem:[%s177 + $0xe8] sm:$0xf] %v294
                %v296 = vld [vmem:[%s176 + $0x1cc] sm:$0xf]
                %297 = vst [vmem:[%s177 + $0xec] sm:$0xf] %v296
                %v298 = vld [vmem:[%s176 + $0x1d0] sm:$0xf]
                %299 = vst [vmem:[%s177 + $0xf0] sm:$0xf] %v298
                %v300 = vld [vmem:[%s176 + $0x1d4] sm:$0xf]
                %301 = vst [vmem:[%s177 + $0xf4] sm:$0xf] %v300
                %v302 = vld [vmem:[%s176 + $0x1d8] sm:$0xf]
                %303 = vst [vmem:[%s177 + $0xf8] sm:$0xf] %v302
                %v304 = vld [vmem:[%s176 + $0x1dc] sm:$0xf]
                %305 = vst [vmem:[%s177 + $0xfc] sm:$0xf] %v304
              $region49: #{grasp_evaluator2_forward.5} parent=43 // loop_footer
                %s175 = sadd.s32 1, %s171
              $region50: #{grasp_evaluator2_forward.5} parent=43 // loop_footer_branch
                %170 = sbr.rel target = $region46
              $region51: #{grasp_evaluator2_forward.5} parent=43 // loop_exit
                _
            $region44: #{grasp_evaluator2_forward.5} parent=35 // pred_fallthru
              _
          $region36: #{grasp_evaluator2_forward.5} parent=31 // pred_fallthru
            _
          %453 = vnop
        $region32: #{grasp_evaluator2_forward.5} parent=27 // pred_fallthru
          _
      $region28: #{grasp_evaluator2_forward.5} parent=5 // pred_fallthru
        _
      %p454 = scmp.le.s32.totalorder 1, %s10
      %p455 = scmp.lt.s32.totalorder %s10, 3
      %p456 = pnand %p454, %p455
      %p457 = pneg %p456
      // Predicated region
      $region70: #{grasp_evaluator2_forward.5} parent=5 // pred_check
        _
      $region71: #{grasp_evaluator2_forward.5} parent=5 // pred_check_branch
        %459 = sbr.rel (%p456) target = $region73
      $region72: #{grasp_evaluator2_forward.5} parent=5 // pred_region
        %s460 = ssub.s32 %s10, 1
        %s461 = sand.u32 %s23, 1
        %s462 = sand.u32 %s23, 1
        %s463 = smul.addr %s462, 256
        %s464 = scalar_lea.vmem [#allocation2], %s463
        // Predicated region
        $region74: #{grasp_evaluator2_forward.5} parent=72 // pred_check
          %p465 = pneg %p36
        $region75: #{grasp_evaluator2_forward.5} parent=72 // pred_check_branch
          %467 = sbr.rel (%p465) target = $region77
        $region76: #{grasp_evaluator2_forward.5} parent=72 // pred_region
          _
        $region77: #{grasp_evaluator2_forward.5} parent=72 // pred_fallthru
          _
        %s468 = sand.u32 %s23, 1
        %s469 = sand.u32 %s23, 1
        %s470 = smul.addr %s469, 256
        %s471 = scalar_lea.vmem [#allocation2], %s470
        %p472 = pneg %p36
        %p473 = pneg %p33
        %p474 = pneg %p57
        %p475 = pneg %p54
        %p476 = pneg %p78
        %p477 = pneg %p75
        %p478 = pneg %p99
        %p479 = pneg %p96
        %p480 = pneg %p125
        %p481 = pneg %p122
        %s482 = smul.u32 8, %s15
        %p483 = scmp.lt.s32.totalorder %s482, 15
        %s484 = scalar_select %p483, %s482, 15
        %s485 = smul.addr %s484, 8
        %s486 = scalar_lea.vmem %s4, %s485
        %s487 = smul.u32 8, %s15
        %s488 = smul.u32 8, %s15
        %p489 = scmp.lt.s32.totalorder %s488, 15
        %s490 = scalar_select %p489, %s488, 15
        %s491 = smul.addr %s490, 8
        %s492 = scalar_lea.vmem %s4, %s491
        %s493 = smul.u32 8, %s15
        %v495 = vld [vmem:[%s464] sm:$0xf]
        %v496 = vld [vmem:[%s464 + $0x4] sm:$0xf]
        %v497 = vld [vmem:[%s464 + $0x8] sm:$0xf]
        %v498 = vld [vmem:[%s464 + $0xc] sm:$0xf]
        %v499 = vld [vmem:[%s464 + $0x10] sm:$0xf]
        %v500 = vld [vmem:[%s464 + $0x14] sm:$0xf]
        %v501 = vld [vmem:[%s464 + $0x18] sm:$0xf]
        %v502 = vld [vmem:[%s464 + $0x1c] sm:$0xf]
        %v503 = vld [vmem:[%s464 + $0x20] sm:$0xf]
        %v504 = vld [vmem:[%s464 + $0x24] sm:$0xf]
        %v505 = vld [vmem:[%s464 + $0x28] sm:$0xf]
        %v506 = vld [vmem:[%s464 + $0x2c] sm:$0xf]
        %v507 = vld [vmem:[%s464 + $0x30] sm:$0xf]
        %v508 = vld [vmem:[%s464 + $0x34] sm:$0xf]
        %v509 = vld [vmem:[%s464 + $0x38] sm:$0xf]
        %v510 = vld [vmem:[%s464 + $0x3c] sm:$0xf]
        %v511 = vld [vmem:[%s464 + $0x40] sm:$0xf]
        %v512 = vld [vmem:[%s464 + $0x44] sm:$0xf]
        %v513 = vld [vmem:[%s464 + $0x48] sm:$0xf]
        %v514 = vld [vmem:[%s464 + $0x4c] sm:$0xf]
        %v515 = vld [vmem:[%s464 + $0x50] sm:$0xf]
        %v516 = vld [vmem:[%s464 + $0x54] sm:$0xf]
        %v517 = vld [vmem:[%s464 + $0x58] sm:$0xf]
        %v518 = vld [vmem:[%s464 + $0x5c] sm:$0xf]
        %v519 = vld [vmem:[%s464 + $0x60] sm:$0xf]
        %v520 = vld [vmem:[%s464 + $0x64] sm:$0xf]
        %v521 = vld [vmem:[%s464 + $0x68] sm:$0xf]
        %v522 = vld [vmem:[%s464 + $0x6c] sm:$0xf]
        %v523 = vld [vmem:[%s464 + $0x70] sm:$0xf]
        %v524 = vld [vmem:[%s464 + $0x74] sm:$0xf]
        %v525 = vld [vmem:[%s464 + $0x78] sm:$0xf]
        %v526 = vld [vmem:[%s464 + $0x7c] sm:$0xf]
        %v527 = vld [vmem:[%s464 + $0x80] sm:$0xf]
        %v528 = vld [vmem:[%s464 + $0x84] sm:$0xf]
        %v529 = vld [vmem:[%s464 + $0x88] sm:$0xf]
        %v530 = vld [vmem:[%s464 + $0x8c] sm:$0xf]
        %v531 = vld [vmem:[%s464 + $0x90] sm:$0xf]
        %v532 = vld [vmem:[%s464 + $0x94] sm:$0xf]
        %v533 = vld [vmem:[%s464 + $0x98] sm:$0xf]
        %v534 = vld [vmem:[%s464 + $0x9c] sm:$0xf]
        %v535 = vld [vmem:[%s464 + $0xa0] sm:$0xf]
        %v536 = vld [vmem:[%s464 + $0xa4] sm:$0xf]
        %v537 = vld [vmem:[%s464 + $0xa8] sm:$0xf]
        %v538 = vld [vmem:[%s464 + $0xac] sm:$0xf]
        %v539 = vld [vmem:[%s464 + $0xb0] sm:$0xf]
        %v540 = vld [vmem:[%s464 + $0xb4] sm:$0xf]
        %v541 = vld [vmem:[%s464 + $0xb8] sm:$0xf]
        %v542 = vld [vmem:[%s464 + $0xbc] sm:$0xf]
        %v543 = vld [vmem:[%s464 + $0xc0] sm:$0xf]
        %v544 = vld [vmem:[%s464 + $0xc4] sm:$0xf]
        %v545 = vld [vmem:[%s464 + $0xc8] sm:$0xf]
        %v546 = vld [vmem:[%s464 + $0xcc] sm:$0xf]
        %v547 = vld [vmem:[%s464 + $0xd0] sm:$0xf]
        %v548 = vld [vmem:[%s464 + $0xd4] sm:$0xf]
        %v549 = vld [vmem:[%s464 + $0xd8] sm:$0xf]
        %v550 = vld [vmem:[%s464 + $0xdc] sm:$0xf]
        %v551 = vld [vmem:[%s464 + $0xe0] sm:$0xf]
        %v552 = vld [vmem:[%s464 + $0xe4] sm:$0xf]
        %v553 = vld [vmem:[%s464 + $0xe8] sm:$0xf]
        %v554 = vld [vmem:[%s464 + $0xec] sm:$0xf]
        %v555 = vld [vmem:[%s464 + $0xf0] sm:$0xf]
        %v556 = vld [vmem:[%s464 + $0xf4] sm:$0xf]
        %v557 = vld [vmem:[%s464 + $0xf8] sm:$0xf]
        %v558 = vld [vmem:[%s464 + $0xfc] sm:$0xf]
        %v559 = vld [vmem:[%s1] sm:$0x7]
        %v624 = vunpack.c.l.b16 %v495
        %v625 = vunpack.c.l.b16 %v496
        %v626 = vunpack.c.l.b16 %v497
        %v627 = vunpack.c.l.b16 %v498
        %v628 = vunpack.c.l.b16 %v499
        %v629 = vunpack.c.l.b16 %v500
        %v630 = vunpack.c.l.b16 %v501
        %v631 = vunpack.c.l.b16 %v502
        %v632 = vunpack.c.l.b16 %v503
        %v633 = vunpack.c.l.b16 %v504
        %v634 = vunpack.c.l.b16 %v505
        %v635 = vunpack.c.l.b16 %v506
        %v636 = vunpack.c.l.b16 %v507
        %v637 = vunpack.c.l.b16 %v508
        %v638 = vunpack.c.l.b16 %v509
        %v639 = vunpack.c.l.b16 %v510
        %v640 = vunpack.c.l.b16 %v511
        %v641 = vunpack.c.l.b16 %v512
        %v642 = vunpack.c.l.b16 %v513
        %v643 = vunpack.c.l.b16 %v514
        %v644 = vunpack.c.l.b16 %v515
        %v645 = vunpack.c.l.b16 %v516
        %v646 = vunpack.c.l.b16 %v517
        %v647 = vunpack.c.l.b16 %v518
        %v648 = vunpack.c.l.b16 %v519
        %v649 = vunpack.c.l.b16 %v520
        %v650 = vunpack.c.l.b16 %v521
        %v651 = vunpack.c.l.b16 %v522
        %v652 = vunpack.c.l.b16 %v523
        %v653 = vunpack.c.l.b16 %v524
        %v654 = vunpack.c.l.b16 %v525
        %v655 = vunpack.c.l.b16 %v526
        %v656 = vunpack.c.l.b16 %v527
        %v657 = vunpack.c.l.b16 %v528
        %v658 = vunpack.c.l.b16 %v529
        %v659 = vunpack.c.l.b16 %v530
        %v660 = vunpack.c.l.b16 %v531
        %v661 = vunpack.c.l.b16 %v532
        %v662 = vunpack.c.l.b16 %v533
        %v663 = vunpack.c.l.b16 %v534
        %v664 = vunpack.c.l.b16 %v535
        %v665 = vunpack.c.l.b16 %v536
        %v666 = vunpack.c.l.b16 %v537
        %v667 = vunpack.c.l.b16 %v538
        %v668 = vunpack.c.l.b16 %v539
        %v669 = vunpack.c.l.b16 %v540
        %v670 = vunpack.c.l.b16 %v541
        %v671 = vunpack.c.l.b16 %v542
        %v672 = vunpack.c.l.b16 %v543
        %v673 = vunpack.c.l.b16 %v544
        %v674 = vunpack.c.l.b16 %v545
        %v675 = vunpack.c.l.b16 %v546
        %v676 = vunpack.c.l.b16 %v547
        %v677 = vunpack.c.l.b16 %v548
        %v678 = vunpack.c.l.b16 %v549
        %v679 = vunpack.c.l.b16 %v550
        %v680 = vunpack.c.l.b16 %v551
        %v681 = vunpack.c.l.b16 %v552
        %v682 = vunpack.c.l.b16 %v553
        %v683 = vunpack.c.l.b16 %v554
        %v684 = vunpack.c.l.b16 %v555
        %v685 = vunpack.c.l.b16 %v556
        %v686 = vunpack.c.l.b16 %v557
        %v687 = vunpack.c.l.b16 %v558
        %v688 = vpack.c.b16 %v625, %v624
        %v689 = vpack.c.b16 %v627, %v626
        %v690 = vpack.c.b16 %v629, %v628
        %v691 = vpack.c.b16 %v631, %v630
        %v692 = vpack.c.b16 %v633, %v632
        %v693 = vpack.c.b16 %v635, %v634
        %v694 = vpack.c.b16 %v637, %v636
        %v695 = vpack.c.b16 %v639, %v638
        %v696 = vpack.c.b16 %v641, %v640
        %v697 = vpack.c.b16 %v643, %v642
        %v698 = vpack.c.b16 %v645, %v644
        %v699 = vpack.c.b16 %v647, %v646
        %v700 = vpack.c.b16 %v649, %v648
        %v701 = vpack.c.b16 %v651, %v650
        %v702 = vpack.c.b16 %v653, %v652
        %v703 = vpack.c.b16 %v655, %v654
        %v704 = vpack.c.b16 %v657, %v656
        %v705 = vpack.c.b16 %v659, %v658
        %v706 = vpack.c.b16 %v661, %v660
        %v707 = vpack.c.b16 %v663, %v662
        %v708 = vpack.c.b16 %v665, %v664
        %v709 = vpack.c.b16 %v667, %v666
        %v710 = vpack.c.b16 %v669, %v668
        %v711 = vpack.c.b16 %v671, %v670
        %v712 = vpack.c.b16 %v673, %v672
        %v713 = vpack.c.b16 %v675, %v674
        %v714 = vpack.c.b16 %v677, %v676
        %v715 = vpack.c.b16 %v679, %v678
        %v716 = vpack.c.b16 %v681, %v680
        %v717 = vpack.c.b16 %v683, %v682
        %v718 = vpack.c.b16 %v685, %v684
        %v719 = vpack.c.b16 %v687, %v686
        %vm720 = vcmask 48128
        %v722 = vsel %vm720, %v688, 0
        %v725 = vsel %vm720, %v689, 0
        %v728 = vsel %vm720, %v690, 0
        %v731 = vsel %vm720, %v691, 0
        %v734 = vsel %vm720, %v692, 0
        %v737 = vsel %vm720, %v693, 0
        %v740 = vsel %vm720, %v694, 0
        %v743 = vsel %vm720, %v695, 0
        %v746 = vsel %vm720, %v696, 0
        %v749 = vsel %vm720, %v697, 0
        %v752 = vsel %vm720, %v698, 0
        %v755 = vsel %vm720, %v699, 0
        %v758 = vsel %vm720, %v700, 0
        %v761 = vsel %vm720, %v701, 0
        %v764 = vsel %vm720, %v702, 0
        %v767 = vsel %vm720, %v703, 0
        %v770 = vsel %vm720, %v704, 0
        %v773 = vsel %vm720, %v705, 0
        %v776 = vsel %vm720, %v706, 0
        %v779 = vsel %vm720, %v707, 0
        %v782 = vsel %vm720, %v708, 0
        %v785 = vsel %vm720, %v709, 0
        %v788 = vsel %vm720, %v710, 0
        %v791 = vsel %vm720, %v711, 0
        %v794 = vsel %vm720, %v712, 0
        %v797 = vsel %vm720, %v713, 0
        %v800 = vsel %vm720, %v714, 0
        %v803 = vsel %vm720, %v715, 0
        %v806 = vsel %vm720, %v716, 0
        %v809 = vsel %vm720, %v717, 0
        %v812 = vsel %vm720, %v718, 0
        %v815 = vsel %vm720, %v719, 0
        %vm817 = vcmask 1042432
        %v819 = vsel %vm817, %v559, 0
        %821 = vmatprep.subr.bf16.mxu0 0
        %822 = vmatpush1.bf16.msra.mxu0 %v819
        %823 = vmatprep.subr.bf16.mxu0 0
        %824 = vmatpush1.bf16.msra.mxu0 0
        %825 = vmatprep.subr.bf16.mxu0 0
        %826 = vmatpush1.bf16.msra.mxu0 0
        %827 = vmatprep.subr.bf16.mxu0 0
        %828 = vmatpush1.bf16.msra.mxu0 0
        %829 = vmatprep.subr.bf16.mxu0 0
        %830 = vmatpush1.bf16.msra.mxu0 0
        %831 = vmatprep.subr.bf16.mxu0 0
        %832 = vmatpush1.bf16.msra.mxu0 0
        %833 = vmatprep.subr.bf16.mxu0 0
        %834 = vmatpush1.bf16.msra.mxu0 0
        %835 = vmatprep.subr.bf16.mxu0 0
        %836 = vmatpush1.bf16.msra.mxu0 0
        %837 = vmatprep.subr.bf16.mxu0 0
        %838 = vmatpush1.bf16.msra.mxu0 0
        %839 = vmatprep.subr.bf16.mxu0 0
        %840 = vmatpush1.bf16.msra.mxu0 0
        %841 = vmatprep.subr.bf16.mxu0 0
        %842 = vmatpush1.bf16.msra.mxu0 0
        %843 = vmatprep.subr.bf16.mxu0 0
        %844 = vmatpush1.bf16.msra.mxu0 0
        %845 = vmatprep.subr.bf16.mxu0 0
        %846 = vmatpush1.bf16.msra.mxu0 0
        %847 = vmatprep.subr.bf16.mxu0 0
        %848 = vmatpush1.bf16.msra.mxu0 0
        %849 = vmatprep.subr.bf16.mxu0 0
        %850 = vmatpush1.bf16.msra.mxu0 0
        %851 = vmatprep.subr.bf16.mxu0 0
        %852 = vmatpush1.bf16.msra.mxu0 0
        %853 = vmatprep.mubr.bf16.mxu0 0
        %854 = vmatmul.mubr.bf16.gmra.mrb[0].mxu0 %v722
        %v855 = vpop.f32.mrb[0].mxu0
        %v856 = vadd.f32 0.0, %v855
        %v857 = vpop.f32.mrb[0].mxu0
        %v858 = vpop.f32.mrb[0].mxu0
        %v859 = vadd.f32 0.0, %v858
        %v860 = vpop.f32.mrb[0].mxu0
        %861 = vmatprep.mubr.bf16.mxu0 0
        %862 = vmatmul.mubr.bf16.gmra.mrb[0].mxu0 %v725
        %v863 = vpop.f32.mrb[0].mxu0
        %v864 = vadd.f32 0.0, %v863
        %v865 = vpop.f32.mrb[0].mxu0
        %v866 = vpop.f32.mrb[0].mxu0
        %v867 = vadd.f32 0.0, %v866
        %v868 = vpop.f32.mrb[0].mxu0
        %869 = vmatprep.mubr.bf16.mxu0 0
        %870 = vmatmul.mubr.bf16.gmra.mrb[0].mxu0 %v728
        %v871 = vpop.f32.mrb[0].mxu0
        %v872 = vadd.f32 0.0, %v871
        %v873 = vpop.f32.mrb[0].mxu0
        %v874 = vpop.f32.mrb[0].mxu0
        %v875 = vadd.f32 0.0, %v874
        %v876 = vpop.f32.mrb[0].mxu0
        %877 = vmatprep.mubr.bf16.mxu0 0
        %878 = vmatmul.mubr.bf16.gmra.mrb[0].mxu0 %v731
        %v879 = vpop.f32.mrb[0].mxu0
        %v880 = vadd.f32 0.0, %v879
        %v881 = vpop.f32.mrb[0].mxu0
        %v882 = vpop.f32.mrb[0].mxu0
        %v883 = vadd.f32 0.0, %v882
        %v884 = vpop.f32.mrb[0].mxu0
        %885 = vmatprep.mubr.bf16.mxu0 0
        %886 = vmatmul.mubr.bf16.gmra.mrb[0].mxu0 %v734
        %v887 = vpop.f32.mrb[0].mxu0
        %v888 = vadd.f32 0.0, %v887
        %v889 = vpop.f32.mrb[0].mxu0
        %v890 = vpop.f32.mrb[0].mxu0
        %v891 = vadd.f32 0.0, %v890
        %v892 = vpop.f32.mrb[0].mxu0
        %893 = vmatprep.mubr.bf16.mxu0 0
        %894 = vmatmul.mubr.bf16.gmra.mrb[0].mxu0 %v737
        %v895 = vpop.f32.mrb[0].mxu0
        %v896 = vadd.f32 0.0, %v895
        %v897 = vpop.f32.mrb[0].mxu0
        %v898 = vpop.f32.mrb[0].mxu0
        %v899 = vadd.f32 0.0, %v898
        %v900 = vpop.f32.mrb[0].mxu0
        %901 = vmatprep.mubr.bf16.mxu0 0
        %902 = vmatmul.mubr.bf16.gmra.mrb[0].mxu0 %v740
        %v903 = vpop.f32.mrb[0].mxu0
        %v904 = vadd.f32 0.0, %v903
        %v905 = vpop.f32.mrb[0].mxu0
        %v906 = vpop.f32.mrb[0].mxu0
        %v907 = vadd.f32 0.0, %v906
        %v908 = vpop.f32.mrb[0].mxu0
        %909 = vmatprep.mubr.bf16.mxu0 0
        %910 = vmatmul.mubr.bf16.gmra.mrb[0].mxu0 %v743
        %v911 = vpop.f32.mrb[0].mxu0
        %v912 = vadd.f32 0.0, %v911
        %v913 = vpop.f32.mrb[0].mxu0
        %v914 = vpop.f32.mrb[0].mxu0
        %v915 = vadd.f32 0.0, %v914
        %v916 = vpop.f32.mrb[0].mxu0
        %917 = vmatprep.mubr.bf16.mxu0 0
        %918 = vmatmul.mubr.bf16.gmra.mrb[0].mxu0 %v746
        %v919 = vpop.f32.mrb[0].mxu0
        %v920 = vadd.f32 0.0, %v919
        %v921 = vpop.f32.mrb[0].mxu0
        %v922 = vpop.f32.mrb[0].mxu0
        %v923 = vadd.f32 0.0, %v922
        %v924 = vpop.f32.mrb[0].mxu0
        %925 = vmatprep.mubr.bf16.mxu0 0
        %926 = vmatmul.mubr.bf16.gmra.mrb[0].mxu0 %v749
        %v927 = vpop.f32.mrb[0].mxu0
        %v928 = vadd.f32 0.0, %v927
        %v929 = vpop.f32.mrb[0].mxu0
        %v930 = vpop.f32.mrb[0].mxu0
        %v931 = vadd.f32 0.0, %v930
        %v932 = vpop.f32.mrb[0].mxu0
        %933 = vmatprep.mubr.bf16.mxu0 0
        %934 = vmatmul.mubr.bf16.gmra.mrb[0].mxu0 %v752
        %v935 = vpop.f32.mrb[0].mxu0
        %v936 = vadd.f32 0.0, %v935
        %v937 = vpop.f32.mrb[0].mxu0
        %v938 = vpop.f32.mrb[0].mxu0
        %v939 = vadd.f32 0.0, %v938
        %v940 = vpop.f32.mrb[0].mxu0
        %941 = vmatprep.mubr.bf16.mxu0 0
        %942 = vmatmul.mubr.bf16.gmra.mrb[0].mxu0 %v755
        %v943 = vpop.f32.mrb[0].mxu0
        %v944 = vadd.f32 0.0, %v943
        %v945 = vpop.f32.mrb[0].mxu0
        %v946 = vpop.f32.mrb[0].mxu0
        %v947 = vadd.f32 0.0, %v946
        %v948 = vpop.f32.mrb[0].mxu0
        %949 = vmatprep.mubr.bf16.mxu0 0
        %950 = vmatmul.mubr.bf16.gmra.mrb[0].mxu0 %v758
        %v951 = vpop.f32.mrb[0].mxu0
        %v952 = vadd.f32 0.0, %v951
        %v953 = vpop.f32.mrb[0].mxu0
        %v954 = vpop.f32.mrb[0].mxu0
        %v955 = vadd.f32 0.0, %v954
        %v956 = vpop.f32.mrb[0].mxu0
        %957 = vmatprep.mubr.bf16.mxu0 0
        %958 = vmatmul.mubr.bf16.gmra.mrb[0].mxu0 %v761
        %v959 = vpop.f32.mrb[0].mxu0
        %v960 = vadd.f32 0.0, %v959
        %v961 = vpop.f32.mrb[0].mxu0
        %v962 = vpop.f32.mrb[0].mxu0
        %v963 = vadd.f32 0.0, %v962
        %v964 = vpop.f32.mrb[0].mxu0
        %965 = vmatprep.mubr.bf16.mxu0 0
        %966 = vmatmul.mubr.bf16.gmra.mrb[0].mxu0 %v764
        %v967 = vpop.f32.mrb[0].mxu0
        %v968 = vadd.f32 0.0, %v967
        %v969 = vpop.f32.mrb[0].mxu0
        %v970 = vpop.f32.mrb[0].mxu0
        %v971 = vadd.f32 0.0, %v970
        %v972 = vpop.f32.mrb[0].mxu0
        %973 = vmatprep.mubr.bf16.mxu0 0
        %974 = vmatmul.mubr.bf16.gmra.mrb[0].mxu0 %v767
        %v975 = vpop.f32.mrb[0].mxu0
        %v976 = vadd.f32 0.0, %v975
        %v977 = vpop.f32.mrb[0].mxu0
        %v978 = vpop.f32.mrb[0].mxu0
        %v979 = vadd.f32 0.0, %v978
        %v980 = vpop.f32.mrb[0].mxu0
        %981 = vmatprep.mubr.bf16.mxu0 0
        %982 = vmatmul.mubr.bf16.gmra.mrb[0].mxu0 %v770
        %v983 = vpop.f32.mrb[0].mxu0
        %v984 = vadd.f32 0.0, %v983
        %v985 = vpop.f32.mrb[0].mxu0
        %v986 = vpop.f32.mrb[0].mxu0
        %v987 = vadd.f32 0.0, %v986
        %v988 = vpop.f32.mrb[0].mxu0
        %989 = vmatprep.mubr.bf16.mxu0 0
        %990 = vmatmul.mubr.bf16.gmra.mrb[0].mxu0 %v773
        %v991 = vpop.f32.mrb[0].mxu0
        %v992 = vadd.f32 0.0, %v991
        %v993 = vpop.f32.mrb[0].mxu0
        %v994 = vpop.f32.mrb[0].mxu0
        %v995 = vadd.f32 0.0, %v994
        %v996 = vpop.f32.mrb[0].mxu0
        %997 = vmatprep.mubr.bf16.mxu0 0
        %998 = vmatmul.mubr.bf16.gmra.mrb[0].mxu0 %v776
        %v999 = vpop.f32.mrb[0].mxu0
        %v1000 = vadd.f32 0.0, %v999
        %v1001 = vpop.f32.mrb[0].mxu0
        %v1002 = vpop.f32.mrb[0].mxu0
        %v1003 = vadd.f32 0.0, %v1002
        %v1004 = vpop.f32.mrb[0].mxu0
        %1005 = vmatprep.mubr.bf16.mxu0 0
        %1006 = vmatmul.mubr.bf16.gmra.mrb[0].mxu0 %v779
        %v1007 = vpop.f32.mrb[0].mxu0
        %v1008 = vadd.f32 0.0, %v1007
        %v1009 = vpop.f32.mrb[0].mxu0
        %v1010 = vpop.f32.mrb[0].mxu0
        %v1011 = vadd.f32 0.0, %v1010
        %v1012 = vpop.f32.mrb[0].mxu0
        %1013 = vmatprep.mubr.bf16.mxu0 0
        %1014 = vmatmul.mubr.bf16.gmra.mrb[0].mxu0 %v782
        %v1015 = vpop.f32.mrb[0].mxu0
        %v1016 = vadd.f32 0.0, %v1015
        %v1017 = vpop.f32.mrb[0].mxu0
        %v1018 = vpop.f32.mrb[0].mxu0
        %v1019 = vadd.f32 0.0, %v1018
        %v1020 = vpop.f32.mrb[0].mxu0
        %1021 = vmatprep.mubr.bf16.mxu0 0
        %1022 = vmatmul.mubr.bf16.gmra.mrb[0].mxu0 %v785
        %v1023 = vpop.f32.mrb[0].mxu0
        %v1024 = vadd.f32 0.0, %v1023
        %v1025 = vpop.f32.mrb[0].mxu0
        %v1026 = vpop.f32.mrb[0].mxu0
        %v1027 = vadd.f32 0.0, %v1026
        %v1028 = vpop.f32.mrb[0].mxu0
        %1029 = vmatprep.mubr.bf16.mxu0 0
        %1030 = vmatmul.mubr.bf16.gmra.mrb[0].mxu0 %v788
        %v1031 = vpop.f32.mrb[0].mxu0
        %v1032 = vadd.f32 0.0, %v1031
        %v1033 = vpop.f32.mrb[0].mxu0
        %v1034 = vpop.f32.mrb[0].mxu0
        %v1035 = vadd.f32 0.0, %v1034
        %v1036 = vpop.f32.mrb[0].mxu0
        %1037 = vmatprep.mubr.bf16.mxu0 0
        %1038 = vmatmul.mubr.bf16.gmra.mrb[0].mxu0 %v791
        %v1039 = vpop.f32.mrb[0].mxu0
        %v1040 = vadd.f32 0.0, %v1039
        %v1041 = vpop.f32.mrb[0].mxu0
        %v1042 = vpop.f32.mrb[0].mxu0
        %v1043 = vadd.f32 0.0, %v1042
        %v1044 = vpop.f32.mrb[0].mxu0
        %1045 = vmatprep.mubr.bf16.mxu0 0
        %1046 = vmatmul.mubr.bf16.gmra.mrb[0].mxu0 %v794
        %v1047 = vpop.f32.mrb[0].mxu0
        %v1048 = vadd.f32 0.0, %v1047
        %v1049 = vpop.f32.mrb[0].mxu0
        %v1050 = vpop.f32.mrb[0].mxu0
        %v1051 = vadd.f32 0.0, %v1050
        %v1052 = vpop.f32.mrb[0].mxu0
        %1053 = vmatprep.mubr.bf16.mxu0 0
        %1054 = vmatmul.mubr.bf16.gmra.mrb[0].mxu0 %v797
        %v1055 = vpop.f32.mrb[0].mxu0
        %v1056 = vadd.f32 0.0, %v1055
        %v1057 = vpop.f32.mrb[0].mxu0
        %v1058 = vpop.f32.mrb[0].mxu0
        %v1059 = vadd.f32 0.0, %v1058
        %v1060 = vpop.f32.mrb[0].mxu0
        %1061 = vmatprep.mubr.bf16.mxu0 0
        %1062 = vmatmul.mubr.bf16.gmra.mrb[0].mxu0 %v800
        %v1063 = vpop.f32.mrb[0].mxu0
        %v1064 = vadd.f32 0.0, %v1063
        %v1065 = vpop.f32.mrb[0].mxu0
        %v1066 = vpop.f32.mrb[0].mxu0
        %v1067 = vadd.f32 0.0, %v1066
        %v1068 = vpop.f32.mrb[0].mxu0
        %1069 = vmatprep.mubr.bf16.mxu0 0
        %1070 = vmatmul.mubr.bf16.gmra.mrb[0].mxu0 %v803
        %v1071 = vpop.f32.mrb[0].mxu0
        %v1072 = vadd.f32 0.0, %v1071
        %v1073 = vpop.f32.mrb[0].mxu0
        %v1074 = vpop.f32.mrb[0].mxu0
        %v1075 = vadd.f32 0.0, %v1074
        %v1076 = vpop.f32.mrb[0].mxu0
        %1077 = vmatprep.mubr.bf16.mxu0 0
        %1078 = vmatmul.mubr.bf16.gmra.mrb[0].mxu0 %v806
        %v1079 = vpop.f32.mrb[0].mxu0
        %v1080 = vadd.f32 0.0, %v1079
        %v1081 = vpop.f32.mrb[0].mxu0
        %v1082 = vpop.f32.mrb[0].mxu0
        %v1083 = vadd.f32 0.0, %v1082
        %v1084 = vpop.f32.mrb[0].mxu0
        %1085 = vmatprep.mubr.bf16.mxu0 0
        %1086 = vmatmul.mubr.bf16.gmra.mrb[0].mxu0 %v809
        %v1087 = vpop.f32.mrb[0].mxu0
        %v1088 = vadd.f32 0.0, %v1087
        %v1089 = vpop.f32.mrb[0].mxu0
        %v1090 = vpop.f32.mrb[0].mxu0
        %v1091 = vadd.f32 0.0, %v1090
        %v1092 = vpop.f32.mrb[0].mxu0
        %1093 = vmatprep.mubr.bf16.mxu0 0
        %1094 = vmatmul.mubr.bf16.gmra.mrb[0].mxu0 %v812
        %v1095 = vpop.f32.mrb[0].mxu0
        %v1096 = vadd.f32 0.0, %v1095
        %v1097 = vpop.f32.mrb[0].mxu0
        %v1098 = vpop.f32.mrb[0].mxu0
        %v1099 = vadd.f32 0.0, %v1098
        %v1100 = vpop.f32.mrb[0].mxu0
        %1101 = vmatprep.mubr.bf16.mxu0 0
        %1102 = vmatmul.mubr.bf16.gmra.mrb[0].mxu0 %v815
        %v1103 = vpop.f32.mrb[0].mxu0
        %v1104 = vadd.f32 0.0, %v1103
        %v1105 = vpop.f32.mrb[0].mxu0
        %v1106 = vpop.f32.mrb[0].mxu0
        %v1107 = vadd.f32 0.0, %v1106
        %v1108 = vpop.f32.mrb[0].mxu0
        %1109 = vdwg.mxu0
        %v1110 = vld [vmem:[%s2] sm:$0x1]
        %v1112 = vlaneseq
        %v1113 = vshrl.u32 %v1112, 7
        %v1114 = vsub.s32 0, %v1113
        %v1115 = vrot.slane %v1110, %v1114
        %v1117 = vmul.f32 %v856, %v1115
        %v1118 = vmul.f32 %v859, %v1115
        %v1119 = vmul.f32 %v864, %v1115
        %v1120 = vmul.f32 %v867, %v1115
        %v1121 = vmul.f32 %v872, %v1115
        %v1122 = vmul.f32 %v875, %v1115
        %v1123 = vmul.f32 %v880, %v1115
        %v1124 = vmul.f32 %v883, %v1115
        %v1125 = vmul.f32 %v888, %v1115
        %v1126 = vmul.f32 %v891, %v1115
        %v1127 = vmul.f32 %v896, %v1115
        %v1128 = vmul.f32 %v899, %v1115
        %v1129 = vmul.f32 %v904, %v1115
        %v1130 = vmul.f32 %v907, %v1115
        %v1131 = vmul.f32 %v912, %v1115
        %v1132 = vmul.f32 %v915, %v1115
        %v1133 = vmul.f32 %v920, %v1115
        %v1134 = vmul.f32 %v923, %v1115
        %v1135 = vmul.f32 %v928, %v1115
        %v1136 = vmul.f32 %v931, %v1115
        %v1137 = vmul.f32 %v936, %v1115
        %v1138 = vmul.f32 %v939, %v1115
        %v1139 = vmul.f32 %v944, %v1115
        %v1140 = vmul.f32 %v947, %v1115
        %v1141 = vmul.f32 %v952, %v1115
        %v1142 = vmul.f32 %v955, %v1115
        %v1143 = vmul.f32 %v960, %v1115
        %v1144 = vmul.f32 %v963, %v1115
        %v1145 = vmul.f32 %v968, %v1115
        %v1146 = vmul.f32 %v971, %v1115
        %v1147 = vmul.f32 %v976, %v1115
        %v1148 = vmul.f32 %v979, %v1115
        %v1149 = vmul.f32 %v984, %v1115
        %v1150 = vmul.f32 %v987, %v1115
        %v1151 = vmul.f32 %v992, %v1115
        %v1152 = vmul.f32 %v995, %v1115
        %v1153 = vmul.f32 %v1000, %v1115
        %v1154 = vmul.f32 %v1003, %v1115
        %v1155 = vmul.f32 %v1008, %v1115
        %v1156 = vmul.f32 %v1011, %v1115
        %v1157 = vmul.f32 %v1016, %v1115
        %v1158 = vmul.f32 %v1019, %v1115
        %v1159 = vmul.f32 %v1024, %v1115
        %v1160 = vmul.f32 %v1027, %v1115
        %v1161 = vmul.f32 %v1032, %v1115
        %v1162 = vmul.f32 %v1035, %v1115
        %v1163 = vmul.f32 %v1040, %v1115
        %v1164 = vmul.f32 %v1043, %v1115
        %v1165 = vmul.f32 %v1048, %v1115
        %v1166 = vmul.f32 %v1051, %v1115
        %v1167 = vmul.f32 %v1056, %v1115
        %v1168 = vmul.f32 %v1059, %v1115
        %v1169 = vmul.f32 %v1064, %v1115
        %v1170 = vmul.f32 %v1067, %v1115
        %v1171 = vmul.f32 %v1072, %v1115
        %v1172 = vmul.f32 %v1075, %v1115
        %v1173 = vmul.f32 %v1080, %v1115
        %v1174 = vmul.f32 %v1083, %v1115
        %v1175 = vmul.f32 %v1088, %v1115
        %v1176 = vmul.f32 %v1091, %v1115
        %v1177 = vmul.f32 %v1096, %v1115
        %v1178 = vmul.f32 %v1099, %v1115
        %v1179 = vmul.f32 %v1104, %v1115
        %v1180 = vmul.f32 %v1107, %v1115
        %v1181 = vld [vmem:[%s3] sm:$0x1]
        %v1183 = vlaneseq
        %v1184 = vshrl.u32 %v1183, 7
        %v1185 = vsub.s32 0, %v1184
        %v1186 = vrot.slane %v1181, %v1185
        %v1188 = vadd.f32 %v1117, %v1186
        %v1189 = vadd.f32 %v1118, %v1186
        %v1190 = vadd.f32 %v1119, %v1186
        %v1191 = vadd.f32 %v1120, %v1186
        %v1192 = vadd.f32 %v1121, %v1186
        %v1193 = vadd.f32 %v1122, %v1186
        %v1194 = vadd.f32 %v1123, %v1186
        %v1195 = vadd.f32 %v1124, %v1186
        %v1196 = vadd.f32 %v1125, %v1186
        %v1197 = vadd.f32 %v1126, %v1186
        %v1198 = vadd.f32 %v1127, %v1186
        %v1199 = vadd.f32 %v1128, %v1186
        %v1200 = vadd.f32 %v1129, %v1186
        %v1201 = vadd.f32 %v1130, %v1186
        %v1202 = vadd.f32 %v1131, %v1186
        %v1203 = vadd.f32 %v1132, %v1186
        %v1204 = vadd.f32 %v1133, %v1186
        %v1205 = vadd.f32 %v1134, %v1186
        %v1206 = vadd.f32 %v1135, %v1186
        %v1207 = vadd.f32 %v1136, %v1186
        %v1208 = vadd.f32 %v1137, %v1186
        %v1209 = vadd.f32 %v1138, %v1186
        %v1210 = vadd.f32 %v1139, %v1186
        %v1211 = vadd.f32 %v1140, %v1186
        %v1212 = vadd.f32 %v1141, %v1186
        %v1213 = vadd.f32 %v1142, %v1186
        %v1214 = vadd.f32 %v1143, %v1186
        %v1215 = vadd.f32 %v1144, %v1186
        %v1216 = vadd.f32 %v1145, %v1186
        %v1217 = vadd.f32 %v1146, %v1186
        %v1218 = vadd.f32 %v1147, %v1186
        %v1219 = vadd.f32 %v1148, %v1186
        %v1220 = vadd.f32 %v1149, %v1186
        %v1221 = vadd.f32 %v1150, %v1186
        %v1222 = vadd.f32 %v1151, %v1186
        %v1223 = vadd.f32 %v1152, %v1186
        %v1224 = vadd.f32 %v1153, %v1186
        %v1225 = vadd.f32 %v1154, %v1186
        %v1226 = vadd.f32 %v1155, %v1186
        %v1227 = vadd.f32 %v1156, %v1186
        %v1228 = vadd.f32 %v1157, %v1186
        %v1229 = vadd.f32 %v1158, %v1186
        %v1230 = vadd.f32 %v1159, %v1186
        %v1231 = vadd.f32 %v1160, %v1186
        %v1232 = vadd.f32 %v1161, %v1186
        %v1233 = vadd.f32 %v1162, %v1186
        %v1234 = vadd.f32 %v1163, %v1186
        %v1235 = vadd.f32 %v1164, %v1186
        %v1236 = vadd.f32 %v1165, %v1186
        %v1237 = vadd.f32 %v1166, %v1186
        %v1238 = vadd.f32 %v1167, %v1186
        %v1239 = vadd.f32 %v1168, %v1186
        %v1240 = vadd.f32 %v1169, %v1186
        %v1241 = vadd.f32 %v1170, %v1186
        %v1242 = vadd.f32 %v1171, %v1186
        %v1243 = vadd.f32 %v1172, %v1186
        %v1244 = vadd.f32 %v1173, %v1186
        %v1245 = vadd.f32 %v1174, %v1186
        %v1246 = vadd.f32 %v1175, %v1186
        %v1247 = vadd.f32 %v1176, %v1186
        %v1248 = vadd.f32 %v1177, %v1186
        %v1249 = vadd.f32 %v1178, %v1186
        %v1250 = vadd.f32 %v1179, %v1186
        %v1251 = vadd.f32 %v1180, %v1186
        %vm1252 = vcmp.gt.f32.partialorder %v1188, 0.0
        %vm1253 = vcmp.gt.f32.partialorder %v1189, 0.0
        %vm1254 = vcmp.gt.f32.partialorder %v1190, 0.0
        %vm1255 = vcmp.gt.f32.partialorder %v1191, 0.0
        %vm1256 = vcmp.gt.f32.partialorder %v1192, 0.0
        %vm1257 = vcmp.gt.f32.partialorder %v1193, 0.0
        %vm1258 = vcmp.gt.f32.partialorder %v1194, 0.0
        %vm1259 = vcmp.gt.f32.partialorder %v1195, 0.0
        %vm1260 = vcmp.gt.f32.partialorder %v1196, 0.0
        %vm1261 = vcmp.gt.f32.partialorder %v1197, 0.0
        %vm1262 = vcmp.gt.f32.partialorder %v1198, 0.0
        %vm1263 = vcmp.gt.f32.partialorder %v1199, 0.0
        %vm1264 = vcmp.gt.f32.partialorder %v1200, 0.0
        %vm1265 = vcmp.gt.f32.partialorder %v1201, 0.0
        %vm1266 = vcmp.gt.f32.partialorder %v1202, 0.0
        %vm1267 = vcmp.gt.f32.partialorder %v1203, 0.0
        %vm1268 = vcmp.gt.f32.partialorder %v1204, 0.0
        %vm1269 = vcmp.gt.f32.partialorder %v1205, 0.0
        %vm1270 = vcmp.gt.f32.partialorder %v1206, 0.0
        %vm1271 = vcmp.gt.f32.partialorder %v1207, 0.0
        %vm1272 = vcmp.gt.f32.partialorder %v1208, 0.0
        %vm1273 = vcmp.gt.f32.partialorder %v1209, 0.0
        %vm1274 = vcmp.gt.f32.partialorder %v1210, 0.0
        %vm1275 = vcmp.gt.f32.partialorder %v1211, 0.0
        %vm1276 = vcmp.gt.f32.partialorder %v1212, 0.0
        %vm1277 = vcmp.gt.f32.partialorder %v1213, 0.0
        %vm1278 = vcmp.gt.f32.partialorder %v1214, 0.0
        %vm1279 = vcmp.gt.f32.partialorder %v1215, 0.0
        %vm1280 = vcmp.gt.f32.partialorder %v1216, 0.0
        %vm1281 = vcmp.gt.f32.partialorder %v1217, 0.0
        %vm1282 = vcmp.gt.f32.partialorder %v1218, 0.0
        %vm1283 = vcmp.gt.f32.partialorder %v1219, 0.0
        %vm1284 = vcmp.gt.f32.partialorder %v1220, 0.0
        %vm1285 = vcmp.gt.f32.partialorder %v1221, 0.0
        %vm1286 = vcmp.gt.f32.partialorder %v1222, 0.0
        %vm1287 = vcmp.gt.f32.partialorder %v1223, 0.0
        %vm1288 = vcmp.gt.f32.partialorder %v1224, 0.0
        %vm1289 = vcmp.gt.f32.partialorder %v1225, 0.0
        %vm1290 = vcmp.gt.f32.partialorder %v1226, 0.0
        %vm1291 = vcmp.gt.f32.partialorder %v1227, 0.0
        %vm1292 = vcmp.gt.f32.partialorder %v1228, 0.0
        %vm1293 = vcmp.gt.f32.partialorder %v1229, 0.0
        %vm1294 = vcmp.gt.f32.partialorder %v1230, 0.0
        %vm1295 = vcmp.gt.f32.partialorder %v1231, 0.0
        %vm1296 = vcmp.gt.f32.partialorder %v1232, 0.0
        %vm1297 = vcmp.gt.f32.partialorder %v1233, 0.0
        %vm1298 = vcmp.gt.f32.partialorder %v1234, 0.0
        %vm1299 = vcmp.gt.f32.partialorder %v1235, 0.0
        %vm1300 = vcmp.gt.f32.partialorder %v1236, 0.0
        %vm1301 = vcmp.gt.f32.partialorder %v1237, 0.0
        %vm1302 = vcmp.gt.f32.partialorder %v1238, 0.0
        %vm1303 = vcmp.gt.f32.partialorder %v1239, 0.0
        %vm1304 = vcmp.gt.f32.partialorder %v1240, 0.0
        %vm1305 = vcmp.gt.f32.partialorder %v1241, 0.0
        %vm1306 = vcmp.gt.f32.partialorder %v1242, 0.0
        %vm1307 = vcmp.gt.f32.partialorder %v1243, 0.0
        %vm1308 = vcmp.gt.f32.partialorder %v1244, 0.0
        %vm1309 = vcmp.gt.f32.partialorder %v1245, 0.0
        %vm1310 = vcmp.gt.f32.partialorder %v1246, 0.0
        %vm1311 = vcmp.gt.f32.partialorder %v1247, 0.0
        %vm1312 = vcmp.gt.f32.partialorder %v1248, 0.0
        %vm1313 = vcmp.gt.f32.partialorder %v1249, 0.0
        %vm1314 = vcmp.gt.f32.partialorder %v1250, 0.0
        %vm1315 = vcmp.gt.f32.partialorder %v1251, 0.0
        %v1316 = vmul.f32 %v1188, 0.2
        %v1317 = vmul.f32 %v1189, 0.2
        %v1318 = vmul.f32 %v1190, 0.2
        %v1319 = vmul.f32 %v1191, 0.2
        %v1320 = vmul.f32 %v1192, 0.2
        %v1321 = vmul.f32 %v1193, 0.2
        %v1322 = vmul.f32 %v1194, 0.2
        %v1323 = vmul.f32 %v1195, 0.2
        %v1324 = vmul.f32 %v1196, 0.2
        %v1325 = vmul.f32 %v1197, 0.2
        %v1326 = vmul.f32 %v1198, 0.2
        %v1327 = vmul.f32 %v1199, 0.2
        %v1328 = vmul.f32 %v1200, 0.2
        %v1329 = vmul.f32 %v1201, 0.2
        %v1330 = vmul.f32 %v1202, 0.2
        %v1331 = vmul.f32 %v1203, 0.2
        %v1332 = vmul.f32 %v1204, 0.2
        %v1333 = vmul.f32 %v1205, 0.2
        %v1334 = vmul.f32 %v1206, 0.2
        %v1335 = vmul.f32 %v1207, 0.2
        %v1336 = vmul.f32 %v1208, 0.2
        %v1337 = vmul.f32 %v1209, 0.2
        %v1338 = vmul.f32 %v1210, 0.2
        %v1339 = vmul.f32 %v1211, 0.2
        %v1340 = vmul.f32 %v1212, 0.2
        %v1341 = vmul.f32 %v1213, 0.2
        %v1342 = vmul.f32 %v1214, 0.2
        %v1343 = vmul.f32 %v1215, 0.2
        %v1344 = vmul.f32 %v1216, 0.2
        %v1345 = vmul.f32 %v1217, 0.2
        %v1346 = vmul.f32 %v1218, 0.2
        %v1347 = vmul.f32 %v1219, 0.2
        %v1348 = vmul.f32 %v1220, 0.2
        %v1349 = vmul.f32 %v1221, 0.2
        %v1350 = vmul.f32 %v1222, 0.2
        %v1351 = vmul.f32 %v1223, 0.2
        %v1352 = vmul.f32 %v1224, 0.2
        %v1353 = vmul.f32 %v1225, 0.2
        %v1354 = vmul.f32 %v1226, 0.2
        %v1355 = vmul.f32 %v1227, 0.2
        %v1356 = vmul.f32 %v1228, 0.2
        %v1357 = vmul.f32 %v1229, 0.2
        %v1358 = vmul.f32 %v1230, 0.2
        %v1359 = vmul.f32 %v1231, 0.2
        %v1360 = vmul.f32 %v1232, 0.2
        %v1361 = vmul.f32 %v1233, 0.2
        %v1362 = vmul.f32 %v1234, 0.2
        %v1363 = vmul.f32 %v1235, 0.2
        %v1364 = vmul.f32 %v1236, 0.2
        %v1365 = vmul.f32 %v1237, 0.2
        %v1366 = vmul.f32 %v1238, 0.2
        %v1367 = vmul.f32 %v1239, 0.2
        %v1368 = vmul.f32 %v1240, 0.2
        %v1369 = vmul.f32 %v1241, 0.2
        %v1370 = vmul.f32 %v1242, 0.2
        %v1371 = vmul.f32 %v1243, 0.2
        %v1372 = vmul.f32 %v1244, 0.2
        %v1373 = vmul.f32 %v1245, 0.2
        %v1374 = vmul.f32 %v1246, 0.2
        %v1375 = vmul.f32 %v1247, 0.2
        %v1376 = vmul.f32 %v1248, 0.2
        %v1377 = vmul.f32 %v1249, 0.2
        %v1378 = vmul.f32 %v1250, 0.2
        %v1379 = vmul.f32 %v1251, 0.2
        %v1380 = vsel %vm1252, %v1188, %v1316
        %v1381 = vsel %vm1253, %v1189, %v1317
        %v1382 = vsel %vm1254, %v1190, %v1318
        %v1383 = vsel %vm1255, %v1191, %v1319
        %v1384 = vsel %vm1256, %v1192, %v1320
        %v1385 = vsel %vm1257, %v1193, %v1321
        %v1386 = vsel %vm1258, %v1194, %v1322
        %v1387 = vsel %vm1259, %v1195, %v1323
        %v1388 = vsel %vm1260, %v1196, %v1324
        %v1389 = vsel %vm1261, %v1197, %v1325
        %v1390 = vsel %vm1262, %v1198, %v1326
        %v1391 = vsel %vm1263, %v1199, %v1327
        %v1392 = vsel %vm1264, %v1200, %v1328
        %v1393 = vsel %vm1265, %v1201, %v1329
        %v1394 = vsel %vm1266, %v1202, %v1330
        %v1395 = vsel %vm1267, %v1203, %v1331
        %v1396 = vsel %vm1268, %v1204, %v1332
        %v1397 = vsel %vm1269, %v1205, %v1333
        %v1398 = vsel %vm1270, %v1206, %v1334
        %v1399 = vsel %vm1271, %v1207, %v1335
        %v1400 = vsel %vm1272, %v1208, %v1336
        %v1401 = vsel %vm1273, %v1209, %v1337
        %v1402 = vsel %vm1274, %v1210, %v1338
        %v1403 = vsel %vm1275, %v1211, %v1339
        %v1404 = vsel %vm1276, %v1212, %v1340
        %v1405 = vsel %vm1277, %v1213, %v1341
        %v1406 = vsel %vm1278, %v1214, %v1342
        %v1407 = vsel %vm1279, %v1215, %v1343
        %v1408 = vsel %vm1280, %v1216, %v1344
        %v1409 = vsel %vm1281, %v1217, %v1345
        %v1410 = vsel %vm1282, %v1218, %v1346
        %v1411 = vsel %vm1283, %v1219, %v1347
        %v1412 = vsel %vm1284, %v1220, %v1348
        %v1413 = vsel %vm1285, %v1221, %v1349
        %v1414 = vsel %vm1286, %v1222, %v1350
        %v1415 = vsel %vm1287, %v1223, %v1351
        %v1416 = vsel %vm1288, %v1224, %v1352
        %v1417 = vsel %vm1289, %v1225, %v1353
        %v1418 = vsel %vm1290, %v1226, %v1354
        %v1419 = vsel %vm1291, %v1227, %v1355
        %v1420 = vsel %vm1292, %v1228, %v1356
        %v1421 = vsel %vm1293, %v1229, %v1357
        %v1422 = vsel %vm1294, %v1230, %v1358
        %v1423 = vsel %vm1295, %v1231, %v1359
        %v1424 = vsel %vm1296, %v1232, %v1360
        %v1425 = vsel %vm1297, %v1233, %v1361
        %v1426 = vsel %vm1298, %v1234, %v1362
        %v1427 = vsel %vm1299, %v1235, %v1363
        %v1428 = vsel %vm1300, %v1236, %v1364
        %v1429 = vsel %vm1301, %v1237, %v1365
        %v1430 = vsel %vm1302, %v1238, %v1366
        %v1431 = vsel %vm1303, %v1239, %v1367
        %v1432 = vsel %vm1304, %v1240, %v1368
        %v1433 = vsel %vm1305, %v1241, %v1369
        %v1434 = vsel %vm1306, %v1242, %v1370
        %v1435 = vsel %vm1307, %v1243, %v1371
        %v1436 = vsel %vm1308, %v1244, %v1372
        %v1437 = vsel %vm1309, %v1245, %v1373
        %v1438 = vsel %vm1310, %v1246, %v1374
        %v1439 = vsel %vm1311, %v1247, %v1375
        %v1440 = vsel %vm1312, %v1248, %v1376
        %v1441 = vsel %vm1313, %v1249, %v1377
        %v1442 = vsel %vm1314, %v1250, %v1378
        %v1443 = vsel %vm1315, %v1251, %v1379
        %v1444 = vmax.f32 %v1380, %v1388
        %v1445 = vmax.f32 %v1444, %v1396
        %v1446 = vmax.f32 %v1445, %v1404
        %v1447 = vmax.f32 %v1446, %v1412
        %v1448 = vmax.f32 %v1447, %v1420
        %v1449 = vmax.f32 %v1448, %v1428
        %v1450 = vmax.f32 %v1449, %v1436
        %v1451 = vmax.f32 %v1381, %v1389
        %v1452 = vmax.f32 %v1451, %v1397
        %v1453 = vmax.f32 %v1452, %v1405
        %v1454 = vmax.f32 %v1453, %v1413
        %v1455 = vmax.f32 %v1454, %v1421
        %v1456 = vmax.f32 %v1455, %v1429
        %v1457 = vmax.f32 %v1456, %v1437
        %v1458 = vmax.f32 %v1382, %v1390
        %v1459 = vmax.f32 %v1458, %v1398
        %v1460 = vmax.f32 %v1459, %v1406
        %v1461 = vmax.f32 %v1460, %v1414
        %v1462 = vmax.f32 %v1461, %v1422
        %v1463 = vmax.f32 %v1462, %v1430
        %v1464 = vmax.f32 %v1463, %v1438
        %v1465 = vmax.f32 %v1383, %v1391
        %v1466 = vmax.f32 %v1465, %v1399
        %v1467 = vmax.f32 %v1466, %v1407
        %v1468 = vmax.f32 %v1467, %v1415
        %v1469 = vmax.f32 %v1468, %v1423
        %v1470 = vmax.f32 %v1469, %v1431
        %v1471 = vmax.f32 %v1470, %v1439
        %v1472 = vmax.f32 %v1384, %v1392
        %v1473 = vmax.f32 %v1472, %v1400
        %v1474 = vmax.f32 %v1473, %v1408
        %v1475 = vmax.f32 %v1474, %v1416
        %v1476 = vmax.f32 %v1475, %v1424
        %v1477 = vmax.f32 %v1476, %v1432
        %v1478 = vmax.f32 %v1477, %v1440
        %v1479 = vmax.f32 %v1385, %v1393
        %v1480 = vmax.f32 %v1479, %v1401
        %v1481 = vmax.f32 %v1480, %v1409
        %v1482 = vmax.f32 %v1481, %v1417
        %v1483 = vmax.f32 %v1482, %v1425
        %v1484 = vmax.f32 %v1483, %v1433
        %v1485 = vmax.f32 %v1484, %v1441
        %v1486 = vmax.f32 %v1386, %v1394
        %v1487 = vmax.f32 %v1486, %v1402
        %v1488 = vmax.f32 %v1487, %v1410
        %v1489 = vmax.f32 %v1488, %v1418
        %v1490 = vmax.f32 %v1489, %v1426
        %v1491 = vmax.f32 %v1490, %v1434
        %v1492 = vmax.f32 %v1491, %v1442
        %v1493 = vmax.f32 %v1387, %v1395
        %v1494 = vmax.f32 %v1493, %v1403
        %v1495 = vmax.f32 %v1494, %v1411
        %v1496 = vmax.f32 %v1495, %v1419
        %v1497 = vmax.f32 %v1496, %v1427
        %v1498 = vmax.f32 %v1497, %v1435
        %v1499 = vmax.f32 %v1498, %v1443
        %1500 = vst [vmem:[%s492] sm:$0xff] %v1450
        %1501 = vst [vmem:[%s492 + $0x8] sm:$0xff] %v1457
        %1502 = vst [vmem:[%s492 + $0x10] sm:$0xff] %v1464
        %1503 = vst [vmem:[%s492 + $0x18] sm:$0xff] %v1471
        %1504 = vst [vmem:[%s492 + $0x20] sm:$0xff] %v1478
        %1505 = vst [vmem:[%s492 + $0x28] sm:$0xff] %v1485
        %1506 = vst [vmem:[%s492 + $0x30] sm:$0xff] %v1492
        %1507 = vst [vmem:[%s492 + $0x38] sm:$0xff] %v1499
        %s1508 = smul.u32 8, %s15
        %p1509 = scmp.lt.s32.totalorder %s1508, 15
        %s1510 = scalar_select %p1509, %s1508, 15
        %s1511 = smul.addr %s1510, 8
        %s1512 = scalar_lea.vmem %s4, %s1511
        // Predicated region
        $region78: #{grasp_evaluator2_forward.5} parent=72 // pred_check
          %p1513 = pneg %p122
        $region79: #{grasp_evaluator2_forward.5} parent=72 // pred_check_branch
          %1515 = sbr.rel (%p1513) target = $region81
        $region80: #{grasp_evaluator2_forward.5} parent=72 // pred_region
          %s1516 = smul.u32 8, %s15
        $region81: #{grasp_evaluator2_forward.5} parent=72 // pred_fallthru
          _
      $region73: #{grasp_evaluator2_forward.5} parent=5 // pred_fallthru
        _
      %p1517 = scmp.le.s32.totalorder 2, %s10
      // Predicated region
      $region82: #{grasp_evaluator2_forward.5} parent=5 // pred_check
        %p1518 = pneg %p1517
      $region83: #{grasp_evaluator2_forward.5} parent=5 // pred_check_branch
        %1520 = sbr.rel (%p1518) target = $region85
      $region84: #{grasp_evaluator2_forward.5} parent=5 // pred_region
        %s1521 = ssub.s32 %s10, 2
        // Predicated region
        $region86: #{grasp_evaluator2_forward.5} parent=84 // pred_check
          %p1522 = pneg %p128
        $region87: #{grasp_evaluator2_forward.5} parent=84 // pred_check_branch
          %1524 = sbr.rel (%p1522) target = $region89
        $region88: #{grasp_evaluator2_forward.5} parent=84 // pred_region
          %s1525 = smul.u32 8, %s16
          %p1526 = scmp.lt.s32.totalorder %s1525, 15
          %s1527 = scalar_select %p1526, %s1525, 15
          %s1528 = smul.addr %s1527, 8
          %s1529 = scalar_lea.vmem %s4, %s1528
        $region89: #{grasp_evaluator2_forward.5} parent=84 // pred_fallthru
          _
      $region85: #{grasp_evaluator2_forward.5} parent=5 // pred_fallthru
        _
    $region6: #{grasp_evaluator2_forward.5} parent=1 // loop_footer
      %s14 = sadd.s32 1, %s10
    $region7: #{grasp_evaluator2_forward.5} parent=1 // loop_footer_branch
      %9 = sbr.rel target = $region3
    $region8: #{grasp_evaluator2_forward.5} parent=1 // loop_exit
      _

// kernel: grasp_evaluator2_forward.6
$region0: #{grasp_evaluator2_forward.6}
  #allocation0 [shape = 'u32[]', space=smem, size = 0x4, offset = 0x4, fixed_abs, tag = 'smem constant byte address 0x4 - core index']
  #allocation1 [shape = 'u32[144,128]{1,0:T(1,128)}', space=vmem, size = 0x12000, scoped, tag = 'internal scratch']
  %s0 = inlined_call_operand.vmem [shape: bf16[8,128,128], index: 0, kind: input, shape index: {}]
  %s1 = inlined_call_operand.vmem [shape: bf16[128,128], index: 1, kind: input, shape index: {}]
  %s2 = inlined_call_operand.vmem [shape: f32[1,128], index: 2, kind: input, shape index: {}]
  %s3 = inlined_call_operand.vmem [shape: f32[1,128], index: 3, kind: input, shape index: {}]
  %s4 = inlined_call_operand.vmem [shape: f32[128,128], index: 4, kind: output, shape index: {}]
  %s5 = sld [smem:[#allocation0]]
  $region90: #{grasp_evaluator2_forward.6} parent=0
    _
  %s7 = ssub.s32 1, %s5
  %s8 = scalar_select 0, %s7, %s5
  $region1: #{grasp_evaluator2_forward.6} parent=0
    #allocation2 [shape = 'u8[262144]{0}', space=vmem, size = 0x40000, scoped, tag = 'input window, operand 0']
    loop: start=0, step=1, limit=4
    $region2: #{grasp_evaluator2_forward.6} parent=1 // loop_pre_header
      _
    $region3: #{grasp_evaluator2_forward.6} parent=1 // loop_header
      %s10 = sphi 0, %s14
      %p11 = scmp.ge.s32.totalorder %s10, 4
      %s20 = sphi 0, %s22
      %s23 = sphi 0, %s20
      %s24 = sphi 0, %s23
      %s40 = sphi 0, %s24
      %s44 = sphi 0, %s44
      %s46 = sphi 0, %s44
      %s47 = sphi 0, %s46
      %s61 = sphi 0, %s47
      %s65 = sphi 0, %s65
      %s67 = sphi 0, %s65
      %s68 = sphi 0, %s67
      %s82 = sphi 0, %s68
      %s86 = sphi 0, %s86
      %s88 = sphi 0, %s86
      %s89 = sphi 0, %s88
      %s103 = sphi 0, %s89
      %s109 = sphi 0, %s111
      %s112 = sphi 0, %s109
      %s113 = sphi 0, %s112
      %s129 = sphi 0, %s113
    $region4: #{grasp_evaluator2_forward.6} parent=1 // loop_header_branch
      %13 = sbr.rel (%p11) target = $region8
    $region5: #{grasp_evaluator2_forward.6} parent=1 // loop_body
      %s15 = ssub.s32 %s10, 1
      %s16 = ssub.s32 %s10, 2
      %s17 = sadd.s32 %s10, 1
      %s18 = ssub.s32 %s10, %s17
      %p19 = scmp.eq.s32.totalorder %s18, 0
      %s21 = sadd.s32 %s20, 1
      %s22 = scalar_select %p19, %s20, %s21
      %p25 = pneg %p19
      %p26 = scmp.eq.s32.totalorder %s10, 1
      %p27 = por %p25, %p26
      %p28 = scmp.ne.s32.totalorder %s20, %s23
      %p29 = scmp.eq.s32.totalorder %s10, 0
      %p30 = por %p28, %p29
      %p31 = scmp.ne.s32.totalorder %s20, %s23
      %p32 = scmp.eq.s32.totalorder %s15, 1
      %p33 = por %p31, %p32
      %p34 = scmp.ne.s32.totalorder %s23, %s24
      %p35 = scmp.eq.s32.totalorder %s15, 0
      %p36 = por %p34, %p35
      %p37 = scmp.ne.s32.totalorder %s23, %s24
      %p38 = scmp.eq.s32.totalorder %s16, 1
      %p39 = por %p37, %p38
      %p41 = scmp.ne.s32.totalorder %s24, %s40
      %p42 = scmp.eq.s32.totalorder %s16, 0
      %p43 = por %p41, %p42
      %s45 = sadd.s32 %s44, 1
      %p48 = scmp.eq.s32.totalorder %s10, 1
      %p49 = scmp.ne.s32.totalorder %s44, %s46
      %p50 = scmp.eq.s32.totalorder %s10, 0
      %p51 = por %p49, %p50
      %p52 = scmp.ne.s32.totalorder %s44, %s46
      %p53 = scmp.eq.s32.totalorder %s15, 1
      %p54 = por %p52, %p53
      %p55 = scmp.ne.s32.totalorder %s46, %s47
      %p56 = scmp.eq.s32.totalorder %s15, 0
      %p57 = por %p55, %p56
      %p58 = scmp.ne.s32.totalorder %s46, %s47
      %p59 = scmp.eq.s32.totalorder %s16, 1
      %p60 = por %p58, %p59
      %p62 = scmp.ne.s32.totalorder %s47, %s61
      %p63 = scmp.eq.s32.totalorder %s16, 0
      %p64 = por %p62, %p63
      %s66 = sadd.s32 %s65, 1
      %p69 = scmp.eq.s32.totalorder %s10, 1
      %p70 = scmp.ne.s32.totalorder %s65, %s67
      %p71 = scmp.eq.s32.totalorder %s10, 0
      %p72 = por %p70, %p71
      %p73 = scmp.ne.s32.totalorder %s65, %s67
      %p74 = scmp.eq.s32.totalorder %s15, 1
      %p75 = por %p73, %p74
      %p76 = scmp.ne.s32.totalorder %s67, %s68
      %p77 = scmp.eq.s32.totalorder %s15, 0
      %p78 = por %p76, %p77
      %p79 = scmp.ne.s32.totalorder %s67, %s68
      %p80 = scmp.eq.s32.totalorder %s16, 1
      %p81 = por %p79, %p80
      %p83 = scmp.ne.s32.totalorder %s68, %s82
      %p84 = scmp.eq.s32.totalorder %s16, 0
      %p85 = por %p83, %p84
      %s87 = sadd.s32 %s86, 1
      %p90 = scmp.eq.s32.totalorder %s10, 1
      %p91 = scmp.ne.s32.totalorder %s86, %s88
      %p92 = scmp.eq.s32.totalorder %s10, 0
      %p93 = por %p91, %p92
      %p94 = scmp.ne.s32.totalorder %s86, %s88
      %p95 = scmp.eq.s32.totalorder %s15, 1
      %p96 = por %p94, %p95
      %p97 = scmp.ne.s32.totalorder %s88, %s89
      %p98 = scmp.eq.s32.totalorder %s15, 0
      %p99 = por %p97, %p98
      %p100 = scmp.ne.s32.totalorder %s88, %s89
      %p101 = scmp.eq.s32.totalorder %s16, 1
      %p102 = por %p100, %p101
      %p104 = scmp.ne.s32.totalorder %s89, %s103
      %p105 = scmp.eq.s32.totalorder %s16, 0
      %p106 = por %p104, %p105
      %s107 = ssub.s32 %s10, %s17
      %p108 = scmp.eq.s32.totalorder %s107, 0
      %s110 = sadd.s32 %s109, 1
      %s111 = scalar_select %p108, %s109, %s110
      %p114 = pneg %p108
      %p115 = scmp.eq.s32.totalorder %s10, 1
      %p116 = por %p114, %p115
      %p117 = scmp.ne.s32.totalorder %s109, %s112
      %p118 = scmp.eq.s32.totalorder %s10, 0
      %p119 = por %p117, %p118
      %p120 = scmp.ne.s32.totalorder %s109, %s112
      %p121 = scmp.eq.s32.totalorder %s15, 1
      %p122 = por %p120, %p121
      %p123 = scmp.ne.s32.totalorder %s112, %s113
      %p124 = scmp.eq.s32.totalorder %s15, 0
      %p125 = por %p123, %p124
      %p126 = scmp.ne.s32.totalorder %s112, %s113
      %p127 = scmp.eq.s32.totalorder %s16, 1
      %p128 = por %p126, %p127
      %p130 = scmp.ne.s32.totalorder %s113, %s129
      %p131 = scmp.eq.s32.totalorder %s16, 0
      %p132 = por %p130, %p131
      %p133 = scmp.le.s32.totalorder 1, %s10
      %p134 = scmp.lt.s32.totalorder %s10, 3
      %p135 = pnand %p133, %p134
      %p136 = pneg %p135
      // Predicated region
      $region9: #{grasp_evaluator2_forward.6} parent=5 // pred_check
        _
      $region10: #{grasp_evaluator2_forward.6} parent=5 // pred_check_branch
        %138 = sbr.rel (%p135) target = $region12
      $region11: #{grasp_evaluator2_forward.6} parent=5 // pred_region
        %s139 = ssub.s32 %s10, 1
        // Predicated region
        $region13: #{grasp_evaluator2_forward.6} parent=11 // pred_check
          %p140 = pneg %p57
        $region14: #{grasp_evaluator2_forward.6} parent=11 // pred_check_branch
          %142 = sbr.rel (%p140) target = $region16
        $region15: #{grasp_evaluator2_forward.6} parent=11 // pred_region
          _
        $region16: #{grasp_evaluator2_forward.6} parent=11 // pred_fallthru
          _
        // Predicated region
        $region17: #{grasp_evaluator2_forward.6} parent=11 // pred_check
          %p143 = pneg %p78
        $region18: #{grasp_evaluator2_forward.6} parent=11 // pred_check_branch
          %145 = sbr.rel (%p143) target = $region20
        $region19: #{grasp_evaluator2_forward.6} parent=11 // pred_region
          _
        $region20: #{grasp_evaluator2_forward.6} parent=11 // pred_fallthru
          _
        // Predicated region
        $region21: #{grasp_evaluator2_forward.6} parent=11 // pred_check
          %p146 = pneg %p99
        $region22: #{grasp_evaluator2_forward.6} parent=11 // pred_check_branch
          %148 = sbr.rel (%p146) target = $region24
        $region23: #{grasp_evaluator2_forward.6} parent=11 // pred_region
          _
        $region24: #{grasp_evaluator2_forward.6} parent=11 // pred_fallthru
          _
      $region12: #{grasp_evaluator2_forward.6} parent=5 // pred_fallthru
        _
      %p149 = scmp.lt.s32.totalorder %s10, 2
      // Predicated region
      $region25: #{grasp_evaluator2_forward.6} parent=5 // pred_check
        %p150 = pneg %p149
      $region26: #{grasp_evaluator2_forward.6} parent=5 // pred_check_branch
        %152 = sbr.rel (%p150) target = $region28
      $region27: #{grasp_evaluator2_forward.6} parent=5 // pred_region
        // Predicated region
        $region29: #{grasp_evaluator2_forward.6} parent=27 // pred_check
          %p153 = pneg %p30
        $region30: #{grasp_evaluator2_forward.6} parent=27 // pred_check_branch
          %155 = sbr.rel (%p153) target = $region32
        $region31: #{grasp_evaluator2_forward.6} parent=27 // pred_region
          %s156 = sand.u32 %s20, 1
          %s157 = sand.u32 %s20, 1
          %s158 = smul.addr %s157, 256
          %s159 = scalar_lea.vmem [#allocation2], %s158
          %s160 = smul.u32 8, %s10
          %s161 = smul.addr %s160, 4
          %s162 = scalar_lea.vmem %s0, %s161
          // Predicated region
          $region33: #{grasp_evaluator2_forward.6} parent=31 // pred_check
            _
          $region34: #{grasp_evaluator2_forward.6} parent=31 // pred_check_branch
            %164 = sbr.rel (0) target = $region36
          $region35: #{grasp_evaluator2_forward.6} parent=31 // pred_region
            // Predicated region
            $region37: #{grasp_evaluator2_forward.6} parent=35 // pred_check
              _
            $region38: #{grasp_evaluator2_forward.6} parent=35 // pred_check_branch
              %166 = sbr.rel target = $region40
            $region39: #{grasp_evaluator2_forward.6} parent=35 // pred_region
              // Predicated region
              $region52: #{grasp_evaluator2_forward.6} parent=39 // pred_check
                _
              $region53: #{grasp_evaluator2_forward.6} parent=39 // pred_check_branch
                %307 = sbr.rel (0) target = $region55
              $region54: #{grasp_evaluator2_forward.6} parent=39 // pred_region
                loop: start=0, step=1, limit=1
                $region56: #{grasp_evaluator2_forward.6} parent=54 // loop_pre_header
                  _
                $region57: #{grasp_evaluator2_forward.6} parent=54 // loop_header
                  %s309 = sphi 0, %s313
                  %p310 = scmp.ge.s32.totalorder %s309, 1
                  %s314 = sphi %s162, %s162
                  %s315 = sphi %s159, %s159
                $region58: #{grasp_evaluator2_forward.6} parent=54 // loop_header_branch
                  %312 = sbr.rel (%p310) target = $region62
                $region59: #{grasp_evaluator2_forward.6} parent=54 // loop_body
                  _
                $region60: #{grasp_evaluator2_forward.6} parent=54 // loop_footer
                  %s313 = sadd.s32 1, %s309
                $region61: #{grasp_evaluator2_forward.6} parent=54 // loop_footer_branch
                  %308 = sbr.rel target = $region57
                $region62: #{grasp_evaluator2_forward.6} parent=54 // loop_exit
                  _
                loop: start=0, step=1, limit=1
                $region63: #{grasp_evaluator2_forward.6} parent=54 // loop_pre_header
                  _
                $region64: #{grasp_evaluator2_forward.6} parent=54 // loop_header
                  %s318 = sphi 0, %s322
                  %p319 = scmp.ge.s32.totalorder %s318, 1
                  %s323 = sphi %s162, %s162
                  %s324 = sphi %s159, %s159
                $region65: #{grasp_evaluator2_forward.6} parent=54 // loop_header_branch
                  %321 = sbr.rel (%p319) target = $region69
                $region66: #{grasp_evaluator2_forward.6} parent=54 // loop_body
                  %v325 = vld [vmem:[%s323] sm:$0xf]
                  %326 = vst [vmem:[%s324] sm:$0xf] %v325
                  %v327 = vld [vmem:[%s323 + $0x4] sm:$0xf]
                  %328 = vst [vmem:[%s324 + $0x4] sm:$0xf] %v327
                  %v329 = vld [vmem:[%s323 + $0x8] sm:$0xf]
                  %330 = vst [vmem:[%s324 + $0x8] sm:$0xf] %v329
                  %v331 = vld [vmem:[%s323 + $0xc] sm:$0xf]
                  %332 = vst [vmem:[%s324 + $0xc] sm:$0xf] %v331
                  %v333 = vld [vmem:[%s323 + $0x10] sm:$0xf]
                  %334 = vst [vmem:[%s324 + $0x10] sm:$0xf] %v333
                  %v335 = vld [vmem:[%s323 + $0x14] sm:$0xf]
                  %336 = vst [vmem:[%s324 + $0x14] sm:$0xf] %v335
                  %v337 = vld [vmem:[%s323 + $0x18] sm:$0xf]
                  %338 = vst [vmem:[%s324 + $0x18] sm:$0xf] %v337
                  %v339 = vld [vmem:[%s323 + $0x1c] sm:$0xf]
                  %340 = vst [vmem:[%s324 + $0x1c] sm:$0xf] %v339
                  %v341 = vld [vmem:[%s323 + $0x40] sm:$0xf]
                  %342 = vst [vmem:[%s324 + $0x20] sm:$0xf] %v341
                  %v343 = vld [vmem:[%s323 + $0x44] sm:$0xf]
                  %344 = vst [vmem:[%s324 + $0x24] sm:$0xf] %v343
                  %v345 = vld [vmem:[%s323 + $0x48] sm:$0xf]
                  %346 = vst [vmem:[%s324 + $0x28] sm:$0xf] %v345
                  %v347 = vld [vmem:[%s323 + $0x4c] sm:$0xf]
                  %348 = vst [vmem:[%s324 + $0x2c] sm:$0xf] %v347
                  %v349 = vld [vmem:[%s323 + $0x50] sm:$0xf]
                  %350 = vst [vmem:[%s324 + $0x30] sm:$0xf] %v349
                  %v351 = vld [vmem:[%s323 + $0x54] sm:$0xf]
                  %352 = vst [vmem:[%s324 + $0x34] sm:$0xf] %v351
                  %v353 = vld [vmem:[%s323 + $0x58] sm:$0xf]
                  %354 = vst [vmem:[%s324 + $0x38] sm:$0xf] %v353
                  %v355 = vld [vmem:[%s323 + $0x5c] sm:$0xf]
                  %356 = vst [vmem:[%s324 + $0x3c] sm:$0xf] %v355
                  %v357 = vld [vmem:[%s323 + $0x80] sm:$0xf]
                  %358 = vst [vmem:[%s324 + $0x40] sm:$0xf] %v357
                  %v359 = vld [vmem:[%s323 + $0x84] sm:$0xf]
                  %360 = vst [vmem:[%s324 + $0x44] sm:$0xf] %v359
                  %v361 = vld [vmem:[%s323 + $0x88] sm:$0xf]
                  %362 = vst [vmem:[%s324 + $0x48] sm:$0xf] %v361
                  %v363 = vld [vmem:[%s323 + $0x8c] sm:$0xf]
                  %364 = vst [vmem:[%s324 + $0x4c] sm:$0xf] %v363
                  %v365 = vld [vmem:[%s323 + $0x90] sm:$0xf]
                  %366 = vst [vmem:[%s324 + $0x50] sm:$0xf] %v365
                  %v367 = vld [vmem:[%s323 + $0x94] sm:$0xf]
                  %368 = vst [vmem:[%s324 + $0x54] sm:$0xf] %v367
                  %v369 = vld [vmem:[%s323 + $0x98] sm:$0xf]
                  %370 = vst [vmem:[%s324 + $0x58] sm:$0xf] %v369
                  %v371 = vld [vmem:[%s323 + $0x9c] sm:$0xf]
                  %372 = vst [vmem:[%s324 + $0x5c] sm:$0xf] %v371
                  %v373 = vld [vmem:[%s323 + $0xc0] sm:$0xf]
                  %374 = vst [vmem:[%s324 + $0x60] sm:$0xf] %v373
                  %v375 = vld [vmem:[%s323 + $0xc4] sm:$0xf]
                  %376 = vst [vmem:[%s324 + $0x64] sm:$0xf] %v375
                  %v377 = vld [vmem:[%s323 + $0xc8] sm:$0xf]
                  %378 = vst [vmem:[%s324 + $0x68] sm:$0xf] %v377
                  %v379 = vld [vmem:[%s323 + $0xcc] sm:$0xf]
                  %380 = vst [vmem:[%s324 + $0x6c] sm:$0xf] %v379
                  %v381 = vld [vmem:[%s323 + $0xd0] sm:$0xf]
                  %382 = vst [vmem:[%s324 + $0x70] sm:$0xf] %v381
                  %v383 = vld [vmem:[%s323 + $0xd4] sm:$0xf]
                  %384 = vst [vmem:[%s324 + $0x74] sm:$0xf] %v383
                  %v385 = vld [vmem:[%s323 + $0xd8] sm:$0xf]
                  %386 = vst [vmem:[%s324 + $0x78] sm:$0xf] %v385
                  %v387 = vld [vmem:[%s323 + $0xdc] sm:$0xf]
                  %388 = vst [vmem:[%s324 + $0x7c] sm:$0xf] %v387
                  %v389 = vld [vmem:[%s323 + $0x100] sm:$0xf]
                  %390 = vst [vmem:[%s324 + $0x80] sm:$0xf] %v389
                  %v391 = vld [vmem:[%s323 + $0x104] sm:$0xf]
                  %392 = vst [vmem:[%s324 + $0x84] sm:$0xf] %v391
                  %v393 = vld [vmem:[%s323 + $0x108] sm:$0xf]
                  %394 = vst [vmem:[%s324 + $0x88] sm:$0xf] %v393
                  %v395 = vld [vmem:[%s323 + $0x10c] sm:$0xf]
                  %396 = vst [vmem:[%s324 + $0x8c] sm:$0xf] %v395
                  %v397 = vld [vmem:[%s323 + $0x110] sm:$0xf]
                  %398 = vst [vmem:[%s324 + $0x90] sm:$0xf] %v397
                  %v399 = vld [vmem:[%s323 + $0x114] sm:$0xf]
                  %400 = vst [vmem:[%s324 + $0x94] sm:$0xf] %v399
                  %v401 = vld [vmem:[%s323 + $0x118] sm:$0xf]
                  %402 = vst [vmem:[%s324 + $0x98] sm:$0xf] %v401
                  %v403 = vld [vmem:[%s323 + $0x11c] sm:$0xf]
                  %404 = vst [vmem:[%s324 + $0x9c] sm:$0xf] %v403
                  %v405 = vld [vmem:[%s323 + $0x140] sm:$0xf]
                  %406 = vst [vmem:[%s324 + $0xa0] sm:$0xf] %v405
                  %v407 = vld [vmem:[%s323 + $0x144] sm:$0xf]
                  %408 = vst [vmem:[%s324 + $0xa4] sm:$0xf] %v407
                  %v409 = vld [vmem:[%s323 + $0x148] sm:$0xf]
                  %410 = vst [vmem:[%s324 + $0xa8] sm:$0xf] %v409
                  %v411 = vld [vmem:[%s323 + $0x14c] sm:$0xf]
                  %412 = vst [vmem:[%s324 + $0xac] sm:$0xf] %v411
                  %v413 = vld [vmem:[%s323 + $0x150] sm:$0xf]
                  %414 = vst [vmem:[%s324 + $0xb0] sm:$0xf] %v413
                  %v415 = vld [vmem:[%s323 + $0x154] sm:$0xf]
                  %416 = vst [vmem:[%s324 + $0xb4] sm:$0xf] %v415
                  %v417 = vld [vmem:[%s323 + $0x158] sm:$0xf]
                  %418 = vst [vmem:[%s324 + $0xb8] sm:$0xf] %v417
                  %v419 = vld [vmem:[%s323 + $0x15c] sm:$0xf]
                  %420 = vst [vmem:[%s324 + $0xbc] sm:$0xf] %v419
                  %v421 = vld [vmem:[%s323 + $0x180] sm:$0xf]
                  %422 = vst [vmem:[%s324 + $0xc0] sm:$0xf] %v421
                  %v423 = vld [vmem:[%s323 + $0x184] sm:$0xf]
                  %424 = vst [vmem:[%s324 + $0xc4] sm:$0xf] %v423
                  %v425 = vld [vmem:[%s323 + $0x188] sm:$0xf]
                  %426 = vst [vmem:[%s324 + $0xc8] sm:$0xf] %v425
                  %v427 = vld [vmem:[%s323 + $0x18c] sm:$0xf]
                  %428 = vst [vmem:[%s324 + $0xcc] sm:$0xf] %v427
                  %v429 = vld [vmem:[%s323 + $0x190] sm:$0xf]
                  %430 = vst [vmem:[%s324 + $0xd0] sm:$0xf] %v429
                  %v431 = vld [vmem:[%s323 + $0x194] sm:$0xf]
                  %432 = vst [vmem:[%s324 + $0xd4] sm:$0xf] %v431
                  %v433 = vld [vmem:[%s323 + $0x198] sm:$0xf]
                  %434 = vst [vmem:[%s324 + $0xd8] sm:$0xf] %v433
                  %v435 = vld [vmem:[%s323 + $0x19c] sm:$0xf]
                  %436 = vst [vmem:[%s324 + $0xdc] sm:$0xf] %v435
                  %v437 = vld [vmem:[%s323 + $0x1c0] sm:$0xf]
                  %438 = vst [vmem:[%s324 + $0xe0] sm:$0xf] %v437
                  %v439 = vld [vmem:[%s323 + $0x1c4] sm:$0xf]
                  %440 = vst [vmem:[%s324 + $0xe4] sm:$0xf] %v439
                  %v441 = vld [vmem:[%s323 + $0x1c8] sm:$0xf]
                  %442 = vst [vmem:[%s324 + $0xe8] sm:$0xf] %v441
                  %v443 = vld [vmem:[%s323 + $0x1cc] sm:$0xf]
                  %444 = vst [vmem:[%s324 + $0xec] sm:$0xf] %v443
                  %v445 = vld [vmem:[%s323 + $0x1d0] sm:$0xf]
                  %446 = vst [vmem:[%s324 + $0xf0] sm:$0xf] %v445
                  %v447 = vld [vmem:[%s323 + $0x1d4] sm:$0xf]
                  %448 = vst [vmem:[%s324 + $0xf4] sm:$0xf] %v447
                  %v449 = vld [vmem:[%s323 + $0x1d8] sm:$0xf]
                  %450 = vst [vmem:[%s324 + $0xf8] sm:$0xf] %v449
                  %v451 = vld [vmem:[%s323 + $0x1dc] sm:$0xf]
                  %452 = vst [vmem:[%s324 + $0xfc] sm:$0xf] %v451
                $region67: #{grasp_evaluator2_forward.6} parent=54 // loop_footer
                  %s322 = sadd.s32 1, %s318
                $region68: #{grasp_evaluator2_forward.6} parent=54 // loop_footer_branch
                  %317 = sbr.rel target = $region64
                $region69: #{grasp_evaluator2_forward.6} parent=54 // loop_exit
                  _
              $region55: #{grasp_evaluator2_forward.6} parent=39 // pred_fallthru
                _
            $region40: #{grasp_evaluator2_forward.6} parent=35 // pred_fallthru
              _
            // Predicated region
            $region41: #{grasp_evaluator2_forward.6} parent=35 // pred_check
              _
            $region42: #{grasp_evaluator2_forward.6} parent=35 // pred_check_branch
              %168 = sbr.rel (0) target = $region44
            $region43: #{grasp_evaluator2_forward.6} parent=35 // pred_region
              loop: start=0, step=1, limit=1
              $region45: #{grasp_evaluator2_forward.6} parent=43 // loop_pre_header
                _
              $region46: #{grasp_evaluator2_forward.6} parent=43 // loop_header
                %s171 = sphi 0, %s175
                %p172 = scmp.ge.s32.totalorder %s171, 1
                %s176 = sphi %s162, %s162
                %s177 = sphi %s159, %s159
              $region47: #{grasp_evaluator2_forward.6} parent=43 // loop_header_branch
                %174 = sbr.rel (%p172) target = $region51
              $region48: #{grasp_evaluator2_forward.6} parent=43 // loop_body
                %v178 = vld [vmem:[%s176] sm:$0xf]
                %179 = vst [vmem:[%s177] sm:$0xf] %v178
                %v180 = vld [vmem:[%s176 + $0x4] sm:$0xf]
                %181 = vst [vmem:[%s177 + $0x4] sm:$0xf] %v180
                %v182 = vld [vmem:[%s176 + $0x8] sm:$0xf]
                %183 = vst [vmem:[%s177 + $0x8] sm:$0xf] %v182
                %v184 = vld [vmem:[%s176 + $0xc] sm:$0xf]
                %185 = vst [vmem:[%s177 + $0xc] sm:$0xf] %v184
                %v186 = vld [vmem:[%s176 + $0x10] sm:$0xf]
                %187 = vst [vmem:[%s177 + $0x10] sm:$0xf] %v186
                %v188 = vld [vmem:[%s176 + $0x14] sm:$0xf]
                %189 = vst [vmem:[%s177 + $0x14] sm:$0xf] %v188
                %v190 = vld [vmem:[%s176 + $0x18] sm:$0xf]
                %191 = vst [vmem:[%s177 + $0x18] sm:$0xf] %v190
                %v192 = vld [vmem:[%s176 + $0x1c] sm:$0xf]
                %193 = vst [vmem:[%s177 + $0x1c] sm:$0xf] %v192
                %v194 = vld [vmem:[%s176 + $0x40] sm:$0xf]
                %195 = vst [vmem:[%s177 + $0x20] sm:$0xf] %v194
                %v196 = vld [vmem:[%s176 + $0x44] sm:$0xf]
                %197 = vst [vmem:[%s177 + $0x24] sm:$0xf] %v196
                %v198 = vld [vmem:[%s176 + $0x48] sm:$0xf]
                %199 = vst [vmem:[%s177 + $0x28] sm:$0xf] %v198
                %v200 = vld [vmem:[%s176 + $0x4c] sm:$0xf]
                %201 = vst [vmem:[%s177 + $0x2c] sm:$0xf] %v200
                %v202 = vld [vmem:[%s176 + $0x50] sm:$0xf]
                %203 = vst [vmem:[%s177 + $0x30] sm:$0xf] %v202
                %v204 = vld [vmem:[%s176 + $0x54] sm:$0xf]
                %205 = vst [vmem:[%s177 + $0x34] sm:$0xf] %v204
                %v206 = vld [vmem:[%s176 + $0x58] sm:$0xf]
                %207 = vst [vmem:[%s177 + $0x38] sm:$0xf] %v206
                %v208 = vld [vmem:[%s176 + $0x5c] sm:$0xf]
                %209 = vst [vmem:[%s177 + $0x3c] sm:$0xf] %v208
                %v210 = vld [vmem:[%s176 + $0x80] sm:$0xf]
                %211 = vst [vmem:[%s177 + $0x40] sm:$0xf] %v210
                %v212 = vld [vmem:[%s176 + $0x84] sm:$0xf]
                %213 = vst [vmem:[%s177 + $0x44] sm:$0xf] %v212
                %v214 = vld [vmem:[%s176 + $0x88] sm:$0xf]
                %215 = vst [vmem:[%s177 + $0x48] sm:$0xf] %v214
                %v216 = vld [vmem:[%s176 + $0x8c] sm:$0xf]
                %217 = vst [vmem:[%s177 + $0x4c] sm:$0xf] %v216
                %v218 = vld [vmem:[%s176 + $0x90] sm:$0xf]
                %219 = vst [vmem:[%s177 + $0x50] sm:$0xf] %v218
                %v220 = vld [vmem:[%s176 + $0x94] sm:$0xf]
                %221 = vst [vmem:[%s177 + $0x54] sm:$0xf] %v220
                %v222 = vld [vmem:[%s176 + $0x98] sm:$0xf]
                %223 = vst [vmem:[%s177 + $0x58] sm:$0xf] %v222
                %v224 = vld [vmem:[%s176 + $0x9c] sm:$0xf]
                %225 = vst [vmem:[%s177 + $0x5c] sm:$0xf] %v224
                %v226 = vld [vmem:[%s176 + $0xc0] sm:$0xf]
                %227 = vst [vmem:[%s177 + $0x60] sm:$0xf] %v226
                %v228 = vld [vmem:[%s176 + $0xc4] sm:$0xf]
                %229 = vst [vmem:[%s177 + $0x64] sm:$0xf] %v228
                %v230 = vld [vmem:[%s176 + $0xc8] sm:$0xf]
                %231 = vst [vmem:[%s177 + $0x68] sm:$0xf] %v230
                %v232 = vld [vmem:[%s176 + $0xcc] sm:$0xf]
                %233 = vst [vmem:[%s177 + $0x6c] sm:$0xf] %v232
                %v234 = vld [vmem:[%s176 + $0xd0] sm:$0xf]
                %235 = vst [vmem:[%s177 + $0x70] sm:$0xf] %v234
                %v236 = vld [vmem:[%s176 + $0xd4] sm:$0xf]
                %237 = vst [vmem:[%s177 + $0x74] sm:$0xf] %v236
                %v238 = vld [vmem:[%s176 + $0xd8] sm:$0xf]
                %239 = vst [vmem:[%s177 + $0x78] sm:$0xf] %v238
                %v240 = vld [vmem:[%s176 + $0xdc] sm:$0xf]
                %241 = vst [vmem:[%s177 + $0x7c] sm:$0xf] %v240
                %v242 = vld [vmem:[%s176 + $0x100] sm:$0xf]
                %243 = vst [vmem:[%s177 + $0x80] sm:$0xf] %v242
                %v244 = vld [vmem:[%s176 + $0x104] sm:$0xf]
                %245 = vst [vmem:[%s177 + $0x84] sm:$0xf] %v244
                %v246 = vld [vmem:[%s176 + $0x108] sm:$0xf]
                %247 = vst [vmem:[%s177 + $0x88] sm:$0xf] %v246
                %v248 = vld [vmem:[%s176 + $0x10c] sm:$0xf]
                %249 = vst [vmem:[%s177 + $0x8c] sm:$0xf] %v248
                %v250 = vld [vmem:[%s176 + $0x110] sm:$0xf]
                %251 = vst [vmem:[%s177 + $0x90] sm:$0xf] %v250
                %v252 = vld [vmem:[%s176 + $0x114] sm:$0xf]
                %253 = vst [vmem:[%s177 + $0x94] sm:$0xf] %v252
                %v254 = vld [vmem:[%s176 + $0x118] sm:$0xf]
                %255 = vst [vmem:[%s177 + $0x98] sm:$0xf] %v254
                %v256 = vld [vmem:[%s176 + $0x11c] sm:$0xf]
                %257 = vst [vmem:[%s177 + $0x9c] sm:$0xf] %v256
                %v258 = vld [vmem:[%s176 + $0x140] sm:$0xf]
                %259 = vst [vmem:[%s177 + $0xa0] sm:$0xf] %v258
                %v260 = vld [vmem:[%s176 + $0x144] sm:$0xf]
                %261 = vst [vmem:[%s177 + $0xa4] sm:$0xf] %v260
                %v262 = vld [vmem:[%s176 + $0x148] sm:$0xf]
                %263 = vst [vmem:[%s177 + $0xa8] sm:$0xf] %v262
                %v264 = vld [vmem:[%s176 + $0x14c] sm:$0xf]
                %265 = vst [vmem:[%s177 + $0xac] sm:$0xf] %v264
                %v266 = vld [vmem:[%s176 + $0x150] sm:$0xf]
                %267 = vst [vmem:[%s177 + $0xb0] sm:$0xf] %v266
                %v268 = vld [vmem:[%s176 + $0x154] sm:$0xf]
                %269 = vst [vmem:[%s177 + $0xb4] sm:$0xf] %v268
                %v270 = vld [vmem:[%s176 + $0x158] sm:$0xf]
                %271 = vst [vmem:[%s177 + $0xb8] sm:$0xf] %v270
                %v272 = vld [vmem:[%s176 + $0x15c] sm:$0xf]
                %273 = vst [vmem:[%s177 + $0xbc] sm:$0xf] %v272
                %v274 = vld [vmem:[%s176 + $0x180] sm:$0xf]
                %275 = vst [vmem:[%s177 + $0xc0] sm:$0xf] %v274
                %v276 = vld [vmem:[%s176 + $0x184] sm:$0xf]
                %277 = vst [vmem:[%s177 + $0xc4] sm:$0xf] %v276
                %v278 = vld [vmem:[%s176 + $0x188] sm:$0xf]
                %279 = vst [vmem:[%s177 + $0xc8] sm:$0xf] %v278
                %v280 = vld [vmem:[%s176 + $0x18c] sm:$0xf]
                %281 = vst [vmem:[%s177 + $0xcc] sm:$0xf] %v280
                %v282 = vld [vmem:[%s176 + $0x190] sm:$0xf]
                %283 = vst [vmem:[%s177 + $0xd0] sm:$0xf] %v282
                %v284 = vld [vmem:[%s176 + $0x194] sm:$0xf]
                %285 = vst [vmem:[%s177 + $0xd4] sm:$0xf] %v284
                %v286 = vld [vmem:[%s176 + $0x198] sm:$0xf]
                %287 = vst [vmem:[%s177 + $0xd8] sm:$0xf] %v286
                %v288 = vld [vmem:[%s176 + $0x19c] sm:$0xf]
                %289 = vst [vmem:[%s177 + $0xdc] sm:$0xf] %v288
                %v290 = vld [vmem:[%s176 + $0x1c0] sm:$0xf]
                %291 = vst [vmem:[%s177 + $0xe0] sm:$0xf] %v290
                %v292 = vld [vmem:[%s176 + $0x1c4] sm:$0xf]
                %293 = vst [vmem:[%s177 + $0xe4] sm:$0xf] %v292
                %v294 = vld [vmem:[%s176 + $0x1c8] sm:$0xf]
                %295 = vst [vmem:[%s177 + $0xe8] sm:$0xf] %v294
                %v296 = vld [vmem:[%s176 + $0x1cc] sm:$0xf]
                %297 = vst [vmem:[%s177 + $0xec] sm:$0xf] %v296
                %v298 = vld [vmem:[%s176 + $0x1d0] sm:$0xf]
                %299 = vst [vmem:[%s177 + $0xf0] sm:$0xf] %v298
                %v300 = vld [vmem:[%s176 + $0x1d4] sm:$0xf]
                %301 = vst [vmem:[%s177 + $0xf4] sm:$0xf] %v300
                %v302 = vld [vmem:[%s176 + $0x1d8] sm:$0xf]
                %303 = vst [vmem:[%s177 + $0xf8] sm:$0xf] %v302
                %v304 = vld [vmem:[%s176 + $0x1dc] sm:$0xf]
                %305 = vst [vmem:[%s177 + $0xfc] sm:$0xf] %v304
              $region49: #{grasp_evaluator2_forward.6} parent=43 // loop_footer
                %s175 = sadd.s32 1, %s171
              $region50: #{grasp_evaluator2_forward.6} parent=43 // loop_footer_branch
                %170 = sbr.rel target = $region46
              $region51: #{grasp_evaluator2_forward.6} parent=43 // loop_exit
                _
            $region44: #{grasp_evaluator2_forward.6} parent=35 // pred_fallthru
              _
          $region36: #{grasp_evaluator2_forward.6} parent=31 // pred_fallthru
            _
          %453 = vnop
        $region32: #{grasp_evaluator2_forward.6} parent=27 // pred_fallthru
          _
      $region28: #{grasp_evaluator2_forward.6} parent=5 // pred_fallthru
        _
      %p454 = scmp.le.s32.totalorder 1, %s10
      %p455 = scmp.lt.s32.totalorder %s10, 3
      %p456 = pnand %p454, %p455
      %p457 = pneg %p456
      // Predicated region
      $region70: #{grasp_evaluator2_forward.6} parent=5 // pred_check
        _
      $region71: #{grasp_evaluator2_forward.6} parent=5 // pred_check_branch
        %459 = sbr.rel (%p456) target = $region73
      $region72: #{grasp_evaluator2_forward.6} parent=5 // pred_region
        %s460 = ssub.s32 %s10, 1
        %s461 = sand.u32 %s23, 1
        %s462 = sand.u32 %s23, 1
        %s463 = smul.addr %s462, 256
        %s464 = scalar_lea.vmem [#allocation2], %s463
        // Predicated region
        $region74: #{grasp_evaluator2_forward.6} parent=72 // pred_check
          %p465 = pneg %p36
        $region75: #{grasp_evaluator2_forward.6} parent=72 // pred_check_branch
          %467 = sbr.rel (%p465) target = $region77
        $region76: #{grasp_evaluator2_forward.6} parent=72 // pred_region
          _
        $region77: #{grasp_evaluator2_forward.6} parent=72 // pred_fallthru
          _
        %s468 = sand.u32 %s23, 1
        %s469 = sand.u32 %s23, 1
        %s470 = smul.addr %s469, 256
        %s471 = scalar_lea.vmem [#allocation2], %s470
        %p472 = pneg %p36
        %p473 = pneg %p33
        %p474 = pneg %p57
        %p475 = pneg %p54
        %p476 = pneg %p78
        %p477 = pneg %p75
        %p478 = pneg %p99
        %p479 = pneg %p96
        %p480 = pneg %p125
        %p481 = pneg %p122
        %s482 = smul.u32 8, %s15
        %p483 = scmp.lt.s32.totalorder %s482, 15
        %s484 = scalar_select %p483, %s482, 15
        %s485 = smul.addr %s484, 8
        %s486 = scalar_lea.vmem %s4, %s485
        %s487 = smul.u32 8, %s15
        %s488 = smul.u32 8, %s15
        %p489 = scmp.lt.s32.totalorder %s488, 15
        %s490 = scalar_select %p489, %s488, 15
        %s491 = smul.addr %s490, 8
        %s492 = scalar_lea.vmem %s4, %s491
        %s493 = smul.u32 8, %s15
        %v495 = vld [vmem:[%s464] sm:$0xf]
        %v496 = vld [vmem:[%s464 + $0x4] sm:$0xf]
        %v497 = vld [vmem:[%s464 + $0x8] sm:$0xf]
        %v498 = vld [vmem:[%s464 + $0xc] sm:$0xf]
        %v499 = vld [vmem:[%s464 + $0x10] sm:$0xf]
        %v500 = vld [vmem:[%s464 + $0x14] sm:$0xf]
        %v501 = vld [vmem:[%s464 + $0x18] sm:$0xf]
        %v502 = vld [vmem:[%s464 + $0x1c] sm:$0xf]
        %v503 = vld [vmem:[%s464 + $0x20] sm:$0xf]
        %v504 = vld [vmem:[%s464 + $0x24] sm:$0xf]
        %v505 = vld [vmem:[%s464 + $0x28] sm:$0xf]
        %v506 = vld [vmem:[%s464 + $0x2c] sm:$0xf]
        %v507 = vld [vmem:[%s464 + $0x30] sm:$0xf]
        %v508 = vld [vmem:[%s464 + $0x34] sm:$0xf]
        %v509 = vld [vmem:[%s464 + $0x38] sm:$0xf]
        %v510 = vld [vmem:[%s464 + $0x3c] sm:$0xf]
        %v511 = vld [vmem:[%s464 + $0x40] sm:$0xf]
        %v512 = vld [vmem:[%s464 + $0x44] sm:$0xf]
        %v513 = vld [vmem:[%s464 + $0x48] sm:$0xf]
        %v514 = vld [vmem:[%s464 + $0x4c] sm:$0xf]
        %v515 = vld [vmem:[%s464 + $0x50] sm:$0xf]
        %v516 = vld [vmem:[%s464 + $0x54] sm:$0xf]
        %v517 = vld [vmem:[%s464 + $0x58] sm:$0xf]
        %v518 = vld [vmem:[%s464 + $0x5c] sm:$0xf]
        %v519 = vld [vmem:[%s464 + $0x60] sm:$0xf]
        %v520 = vld [vmem:[%s464 + $0x64] sm:$0xf]
        %v521 = vld [vmem:[%s464 + $0x68] sm:$0xf]
        %v522 = vld [vmem:[%s464 + $0x6c] sm:$0xf]
        %v523 = vld [vmem:[%s464 + $0x70] sm:$0xf]
        %v524 = vld [vmem:[%s464 + $0x74] sm:$0xf]
        %v525 = vld [vmem:[%s464 + $0x78] sm:$0xf]
        %v526 = vld [vmem:[%s464 + $0x7c] sm:$0xf]
        %v527 = vld [vmem:[%s464 + $0x80] sm:$0xf]
        %v528 = vld [vmem:[%s464 + $0x84] sm:$0xf]
        %v529 = vld [vmem:[%s464 + $0x88] sm:$0xf]
        %v530 = vld [vmem:[%s464 + $0x8c] sm:$0xf]
        %v531 = vld [vmem:[%s464 + $0x90] sm:$0xf]
        %v532 = vld [vmem:[%s464 + $0x94] sm:$0xf]
        %v533 = vld [vmem:[%s464 + $0x98] sm:$0xf]
        %v534 = vld [vmem:[%s464 + $0x9c] sm:$0xf]
        %v535 = vld [vmem:[%s464 + $0xa0] sm:$0xf]
        %v536 = vld [vmem:[%s464 + $0xa4] sm:$0xf]
        %v537 = vld [vmem:[%s464 + $0xa8] sm:$0xf]
        %v538 = vld [vmem:[%s464 + $0xac] sm:$0xf]
        %v539 = vld [vmem:[%s464 + $0xb0] sm:$0xf]
        %v540 = vld [vmem:[%s464 + $0xb4] sm:$0xf]
        %v541 = vld [vmem:[%s464 + $0xb8] sm:$0xf]
        %v542 = vld [vmem:[%s464 + $0xbc] sm:$0xf]
        %v543 = vld [vmem:[%s464 + $0xc0] sm:$0xf]
        %v544 = vld [vmem:[%s464 + $0xc4] sm:$0xf]
        %v545 = vld [vmem:[%s464 + $0xc8] sm:$0xf]
        %v546 = vld [vmem:[%s464 + $0xcc] sm:$0xf]
        %v547 = vld [vmem:[%s464 + $0xd0] sm:$0xf]
        %v548 = vld [vmem:[%s464 + $0xd4] sm:$0xf]
        %v549 = vld [vmem:[%s464 + $0xd8] sm:$0xf]
        %v550 = vld [vmem:[%s464 + $0xdc] sm:$0xf]
        %v551 = vld [vmem:[%s464 + $0xe0] sm:$0xf]
        %v552 = vld [vmem:[%s464 + $0xe4] sm:$0xf]
        %v553 = vld [vmem:[%s464 + $0xe8] sm:$0xf]
        %v554 = vld [vmem:[%s464 + $0xec] sm:$0xf]
        %v555 = vld [vmem:[%s464 + $0xf0] sm:$0xf]
        %v556 = vld [vmem:[%s464 + $0xf4] sm:$0xf]
        %v557 = vld [vmem:[%s464 + $0xf8] sm:$0xf]
        %v558 = vld [vmem:[%s464 + $0xfc] sm:$0xf]
        %v559 = vld [vmem:[%s1] sm:$0xf]
        %v560 = vld [vmem:[%s1 + $0x4] sm:$0xf]
        %v561 = vld [vmem:[%s1 + $0x8] sm:$0xf]
        %v562 = vld [vmem:[%s1 + $0xc] sm:$0xf]
        %v563 = vld [vmem:[%s1 + $0x10] sm:$0xf]
        %v564 = vld [vmem:[%s1 + $0x14] sm:$0xf]
        %v565 = vld [vmem:[%s1 + $0x18] sm:$0xf]
        %v566 = vld [vmem:[%s1 + $0x1c] sm:$0xf]
        %v567 = vld [vmem:[%s1 + $0x20] sm:$0xf]
        %v568 = vld [vmem:[%s1 + $0x24] sm:$0xf]
        %v569 = vld [vmem:[%s1 + $0x28] sm:$0xf]
        %v570 = vld [vmem:[%s1 + $0x2c] sm:$0xf]
        %v571 = vld [vmem:[%s1 + $0x30] sm:$0xf]
        %v572 = vld [vmem:[%s1 + $0x34] sm:$0xf]
        %v573 = vld [vmem:[%s1 + $0x38] sm:$0xf]
        %v574 = vld [vmem:[%s1 + $0x3c] sm:$0xf]
        %v639 = vunpack.c.l.b16 %v495
        %v640 = vunpack.c.l.b16 %v496
        %v641 = vunpack.c.l.b16 %v497
        %v642 = vunpack.c.l.b16 %v498
        %v643 = vunpack.c.l.b16 %v499
        %v644 = vunpack.c.l.b16 %v500
        %v645 = vunpack.c.l.b16 %v501
        %v646 = vunpack.c.l.b16 %v502
        %v647 = vunpack.c.l.b16 %v503
        %v648 = vunpack.c.l.b16 %v504
        %v649 = vunpack.c.l.b16 %v505
        %v650 = vunpack.c.l.b16 %v506
        %v651 = vunpack.c.l.b16 %v507
        %v652 = vunpack.c.l.b16 %v508
        %v653 = vunpack.c.l.b16 %v509
        %v654 = vunpack.c.l.b16 %v510
        %v655 = vunpack.c.l.b16 %v511
        %v656 = vunpack.c.l.b16 %v512
        %v657 = vunpack.c.l.b16 %v513
        %v658 = vunpack.c.l.b16 %v514
        %v659 = vunpack.c.l.b16 %v515
        %v660 = vunpack.c.l.b16 %v516
        %v661 = vunpack.c.l.b16 %v517
        %v662 = vunpack.c.l.b16 %v518
        %v663 = vunpack.c.l.b16 %v519
        %v664 = vunpack.c.l.b16 %v520
        %v665 = vunpack.c.l.b16 %v521
        %v666 = vunpack.c.l.b16 %v522
        %v667 = vunpack.c.l.b16 %v523
        %v668 = vunpack.c.l.b16 %v524
        %v669 = vunpack.c.l.b16 %v525
        %v670 = vunpack.c.l.b16 %v526
        %v671 = vunpack.c.l.b16 %v527
        %v672 = vunpack.c.l.b16 %v528
        %v673 = vunpack.c.l.b16 %v529
        %v674 = vunpack.c.l.b16 %v530
        %v675 = vunpack.c.l.b16 %v531
        %v676 = vunpack.c.l.b16 %v532
        %v677 = vunpack.c.l.b16 %v533
        %v678 = vunpack.c.l.b16 %v534
        %v679 = vunpack.c.l.b16 %v535
        %v680 = vunpack.c.l.b16 %v536
        %v681 = vunpack.c.l.b16 %v537
        %v682 = vunpack.c.l.b16 %v538
        %v683 = vunpack.c.l.b16 %v539
        %v684 = vunpack.c.l.b16 %v540
        %v685 = vunpack.c.l.b16 %v541
        %v686 = vunpack.c.l.b16 %v542
        %v687 = vunpack.c.l.b16 %v543
        %v688 = vunpack.c.l.b16 %v544
        %v689 = vunpack.c.l.b16 %v545
        %v690 = vunpack.c.l.b16 %v546
        %v691 = vunpack.c.l.b16 %v547
        %v692 = vunpack.c.l.b16 %v548
        %v693 = vunpack.c.l.b16 %v549
        %v694 = vunpack.c.l.b16 %v550
        %v695 = vunpack.c.l.b16 %v551
        %v696 = vunpack.c.l.b16 %v552
        %v697 = vunpack.c.l.b16 %v553
        %v698 = vunpack.c.l.b16 %v554
        %v699 = vunpack.c.l.b16 %v555
        %v700 = vunpack.c.l.b16 %v556
        %v701 = vunpack.c.l.b16 %v557
        %v702 = vunpack.c.l.b16 %v558
        %v703 = vpack.c.b16 %v640, %v639
        %v704 = vpack.c.b16 %v642, %v641
        %v705 = vpack.c.b16 %v644, %v643
        %v706 = vpack.c.b16 %v646, %v645
        %v707 = vpack.c.b16 %v648, %v647
        %v708 = vpack.c.b16 %v650, %v649
        %v709 = vpack.c.b16 %v652, %v651
        %v710 = vpack.c.b16 %v654, %v653
        %v711 = vpack.c.b16 %v656, %v655
        %v712 = vpack.c.b16 %v658, %v657
        %v713 = vpack.c.b16 %v660, %v659
        %v714 = vpack.c.b16 %v662, %v661
        %v715 = vpack.c.b16 %v664, %v663
        %v716 = vpack.c.b16 %v666, %v665
        %v717 = vpack.c.b16 %v668, %v667
        %v718 = vpack.c.b16 %v670, %v669
        %v719 = vpack.c.b16 %v672, %v671
        %v720 = vpack.c.b16 %v674, %v673
        %v721 = vpack.c.b16 %v676, %v675
        %v722 = vpack.c.b16 %v678, %v677
        %v723 = vpack.c.b16 %v680, %v679
        %v724 = vpack.c.b16 %v682, %v681
        %v725 = vpack.c.b16 %v684, %v683
        %v726 = vpack.c.b16 %v686, %v685
        %v727 = vpack.c.b16 %v688, %v687
        %v728 = vpack.c.b16 %v690, %v689
        %v729 = vpack.c.b16 %v692, %v691
        %v730 = vpack.c.b16 %v694, %v693
        %v731 = vpack.c.b16 %v696, %v695
        %v732 = vpack.c.b16 %v698, %v697
        %v733 = vpack.c.b16 %v700, %v699
        %v734 = vpack.c.b16 %v702, %v701
        %v783 = vunpack.c.l.b16 %v559
        %v784 = vunpack.c.l.b16 %v560
        %v785 = vunpack.c.l.b16 %v561
        %v786 = vunpack.c.l.b16 %v562
        %v787 = vunpack.c.l.b16 %v563
        %v788 = vunpack.c.l.b16 %v564
        %v789 = vunpack.c.l.b16 %v565
        %v790 = vunpack.c.l.b16 %v566
        %v791 = vunpack.c.l.b16 %v567
        %v792 = vunpack.c.l.b16 %v568
        %v793 = vunpack.c.l.b16 %v569
        %v794 = vunpack.c.l.b16 %v570
        %v795 = vunpack.c.l.b16 %v571
        %v796 = vunpack.c.l.b16 %v572
        %v797 = vunpack.c.l.b16 %v573
        %v798 = vunpack.c.l.b16 %v574
        %v799 = vpack.c.b16 %v784, %v783
        %v800 = vpack.c.b16 %v786, %v785
        %v801 = vpack.c.b16 %v788, %v787
        %v802 = vpack.c.b16 %v790, %v789
        %v803 = vpack.c.b16 %v792, %v791
        %v804 = vpack.c.b16 %v794, %v793
        %v805 = vpack.c.b16 %v796, %v795
        %v806 = vpack.c.b16 %v798, %v797
        %815 = vmatprep.subr.bf16.mxu0 0
        %816 = vmatpush1.bf16.msra.mxu0 %v799
        %817 = vmatprep.subr.bf16.mxu0 0
        %818 = vmatpush1.bf16.msra.mxu0 %v800
        %819 = vmatprep.subr.bf16.mxu0 0
        %820 = vmatpush1.bf16.msra.mxu0 %v801
        %821 = vmatprep.subr.bf16.mxu0 0
        %822 = vmatpush1.bf16.msra.mxu0 %v802
        %823 = vmatprep.subr.bf16.mxu0 0
        %824 = vmatpush1.bf16.msra.mxu0 %v803
        %825 = vmatprep.subr.bf16.mxu0 0
        %826 = vmatpush1.bf16.msra.mxu0 %v804
        %827 = vmatprep.subr.bf16.mxu0 0
        %828 = vmatpush1.bf16.msra.mxu0 %v805
        %829 = vmatprep.subr.bf16.mxu0 0
        %830 = vmatpush1.bf16.msra.mxu0 %v806
        %831 = vmatprep.subr.bf16.mxu0 0
        %832 = vmatpush1.bf16.msra.mxu0 0
        %833 = vmatprep.subr.bf16.mxu0 0
        %834 = vmatpush1.bf16.msra.mxu0 0
        %835 = vmatprep.subr.bf16.mxu0 0
        %836 = vmatpush1.bf16.msra.mxu0 0
        %837 = vmatprep.subr.bf16.mxu0 0
        %838 = vmatpush1.bf16.msra.mxu0 0
        %839 = vmatprep.subr.bf16.mxu0 0
        %840 = vmatpush1.bf16.msra.mxu0 0
        %841 = vmatprep.subr.bf16.mxu0 0
        %842 = vmatpush1.bf16.msra.mxu0 0
        %843 = vmatprep.subr.bf16.mxu0 0
        %844 = vmatpush1.bf16.msra.mxu0 0
        %845 = vmatprep.subr.bf16.mxu0 0
        %846 = vmatpush1.bf16.msra.mxu0 0
        %847 = vmatprep.mubr.bf16.mxu0 0
        %848 = vmatmul.mubr.bf16.gmra.mrb[0].mxu0 %v703
        %v849 = vpop.f32.mrb[0].mxu0
        %v850 = vadd.f32 0.0, %v849
        %v851 = vpop.f32.mrb[0].mxu0
        %v852 = vpop.f32.mrb[0].mxu0
        %v853 = vadd.f32 0.0, %v852
        %v854 = vpop.f32.mrb[0].mxu0
        %855 = vmatprep.mubr.bf16.mxu0 0
        %856 = vmatmul.mubr.bf16.gmra.mrb[0].mxu0 %v704
        %v857 = vpop.f32.mrb[0].mxu0
        %v858 = vadd.f32 0.0, %v857
        %v859 = vpop.f32.mrb[0].mxu0
        %v860 = vpop.f32.mrb[0].mxu0
        %v861 = vadd.f32 0.0, %v860
        %v862 = vpop.f32.mrb[0].mxu0
        %863 = vmatprep.mubr.bf16.mxu0 0
        %864 = vmatmul.mubr.bf16.gmra.mrb[0].mxu0 %v705
        %v865 = vpop.f32.mrb[0].mxu0
        %v866 = vadd.f32 0.0, %v865
        %v867 = vpop.f32.mrb[0].mxu0
        %v868 = vpop.f32.mrb[0].mxu0
        %v869 = vadd.f32 0.0, %v868
        %v870 = vpop.f32.mrb[0].mxu0
        %871 = vmatprep.mubr.bf16.mxu0 0
        %872 = vmatmul.mubr.bf16.gmra.mrb[0].mxu0 %v706
        %v873 = vpop.f32.mrb[0].mxu0
        %v874 = vadd.f32 0.0, %v873
        %v875 = vpop.f32.mrb[0].mxu0
        %v876 = vpop.f32.mrb[0].mxu0
        %v877 = vadd.f32 0.0, %v876
        %v878 = vpop.f32.mrb[0].mxu0
        %879 = vmatprep.mubr.bf16.mxu0 0
        %880 = vmatmul.mubr.bf16.gmra.mrb[0].mxu0 %v707
        %v881 = vpop.f32.mrb[0].mxu0
        %v882 = vadd.f32 0.0, %v881
        %v883 = vpop.f32.mrb[0].mxu0
        %v884 = vpop.f32.mrb[0].mxu0
        %v885 = vadd.f32 0.0, %v884
        %v886 = vpop.f32.mrb[0].mxu0
        %887 = vmatprep.mubr.bf16.mxu0 0
        %888 = vmatmul.mubr.bf16.gmra.mrb[0].mxu0 %v708
        %v889 = vpop.f32.mrb[0].mxu0
        %v890 = vadd.f32 0.0, %v889
        %v891 = vpop.f32.mrb[0].mxu0
        %v892 = vpop.f32.mrb[0].mxu0
        %v893 = vadd.f32 0.0, %v892
        %v894 = vpop.f32.mrb[0].mxu0
        %895 = vmatprep.mubr.bf16.mxu0 0
        %896 = vmatmul.mubr.bf16.gmra.mrb[0].mxu0 %v709
        %v897 = vpop.f32.mrb[0].mxu0
        %v898 = vadd.f32 0.0, %v897
        %v899 = vpop.f32.mrb[0].mxu0
        %v900 = vpop.f32.mrb[0].mxu0
        %v901 = vadd.f32 0.0, %v900
        %v902 = vpop.f32.mrb[0].mxu0
        %903 = vmatprep.mubr.bf16.mxu0 0
        %904 = vmatmul.mubr.bf16.gmra.mrb[0].mxu0 %v710
        %v905 = vpop.f32.mrb[0].mxu0
        %v906 = vadd.f32 0.0, %v905
        %v907 = vpop.f32.mrb[0].mxu0
        %v908 = vpop.f32.mrb[0].mxu0
        %v909 = vadd.f32 0.0, %v908
        %v910 = vpop.f32.mrb[0].mxu0
        %911 = vmatprep.mubr.bf16.mxu0 0
        %912 = vmatmul.mubr.bf16.gmra.mrb[0].mxu0 %v711
        %v913 = vpop.f32.mrb[0].mxu0
        %v914 = vadd.f32 0.0, %v913
        %v915 = vpop.f32.mrb[0].mxu0
        %v916 = vpop.f32.mrb[0].mxu0
        %v917 = vadd.f32 0.0, %v916
        %v918 = vpop.f32.mrb[0].mxu0
        %919 = vmatprep.mubr.bf16.mxu0 0
        %920 = vmatmul.mubr.bf16.gmra.mrb[0].mxu0 %v712
        %v921 = vpop.f32.mrb[0].mxu0
        %v922 = vadd.f32 0.0, %v921
        %v923 = vpop.f32.mrb[0].mxu0
        %v924 = vpop.f32.mrb[0].mxu0
        %v925 = vadd.f32 0.0, %v924
        %v926 = vpop.f32.mrb[0].mxu0
        %927 = vmatprep.mubr.bf16.mxu0 0
        %928 = vmatmul.mubr.bf16.gmra.mrb[0].mxu0 %v713
        %v929 = vpop.f32.mrb[0].mxu0
        %v930 = vadd.f32 0.0, %v929
        %v931 = vpop.f32.mrb[0].mxu0
        %v932 = vpop.f32.mrb[0].mxu0
        %v933 = vadd.f32 0.0, %v932
        %v934 = vpop.f32.mrb[0].mxu0
        %935 = vmatprep.mubr.bf16.mxu0 0
        %936 = vmatmul.mubr.bf16.gmra.mrb[0].mxu0 %v714
        %v937 = vpop.f32.mrb[0].mxu0
        %v938 = vadd.f32 0.0, %v937
        %v939 = vpop.f32.mrb[0].mxu0
        %v940 = vpop.f32.mrb[0].mxu0
        %v941 = vadd.f32 0.0, %v940
        %v942 = vpop.f32.mrb[0].mxu0
        %943 = vmatprep.mubr.bf16.mxu0 0
        %944 = vmatmul.mubr.bf16.gmra.mrb[0].mxu0 %v715
        %v945 = vpop.f32.mrb[0].mxu0
        %v946 = vadd.f32 0.0, %v945
        %v947 = vpop.f32.mrb[0].mxu0
        %v948 = vpop.f32.mrb[0].mxu0
        %v949 = vadd.f32 0.0, %v948
        %v950 = vpop.f32.mrb[0].mxu0
        %951 = vmatprep.mubr.bf16.mxu0 0
        %952 = vmatmul.mubr.bf16.gmra.mrb[0].mxu0 %v716
        %v953 = vpop.f32.mrb[0].mxu0
        %v954 = vadd.f32 0.0, %v953
        %v955 = vpop.f32.mrb[0].mxu0
        %v956 = vpop.f32.mrb[0].mxu0
        %v957 = vadd.f32 0.0, %v956
        %v958 = vpop.f32.mrb[0].mxu0
        %959 = vmatprep.mubr.bf16.mxu0 0
        %960 = vmatmul.mubr.bf16.gmra.mrb[0].mxu0 %v717
        %v961 = vpop.f32.mrb[0].mxu0
        %v962 = vadd.f32 0.0, %v961
        %v963 = vpop.f32.mrb[0].mxu0
        %v964 = vpop.f32.mrb[0].mxu0
        %v965 = vadd.f32 0.0, %v964
        %v966 = vpop.f32.mrb[0].mxu0
        %967 = vmatprep.mubr.bf16.mxu0 0
        %968 = vmatmul.mubr.bf16.gmra.mrb[0].mxu0 %v718
        %v969 = vpop.f32.mrb[0].mxu0
        %v970 = vadd.f32 0.0, %v969
        %v971 = vpop.f32.mrb[0].mxu0
        %v972 = vpop.f32.mrb[0].mxu0
        %v973 = vadd.f32 0.0, %v972
        %v974 = vpop.f32.mrb[0].mxu0
        %975 = vmatprep.mubr.bf16.mxu0 0
        %976 = vmatmul.mubr.bf16.gmra.mrb[0].mxu0 %v719
        %v977 = vpop.f32.mrb[0].mxu0
        %v978 = vadd.f32 0.0, %v977
        %v979 = vpop.f32.mrb[0].mxu0
        %v980 = vpop.f32.mrb[0].mxu0
        %v981 = vadd.f32 0.0, %v980
        %v982 = vpop.f32.mrb[0].mxu0
        %983 = vmatprep.mubr.bf16.mxu0 0
        %984 = vmatmul.mubr.bf16.gmra.mrb[0].mxu0 %v720
        %v985 = vpop.f32.mrb[0].mxu0
        %v986 = vadd.f32 0.0, %v985
        %v987 = vpop.f32.mrb[0].mxu0
        %v988 = vpop.f32.mrb[0].mxu0
        %v989 = vadd.f32 0.0, %v988
        %v990 = vpop.f32.mrb[0].mxu0
        %991 = vmatprep.mubr.bf16.mxu0 0
        %992 = vmatmul.mubr.bf16.gmra.mrb[0].mxu0 %v721
        %v993 = vpop.f32.mrb[0].mxu0
        %v994 = vadd.f32 0.0, %v993
        %v995 = vpop.f32.mrb[0].mxu0
        %v996 = vpop.f32.mrb[0].mxu0
        %v997 = vadd.f32 0.0, %v996
        %v998 = vpop.f32.mrb[0].mxu0
        %999 = vmatprep.mubr.bf16.mxu0 0
        %1000 = vmatmul.mubr.bf16.gmra.mrb[0].mxu0 %v722
        %v1001 = vpop.f32.mrb[0].mxu0
        %v1002 = vadd.f32 0.0, %v1001
        %v1003 = vpop.f32.mrb[0].mxu0
        %v1004 = vpop.f32.mrb[0].mxu0
        %v1005 = vadd.f32 0.0, %v1004
        %v1006 = vpop.f32.mrb[0].mxu0
        %1007 = vmatprep.mubr.bf16.mxu0 0
        %1008 = vmatmul.mubr.bf16.gmra.mrb[0].mxu0 %v723
        %v1009 = vpop.f32.mrb[0].mxu0
        %v1010 = vadd.f32 0.0, %v1009
        %v1011 = vpop.f32.mrb[0].mxu0
        %v1012 = vpop.f32.mrb[0].mxu0
        %v1013 = vadd.f32 0.0, %v1012
        %v1014 = vpop.f32.mrb[0].mxu0
        %1015 = vmatprep.mubr.bf16.mxu0 0
        %1016 = vmatmul.mubr.bf16.gmra.mrb[0].mxu0 %v724
        %v1017 = vpop.f32.mrb[0].mxu0
        %v1018 = vadd.f32 0.0, %v1017
        %v1019 = vpop.f32.mrb[0].mxu0
        %v1020 = vpop.f32.mrb[0].mxu0
        %v1021 = vadd.f32 0.0, %v1020
        %v1022 = vpop.f32.mrb[0].mxu0
        %1023 = vmatprep.mubr.bf16.mxu0 0
        %1024 = vmatmul.mubr.bf16.gmra.mrb[0].mxu0 %v725
        %v1025 = vpop.f32.mrb[0].mxu0
        %v1026 = vadd.f32 0.0, %v1025
        %v1027 = vpop.f32.mrb[0].mxu0
        %v1028 = vpop.f32.mrb[0].mxu0
        %v1029 = vadd.f32 0.0, %v1028
        %v1030 = vpop.f32.mrb[0].mxu0
        %1031 = vmatprep.mubr.bf16.mxu0 0
        %1032 = vmatmul.mubr.bf16.gmra.mrb[0].mxu0 %v726
        %v1033 = vpop.f32.mrb[0].mxu0
        %v1034 = vadd.f32 0.0, %v1033
        %v1035 = vpop.f32.mrb[0].mxu0
        %v1036 = vpop.f32.mrb[0].mxu0
        %v1037 = vadd.f32 0.0, %v1036
        %v1038 = vpop.f32.mrb[0].mxu0
        %1039 = vmatprep.mubr.bf16.mxu0 0
        %1040 = vmatmul.mubr.bf16.gmra.mrb[0].mxu0 %v727
        %v1041 = vpop.f32.mrb[0].mxu0
        %v1042 = vadd.f32 0.0, %v1041
        %v1043 = vpop.f32.mrb[0].mxu0
        %v1044 = vpop.f32.mrb[0].mxu0
        %v1045 = vadd.f32 0.0, %v1044
        %v1046 = vpop.f32.mrb[0].mxu0
        %1047 = vmatprep.mubr.bf16.mxu0 0
        %1048 = vmatmul.mubr.bf16.gmra.mrb[0].mxu0 %v728
        %v1049 = vpop.f32.mrb[0].mxu0
        %v1050 = vadd.f32 0.0, %v1049
        %v1051 = vpop.f32.mrb[0].mxu0
        %v1052 = vpop.f32.mrb[0].mxu0
        %v1053 = vadd.f32 0.0, %v1052
        %v1054 = vpop.f32.mrb[0].mxu0
        %1055 = vmatprep.mubr.bf16.mxu0 0
        %1056 = vmatmul.mubr.bf16.gmra.mrb[0].mxu0 %v729
        %v1057 = vpop.f32.mrb[0].mxu0
        %v1058 = vadd.f32 0.0, %v1057
        %v1059 = vpop.f32.mrb[0].mxu0
        %v1060 = vpop.f32.mrb[0].mxu0
        %v1061 = vadd.f32 0.0, %v1060
        %v1062 = vpop.f32.mrb[0].mxu0
        %1063 = vmatprep.mubr.bf16.mxu0 0
        %1064 = vmatmul.mubr.bf16.gmra.mrb[0].mxu0 %v730
        %v1065 = vpop.f32.mrb[0].mxu0
        %v1066 = vadd.f32 0.0, %v1065
        %v1067 = vpop.f32.mrb[0].mxu0
        %v1068 = vpop.f32.mrb[0].mxu0
        %v1069 = vadd.f32 0.0, %v1068
        %v1070 = vpop.f32.mrb[0].mxu0
        %1071 = vmatprep.mubr.bf16.mxu0 0
        %1072 = vmatmul.mubr.bf16.gmra.mrb[0].mxu0 %v731
        %v1073 = vpop.f32.mrb[0].mxu0
        %v1074 = vadd.f32 0.0, %v1073
        %v1075 = vpop.f32.mrb[0].mxu0
        %v1076 = vpop.f32.mrb[0].mxu0
        %v1077 = vadd.f32 0.0, %v1076
        %v1078 = vpop.f32.mrb[0].mxu0
        %1079 = vmatprep.mubr.bf16.mxu0 0
        %1080 = vmatmul.mubr.bf16.gmra.mrb[0].mxu0 %v732
        %v1081 = vpop.f32.mrb[0].mxu0
        %v1082 = vadd.f32 0.0, %v1081
        %v1083 = vpop.f32.mrb[0].mxu0
        %v1084 = vpop.f32.mrb[0].mxu0
        %v1085 = vadd.f32 0.0, %v1084
        %v1086 = vpop.f32.mrb[0].mxu0
        %1087 = vmatprep.mubr.bf16.mxu0 0
        %1088 = vmatmul.mubr.bf16.gmra.mrb[0].mxu0 %v733
        %v1089 = vpop.f32.mrb[0].mxu0
        %v1090 = vadd.f32 0.0, %v1089
        %v1091 = vpop.f32.mrb[0].mxu0
        %v1092 = vpop.f32.mrb[0].mxu0
        %v1093 = vadd.f32 0.0, %v1092
        %v1094 = vpop.f32.mrb[0].mxu0
        %1095 = vmatprep.mubr.bf16.mxu0 0
        %1096 = vmatmul.mubr.bf16.gmra.mrb[0].mxu0 %v734
        %v1097 = vpop.f32.mrb[0].mxu0
        %v1098 = vadd.f32 0.0, %v1097
        %v1099 = vpop.f32.mrb[0].mxu0
        %v1100 = vpop.f32.mrb[0].mxu0
        %v1101 = vadd.f32 0.0, %v1100
        %v1102 = vpop.f32.mrb[0].mxu0
        %1103 = vdwg.mxu0
        %v1104 = vld [vmem:[%s2] sm:$0x1]
        %v1106 = vlaneseq
        %v1107 = vshrl.u32 %v1106, 7
        %v1108 = vsub.s32 0, %v1107
        %v1109 = vrot.slane %v1104, %v1108
        %v1111 = vmul.f32 %v850, %v1109
        %v1112 = vmul.f32 %v853, %v1109
        %v1113 = vmul.f32 %v858, %v1109
        %v1114 = vmul.f32 %v861, %v1109
        %v1115 = vmul.f32 %v866, %v1109
        %v1116 = vmul.f32 %v869, %v1109
        %v1117 = vmul.f32 %v874, %v1109
        %v1118 = vmul.f32 %v877, %v1109
        %v1119 = vmul.f32 %v882, %v1109
        %v1120 = vmul.f32 %v885, %v1109
        %v1121 = vmul.f32 %v890, %v1109
        %v1122 = vmul.f32 %v893, %v1109
        %v1123 = vmul.f32 %v898, %v1109
        %v1124 = vmul.f32 %v901, %v1109
        %v1125 = vmul.f32 %v906, %v1109
        %v1126 = vmul.f32 %v909, %v1109
        %v1127 = vmul.f32 %v914, %v1109
        %v1128 = vmul.f32 %v917, %v1109
        %v1129 = vmul.f32 %v922, %v1109
        %v1130 = vmul.f32 %v925, %v1109
        %v1131 = vmul.f32 %v930, %v1109
        %v1132 = vmul.f32 %v933, %v1109
        %v1133 = vmul.f32 %v938, %v1109
        %v1134 = vmul.f32 %v941, %v1109
        %v1135 = vmul.f32 %v946, %v1109
        %v1136 = vmul.f32 %v949, %v1109
        %v1137 = vmul.f32 %v954, %v1109
        %v1138 = vmul.f32 %v957, %v1109
        %v1139 = vmul.f32 %v962, %v1109
        %v1140 = vmul.f32 %v965, %v1109
        %v1141 = vmul.f32 %v970, %v1109
        %v1142 = vmul.f32 %v973, %v1109
        %v1143 = vmul.f32 %v978, %v1109
        %v1144 = vmul.f32 %v981, %v1109
        %v1145 = vmul.f32 %v986, %v1109
        %v1146 = vmul.f32 %v989, %v1109
        %v1147 = vmul.f32 %v994, %v1109
        %v1148 = vmul.f32 %v997, %v1109
        %v1149 = vmul.f32 %v1002, %v1109
        %v1150 = vmul.f32 %v1005, %v1109
        %v1151 = vmul.f32 %v1010, %v1109
        %v1152 = vmul.f32 %v1013, %v1109
        %v1153 = vmul.f32 %v1018, %v1109
        %v1154 = vmul.f32 %v1021, %v1109
        %v1155 = vmul.f32 %v1026, %v1109
        %v1156 = vmul.f32 %v1029, %v1109
        %v1157 = vmul.f32 %v1034, %v1109
        %v1158 = vmul.f32 %v1037, %v1109
        %v1159 = vmul.f32 %v1042, %v1109
        %v1160 = vmul.f32 %v1045, %v1109
        %v1161 = vmul.f32 %v1050, %v1109
        %v1162 = vmul.f32 %v1053, %v1109
        %v1163 = vmul.f32 %v1058, %v1109
        %v1164 = vmul.f32 %v1061, %v1109
        %v1165 = vmul.f32 %v1066, %v1109
        %v1166 = vmul.f32 %v1069, %v1109
        %v1167 = vmul.f32 %v1074, %v1109
        %v1168 = vmul.f32 %v1077, %v1109
        %v1169 = vmul.f32 %v1082, %v1109
        %v1170 = vmul.f32 %v1085, %v1109
        %v1171 = vmul.f32 %v1090, %v1109
        %v1172 = vmul.f32 %v1093, %v1109
        %v1173 = vmul.f32 %v1098, %v1109
        %v1174 = vmul.f32 %v1101, %v1109
        %v1175 = vld [vmem:[%s3] sm:$0x1]
        %v1177 = vlaneseq
        %v1178 = vshrl.u32 %v1177, 7
        %v1179 = vsub.s32 0, %v1178
        %v1180 = vrot.slane %v1175, %v1179
        %v1182 = vadd.f32 %v1111, %v1180
        %v1183 = vadd.f32 %v1112, %v1180
        %v1184 = vadd.f32 %v1113, %v1180
        %v1185 = vadd.f32 %v1114, %v1180
        %v1186 = vadd.f32 %v1115, %v1180
        %v1187 = vadd.f32 %v1116, %v1180
        %v1188 = vadd.f32 %v1117, %v1180
        %v1189 = vadd.f32 %v1118, %v1180
        %v1190 = vadd.f32 %v1119, %v1180
        %v1191 = vadd.f32 %v1120, %v1180
        %v1192 = vadd.f32 %v1121, %v1180
        %v1193 = vadd.f32 %v1122, %v1180
        %v1194 = vadd.f32 %v1123, %v1180
        %v1195 = vadd.f32 %v1124, %v1180
        %v1196 = vadd.f32 %v1125, %v1180
        %v1197 = vadd.f32 %v1126, %v1180
        %v1198 = vadd.f32 %v1127, %v1180
        %v1199 = vadd.f32 %v1128, %v1180
        %v1200 = vadd.f32 %v1129, %v1180
        %v1201 = vadd.f32 %v1130, %v1180
        %v1202 = vadd.f32 %v1131, %v1180
        %v1203 = vadd.f32 %v1132, %v1180
        %v1204 = vadd.f32 %v1133, %v1180
        %v1205 = vadd.f32 %v1134, %v1180
        %v1206 = vadd.f32 %v1135, %v1180
        %v1207 = vadd.f32 %v1136, %v1180
        %v1208 = vadd.f32 %v1137, %v1180
        %v1209 = vadd.f32 %v1138, %v1180
        %v1210 = vadd.f32 %v1139, %v1180
        %v1211 = vadd.f32 %v1140, %v1180
        %v1212 = vadd.f32 %v1141, %v1180
        %v1213 = vadd.f32 %v1142, %v1180
        %v1214 = vadd.f32 %v1143, %v1180
        %v1215 = vadd.f32 %v1144, %v1180
        %v1216 = vadd.f32 %v1145, %v1180
        %v1217 = vadd.f32 %v1146, %v1180
        %v1218 = vadd.f32 %v1147, %v1180
        %v1219 = vadd.f32 %v1148, %v1180
        %v1220 = vadd.f32 %v1149, %v1180
        %v1221 = vadd.f32 %v1150, %v1180
        %v1222 = vadd.f32 %v1151, %v1180
        %v1223 = vadd.f32 %v1152, %v1180
        %v1224 = vadd.f32 %v1153, %v1180
        %v1225 = vadd.f32 %v1154, %v1180
        %v1226 = vadd.f32 %v1155, %v1180
        %v1227 = vadd.f32 %v1156, %v1180
        %v1228 = vadd.f32 %v1157, %v1180
        %v1229 = vadd.f32 %v1158, %v1180
        %v1230 = vadd.f32 %v1159, %v1180
        %v1231 = vadd.f32 %v1160, %v1180
        %v1232 = vadd.f32 %v1161, %v1180
        %v1233 = vadd.f32 %v1162, %v1180
        %v1234 = vadd.f32 %v1163, %v1180
        %v1235 = vadd.f32 %v1164, %v1180
        %v1236 = vadd.f32 %v1165, %v1180
        %v1237 = vadd.f32 %v1166, %v1180
        %v1238 = vadd.f32 %v1167, %v1180
        %v1239 = vadd.f32 %v1168, %v1180
        %v1240 = vadd.f32 %v1169, %v1180
        %v1241 = vadd.f32 %v1170, %v1180
        %v1242 = vadd.f32 %v1171, %v1180
        %v1243 = vadd.f32 %v1172, %v1180
        %v1244 = vadd.f32 %v1173, %v1180
        %v1245 = vadd.f32 %v1174, %v1180
        %vm1246 = vcmp.gt.f32.partialorder %v1182, 0.0
        %vm1247 = vcmp.gt.f32.partialorder %v1183, 0.0
        %vm1248 = vcmp.gt.f32.partialorder %v1184, 0.0
        %vm1249 = vcmp.gt.f32.partialorder %v1185, 0.0
        %vm1250 = vcmp.gt.f32.partialorder %v1186, 0.0
        %vm1251 = vcmp.gt.f32.partialorder %v1187, 0.0
        %vm1252 = vcmp.gt.f32.partialorder %v1188, 0.0
        %vm1253 = vcmp.gt.f32.partialorder %v1189, 0.0
        %vm1254 = vcmp.gt.f32.partialorder %v1190, 0.0
        %vm1255 = vcmp.gt.f32.partialorder %v1191, 0.0
        %vm1256 = vcmp.gt.f32.partialorder %v1192, 0.0
        %vm1257 = vcmp.gt.f32.partialorder %v1193, 0.0
        %vm1258 = vcmp.gt.f32.partialorder %v1194, 0.0
        %vm1259 = vcmp.gt.f32.partialorder %v1195, 0.0
        %vm1260 = vcmp.gt.f32.partialorder %v1196, 0.0
        %vm1261 = vcmp.gt.f32.partialorder %v1197, 0.0
        %vm1262 = vcmp.gt.f32.partialorder %v1198, 0.0
        %vm1263 = vcmp.gt.f32.partialorder %v1199, 0.0
        %vm1264 = vcmp.gt.f32.partialorder %v1200, 0.0
        %vm1265 = vcmp.gt.f32.partialorder %v1201, 0.0
        %vm1266 = vcmp.gt.f32.partialorder %v1202, 0.0
        %vm1267 = vcmp.gt.f32.partialorder %v1203, 0.0
        %vm1268 = vcmp.gt.f32.partialorder %v1204, 0.0
        %vm1269 = vcmp.gt.f32.partialorder %v1205, 0.0
        %vm1270 = vcmp.gt.f32.partialorder %v1206, 0.0
        %vm1271 = vcmp.gt.f32.partialorder %v1207, 0.0
        %vm1272 = vcmp.gt.f32.partialorder %v1208, 0.0
        %vm1273 = vcmp.gt.f32.partialorder %v1209, 0.0
        %vm1274 = vcmp.gt.f32.partialorder %v1210, 0.0
        %vm1275 = vcmp.gt.f32.partialorder %v1211, 0.0
        %vm1276 = vcmp.gt.f32.partialorder %v1212, 0.0
        %vm1277 = vcmp.gt.f32.partialorder %v1213, 0.0
        %vm1278 = vcmp.gt.f32.partialorder %v1214, 0.0
        %vm1279 = vcmp.gt.f32.partialorder %v1215, 0.0
        %vm1280 = vcmp.gt.f32.partialorder %v1216, 0.0
        %vm1281 = vcmp.gt.f32.partialorder %v1217, 0.0
        %vm1282 = vcmp.gt.f32.partialorder %v1218, 0.0
        %vm1283 = vcmp.gt.f32.partialorder %v1219, 0.0
        %vm1284 = vcmp.gt.f32.partialorder %v1220, 0.0
        %vm1285 = vcmp.gt.f32.partialorder %v1221, 0.0
        %vm1286 = vcmp.gt.f32.partialorder %v1222, 0.0
        %vm1287 = vcmp.gt.f32.partialorder %v1223, 0.0
        %vm1288 = vcmp.gt.f32.partialorder %v1224, 0.0
        %vm1289 = vcmp.gt.f32.partialorder %v1225, 0.0
        %vm1290 = vcmp.gt.f32.partialorder %v1226, 0.0
        %vm1291 = vcmp.gt.f32.partialorder %v1227, 0.0
        %vm1292 = vcmp.gt.f32.partialorder %v1228, 0.0
        %vm1293 = vcmp.gt.f32.partialorder %v1229, 0.0
        %vm1294 = vcmp.gt.f32.partialorder %v1230, 0.0
        %vm1295 = vcmp.gt.f32.partialorder %v1231, 0.0
        %vm1296 = vcmp.gt.f32.partialorder %v1232, 0.0
        %vm1297 = vcmp.gt.f32.partialorder %v1233, 0.0
        %vm1298 = vcmp.gt.f32.partialorder %v1234, 0.0
        %vm1299 = vcmp.gt.f32.partialorder %v1235, 0.0
        %vm1300 = vcmp.gt.f32.partialorder %v1236, 0.0
        %vm1301 = vcmp.gt.f32.partialorder %v1237, 0.0
        %vm1302 = vcmp.gt.f32.partialorder %v1238, 0.0
        %vm1303 = vcmp.gt.f32.partialorder %v1239, 0.0
        %vm1304 = vcmp.gt.f32.partialorder %v1240, 0.0
        %vm1305 = vcmp.gt.f32.partialorder %v1241, 0.0
        %vm1306 = vcmp.gt.f32.partialorder %v1242, 0.0
        %vm1307 = vcmp.gt.f32.partialorder %v1243, 0.0
        %vm1308 = vcmp.gt.f32.partialorder %v1244, 0.0
        %vm1309 = vcmp.gt.f32.partialorder %v1245, 0.0
        %v1310 = vmul.f32 %v1182, 0.2
        %v1311 = vmul.f32 %v1183, 0.2
        %v1312 = vmul.f32 %v1184, 0.2
        %v1313 = vmul.f32 %v1185, 0.2
        %v1314 = vmul.f32 %v1186, 0.2
        %v1315 = vmul.f32 %v1187, 0.2
        %v1316 = vmul.f32 %v1188, 0.2
        %v1317 = vmul.f32 %v1189, 0.2
        %v1318 = vmul.f32 %v1190, 0.2
        %v1319 = vmul.f32 %v1191, 0.2
        %v1320 = vmul.f32 %v1192, 0.2
        %v1321 = vmul.f32 %v1193, 0.2
        %v1322 = vmul.f32 %v1194, 0.2
        %v1323 = vmul.f32 %v1195, 0.2
        %v1324 = vmul.f32 %v1196, 0.2
        %v1325 = vmul.f32 %v1197, 0.2
        %v1326 = vmul.f32 %v1198, 0.2
        %v1327 = vmul.f32 %v1199, 0.2
        %v1328 = vmul.f32 %v1200, 0.2
        %v1329 = vmul.f32 %v1201, 0.2
        %v1330 = vmul.f32 %v1202, 0.2
        %v1331 = vmul.f32 %v1203, 0.2
        %v1332 = vmul.f32 %v1204, 0.2
        %v1333 = vmul.f32 %v1205, 0.2
        %v1334 = vmul.f32 %v1206, 0.2
        %v1335 = vmul.f32 %v1207, 0.2
        %v1336 = vmul.f32 %v1208, 0.2
        %v1337 = vmul.f32 %v1209, 0.2
        %v1338 = vmul.f32 %v1210, 0.2
        %v1339 = vmul.f32 %v1211, 0.2
        %v1340 = vmul.f32 %v1212, 0.2
        %v1341 = vmul.f32 %v1213, 0.2
        %v1342 = vmul.f32 %v1214, 0.2
        %v1343 = vmul.f32 %v1215, 0.2
        %v1344 = vmul.f32 %v1216, 0.2
        %v1345 = vmul.f32 %v1217, 0.2
        %v1346 = vmul.f32 %v1218, 0.2
        %v1347 = vmul.f32 %v1219, 0.2
        %v1348 = vmul.f32 %v1220, 0.2
        %v1349 = vmul.f32 %v1221, 0.2
        %v1350 = vmul.f32 %v1222, 0.2
        %v1351 = vmul.f32 %v1223, 0.2
        %v1352 = vmul.f32 %v1224, 0.2
        %v1353 = vmul.f32 %v1225, 0.2
        %v1354 = vmul.f32 %v1226, 0.2
        %v1355 = vmul.f32 %v1227, 0.2
        %v1356 = vmul.f32 %v1228, 0.2
        %v1357 = vmul.f32 %v1229, 0.2
        %v1358 = vmul.f32 %v1230, 0.2
        %v1359 = vmul.f32 %v1231, 0.2
        %v1360 = vmul.f32 %v1232, 0.2
        %v1361 = vmul.f32 %v1233, 0.2
        %v1362 = vmul.f32 %v1234, 0.2
        %v1363 = vmul.f32 %v1235, 0.2
        %v1364 = vmul.f32 %v1236, 0.2
        %v1365 = vmul.f32 %v1237, 0.2
        %v1366 = vmul.f32 %v1238, 0.2
        %v1367 = vmul.f32 %v1239, 0.2
        %v1368 = vmul.f32 %v1240, 0.2
        %v1369 = vmul.f32 %v1241, 0.2
        %v1370 = vmul.f32 %v1242, 0.2
        %v1371 = vmul.f32 %v1243, 0.2
        %v1372 = vmul.f32 %v1244, 0.2
        %v1373 = vmul.f32 %v1245, 0.2
        %v1374 = vsel %vm1246, %v1182, %v1310
        %v1375 = vsel %vm1247, %v1183, %v1311
        %v1376 = vsel %vm1248, %v1184, %v1312
        %v1377 = vsel %vm1249, %v1185, %v1313
        %v1378 = vsel %vm1250, %v1186, %v1314
        %v1379 = vsel %vm1251, %v1187, %v1315
        %v1380 = vsel %vm1252, %v1188, %v1316
        %v1381 = vsel %vm1253, %v1189, %v1317
        %v1382 = vsel %vm1254, %v1190, %v1318
        %v1383 = vsel %vm1255, %v1191, %v1319
        %v1384 = vsel %vm1256, %v1192, %v1320
        %v1385 = vsel %vm1257, %v1193, %v1321
        %v1386 = vsel %vm1258, %v1194, %v1322
        %v1387 = vsel %vm1259, %v1195, %v1323
        %v1388 = vsel %vm1260, %v1196, %v1324
        %v1389 = vsel %vm1261, %v1197, %v1325
        %v1390 = vsel %vm1262, %v1198, %v1326
        %v1391 = vsel %vm1263, %v1199, %v1327
        %v1392 = vsel %vm1264, %v1200, %v1328
        %v1393 = vsel %vm1265, %v1201, %v1329
        %v1394 = vsel %vm1266, %v1202, %v1330
        %v1395 = vsel %vm1267, %v1203, %v1331
        %v1396 = vsel %vm1268, %v1204, %v1332
        %v1397 = vsel %vm1269, %v1205, %v1333
        %v1398 = vsel %vm1270, %v1206, %v1334
        %v1399 = vsel %vm1271, %v1207, %v1335
        %v1400 = vsel %vm1272, %v1208, %v1336
        %v1401 = vsel %vm1273, %v1209, %v1337
        %v1402 = vsel %vm1274, %v1210, %v1338
        %v1403 = vsel %vm1275, %v1211, %v1339
        %v1404 = vsel %vm1276, %v1212, %v1340
        %v1405 = vsel %vm1277, %v1213, %v1341
        %v1406 = vsel %vm1278, %v1214, %v1342
        %v1407 = vsel %vm1279, %v1215, %v1343
        %v1408 = vsel %vm1280, %v1216, %v1344
        %v1409 = vsel %vm1281, %v1217, %v1345
        %v1410 = vsel %vm1282, %v1218, %v1346
        %v1411 = vsel %vm1283, %v1219, %v1347
        %v1412 = vsel %vm1284, %v1220, %v1348
        %v1413 = vsel %vm1285, %v1221, %v1349
        %v1414 = vsel %vm1286, %v1222, %v1350
        %v1415 = vsel %vm1287, %v1223, %v1351
        %v1416 = vsel %vm1288, %v1224, %v1352
        %v1417 = vsel %vm1289, %v1225, %v1353
        %v1418 = vsel %vm1290, %v1226, %v1354
        %v1419 = vsel %vm1291, %v1227, %v1355
        %v1420 = vsel %vm1292, %v1228, %v1356
        %v1421 = vsel %vm1293, %v1229, %v1357
        %v1422 = vsel %vm1294, %v1230, %v1358
        %v1423 = vsel %vm1295, %v1231, %v1359
        %v1424 = vsel %vm1296, %v1232, %v1360
        %v1425 = vsel %vm1297, %v1233, %v1361
        %v1426 = vsel %vm1298, %v1234, %v1362
        %v1427 = vsel %vm1299, %v1235, %v1363
        %v1428 = vsel %vm1300, %v1236, %v1364
        %v1429 = vsel %vm1301, %v1237, %v1365
        %v1430 = vsel %vm1302, %v1238, %v1366
        %v1431 = vsel %vm1303, %v1239, %v1367
        %v1432 = vsel %vm1304, %v1240, %v1368
        %v1433 = vsel %vm1305, %v1241, %v1369
        %v1434 = vsel %vm1306, %v1242, %v1370
        %v1435 = vsel %vm1307, %v1243, %v1371
        %v1436 = vsel %vm1308, %v1244, %v1372
        %v1437 = vsel %vm1309, %v1245, %v1373
        %v1438 = vmax.f32 %v1374, %v1382
        %v1439 = vmax.f32 %v1438, %v1390
        %v1440 = vmax.f32 %v1439, %v1398
        %v1441 = vmax.f32 %v1440, %v1406
        %v1442 = vmax.f32 %v1441, %v1414
        %v1443 = vmax.f32 %v1442, %v1422
        %v1444 = vmax.f32 %v1443, %v1430
        %v1445 = vmax.f32 %v1375, %v1383
        %v1446 = vmax.f32 %v1445, %v1391
        %v1447 = vmax.f32 %v1446, %v1399
        %v1448 = vmax.f32 %v1447, %v1407
        %v1449 = vmax.f32 %v1448, %v1415
        %v1450 = vmax.f32 %v1449, %v1423
        %v1451 = vmax.f32 %v1450, %v1431
        %v1452 = vmax.f32 %v1376, %v1384
        %v1453 = vmax.f32 %v1452, %v1392
        %v1454 = vmax.f32 %v1453, %v1400
        %v1455 = vmax.f32 %v1454, %v1408
        %v1456 = vmax.f32 %v1455, %v1416
        %v1457 = vmax.f32 %v1456, %v1424
        %v1458 = vmax.f32 %v1457, %v1432
        %v1459 = vmax.f32 %v1377, %v1385
        %v1460 = vmax.f32 %v1459, %v1393
        %v1461 = vmax.f32 %v1460, %v1401
        %v1462 = vmax.f32 %v1461, %v1409
        %v1463 = vmax.f32 %v1462, %v1417
        %v1464 = vmax.f32 %v1463, %v1425
        %v1465 = vmax.f32 %v1464, %v1433
        %v1466 = vmax.f32 %v1378, %v1386
        %v1467 = vmax.f32 %v1466, %v1394
        %v1468 = vmax.f32 %v1467, %v1402
        %v1469 = vmax.f32 %v1468, %v1410
        %v1470 = vmax.f32 %v1469, %v1418
        %v1471 = vmax.f32 %v1470, %v1426
        %v1472 = vmax.f32 %v1471, %v1434
        %v1473 = vmax.f32 %v1379, %v1387
        %v1474 = vmax.f32 %v1473, %v1395
        %v1475 = vmax.f32 %v1474, %v1403
        %v1476 = vmax.f32 %v1475, %v1411
        %v1477 = vmax.f32 %v1476, %v1419
        %v1478 = vmax.f32 %v1477, %v1427
        %v1479 = vmax.f32 %v1478, %v1435
        %v1480 = vmax.f32 %v1380, %v1388
        %v1481 = vmax.f32 %v1480, %v1396
        %v1482 = vmax.f32 %v1481, %v1404
        %v1483 = vmax.f32 %v1482, %v1412
        %v1484 = vmax.f32 %v1483, %v1420
        %v1485 = vmax.f32 %v1484, %v1428
        %v1486 = vmax.f32 %v1485, %v1436
        %v1487 = vmax.f32 %v1381, %v1389
        %v1488 = vmax.f32 %v1487, %v1397
        %v1489 = vmax.f32 %v1488, %v1405
        %v1490 = vmax.f32 %v1489, %v1413
        %v1491 = vmax.f32 %v1490, %v1421
        %v1492 = vmax.f32 %v1491, %v1429
        %v1493 = vmax.f32 %v1492, %v1437
        %1494 = vst [vmem:[%s492] sm:$0xff] %v1444
        %1495 = vst [vmem:[%s492 + $0x8] sm:$0xff] %v1451
        %1496 = vst [vmem:[%s492 + $0x10] sm:$0xff] %v1458
        %1497 = vst [vmem:[%s492 + $0x18] sm:$0xff] %v1465
        %1498 = vst [vmem:[%s492 + $0x20] sm:$0xff] %v1472
        %1499 = vst [vmem:[%s492 + $0x28] sm:$0xff] %v1479
        %1500 = vst [vmem:[%s492 + $0x30] sm:$0xff] %v1486
        %1501 = vst [vmem:[%s492 + $0x38] sm:$0xff] %v1493
        %s1502 = smul.u32 8, %s15
        %p1503 = scmp.lt.s32.totalorder %s1502, 15
        %s1504 = scalar_select %p1503, %s1502, 15
        %s1505 = smul.addr %s1504, 8
        %s1506 = scalar_lea.vmem %s4, %s1505
        // Predicated region
        $region78: #{grasp_evaluator2_forward.6} parent=72 // pred_check
          %p1507 = pneg %p122
        $region79: #{grasp_evaluator2_forward.6} parent=72 // pred_check_branch
          %1509 = sbr.rel (%p1507) target = $region81
        $region80: #{grasp_evaluator2_forward.6} parent=72 // pred_region
          %s1510 = smul.u32 8, %s15
        $region81: #{grasp_evaluator2_forward.6} parent=72 // pred_fallthru
          _
      $region73: #{grasp_evaluator2_forward.6} parent=5 // pred_fallthru
        _
      %p1511 = scmp.le.s32.totalorder 2, %s10
      // Predicated region
      $region82: #{grasp_evaluator2_forward.6} parent=5 // pred_check
        %p1512 = pneg %p1511
      $region83: #{grasp_evaluator2_forward.6} parent=5 // pred_check_branch
        %1514 = sbr.rel (%p1512) target = $region85
      $region84: #{grasp_evaluator2_forward.6} parent=5 // pred_region
        %s1515 = ssub.s32 %s10, 2
        // Predicated region
        $region86: #{grasp_evaluator2_forward.6} parent=84 // pred_check
          %p1516 = pneg %p128
        $region87: #{grasp_evaluator2_forward.6} parent=84 // pred_check_branch
          %1518 = sbr.rel (%p1516) target = $region89
        $region88: #{grasp_evaluator2_forward.6} parent=84 // pred_region
          %s1519 = smul.u32 8, %s16
          %p1520 = scmp.lt.s32.totalorder %s1519, 15
          %s1521 = scalar_select %p1520, %s1519, 15
          %s1522 = smul.addr %s1521, 8
          %s1523 = scalar_lea.vmem %s4, %s1522
        $region89: #{grasp_evaluator2_forward.6} parent=84 // pred_fallthru
          _
      $region85: #{grasp_evaluator2_forward.6} parent=5 // pred_fallthru
        _
    $region6: #{grasp_evaluator2_forward.6} parent=1 // loop_footer
      %s14 = sadd.s32 1, %s10
    $region7: #{grasp_evaluator2_forward.6} parent=1 // loop_footer_branch
      %9 = sbr.rel target = $region3
    $region8: #{grasp_evaluator2_forward.6} parent=1 // loop_exit
      _

// kernel: grasp_evaluator2_forward.8
$region0: #{grasp_evaluator2_forward.8}
  #allocation0 [shape = 'u32[]', space=smem, size = 0x4, offset = 0x4, fixed_abs, tag = 'smem constant byte address 0x4 - core index']
  #allocation1 [shape = 'u32[144,128]{1,0:T(1,128)}', space=vmem, size = 0x12000, scoped, tag = 'internal scratch']
  %s0 = inlined_call_operand.vmem [shape: bf16[8,128,256], index: 0, kind: input, shape index: {}]
  %s1 = inlined_call_operand.vmem [shape: bf16[256,256], index: 1, kind: input, shape index: {}]
  %s2 = inlined_call_operand.vmem [shape: f32[1,256], index: 2, kind: input, shape index: {}]
  %s3 = inlined_call_operand.vmem [shape: f32[1,256], index: 3, kind: input, shape index: {}]
  %s4 = inlined_call_operand.vmem [shape: f32[128,256], index: 4, kind: output, shape index: {}]
  %s5 = sld [smem:[#allocation0]]
  $region87: #{grasp_evaluator2_forward.8} parent=0
    _
  %s7 = ssub.s32 1, %s5
  %s8 = scalar_select 0, %s7, %s5
  $region1: #{grasp_evaluator2_forward.8} parent=0
    #allocation2 [shape = 'u8[524288]{0}', space=vmem, size = 0x80000, scoped, tag = 'input window, operand 0']
    loop: start=0, step=1, limit=4
    $region2: #{grasp_evaluator2_forward.8} parent=1 // loop_pre_header
      _
    $region3: #{grasp_evaluator2_forward.8} parent=1 // loop_header
      %s10 = sphi 0, %s14
      %p11 = scmp.ge.s32.totalorder %s10, 4
      %s20 = sphi 0, %s22
      %s23 = sphi 0, %s20
      %s24 = sphi 0, %s23
      %s40 = sphi 0, %s24
      %s44 = sphi 0, %s44
      %s46 = sphi 0, %s44
      %s47 = sphi 0, %s46
      %s61 = sphi 0, %s47
      %s65 = sphi 0, %s65
      %s67 = sphi 0, %s65
      %s68 = sphi 0, %s67
      %s82 = sphi 0, %s68
      %s86 = sphi 0, %s86
      %s88 = sphi 0, %s86
      %s89 = sphi 0, %s88
      %s103 = sphi 0, %s89
      %s109 = sphi 0, %s111
      %s112 = sphi 0, %s109
      %s113 = sphi 0, %s112
      %s129 = sphi 0, %s113
    $region4: #{grasp_evaluator2_forward.8} parent=1 // loop_header_branch
      %13 = sbr.rel (%p11) target = $region8
    $region5: #{grasp_evaluator2_forward.8} parent=1 // loop_body
      %s15 = ssub.s32 %s10, 1
      %s16 = ssub.s32 %s10, 2
      %s17 = sadd.s32 %s10, 1
      %s18 = ssub.s32 %s10, %s17
      %p19 = scmp.eq.s32.totalorder %s18, 0
      %s21 = sadd.s32 %s20, 1
      %s22 = scalar_select %p19, %s20, %s21
      %p25 = pneg %p19
      %p26 = scmp.eq.s32.totalorder %s10, 1
      %p27 = por %p25, %p26
      %p28 = scmp.ne.s32.totalorder %s20, %s23
      %p29 = scmp.eq.s32.totalorder %s10, 0
      %p30 = por %p28, %p29
      %p31 = scmp.ne.s32.totalorder %s20, %s23
      %p32 = scmp.eq.s32.totalorder %s15, 1
      %p33 = por %p31, %p32
      %p34 = scmp.ne.s32.totalorder %s23, %s24
      %p35 = scmp.eq.s32.totalorder %s15, 0
      %p36 = por %p34, %p35
      %p37 = scmp.ne.s32.totalorder %s23, %s24
      %p38 = scmp.eq.s32.totalorder %s16, 1
      %p39 = por %p37, %p38
      %p41 = scmp.ne.s32.totalorder %s24, %s40
      %p42 = scmp.eq.s32.totalorder %s16, 0
      %p43 = por %p41, %p42
      %s45 = sadd.s32 %s44, 1
      %p48 = scmp.eq.s32.totalorder %s10, 1
      %p49 = scmp.ne.s32.totalorder %s44, %s46
      %p50 = scmp.eq.s32.totalorder %s10, 0
      %p51 = por %p49, %p50
      %p52 = scmp.ne.s32.totalorder %s44, %s46
      %p53 = scmp.eq.s32.totalorder %s15, 1
      %p54 = por %p52, %p53
      %p55 = scmp.ne.s32.totalorder %s46, %s47
      %p56 = scmp.eq.s32.totalorder %s15, 0
      %p57 = por %p55, %p56
      %p58 = scmp.ne.s32.totalorder %s46, %s47
      %p59 = scmp.eq.s32.totalorder %s16, 1
      %p60 = por %p58, %p59
      %p62 = scmp.ne.s32.totalorder %s47, %s61
      %p63 = scmp.eq.s32.totalorder %s16, 0
      %p64 = por %p62, %p63
      %s66 = sadd.s32 %s65, 1
      %p69 = scmp.eq.s32.totalorder %s10, 1
      %p70 = scmp.ne.s32.totalorder %s65, %s67
      %p71 = scmp.eq.s32.totalorder %s10, 0
      %p72 = por %p70, %p71
      %p73 = scmp.ne.s32.totalorder %s65, %s67
      %p74 = scmp.eq.s32.totalorder %s15, 1
      %p75 = por %p73, %p74
      %p76 = scmp.ne.s32.totalorder %s67, %s68
      %p77 = scmp.eq.s32.totalorder %s15, 0
      %p78 = por %p76, %p77
      %p79 = scmp.ne.s32.totalorder %s67, %s68
      %p80 = scmp.eq.s32.totalorder %s16, 1
      %p81 = por %p79, %p80
      %p83 = scmp.ne.s32.totalorder %s68, %s82
      %p84 = scmp.eq.s32.totalorder %s16, 0
      %p85 = por %p83, %p84
      %s87 = sadd.s32 %s86, 1
      %p90 = scmp.eq.s32.totalorder %s10, 1
      %p91 = scmp.ne.s32.totalorder %s86, %s88
      %p92 = scmp.eq.s32.totalorder %s10, 0
      %p93 = por %p91, %p92
      %p94 = scmp.ne.s32.totalorder %s86, %s88
      %p95 = scmp.eq.s32.totalorder %s15, 1
      %p96 = por %p94, %p95
      %p97 = scmp.ne.s32.totalorder %s88, %s89
      %p98 = scmp.eq.s32.totalorder %s15, 0
      %p99 = por %p97, %p98
      %p100 = scmp.ne.s32.totalorder %s88, %s89
      %p101 = scmp.eq.s32.totalorder %s16, 1
      %p102 = por %p100, %p101
      %p104 = scmp.ne.s32.totalorder %s89, %s103
      %p105 = scmp.eq.s32.totalorder %s16, 0
      %p106 = por %p104, %p105
      %s107 = ssub.s32 %s10, %s17
      %p108 = scmp.eq.s32.totalorder %s107, 0
      %s110 = sadd.s32 %s109, 1
      %s111 = scalar_select %p108, %s109, %s110
      %p114 = pneg %p108
      %p115 = scmp.eq.s32.totalorder %s10, 1
      %p116 = por %p114, %p115
      %p117 = scmp.ne.s32.totalorder %s109, %s112
      %p118 = scmp.eq.s32.totalorder %s10, 0
      %p119 = por %p117, %p118
      %p120 = scmp.ne.s32.totalorder %s109, %s112
      %p121 = scmp.eq.s32.totalorder %s15, 1
      %p122 = por %p120, %p121
      %p123 = scmp.ne.s32.totalorder %s112, %s113
      %p124 = scmp.eq.s32.totalorder %s15, 0
      %p125 = por %p123, %p124
      %p126 = scmp.ne.s32.totalorder %s112, %s113
      %p127 = scmp.eq.s32.totalorder %s16, 1
      %p128 = por %p126, %p127
      %p130 = scmp.ne.s32.totalorder %s113, %s129
      %p131 = scmp.eq.s32.totalorder %s16, 0
      %p132 = por %p130, %p131
      %p133 = scmp.le.s32.totalorder 1, %s10
      %p134 = scmp.lt.s32.totalorder %s10, 3
      %p135 = pnand %p133, %p134
      %p136 = pneg %p135
      // Predicated region
      $region9: #{grasp_evaluator2_forward.8} parent=5 // pred_check
        _
      $region10: #{grasp_evaluator2_forward.8} parent=5 // pred_check_branch
        %138 = sbr.rel (%p135) target = $region12
      $region11: #{grasp_evaluator2_forward.8} parent=5 // pred_region
        %s139 = ssub.s32 %s10, 1
        // Predicated region
        $region13: #{grasp_evaluator2_forward.8} parent=11 // pred_check
          %p140 = pneg %p57
        $region14: #{grasp_evaluator2_forward.8} parent=11 // pred_check_branch
          %142 = sbr.rel (%p140) target = $region16
        $region15: #{grasp_evaluator2_forward.8} parent=11 // pred_region
          _
        $region16: #{grasp_evaluator2_forward.8} parent=11 // pred_fallthru
          _
        // Predicated region
        $region17: #{grasp_evaluator2_forward.8} parent=11 // pred_check
          %p143 = pneg %p78
        $region18: #{grasp_evaluator2_forward.8} parent=11 // pred_check_branch
          %145 = sbr.rel (%p143) target = $region20
        $region19: #{grasp_evaluator2_forward.8} parent=11 // pred_region
          _
        $region20: #{grasp_evaluator2_forward.8} parent=11 // pred_fallthru
          _
        // Predicated region
        $region21: #{grasp_evaluator2_forward.8} parent=11 // pred_check
          %p146 = pneg %p99
        $region22: #{grasp_evaluator2_forward.8} parent=11 // pred_check_branch
          %148 = sbr.rel (%p146) target = $region24
        $region23: #{grasp_evaluator2_forward.8} parent=11 // pred_region
          _
        $region24: #{grasp_evaluator2_forward.8} parent=11 // pred_fallthru
          _
      $region12: #{grasp_evaluator2_forward.8} parent=5 // pred_fallthru
        _
      %p149 = scmp.lt.s32.totalorder %s10, 2
      // Predicated region
      $region25: #{grasp_evaluator2_forward.8} parent=5 // pred_check
        %p150 = pneg %p149
      $region26: #{grasp_evaluator2_forward.8} parent=5 // pred_check_branch
        %152 = sbr.rel (%p150) target = $region28
      $region27: #{grasp_evaluator2_forward.8} parent=5 // pred_region
        // Predicated region
        $region29: #{grasp_evaluator2_forward.8} parent=27 // pred_check
          %p153 = pneg %p30
        $region30: #{grasp_evaluator2_forward.8} parent=27 // pred_check_branch
          %155 = sbr.rel (%p153) target = $region32
        $region31: #{grasp_evaluator2_forward.8} parent=27 // pred_region
          %s156 = sand.u32 %s20, 1
          %s157 = sand.u32 %s20, 1
          %s158 = smul.addr %s157, 512
          %s159 = scalar_lea.vmem [#allocation2], %s158
          %s160 = smul.u32 8, %s10
          %s161 = smul.addr %s160, 2
          %s162 = smul.addr %s161, 4
          %s163 = scalar_lea.vmem %s0, %s162
          // Predicated region
          $region33: #{grasp_evaluator2_forward.8} parent=31 // pred_check
            _
          $region34: #{grasp_evaluator2_forward.8} parent=31 // pred_check_branch
            %165 = sbr.rel (0) target = $region36
          $region35: #{grasp_evaluator2_forward.8} parent=31 // pred_region
            // Predicated region
            $region37: #{grasp_evaluator2_forward.8} parent=35 // pred_check
              _
            $region38: #{grasp_evaluator2_forward.8} parent=35 // pred_check_branch
              %167 = sbr.rel (0) target = $region40
            $region39: #{grasp_evaluator2_forward.8} parent=35 // pred_region
              // Predicated region
              $region52: #{grasp_evaluator2_forward.8} parent=39 // pred_check
                _
              $region53: #{grasp_evaluator2_forward.8} parent=39 // pred_check_branch
                %308 = sbr.rel (0) target = $region55
              $region54: #{grasp_evaluator2_forward.8} parent=39 // pred_region
                loop: start=0, step=1, limit=1
                $region56: #{grasp_evaluator2_forward.8} parent=54 // loop_pre_header
                  _
                $region57: #{grasp_evaluator2_forward.8} parent=54 // loop_header
                  %s310 = sphi 0, %s314
                  %p311 = scmp.ge.s32.totalorder %s310, 1
                  %s315 = sphi %s163, %s163
                  %s316 = sphi %s159, %s159
                $region58: #{grasp_evaluator2_forward.8} parent=54 // loop_header_branch
                  %313 = sbr.rel (%p311) target = $region62
                $region59: #{grasp_evaluator2_forward.8} parent=54 // loop_body
                  %v317 = vld [vmem:[%s315] sm:$0xff]
                  %318 = vst [vmem:[%s316] sm:$0xff] %v317
                  %v319 = vld [vmem:[%s315 + $0x8] sm:$0xff]
                  %320 = vst [vmem:[%s316 + $0x8] sm:$0xff] %v319
                  %v321 = vld [vmem:[%s315 + $0x10] sm:$0xff]
                  %322 = vst [vmem:[%s316 + $0x10] sm:$0xff] %v321
                  %v323 = vld [vmem:[%s315 + $0x18] sm:$0xff]
                  %324 = vst [vmem:[%s316 + $0x18] sm:$0xff] %v323
                  %v325 = vld [vmem:[%s315 + $0x20] sm:$0xff]
                  %326 = vst [vmem:[%s316 + $0x20] sm:$0xff] %v325
                  %v327 = vld [vmem:[%s315 + $0x28] sm:$0xff]
                  %328 = vst [vmem:[%s316 + $0x28] sm:$0xff] %v327
                  %v329 = vld [vmem:[%s315 + $0x30] sm:$0xff]
                  %330 = vst [vmem:[%s316 + $0x30] sm:$0xff] %v329
                  %v331 = vld [vmem:[%s315 + $0x38] sm:$0xff]
                  %332 = vst [vmem:[%s316 + $0x38] sm:$0xff] %v331
                  %v333 = vld [vmem:[%s315 + $0x80] sm:$0xff]
                  %334 = vst [vmem:[%s316 + $0x40] sm:$0xff] %v333
                  %v335 = vld [vmem:[%s315 + $0x88] sm:$0xff]
                  %336 = vst [vmem:[%s316 + $0x48] sm:$0xff] %v335
                  %v337 = vld [vmem:[%s315 + $0x90] sm:$0xff]
                  %338 = vst [vmem:[%s316 + $0x50] sm:$0xff] %v337
                  %v339 = vld [vmem:[%s315 + $0x98] sm:$0xff]
                  %340 = vst [vmem:[%s316 + $0x58] sm:$0xff] %v339
                  %v341 = vld [vmem:[%s315 + $0xa0] sm:$0xff]
                  %342 = vst [vmem:[%s316 + $0x60] sm:$0xff] %v341
                  %v343 = vld [vmem:[%s315 + $0xa8] sm:$0xff]
                  %344 = vst [vmem:[%s316 + $0x68] sm:$0xff] %v343
                  %v345 = vld [vmem:[%s315 + $0xb0] sm:$0xff]
                  %346 = vst [vmem:[%s316 + $0x70] sm:$0xff] %v345
                  %v347 = vld [vmem:[%s315 + $0xb8] sm:$0xff]
                  %348 = vst [vmem:[%s316 + $0x78] sm:$0xff] %v347
                  %v349 = vld [vmem:[%s315 + $0x100] sm:$0xff]
                  %350 = vst [vmem:[%s316 + $0x80] sm:$0xff] %v349
                  %v351 = vld [vmem:[%s315 + $0x108] sm:$0xff]
                  %352 = vst [vmem:[%s316 + $0x88] sm:$0xff] %v351
                  %v353 = vld [vmem:[%s315 + $0x110] sm:$0xff]
                  %354 = vst [vmem:[%s316 + $0x90] sm:$0xff] %v353
                  %v355 = vld [vmem:[%s315 + $0x118] sm:$0xff]
                  %356 = vst [vmem:[%s316 + $0x98] sm:$0xff] %v355
                  %v357 = vld [vmem:[%s315 + $0x120] sm:$0xff]
                  %358 = vst [vmem:[%s316 + $0xa0] sm:$0xff] %v357
                  %v359 = vld [vmem:[%s315 + $0x128] sm:$0xff]
                  %360 = vst [vmem:[%s316 + $0xa8] sm:$0xff] %v359
                  %v361 = vld [vmem:[%s315 + $0x130] sm:$0xff]
                  %362 = vst [vmem:[%s316 + $0xb0] sm:$0xff] %v361
                  %v363 = vld [vmem:[%s315 + $0x138] sm:$0xff]
                  %364 = vst [vmem:[%s316 + $0xb8] sm:$0xff] %v363
                  %v365 = vld [vmem:[%s315 + $0x180] sm:$0xff]
                  %366 = vst [vmem:[%s316 + $0xc0] sm:$0xff] %v365
                  %v367 = vld [vmem:[%s315 + $0x188] sm:$0xff]
                  %368 = vst [vmem:[%s316 + $0xc8] sm:$0xff] %v367
                  %v369 = vld [vmem:[%s315 + $0x190] sm:$0xff]
                  %370 = vst [vmem:[%s316 + $0xd0] sm:$0xff] %v369
                  %v371 = vld [vmem:[%s315 + $0x198] sm:$0xff]
                  %372 = vst [vmem:[%s316 + $0xd8] sm:$0xff] %v371
                  %v373 = vld [vmem:[%s315 + $0x1a0] sm:$0xff]
                  %374 = vst [vmem:[%s316 + $0xe0] sm:$0xff] %v373
                  %v375 = vld [vmem:[%s315 + $0x1a8] sm:$0xff]
                  %376 = vst [vmem:[%s316 + $0xe8] sm:$0xff] %v375
                  %v377 = vld [vmem:[%s315 + $0x1b0] sm:$0xff]
                  %378 = vst [vmem:[%s316 + $0xf0] sm:$0xff] %v377
                  %v379 = vld [vmem:[%s315 + $0x1b8] sm:$0xff]
                  %380 = vst [vmem:[%s316 + $0xf8] sm:$0xff] %v379
                  %v381 = vld [vmem:[%s315 + $0x200] sm:$0xff]
                  %382 = vst [vmem:[%s316 + $0x100] sm:$0xff] %v381
                  %v383 = vld [vmem:[%s315 + $0x208] sm:$0xff]
                  %384 = vst [vmem:[%s316 + $0x108] sm:$0xff] %v383
                  %v385 = vld [vmem:[%s315 + $0x210] sm:$0xff]
                  %386 = vst [vmem:[%s316 + $0x110] sm:$0xff] %v385
                  %v387 = vld [vmem:[%s315 + $0x218] sm:$0xff]
                  %388 = vst [vmem:[%s316 + $0x118] sm:$0xff] %v387
                  %v389 = vld [vmem:[%s315 + $0x220] sm:$0xff]
                  %390 = vst [vmem:[%s316 + $0x120] sm:$0xff] %v389
                  %v391 = vld [vmem:[%s315 + $0x228] sm:$0xff]
                  %392 = vst [vmem:[%s316 + $0x128] sm:$0xff] %v391
                  %v393 = vld [vmem:[%s315 + $0x230] sm:$0xff]
                  %394 = vst [vmem:[%s316 + $0x130] sm:$0xff] %v393
                  %v395 = vld [vmem:[%s315 + $0x238] sm:$0xff]
                  %396 = vst [vmem:[%s316 + $0x138] sm:$0xff] %v395
                  %v397 = vld [vmem:[%s315 + $0x280] sm:$0xff]
                  %398 = vst [vmem:[%s316 + $0x140] sm:$0xff] %v397
                  %v399 = vld [vmem:[%s315 + $0x288] sm:$0xff]
                  %400 = vst [vmem:[%s316 + $0x148] sm:$0xff] %v399
                  %v401 = vld [vmem:[%s315 + $0x290] sm:$0xff]
                  %402 = vst [vmem:[%s316 + $0x150] sm:$0xff] %v401
                  %v403 = vld [vmem:[%s315 + $0x298] sm:$0xff]
                  %404 = vst [vmem:[%s316 + $0x158] sm:$0xff] %v403
                  %v405 = vld [vmem:[%s315 + $0x2a0] sm:$0xff]
                  %406 = vst [vmem:[%s316 + $0x160] sm:$0xff] %v405
                  %v407 = vld [vmem:[%s315 + $0x2a8] sm:$0xff]
                  %408 = vst [vmem:[%s316 + $0x168] sm:$0xff] %v407
                  %v409 = vld [vmem:[%s315 + $0x2b0] sm:$0xff]
                  %410 = vst [vmem:[%s316 + $0x170] sm:$0xff] %v409
                  %v411 = vld [vmem:[%s315 + $0x2b8] sm:$0xff]
                  %412 = vst [vmem:[%s316 + $0x178] sm:$0xff] %v411
                  %v413 = vld [vmem:[%s315 + $0x300] sm:$0xff]
                  %414 = vst [vmem:[%s316 + $0x180] sm:$0xff] %v413
                  %v415 = vld [vmem:[%s315 + $0x308] sm:$0xff]
                  %416 = vst [vmem:[%s316 + $0x188] sm:$0xff] %v415
                  %v417 = vld [vmem:[%s315 + $0x310] sm:$0xff]
                  %418 = vst [vmem:[%s316 + $0x190] sm:$0xff] %v417
                  %v419 = vld [vmem:[%s315 + $0x318] sm:$0xff]
                  %420 = vst [vmem:[%s316 + $0x198] sm:$0xff] %v419
                  %v421 = vld [vmem:[%s315 + $0x320] sm:$0xff]
                  %422 = vst [vmem:[%s316 + $0x1a0] sm:$0xff] %v421
                  %v423 = vld [vmem:[%s315 + $0x328] sm:$0xff]
                  %424 = vst [vmem:[%s316 + $0x1a8] sm:$0xff] %v423
                  %v425 = vld [vmem:[%s315 + $0x330] sm:$0xff]
                  %426 = vst [vmem:[%s316 + $0x1b0] sm:$0xff] %v425
                  %v427 = vld [vmem:[%s315 + $0x338] sm:$0xff]
                  %428 = vst [vmem:[%s316 + $0x1b8] sm:$0xff] %v427
                  %v429 = vld [vmem:[%s315 + $0x380] sm:$0xff]
                  %430 = vst [vmem:[%s316 + $0x1c0] sm:$0xff] %v429
                  %v431 = vld [vmem:[%s315 + $0x388] sm:$0xff]
                  %432 = vst [vmem:[%s316 + $0x1c8] sm:$0xff] %v431
                  %v433 = vld [vmem:[%s315 + $0x390] sm:$0xff]
                  %434 = vst [vmem:[%s316 + $0x1d0] sm:$0xff] %v433
                  %v435 = vld [vmem:[%s315 + $0x398] sm:$0xff]
                  %436 = vst [vmem:[%s316 + $0x1d8] sm:$0xff] %v435
                  %v437 = vld [vmem:[%s315 + $0x3a0] sm:$0xff]
                  %438 = vst [vmem:[%s316 + $0x1e0] sm:$0xff] %v437
                  %v439 = vld [vmem:[%s315 + $0x3a8] sm:$0xff]
                  %440 = vst [vmem:[%s316 + $0x1e8] sm:$0xff] %v439
                  %v441 = vld [vmem:[%s315 + $0x3b0] sm:$0xff]
                  %442 = vst [vmem:[%s316 + $0x1f0] sm:$0xff] %v441
                  %v443 = vld [vmem:[%s315 + $0x3b8] sm:$0xff]
                  %444 = vst [vmem:[%s316 + $0x1f8] sm:$0xff] %v443
                $region60: #{grasp_evaluator2_forward.8} parent=54 // loop_footer
                  %s314 = sadd.s32 1, %s310
                $region61: #{grasp_evaluator2_forward.8} parent=54 // loop_footer_branch
                  %309 = sbr.rel target = $region57
                $region62: #{grasp_evaluator2_forward.8} parent=54 // loop_exit
                  _
              $region55: #{grasp_evaluator2_forward.8} parent=39 // pred_fallthru
                _
              // Predicated region
              $region63: #{grasp_evaluator2_forward.8} parent=39 // pred_check
                _
              $region64: #{grasp_evaluator2_forward.8} parent=39 // pred_check_branch
                %446 = sbr.rel target = $region66
              $region65: #{grasp_evaluator2_forward.8} parent=39 // pred_region
                _
              $region66: #{grasp_evaluator2_forward.8} parent=39 // pred_fallthru
                _
            $region40: #{grasp_evaluator2_forward.8} parent=35 // pred_fallthru
              _
            // Predicated region
            $region41: #{grasp_evaluator2_forward.8} parent=35 // pred_check
              _
            $region42: #{grasp_evaluator2_forward.8} parent=35 // pred_check_branch
              %169 = sbr.rel target = $region44
            $region43: #{grasp_evaluator2_forward.8} parent=35 // pred_region
              loop: start=0, step=1, limit=1
              $region45: #{grasp_evaluator2_forward.8} parent=43 // loop_pre_header
                _
              $region46: #{grasp_evaluator2_forward.8} parent=43 // loop_header
                %s172 = sphi 0, %s176
                %p173 = scmp.ge.s32.totalorder %s172, 1
                %s177 = sphi %s163, %s163
                %s178 = sphi %s159, %s159
              $region47: #{grasp_evaluator2_forward.8} parent=43 // loop_header_branch
                %175 = sbr.rel (%p173) target = $region51
              $region48: #{grasp_evaluator2_forward.8} parent=43 // loop_body
                %v179 = vld [vmem:[%s177] sm:$0xff]
                %180 = vst [vmem:[%s178] sm:$0xff] %v179
                %v181 = vld [vmem:[%s177 + $0x8] sm:$0xff]
                %182 = vst [vmem:[%s178 + $0x8] sm:$0xff] %v181
                %v183 = vld [vmem:[%s177 + $0x10] sm:$0xff]
                %184 = vst [vmem:[%s178 + $0x10] sm:$0xff] %v183
                %v185 = vld [vmem:[%s177 + $0x18] sm:$0xff]
                %186 = vst [vmem:[%s178 + $0x18] sm:$0xff] %v185
                %v187 = vld [vmem:[%s177 + $0x20] sm:$0xff]
                %188 = vst [vmem:[%s178 + $0x20] sm:$0xff] %v187
                %v189 = vld [vmem:[%s177 + $0x28] sm:$0xff]
                %190 = vst [vmem:[%s178 + $0x28] sm:$0xff] %v189
                %v191 = vld [vmem:[%s177 + $0x30] sm:$0xff]
                %192 = vst [vmem:[%s178 + $0x30] sm:$0xff] %v191
                %v193 = vld [vmem:[%s177 + $0x38] sm:$0xff]
                %194 = vst [vmem:[%s178 + $0x38] sm:$0xff] %v193
                %v195 = vld [vmem:[%s177 + $0x80] sm:$0xff]
                %196 = vst [vmem:[%s178 + $0x40] sm:$0xff] %v195
                %v197 = vld [vmem:[%s177 + $0x88] sm:$0xff]
                %198 = vst [vmem:[%s178 + $0x48] sm:$0xff] %v197
                %v199 = vld [vmem:[%s177 + $0x90] sm:$0xff]
                %200 = vst [vmem:[%s178 + $0x50] sm:$0xff] %v199
                %v201 = vld [vmem:[%s177 + $0x98] sm:$0xff]
                %202 = vst [vmem:[%s178 + $0x58] sm:$0xff] %v201
                %v203 = vld [vmem:[%s177 + $0xa0] sm:$0xff]
                %204 = vst [vmem:[%s178 + $0x60] sm:$0xff] %v203
                %v205 = vld [vmem:[%s177 + $0xa8] sm:$0xff]
                %206 = vst [vmem:[%s178 + $0x68] sm:$0xff] %v205
                %v207 = vld [vmem:[%s177 + $0xb0] sm:$0xff]
                %208 = vst [vmem:[%s178 + $0x70] sm:$0xff] %v207
                %v209 = vld [vmem:[%s177 + $0xb8] sm:$0xff]
                %210 = vst [vmem:[%s178 + $0x78] sm:$0xff] %v209
                %v211 = vld [vmem:[%s177 + $0x100] sm:$0xff]
                %212 = vst [vmem:[%s178 + $0x80] sm:$0xff] %v211
                %v213 = vld [vmem:[%s177 + $0x108] sm:$0xff]
                %214 = vst [vmem:[%s178 + $0x88] sm:$0xff] %v213
                %v215 = vld [vmem:[%s177 + $0x110] sm:$0xff]
                %216 = vst [vmem:[%s178 + $0x90] sm:$0xff] %v215
                %v217 = vld [vmem:[%s177 + $0x118] sm:$0xff]
                %218 = vst [vmem:[%s178 + $0x98] sm:$0xff] %v217
                %v219 = vld [vmem:[%s177 + $0x120] sm:$0xff]
                %220 = vst [vmem:[%s178 + $0xa0] sm:$0xff] %v219
                %v221 = vld [vmem:[%s177 + $0x128] sm:$0xff]
                %222 = vst [vmem:[%s178 + $0xa8] sm:$0xff] %v221
                %v223 = vld [vmem:[%s177 + $0x130] sm:$0xff]
                %224 = vst [vmem:[%s178 + $0xb0] sm:$0xff] %v223
                %v225 = vld [vmem:[%s177 + $0x138] sm:$0xff]
                %226 = vst [vmem:[%s178 + $0xb8] sm:$0xff] %v225
                %v227 = vld [vmem:[%s177 + $0x180] sm:$0xff]
                %228 = vst [vmem:[%s178 + $0xc0] sm:$0xff] %v227
                %v229 = vld [vmem:[%s177 + $0x188] sm:$0xff]
                %230 = vst [vmem:[%s178 + $0xc8] sm:$0xff] %v229
                %v231 = vld [vmem:[%s177 + $0x190] sm:$0xff]
                %232 = vst [vmem:[%s178 + $0xd0] sm:$0xff] %v231
                %v233 = vld [vmem:[%s177 + $0x198] sm:$0xff]
                %234 = vst [vmem:[%s178 + $0xd8] sm:$0xff] %v233
                %v235 = vld [vmem:[%s177 + $0x1a0] sm:$0xff]
                %236 = vst [vmem:[%s178 + $0xe0] sm:$0xff] %v235
                %v237 = vld [vmem:[%s177 + $0x1a8] sm:$0xff]
                %238 = vst [vmem:[%s178 + $0xe8] sm:$0xff] %v237
                %v239 = vld [vmem:[%s177 + $0x1b0] sm:$0xff]
                %240 = vst [vmem:[%s178 + $0xf0] sm:$0xff] %v239
                %v241 = vld [vmem:[%s177 + $0x1b8] sm:$0xff]
                %242 = vst [vmem:[%s178 + $0xf8] sm:$0xff] %v241
                %v243 = vld [vmem:[%s177 + $0x200] sm:$0xff]
                %244 = vst [vmem:[%s178 + $0x100] sm:$0xff] %v243
                %v245 = vld [vmem:[%s177 + $0x208] sm:$0xff]
                %246 = vst [vmem:[%s178 + $0x108] sm:$0xff] %v245
                %v247 = vld [vmem:[%s177 + $0x210] sm:$0xff]
                %248 = vst [vmem:[%s178 + $0x110] sm:$0xff] %v247
                %v249 = vld [vmem:[%s177 + $0x218] sm:$0xff]
                %250 = vst [vmem:[%s178 + $0x118] sm:$0xff] %v249
                %v251 = vld [vmem:[%s177 + $0x220] sm:$0xff]
                %252 = vst [vmem:[%s178 + $0x120] sm:$0xff] %v251
                %v253 = vld [vmem:[%s177 + $0x228] sm:$0xff]
                %254 = vst [vmem:[%s178 + $0x128] sm:$0xff] %v253
                %v255 = vld [vmem:[%s177 + $0x230] sm:$0xff]
                %256 = vst [vmem:[%s178 + $0x130] sm:$0xff] %v255
                %v257 = vld [vmem:[%s177 + $0x238] sm:$0xff]
                %258 = vst [vmem:[%s178 + $0x138] sm:$0xff] %v257
                %v259 = vld [vmem:[%s177 + $0x280] sm:$0xff]
                %260 = vst [vmem:[%s178 + $0x140] sm:$0xff] %v259
                %v261 = vld [vmem:[%s177 + $0x288] sm:$0xff]
                %262 = vst [vmem:[%s178 + $0x148] sm:$0xff] %v261
                %v263 = vld [vmem:[%s177 + $0x290] sm:$0xff]
                %264 = vst [vmem:[%s178 + $0x150] sm:$0xff] %v263
                %v265 = vld [vmem:[%s177 + $0x298] sm:$0xff]
                %266 = vst [vmem:[%s178 + $0x158] sm:$0xff] %v265
                %v267 = vld [vmem:[%s177 + $0x2a0] sm:$0xff]
                %268 = vst [vmem:[%s178 + $0x160] sm:$0xff] %v267
                %v269 = vld [vmem:[%s177 + $0x2a8] sm:$0xff]
                %270 = vst [vmem:[%s178 + $0x168] sm:$0xff] %v269
                %v271 = vld [vmem:[%s177 + $0x2b0] sm:$0xff]
                %272 = vst [vmem:[%s178 + $0x170] sm:$0xff] %v271
                %v273 = vld [vmem:[%s177 + $0x2b8] sm:$0xff]
                %274 = vst [vmem:[%s178 + $0x178] sm:$0xff] %v273
                %v275 = vld [vmem:[%s177 + $0x300] sm:$0xff]
                %276 = vst [vmem:[%s178 + $0x180] sm:$0xff] %v275
                %v277 = vld [vmem:[%s177 + $0x308] sm:$0xff]
                %278 = vst [vmem:[%s178 + $0x188] sm:$0xff] %v277
                %v279 = vld [vmem:[%s177 + $0x310] sm:$0xff]
                %280 = vst [vmem:[%s178 + $0x190] sm:$0xff] %v279
                %v281 = vld [vmem:[%s177 + $0x318] sm:$0xff]
                %282 = vst [vmem:[%s178 + $0x198] sm:$0xff] %v281
                %v283 = vld [vmem:[%s177 + $0x320] sm:$0xff]
                %284 = vst [vmem:[%s178 + $0x1a0] sm:$0xff] %v283
                %v285 = vld [vmem:[%s177 + $0x328] sm:$0xff]
                %286 = vst [vmem:[%s178 + $0x1a8] sm:$0xff] %v285
                %v287 = vld [vmem:[%s177 + $0x330] sm:$0xff]
                %288 = vst [vmem:[%s178 + $0x1b0] sm:$0xff] %v287
                %v289 = vld [vmem:[%s177 + $0x338] sm:$0xff]
                %290 = vst [vmem:[%s178 + $0x1b8] sm:$0xff] %v289
                %v291 = vld [vmem:[%s177 + $0x380] sm:$0xff]
                %292 = vst [vmem:[%s178 + $0x1c0] sm:$0xff] %v291
                %v293 = vld [vmem:[%s177 + $0x388] sm:$0xff]
                %294 = vst [vmem:[%s178 + $0x1c8] sm:$0xff] %v293
                %v295 = vld [vmem:[%s177 + $0x390] sm:$0xff]
                %296 = vst [vmem:[%s178 + $0x1d0] sm:$0xff] %v295
                %v297 = vld [vmem:[%s177 + $0x398] sm:$0xff]
                %298 = vst [vmem:[%s178 + $0x1d8] sm:$0xff] %v297
                %v299 = vld [vmem:[%s177 + $0x3a0] sm:$0xff]
                %300 = vst [vmem:[%s178 + $0x1e0] sm:$0xff] %v299
                %v301 = vld [vmem:[%s177 + $0x3a8] sm:$0xff]
                %302 = vst [vmem:[%s178 + $0x1e8] sm:$0xff] %v301
                %v303 = vld [vmem:[%s177 + $0x3b0] sm:$0xff]
                %304 = vst [vmem:[%s178 + $0x1f0] sm:$0xff] %v303
                %v305 = vld [vmem:[%s177 + $0x3b8] sm:$0xff]
                %306 = vst [vmem:[%s178 + $0x1f8] sm:$0xff] %v305
              $region49: #{grasp_evaluator2_forward.8} parent=43 // loop_footer
                %s176 = sadd.s32 1, %s172
              $region50: #{grasp_evaluator2_forward.8} parent=43 // loop_footer_branch
                %171 = sbr.rel target = $region46
              $region51: #{grasp_evaluator2_forward.8} parent=43 // loop_exit
                _
            $region44: #{grasp_evaluator2_forward.8} parent=35 // pred_fallthru
              _
          $region36: #{grasp_evaluator2_forward.8} parent=31 // pred_fallthru
            _
          %447 = vnop
        $region32: #{grasp_evaluator2_forward.8} parent=27 // pred_fallthru
          _
      $region28: #{grasp_evaluator2_forward.8} parent=5 // pred_fallthru
        _
      %p448 = scmp.le.s32.totalorder 1, %s10
      %p449 = scmp.lt.s32.totalorder %s10, 3
      %p450 = pnand %p448, %p449
      %p451 = pneg %p450
      // Predicated region
      $region67: #{grasp_evaluator2_forward.8} parent=5 // pred_check
        _
      $region68: #{grasp_evaluator2_forward.8} parent=5 // pred_check_branch
        %453 = sbr.rel (%p450) target = $region70
      $region69: #{grasp_evaluator2_forward.8} parent=5 // pred_region
        %s454 = ssub.s32 %s10, 1
        %s455 = sand.u32 %s23, 1
        %s456 = sand.u32 %s23, 1
        %s457 = smul.addr %s456, 512
        %s458 = scalar_lea.vmem [#allocation2], %s457
        // Predicated region
        $region71: #{grasp_evaluator2_forward.8} parent=69 // pred_check
          %p459 = pneg %p36
        $region72: #{grasp_evaluator2_forward.8} parent=69 // pred_check_branch
          %461 = sbr.rel (%p459) target = $region74
        $region73: #{grasp_evaluator2_forward.8} parent=69 // pred_region
          _
        $region74: #{grasp_evaluator2_forward.8} parent=69 // pred_fallthru
          _
        %s462 = sand.u32 %s23, 1
        %s463 = sand.u32 %s23, 1
        %s464 = smul.addr %s463, 512
        %s465 = scalar_lea.vmem [#allocation2], %s464
        %p466 = pneg %p36
        %p467 = pneg %p33
        %p468 = pneg %p57
        %p469 = pneg %p54
        %p470 = pneg %p78
        %p471 = pneg %p75
        %p472 = pneg %p99
        %p473 = pneg %p96
        %p474 = pneg %p125
        %p475 = pneg %p122
        %s476 = smul.u32 8, %s15
        %p477 = scmp.lt.s32.totalorder %s476, 15
        %s478 = scalar_select %p477, %s476, 15
        %s479 = smul.addr %s478, 2
        %s480 = smul.addr %s479, 8
        %s481 = scalar_lea.vmem %s4, %s480
        %s482 = smul.u32 8, %s15
        %s483 = smul.u32 8, %s15
        %p484 = scmp.lt.s32.totalorder %s483, 15
        %s485 = scalar_select %p484, %s483, 15
        %s486 = smul.addr %s485, 2
        %s487 = smul.addr %s486, 8
        %s488 = scalar_lea.vmem %s4, %s487
        %s489 = smul.u32 8, %s15
        %v490 = vld [vmem:[%s458] sm:$0xff]
        %v491 = vld [vmem:[%s458 + $0x8] sm:$0xff]
        %v492 = vld [vmem:[%s458 + $0x10] sm:$0xff]
        %v493 = vld [vmem:[%s458 + $0x18] sm:$0xff]
        %v494 = vld [vmem:[%s458 + $0x20] sm:$0xff]
        %v495 = vld [vmem:[%s458 + $0x28] sm:$0xff]
        %v496 = vld [vmem:[%s458 + $0x30] sm:$0xff]
        %v497 = vld [vmem:[%s458 + $0x38] sm:$0xff]
        %v498 = vld [vmem:[%s458 + $0x40] sm:$0xff]
        %v499 = vld [vmem:[%s458 + $0x48] sm:$0xff]
        %v500 = vld [vmem:[%s458 + $0x50] sm:$0xff]
        %v501 = vld [vmem:[%s458 + $0x58] sm:$0xff]
        %v502 = vld [vmem:[%s458 + $0x60] sm:$0xff]
        %v503 = vld [vmem:[%s458 + $0x68] sm:$0xff]
        %v504 = vld [vmem:[%s458 + $0x70] sm:$0xff]
        %v505 = vld [vmem:[%s458 + $0x78] sm:$0xff]
        %v506 = vld [vmem:[%s458 + $0x80] sm:$0xff]
        %v507 = vld [vmem:[%s458 + $0x88] sm:$0xff]
        %v508 = vld [vmem:[%s458 + $0x90] sm:$0xff]
        %v509 = vld [vmem:[%s458 + $0x98] sm:$0xff]
        %v510 = vld [vmem:[%s458 + $0xa0] sm:$0xff]
        %v511 = vld [vmem:[%s458 + $0xa8] sm:$0xff]
        %v512 = vld [vmem:[%s458 + $0xb0] sm:$0xff]
        %v513 = vld [vmem:[%s458 + $0xb8] sm:$0xff]
        %v514 = vld [vmem:[%s458 + $0xc0] sm:$0xff]
        %v515 = vld [vmem:[%s458 + $0xc8] sm:$0xff]
        %v516 = vld [vmem:[%s458 + $0xd0] sm:$0xff]
        %v517 = vld [vmem:[%s458 + $0xd8] sm:$0xff]
        %v518 = vld [vmem:[%s458 + $0xe0] sm:$0xff]
        %v519 = vld [vmem:[%s458 + $0xe8] sm:$0xff]
        %v520 = vld [vmem:[%s458 + $0xf0] sm:$0xff]
        %v521 = vld [vmem:[%s458 + $0xf8] sm:$0xff]
        %v522 = vld [vmem:[%s458 + $0x100] sm:$0xff]
        %v523 = vld [vmem:[%s458 + $0x108] sm:$0xff]
        %v524 = vld [vmem:[%s458 + $0x110] sm:$0xff]
        %v525 = vld [vmem:[%s458 + $0x118] sm:$0xff]
        %v526 = vld [vmem:[%s458 + $0x120] sm:$0xff]
        %v527 = vld [vmem:[%s458 + $0x128] sm:$0xff]
        %v528 = vld [vmem:[%s458 + $0x130] sm:$0xff]
        %v529 = vld [vmem:[%s458 + $0x138] sm:$0xff]
        %v530 = vld [vmem:[%s458 + $0x140] sm:$0xff]
        %v531 = vld [vmem:[%s458 + $0x148] sm:$0xff]
        %v532 = vld [vmem:[%s458 + $0x150] sm:$0xff]
        %v533 = vld [vmem:[%s458 + $0x158] sm:$0xff]
        %v534 = vld [vmem:[%s458 + $0x160] sm:$0xff]
        %v535 = vld [vmem:[%s458 + $0x168] sm:$0xff]
        %v536 = vld [vmem:[%s458 + $0x170] sm:$0xff]
        %v537 = vld [vmem:[%s458 + $0x178] sm:$0xff]
        %v538 = vld [vmem:[%s458 + $0x180] sm:$0xff]
        %v539 = vld [vmem:[%s458 + $0x188] sm:$0xff]
        %v540 = vld [vmem:[%s458 + $0x190] sm:$0xff]
        %v541 = vld [vmem:[%s458 + $0x198] sm:$0xff]
        %v542 = vld [vmem:[%s458 + $0x1a0] sm:$0xff]
        %v543 = vld [vmem:[%s458 + $0x1a8] sm:$0xff]
        %v544 = vld [vmem:[%s458 + $0x1b0] sm:$0xff]
        %v545 = vld [vmem:[%s458 + $0x1b8] sm:$0xff]
        %v546 = vld [vmem:[%s458 + $0x1c0] sm:$0xff]
        %v547 = vld [vmem:[%s458 + $0x1c8] sm:$0xff]
        %v548 = vld [vmem:[%s458 + $0x1d0] sm:$0xff]
        %v549 = vld [vmem:[%s458 + $0x1d8] sm:$0xff]
        %v550 = vld [vmem:[%s458 + $0x1e0] sm:$0xff]
        %v551 = vld [vmem:[%s458 + $0x1e8] sm:$0xff]
        %v552 = vld [vmem:[%s458 + $0x1f0] sm:$0xff]
        %v553 = vld [vmem:[%s458 + $0x1f8] sm:$0xff]
        %v554 = vld [vmem:[%s1] sm:$0xff]
        %v555 = vld [vmem:[%s1 + $0x8] sm:$0xff]
        %v556 = vld [vmem:[%s1 + $0x10] sm:$0xff]
        %v557 = vld [vmem:[%s1 + $0x18] sm:$0xff]
        %v558 = vld [vmem:[%s1 + $0x20] sm:$0xff]
        %v559 = vld [vmem:[%s1 + $0x28] sm:$0xff]
        %v560 = vld [vmem:[%s1 + $0x30] sm:$0xff]
        %v561 = vld [vmem:[%s1 + $0x38] sm:$0xff]
        %v562 = vld [vmem:[%s1 + $0x40] sm:$0xff]
        %v563 = vld [vmem:[%s1 + $0x48] sm:$0xff]
        %v564 = vld [vmem:[%s1 + $0x50] sm:$0xff]
        %v565 = vld [vmem:[%s1 + $0x58] sm:$0xff]
        %v566 = vld [vmem:[%s1 + $0x60] sm:$0xff]
        %v567 = vld [vmem:[%s1 + $0x68] sm:$0xff]
        %v568 = vld [vmem:[%s1 + $0x70] sm:$0xff]
        %v569 = vld [vmem:[%s1 + $0x78] sm:$0xff]
        %v570 = vld [vmem:[%s1 + $0x80] sm:$0xff]
        %v571 = vld [vmem:[%s1 + $0x88] sm:$0xff]
        %v572 = vld [vmem:[%s1 + $0x90] sm:$0xff]
        %v573 = vld [vmem:[%s1 + $0x98] sm:$0xff]
        %v574 = vld [vmem:[%s1 + $0xa0] sm:$0xff]
        %v575 = vld [vmem:[%s1 + $0xa8] sm:$0xff]
        %v576 = vld [vmem:[%s1 + $0xb0] sm:$0xff]
        %v577 = vld [vmem:[%s1 + $0xb8] sm:$0xff]
        %v578 = vld [vmem:[%s1 + $0xc0] sm:$0xff]
        %v579 = vld [vmem:[%s1 + $0xc8] sm:$0xff]
        %v580 = vld [vmem:[%s1 + $0xd0] sm:$0xff]
        %v581 = vld [vmem:[%s1 + $0xd8] sm:$0xff]
        %v582 = vld [vmem:[%s1 + $0xe0] sm:$0xff]
        %v583 = vld [vmem:[%s1 + $0xe8] sm:$0xff]
        %v584 = vld [vmem:[%s1 + $0xf0] sm:$0xff]
        %v585 = vld [vmem:[%s1 + $0xf8] sm:$0xff]
        %v650 = vunpack.c.l.b16 %v490
        %v651 = vunpack.c.h.b16 %v490
        %v652 = vunpack.c.l.b16 %v491
        %v653 = vunpack.c.h.b16 %v491
        %v654 = vunpack.c.l.b16 %v492
        %v655 = vunpack.c.h.b16 %v492
        %v656 = vunpack.c.l.b16 %v493
        %v657 = vunpack.c.h.b16 %v493
        %v658 = vunpack.c.l.b16 %v494
        %v659 = vunpack.c.h.b16 %v494
        %v660 = vunpack.c.l.b16 %v495
        %v661 = vunpack.c.h.b16 %v495
        %v662 = vunpack.c.l.b16 %v496
        %v663 = vunpack.c.h.b16 %v496
        %v664 = vunpack.c.l.b16 %v497
        %v665 = vunpack.c.h.b16 %v497
        %v666 = vunpack.c.l.b16 %v498
        %v667 = vunpack.c.h.b16 %v498
        %v668 = vunpack.c.l.b16 %v499
        %v669 = vunpack.c.h.b16 %v499
        %v670 = vunpack.c.l.b16 %v500
        %v671 = vunpack.c.h.b16 %v500
        %v672 = vunpack.c.l.b16 %v501
        %v673 = vunpack.c.h.b16 %v501
        %v674 = vunpack.c.l.b16 %v502
        %v675 = vunpack.c.h.b16 %v502
        %v676 = vunpack.c.l.b16 %v503
        %v677 = vunpack.c.h.b16 %v503
        %v678 = vunpack.c.l.b16 %v504
        %v679 = vunpack.c.h.b16 %v504
        %v680 = vunpack.c.l.b16 %v505
        %v681 = vunpack.c.h.b16 %v505
        %v682 = vunpack.c.l.b16 %v506
        %v683 = vunpack.c.h.b16 %v506
        %v684 = vunpack.c.l.b16 %v507
        %v685 = vunpack.c.h.b16 %v507
        %v686 = vunpack.c.l.b16 %v508
        %v687 = vunpack.c.h.b16 %v508
        %v688 = vunpack.c.l.b16 %v509
        %v689 = vunpack.c.h.b16 %v509
        %v690 = vunpack.c.l.b16 %v510
        %v691 = vunpack.c.h.b16 %v510
        %v692 = vunpack.c.l.b16 %v511
        %v693 = vunpack.c.h.b16 %v511
        %v694 = vunpack.c.l.b16 %v512
        %v695 = vunpack.c.h.b16 %v512
        %v696 = vunpack.c.l.b16 %v513
        %v697 = vunpack.c.h.b16 %v513
        %v698 = vunpack.c.l.b16 %v514
        %v699 = vunpack.c.h.b16 %v514
        %v700 = vunpack.c.l.b16 %v515
        %v701 = vunpack.c.h.b16 %v515
        %v702 = vunpack.c.l.b16 %v516
        %v703 = vunpack.c.h.b16 %v516
        %v704 = vunpack.c.l.b16 %v517
        %v705 = vunpack.c.h.b16 %v517
        %v706 = vunpack.c.l.b16 %v518
        %v707 = vunpack.c.h.b16 %v518
        %v708 = vunpack.c.l.b16 %v519
        %v709 = vunpack.c.h.b16 %v519
        %v710 = vunpack.c.l.b16 %v520
        %v711 = vunpack.c.h.b16 %v520
        %v712 = vunpack.c.l.b16 %v521
        %v713 = vunpack.c.h.b16 %v521
        %v714 = vunpack.c.l.b16 %v522
        %v715 = vunpack.c.h.b16 %v522
        %v716 = vunpack.c.l.b16 %v523
        %v717 = vunpack.c.h.b16 %v523
        %v718 = vunpack.c.l.b16 %v524
        %v719 = vunpack.c.h.b16 %v524
        %v720 = vunpack.c.l.b16 %v525
        %v721 = vunpack.c.h.b16 %v525
        %v722 = vunpack.c.l.b16 %v526
        %v723 = vunpack.c.h.b16 %v526
        %v724 = vunpack.c.l.b16 %v527
        %v725 = vunpack.c.h.b16 %v527
        %v726 = vunpack.c.l.b16 %v528
        %v727 = vunpack.c.h.b16 %v528
        %v728 = vunpack.c.l.b16 %v529
        %v729 = vunpack.c.h.b16 %v529
        %v730 = vunpack.c.l.b16 %v530
        %v731 = vunpack.c.h.b16 %v530
        %v732 = vunpack.c.l.b16 %v531
        %v733 = vunpack.c.h.b16 %v531
        %v734 = vunpack.c.l.b16 %v532
        %v735 = vunpack.c.h.b16 %v532
        %v736 = vunpack.c.l.b16 %v533
        %v737 = vunpack.c.h.b16 %v533
        %v738 = vunpack.c.l.b16 %v534
        %v739 = vunpack.c.h.b16 %v534
        %v740 = vunpack.c.l.b16 %v535
        %v741 = vunpack.c.h.b16 %v535
        %v742 = vunpack.c.l.b16 %v536
        %v743 = vunpack.c.h.b16 %v536
        %v744 = vunpack.c.l.b16 %v537
        %v745 = vunpack.c.h.b16 %v537
        %v746 = vunpack.c.l.b16 %v538
        %v747 = vunpack.c.h.b16 %v538
        %v748 = vunpack.c.l.b16 %v539
        %v749 = vunpack.c.h.b16 %v539
        %v750 = vunpack.c.l.b16 %v540
        %v751 = vunpack.c.h.b16 %v540
        %v752 = vunpack.c.l.b16 %v541
        %v753 = vunpack.c.h.b16 %v541
        %v754 = vunpack.c.l.b16 %v542
        %v755 = vunpack.c.h.b16 %v542
        %v756 = vunpack.c.l.b16 %v543
        %v757 = vunpack.c.h.b16 %v543
        %v758 = vunpack.c.l.b16 %v544
        %v759 = vunpack.c.h.b16 %v544
        %v760 = vunpack.c.l.b16 %v545
        %v761 = vunpack.c.h.b16 %v545
        %v762 = vunpack.c.l.b16 %v546
        %v763 = vunpack.c.h.b16 %v546
        %v764 = vunpack.c.l.b16 %v547
        %v765 = vunpack.c.h.b16 %v547
        %v766 = vunpack.c.l.b16 %v548
        %v767 = vunpack.c.h.b16 %v548
        %v768 = vunpack.c.l.b16 %v549
        %v769 = vunpack.c.h.b16 %v549
        %v770 = vunpack.c.l.b16 %v550
        %v771 = vunpack.c.h.b16 %v550
        %v772 = vunpack.c.l.b16 %v551
        %v773 = vunpack.c.h.b16 %v551
        %v774 = vunpack.c.l.b16 %v552
        %v775 = vunpack.c.h.b16 %v552
        %v776 = vunpack.c.l.b16 %v553
        %v777 = vunpack.c.h.b16 %v553
        %v778 = vpack.c.b16 %v652, %v650
        %v779 = vpack.c.b16 %v653, %v651
        %v780 = vpack.c.b16 %v656, %v654
        %v781 = vpack.c.b16 %v657, %v655
        %v782 = vpack.c.b16 %v660, %v658
        %v783 = vpack.c.b16 %v661, %v659
        %v784 = vpack.c.b16 %v664, %v662
        %v785 = vpack.c.b16 %v665, %v663
        %v786 = vpack.c.b16 %v668, %v666
        %v787 = vpack.c.b16 %v669, %v667
        %v788 = vpack.c.b16 %v672, %v670
        %v789 = vpack.c.b16 %v673, %v671
        %v790 = vpack.c.b16 %v676, %v674
        %v791 = vpack.c.b16 %v677, %v675
        %v792 = vpack.c.b16 %v680, %v678
        %v793 = vpack.c.b16 %v681, %v679
        %v794 = vpack.c.b16 %v684, %v682
        %v795 = vpack.c.b16 %v685, %v683
        %v796 = vpack.c.b16 %v688, %v686
        %v797 = vpack.c.b16 %v689, %v687
        %v798 = vpack.c.b16 %v692, %v690
        %v799 = vpack.c.b16 %v693, %v691
        %v800 = vpack.c.b16 %v696, %v694
        %v801 = vpack.c.b16 %v697, %v695
        %v802 = vpack.c.b16 %v700, %v698
        %v803 = vpack.c.b16 %v701, %v699
        %v804 = vpack.c.b16 %v704, %v702
        %v805 = vpack.c.b16 %v705, %v703
        %v806 = vpack.c.b16 %v708, %v706
        %v807 = vpack.c.b16 %v709, %v707
        %v808 = vpack.c.b16 %v712, %v710
        %v809 = vpack.c.b16 %v713, %v711
        %v810 = vpack.c.b16 %v716, %v714
        %v811 = vpack.c.b16 %v717, %v715
        %v812 = vpack.c.b16 %v720, %v718
        %v813 = vpack.c.b16 %v721, %v719
        %v814 = vpack.c.b16 %v724, %v722
        %v815 = vpack.c.b16 %v725, %v723
        %v816 = vpack.c.b16 %v728, %v726
        %v817 = vpack.c.b16 %v729, %v727
        %v818 = vpack.c.b16 %v732, %v730
        %v819 = vpack.c.b16 %v733, %v731
        %v820 = vpack.c.b16 %v736, %v734
        %v821 = vpack.c.b16 %v737, %v735
        %v822 = vpack.c.b16 %v740, %v738
        %v823 = vpack.c.b16 %v741, %v739
        %v824 = vpack.c.b16 %v744, %v742
        %v825 = vpack.c.b16 %v745, %v743
        %v826 = vpack.c.b16 %v748, %v746
        %v827 = vpack.c.b16 %v749, %v747
        %v828 = vpack.c.b16 %v752, %v750
        %v829 = vpack.c.b16 %v753, %v751
        %v830 = vpack.c.b16 %v756, %v754
        %v831 = vpack.c.b16 %v757, %v755
        %v832 = vpack.c.b16 %v760, %v758
        %v833 = vpack.c.b16 %v761, %v759
        %v834 = vpack.c.b16 %v764, %v762
        %v835 = vpack.c.b16 %v765, %v763
        %v836 = vpack.c.b16 %v768, %v766
        %v837 = vpack.c.b16 %v769, %v767
        %v838 = vpack.c.b16 %v772, %v770
        %v839 = vpack.c.b16 %v773, %v771
        %v840 = vpack.c.b16 %v776, %v774
        %v841 = vpack.c.b16 %v777, %v775
        %v938 = vunpack.c.l.b16 %v554
        %v939 = vunpack.c.h.b16 %v554
        %v940 = vunpack.c.l.b16 %v555
        %v941 = vunpack.c.h.b16 %v555
        %v942 = vunpack.c.l.b16 %v556
        %v943 = vunpack.c.h.b16 %v556
        %v944 = vunpack.c.l.b16 %v557
        %v945 = vunpack.c.h.b16 %v557
        %v946 = vunpack.c.l.b16 %v558
        %v947 = vunpack.c.h.b16 %v558
        %v948 = vunpack.c.l.b16 %v559
        %v949 = vunpack.c.h.b16 %v559
        %v950 = vunpack.c.l.b16 %v560
        %v951 = vunpack.c.h.b16 %v560
        %v952 = vunpack.c.l.b16 %v561
        %v953 = vunpack.c.h.b16 %v561
        %v954 = vunpack.c.l.b16 %v562
        %v955 = vunpack.c.h.b16 %v562
        %v956 = vunpack.c.l.b16 %v563
        %v957 = vunpack.c.h.b16 %v563
        %v958 = vunpack.c.l.b16 %v564
        %v959 = vunpack.c.h.b16 %v564
        %v960 = vunpack.c.l.b16 %v565
        %v961 = vunpack.c.h.b16 %v565
        %v962 = vunpack.c.l.b16 %v566
        %v963 = vunpack.c.h.b16 %v566
        %v964 = vunpack.c.l.b16 %v567
        %v965 = vunpack.c.h.b16 %v567
        %v966 = vunpack.c.l.b16 %v568
        %v967 = vunpack.c.h.b16 %v568
        %v968 = vunpack.c.l.b16 %v569
        %v969 = vunpack.c.h.b16 %v569
        %v970 = vunpack.c.l.b16 %v570
        %v971 = vunpack.c.h.b16 %v570
        %v972 = vunpack.c.l.b16 %v571
        %v973 = vunpack.c.h.b16 %v571
        %v974 = vunpack.c.l.b16 %v572
        %v975 = vunpack.c.h.b16 %v572
        %v976 = vunpack.c.l.b16 %v573
        %v977 = vunpack.c.h.b16 %v573
        %v978 = vunpack.c.l.b16 %v574
        %v979 = vunpack.c.h.b16 %v574
        %v980 = vunpack.c.l.b16 %v575
        %v981 = vunpack.c.h.b16 %v575
        %v982 = vunpack.c.l.b16 %v576
        %v983 = vunpack.c.h.b16 %v576
        %v984 = vunpack.c.l.b16 %v577
        %v985 = vunpack.c.h.b16 %v577
        %v986 = vunpack.c.l.b16 %v578
        %v987 = vunpack.c.h.b16 %v578
        %v988 = vunpack.c.l.b16 %v579
        %v989 = vunpack.c.h.b16 %v579
        %v990 = vunpack.c.l.b16 %v580
        %v991 = vunpack.c.h.b16 %v580
        %v992 = vunpack.c.l.b16 %v581
        %v993 = vunpack.c.h.b16 %v581
        %v994 = vunpack.c.l.b16 %v582
        %v995 = vunpack.c.h.b16 %v582
        %v996 = vunpack.c.l.b16 %v583
        %v997 = vunpack.c.h.b16 %v583
        %v998 = vunpack.c.l.b16 %v584
        %v999 = vunpack.c.h.b16 %v584
        %v1000 = vunpack.c.l.b16 %v585
        %v1001 = vunpack.c.h.b16 %v585
        %v1002 = vpack.c.b16 %v940, %v938
        %v1003 = vpack.c.b16 %v941, %v939
        %v1004 = vpack.c.b16 %v944, %v942
        %v1005 = vpack.c.b16 %v945, %v943
        %v1006 = vpack.c.b16 %v948, %v946
        %v1007 = vpack.c.b16 %v949, %v947
        %v1008 = vpack.c.b16 %v952, %v950
        %v1009 = vpack.c.b16 %v953, %v951
        %v1010 = vpack.c.b16 %v956, %v954
        %v1011 = vpack.c.b16 %v957, %v955
        %v1012 = vpack.c.b16 %v960, %v958
        %v1013 = vpack.c.b16 %v961, %v959
        %v1014 = vpack.c.b16 %v964, %v962
        %v1015 = vpack.c.b16 %v965, %v963
        %v1016 = vpack.c.b16 %v968, %v966
        %v1017 = vpack.c.b16 %v969, %v967
        %v1018 = vpack.c.b16 %v972, %v970
        %v1019 = vpack.c.b16 %v973, %v971
        %v1020 = vpack.c.b16 %v976, %v974
        %v1021 = vpack.c.b16 %v977, %v975
        %v1022 = vpack.c.b16 %v980, %v978
        %v1023 = vpack.c.b16 %v981, %v979
        %v1024 = vpack.c.b16 %v984, %v982
        %v1025 = vpack.c.b16 %v985, %v983
        %v1026 = vpack.c.b16 %v988, %v986
        %v1027 = vpack.c.b16 %v989, %v987
        %v1028 = vpack.c.b16 %v992, %v990
        %v1029 = vpack.c.b16 %v993, %v991
        %v1030 = vpack.c.b16 %v996, %v994
        %v1031 = vpack.c.b16 %v997, %v995
        %v1032 = vpack.c.b16 %v1000, %v998
        %v1033 = vpack.c.b16 %v1001, %v999
        %1066 = vmatprep.subr.bf16.mxu0 %v1003
        %1067 = vmatpush1.bf16.msra.mxu0 %v1002
        %1068 = vmatprep.subr.bf16.mxu0 %v1005
        %1069 = vmatpush1.bf16.msra.mxu0 %v1004
        %1070 = vmatprep.subr.bf16.mxu0 %v1007
        %1071 = vmatpush1.bf16.msra.mxu0 %v1006
        %1072 = vmatprep.subr.bf16.mxu0 %v1009
        %1073 = vmatpush1.bf16.msra.mxu0 %v1008
        %1074 = vmatprep.subr.bf16.mxu0 %v1011
        %1075 = vmatpush1.bf16.msra.mxu0 %v1010
        %1076 = vmatprep.subr.bf16.mxu0 %v1013
        %1077 = vmatpush1.bf16.msra.mxu0 %v1012
        %1078 = vmatprep.subr.bf16.mxu0 %v1015
        %1079 = vmatpush1.bf16.msra.mxu0 %v1014
        %1080 = vmatprep.subr.bf16.mxu0 %v1017
        %1081 = vmatpush1.bf16.msra.mxu0 %v1016
        %1082 = vmatprep.subr.bf16.mxu0 %v1019
        %1083 = vmatpush1.bf16.msra.mxu0 %v1018
        %1084 = vmatprep.subr.bf16.mxu0 %v1021
        %1085 = vmatpush1.bf16.msra.mxu0 %v1020
        %1086 = vmatprep.subr.bf16.mxu0 %v1023
        %1087 = vmatpush1.bf16.msra.mxu0 %v1022
        %1088 = vmatprep.subr.bf16.mxu0 %v1025
        %1089 = vmatpush1.bf16.msra.mxu0 %v1024
        %1090 = vmatprep.subr.bf16.mxu0 %v1027
        %1091 = vmatpush1.bf16.msra.mxu0 %v1026
        %1092 = vmatprep.subr.bf16.mxu0 %v1029
        %1093 = vmatpush1.bf16.msra.mxu0 %v1028
        %1094 = vmatprep.subr.bf16.mxu0 %v1031
        %1095 = vmatpush1.bf16.msra.mxu0 %v1030
        %1096 = vmatprep.subr.bf16.mxu0 %v1033
        %1097 = vmatpush1.bf16.msra.mxu0 %v1032
        %1098 = vmatprep.mubr.bf16.mxu0 %v779
        %1099 = vmatmul.mubr.bf16.gmra.mrb[0].mxu0 %v778
        %v1100 = vpop.f32.mrb[0].mxu0
        %v1101 = vadd.f32 0.0, %v1100
        %v1102 = vpop.f32.mrb[0].mxu0
        %v1103 = vadd.f32 0.0, %v1102
        %v1104 = vpop.f32.mrb[0].mxu0
        %v1105 = vadd.f32 0.0, %v1104
        %v1106 = vpop.f32.mrb[0].mxu0
        %v1107 = vadd.f32 0.0, %v1106
        %1108 = vmatprep.mubr.bf16.mxu0 %v781
        %1109 = vmatmul.mubr.bf16.gmra.mrb[0].mxu0 %v780
        %v1110 = vpop.f32.mrb[0].mxu0
        %v1111 = vadd.f32 0.0, %v1110
        %v1112 = vpop.f32.mrb[0].mxu0
        %v1113 = vadd.f32 0.0, %v1112
        %v1114 = vpop.f32.mrb[0].mxu0
        %v1115 = vadd.f32 0.0, %v1114
        %v1116 = vpop.f32.mrb[0].mxu0
        %v1117 = vadd.f32 0.0, %v1116
        %1118 = vmatprep.mubr.bf16.mxu0 %v783
        %1119 = vmatmul.mubr.bf16.gmra.mrb[0].mxu0 %v782
        %v1120 = vpop.f32.mrb[0].mxu0
        %v1121 = vadd.f32 0.0, %v1120
        %v1122 = vpop.f32.mrb[0].mxu0
        %v1123 = vadd.f32 0.0, %v1122
        %v1124 = vpop.f32.mrb[0].mxu0
        %v1125 = vadd.f32 0.0, %v1124
        %v1126 = vpop.f32.mrb[0].mxu0
        %v1127 = vadd.f32 0.0, %v1126
        %1128 = vmatprep.mubr.bf16.mxu0 %v785
        %1129 = vmatmul.mubr.bf16.gmra.mrb[0].mxu0 %v784
        %v1130 = vpop.f32.mrb[0].mxu0
        %v1131 = vadd.f32 0.0, %v1130
        %v1132 = vpop.f32.mrb[0].mxu0
        %v1133 = vadd.f32 0.0, %v1132
        %v1134 = vpop.f32.mrb[0].mxu0
        %v1135 = vadd.f32 0.0, %v1134
        %v1136 = vpop.f32.mrb[0].mxu0
        %v1137 = vadd.f32 0.0, %v1136
        %1138 = vmatprep.mubr.bf16.mxu0 %v787
        %1139 = vmatmul.mubr.bf16.gmra.mrb[0].mxu0 %v786
        %v1140 = vpop.f32.mrb[0].mxu0
        %v1141 = vadd.f32 0.0, %v1140
        %v1142 = vpop.f32.mrb[0].mxu0
        %v1143 = vadd.f32 0.0, %v1142
        %v1144 = vpop.f32.mrb[0].mxu0
        %v1145 = vadd.f32 0.0, %v1144
        %v1146 = vpop.f32.mrb[0].mxu0
        %v1147 = vadd.f32 0.0, %v1146
        %1148 = vmatprep.mubr.bf16.mxu0 %v789
        %1149 = vmatmul.mubr.bf16.gmra.mrb[0].mxu0 %v788
        %v1150 = vpop.f32.mrb[0].mxu0
        %v1151 = vadd.f32 0.0, %v1150
        %v1152 = vpop.f32.mrb[0].mxu0
        %v1153 = vadd.f32 0.0, %v1152
        %v1154 = vpop.f32.mrb[0].mxu0
        %v1155 = vadd.f32 0.0, %v1154
        %v1156 = vpop.f32.mrb[0].mxu0
        %v1157 = vadd.f32 0.0, %v1156
        %1158 = vmatprep.mubr.bf16.mxu0 %v791
        %1159 = vmatmul.mubr.bf16.gmra.mrb[0].mxu0 %v790
        %v1160 = vpop.f32.mrb[0].mxu0
        %v1161 = vadd.f32 0.0, %v1160
        %v1162 = vpop.f32.mrb[0].mxu0
        %v1163 = vadd.f32 0.0, %v1162
        %v1164 = vpop.f32.mrb[0].mxu0
        %v1165 = vadd.f32 0.0, %v1164
        %v1166 = vpop.f32.mrb[0].mxu0
        %v1167 = vadd.f32 0.0, %v1166
        %1168 = vmatprep.mubr.bf16.mxu0 %v793
        %1169 = vmatmul.mubr.bf16.gmra.mrb[0].mxu0 %v792
        %v1170 = vpop.f32.mrb[0].mxu0
        %v1171 = vadd.f32 0.0, %v1170
        %v1172 = vpop.f32.mrb[0].mxu0
        %v1173 = vadd.f32 0.0, %v1172
        %v1174 = vpop.f32.mrb[0].mxu0
        %v1175 = vadd.f32 0.0, %v1174
        %v1176 = vpop.f32.mrb[0].mxu0
        %v1177 = vadd.f32 0.0, %v1176
        %1178 = vmatprep.mubr.bf16.mxu0 %v795
        %1179 = vmatmul.mubr.bf16.gmra.mrb[0].mxu0 %v794
        %v1180 = vpop.f32.mrb[0].mxu0
        %v1181 = vadd.f32 0.0, %v1180
        %v1182 = vpop.f32.mrb[0].mxu0
        %v1183 = vadd.f32 0.0, %v1182
        %v1184 = vpop.f32.mrb[0].mxu0
        %v1185 = vadd.f32 0.0, %v1184
        %v1186 = vpop.f32.mrb[0].mxu0
        %v1187 = vadd.f32 0.0, %v1186
        %1188 = vmatprep.mubr.bf16.mxu0 %v797
        %1189 = vmatmul.mubr.bf16.gmra.mrb[0].mxu0 %v796
        %v1190 = vpop.f32.mrb[0].mxu0
        %v1191 = vadd.f32 0.0, %v1190
        %v1192 = vpop.f32.mrb[0].mxu0
        %v1193 = vadd.f32 0.0, %v1192
        %v1194 = vpop.f32.mrb[0].mxu0
        %v1195 = vadd.f32 0.0, %v1194
        %v1196 = vpop.f32.mrb[0].mxu0
        %v1197 = vadd.f32 0.0, %v1196
        %1198 = vmatprep.mubr.bf16.mxu0 %v799
        %1199 = vmatmul.mubr.bf16.gmra.mrb[0].mxu0 %v798
        %v1200 = vpop.f32.mrb[0].mxu0
        %v1201 = vadd.f32 0.0, %v1200
        %v1202 = vpop.f32.mrb[0].mxu0
        %v1203 = vadd.f32 0.0, %v1202
        %v1204 = vpop.f32.mrb[0].mxu0
        %v1205 = vadd.f32 0.0, %v1204
        %v1206 = vpop.f32.mrb[0].mxu0
        %v1207 = vadd.f32 0.0, %v1206
        %1208 = vmatprep.mubr.bf16.mxu0 %v801
        %1209 = vmatmul.mubr.bf16.gmra.mrb[0].mxu0 %v800
        %v1210 = vpop.f32.mrb[0].mxu0
        %v1211 = vadd.f32 0.0, %v1210
        %v1212 = vpop.f32.mrb[0].mxu0
        %v1213 = vadd.f32 0.0, %v1212
        %v1214 = vpop.f32.mrb[0].mxu0
        %v1215 = vadd.f32 0.0, %v1214
        %v1216 = vpop.f32.mrb[0].mxu0
        %v1217 = vadd.f32 0.0, %v1216
        %1218 = vmatprep.mubr.bf16.mxu0 %v803
        %1219 = vmatmul.mubr.bf16.gmra.mrb[0].mxu0 %v802
        %v1220 = vpop.f32.mrb[0].mxu0
        %v1221 = vadd.f32 0.0, %v1220
        %v1222 = vpop.f32.mrb[0].mxu0
        %v1223 = vadd.f32 0.0, %v1222
        %v1224 = vpop.f32.mrb[0].mxu0
        %v1225 = vadd.f32 0.0, %v1224
        %v1226 = vpop.f32.mrb[0].mxu0
        %v1227 = vadd.f32 0.0, %v1226
        %1228 = vmatprep.mubr.bf16.mxu0 %v805
        %1229 = vmatmul.mubr.bf16.gmra.mrb[0].mxu0 %v804
        %v1230 = vpop.f32.mrb[0].mxu0
        %v1231 = vadd.f32 0.0, %v1230
        %v1232 = vpop.f32.mrb[0].mxu0
        %v1233 = vadd.f32 0.0, %v1232
        %v1234 = vpop.f32.mrb[0].mxu0
        %v1235 = vadd.f32 0.0, %v1234
        %v1236 = vpop.f32.mrb[0].mxu0
        %v1237 = vadd.f32 0.0, %v1236
        %1238 = vmatprep.mubr.bf16.mxu0 %v807
        %1239 = vmatmul.mubr.bf16.gmra.mrb[0].mxu0 %v806
        %v1240 = vpop.f32.mrb[0].mxu0
        %v1241 = vadd.f32 0.0, %v1240
        %v1242 = vpop.f32.mrb[0].mxu0
        %v1243 = vadd.f32 0.0, %v1242
        %v1244 = vpop.f32.mrb[0].mxu0
        %v1245 = vadd.f32 0.0, %v1244
        %v1246 = vpop.f32.mrb[0].mxu0
        %v1247 = vadd.f32 0.0, %v1246
        %1248 = vmatprep.mubr.bf16.mxu0 %v809
        %1249 = vmatmul.mubr.bf16.gmra.mrb[0].mxu0 %v808
        %v1250 = vpop.f32.mrb[0].mxu0
        %v1251 = vadd.f32 0.0, %v1250
        %v1252 = vpop.f32.mrb[0].mxu0
        %v1253 = vadd.f32 0.0, %v1252
        %v1254 = vpop.f32.mrb[0].mxu0
        %v1255 = vadd.f32 0.0, %v1254
        %v1256 = vpop.f32.mrb[0].mxu0
        %v1257 = vadd.f32 0.0, %v1256
        %1258 = vmatprep.mubr.bf16.mxu0 %v811
        %1259 = vmatmul.mubr.bf16.gmra.mrb[0].mxu0 %v810
        %v1260 = vpop.f32.mrb[0].mxu0
        %v1261 = vadd.f32 0.0, %v1260
        %v1262 = vpop.f32.mrb[0].mxu0
        %v1263 = vadd.f32 0.0, %v1262
        %v1264 = vpop.f32.mrb[0].mxu0
        %v1265 = vadd.f32 0.0, %v1264
        %v1266 = vpop.f32.mrb[0].mxu0
        %v1267 = vadd.f32 0.0, %v1266
        %1268 = vmatprep.mubr.bf16.mxu0 %v813
        %1269 = vmatmul.mubr.bf16.gmra.mrb[0].mxu0 %v812
        %v1270 = vpop.f32.mrb[0].mxu0
        %v1271 = vadd.f32 0.0, %v1270
        %v1272 = vpop.f32.mrb[0].mxu0
        %v1273 = vadd.f32 0.0, %v1272
        %v1274 = vpop.f32.mrb[0].mxu0
        %v1275 = vadd.f32 0.0, %v1274
        %v1276 = vpop.f32.mrb[0].mxu0
        %v1277 = vadd.f32 0.0, %v1276
        %1278 = vmatprep.mubr.bf16.mxu0 %v815
        %1279 = vmatmul.mubr.bf16.gmra.mrb[0].mxu0 %v814
        %v1280 = vpop.f32.mrb[0].mxu0
        %v1281 = vadd.f32 0.0, %v1280
        %v1282 = vpop.f32.mrb[0].mxu0
        %v1283 = vadd.f32 0.0, %v1282
        %v1284 = vpop.f32.mrb[0].mxu0
        %v1285 = vadd.f32 0.0, %v1284
        %v1286 = vpop.f32.mrb[0].mxu0
        %v1287 = vadd.f32 0.0, %v1286
        %1288 = vmatprep.mubr.bf16.mxu0 %v817
        %1289 = vmatmul.mubr.bf16.gmra.mrb[0].mxu0 %v816
        %v1290 = vpop.f32.mrb[0].mxu0
        %v1291 = vadd.f32 0.0, %v1290
        %v1292 = vpop.f32.mrb[0].mxu0
        %v1293 = vadd.f32 0.0, %v1292
        %v1294 = vpop.f32.mrb[0].mxu0
        %v1295 = vadd.f32 0.0, %v1294
        %v1296 = vpop.f32.mrb[0].mxu0
        %v1297 = vadd.f32 0.0, %v1296
        %1298 = vmatprep.mubr.bf16.mxu0 %v819
        %1299 = vmatmul.mubr.bf16.gmra.mrb[0].mxu0 %v818
        %v1300 = vpop.f32.mrb[0].mxu0
        %v1301 = vadd.f32 0.0, %v1300
        %v1302 = vpop.f32.mrb[0].mxu0
        %v1303 = vadd.f32 0.0, %v1302
        %v1304 = vpop.f32.mrb[0].mxu0
        %v1305 = vadd.f32 0.0, %v1304
        %v1306 = vpop.f32.mrb[0].mxu0
        %v1307 = vadd.f32 0.0, %v1306
        %1308 = vmatprep.mubr.bf16.mxu0 %v821
        %1309 = vmatmul.mubr.bf16.gmra.mrb[0].mxu0 %v820
        %v1310 = vpop.f32.mrb[0].mxu0
        %v1311 = vadd.f32 0.0, %v1310
        %v1312 = vpop.f32.mrb[0].mxu0
        %v1313 = vadd.f32 0.0, %v1312
        %v1314 = vpop.f32.mrb[0].mxu0
        %v1315 = vadd.f32 0.0, %v1314
        %v1316 = vpop.f32.mrb[0].mxu0
        %v1317 = vadd.f32 0.0, %v1316
        %1318 = vmatprep.mubr.bf16.mxu0 %v823
        %1319 = vmatmul.mubr.bf16.gmra.mrb[0].mxu0 %v822
        %v1320 = vpop.f32.mrb[0].mxu0
        %v1321 = vadd.f32 0.0, %v1320
        %v1322 = vpop.f32.mrb[0].mxu0
        %v1323 = vadd.f32 0.0, %v1322
        %v1324 = vpop.f32.mrb[0].mxu0
        %v1325 = vadd.f32 0.0, %v1324
        %v1326 = vpop.f32.mrb[0].mxu0
        %v1327 = vadd.f32 0.0, %v1326
        %1328 = vmatprep.mubr.bf16.mxu0 %v825
        %1329 = vmatmul.mubr.bf16.gmra.mrb[0].mxu0 %v824
        %v1330 = vpop.f32.mrb[0].mxu0
        %v1331 = vadd.f32 0.0, %v1330
        %v1332 = vpop.f32.mrb[0].mxu0
        %v1333 = vadd.f32 0.0, %v1332
        %v1334 = vpop.f32.mrb[0].mxu0
        %v1335 = vadd.f32 0.0, %v1334
        %v1336 = vpop.f32.mrb[0].mxu0
        %v1337 = vadd.f32 0.0, %v1336
        %1338 = vmatprep.mubr.bf16.mxu0 %v827
        %1339 = vmatmul.mubr.bf16.gmra.mrb[0].mxu0 %v826
        %v1340 = vpop.f32.mrb[0].mxu0
        %v1341 = vadd.f32 0.0, %v1340
        %v1342 = vpop.f32.mrb[0].mxu0
        %v1343 = vadd.f32 0.0, %v1342
        %v1344 = vpop.f32.mrb[0].mxu0
        %v1345 = vadd.f32 0.0, %v1344
        %v1346 = vpop.f32.mrb[0].mxu0
        %v1347 = vadd.f32 0.0, %v1346
        %1348 = vmatprep.mubr.bf16.mxu0 %v829
        %1349 = vmatmul.mubr.bf16.gmra.mrb[0].mxu0 %v828
        %v1350 = vpop.f32.mrb[0].mxu0
        %v1351 = vadd.f32 0.0, %v1350
        %v1352 = vpop.f32.mrb[0].mxu0
        %v1353 = vadd.f32 0.0, %v1352
        %v1354 = vpop.f32.mrb[0].mxu0
        %v1355 = vadd.f32 0.0, %v1354
        %v1356 = vpop.f32.mrb[0].mxu0
        %v1357 = vadd.f32 0.0, %v1356
        %1358 = vmatprep.mubr.bf16.mxu0 %v831
        %1359 = vmatmul.mubr.bf16.gmra.mrb[0].mxu0 %v830
        %v1360 = vpop.f32.mrb[0].mxu0
        %v1361 = vadd.f32 0.0, %v1360
        %v1362 = vpop.f32.mrb[0].mxu0
        %v1363 = vadd.f32 0.0, %v1362
        %v1364 = vpop.f32.mrb[0].mxu0
        %v1365 = vadd.f32 0.0, %v1364
        %v1366 = vpop.f32.mrb[0].mxu0
        %v1367 = vadd.f32 0.0, %v1366
        %1368 = vmatprep.mubr.bf16.mxu0 %v833
        %1369 = vmatmul.mubr.bf16.gmra.mrb[0].mxu0 %v832
        %v1370 = vpop.f32.mrb[0].mxu0
        %v1371 = vadd.f32 0.0, %v1370
        %v1372 = vpop.f32.mrb[0].mxu0
        %v1373 = vadd.f32 0.0, %v1372
        %v1374 = vpop.f32.mrb[0].mxu0
        %v1375 = vadd.f32 0.0, %v1374
        %v1376 = vpop.f32.mrb[0].mxu0
        %v1377 = vadd.f32 0.0, %v1376
        %1378 = vmatprep.mubr.bf16.mxu0 %v835
        %1379 = vmatmul.mubr.bf16.gmra.mrb[0].mxu0 %v834
        %v1380 = vpop.f32.mrb[0].mxu0
        %v1381 = vadd.f32 0.0, %v1380
        %v1382 = vpop.f32.mrb[0].mxu0
        %v1383 = vadd.f32 0.0, %v1382
        %v1384 = vpop.f32.mrb[0].mxu0
        %v1385 = vadd.f32 0.0, %v1384
        %v1386 = vpop.f32.mrb[0].mxu0
        %v1387 = vadd.f32 0.0, %v1386
        %1388 = vmatprep.mubr.bf16.mxu0 %v837
        %1389 = vmatmul.mubr.bf16.gmra.mrb[0].mxu0 %v836
        %v1390 = vpop.f32.mrb[0].mxu0
        %v1391 = vadd.f32 0.0, %v1390
        %v1392 = vpop.f32.mrb[0].mxu0
        %v1393 = vadd.f32 0.0, %v1392
        %v1394 = vpop.f32.mrb[0].mxu0
        %v1395 = vadd.f32 0.0, %v1394
        %v1396 = vpop.f32.mrb[0].mxu0
        %v1397 = vadd.f32 0.0, %v1396
        %1398 = vmatprep.mubr.bf16.mxu0 %v839
        %1399 = vmatmul.mubr.bf16.gmra.mrb[0].mxu0 %v838
        %v1400 = vpop.f32.mrb[0].mxu0
        %v1401 = vadd.f32 0.0, %v1400
        %v1402 = vpop.f32.mrb[0].mxu0
        %v1403 = vadd.f32 0.0, %v1402
        %v1404 = vpop.f32.mrb[0].mxu0
        %v1405 = vadd.f32 0.0, %v1404
        %v1406 = vpop.f32.mrb[0].mxu0
        %v1407 = vadd.f32 0.0, %v1406
        %1408 = vmatprep.mubr.bf16.mxu0 %v841
        %1409 = vmatmul.mubr.bf16.gmra.mrb[0].mxu0 %v840
        %v1410 = vpop.f32.mrb[0].mxu0
        %v1411 = vadd.f32 0.0, %v1410
        %v1412 = vpop.f32.mrb[0].mxu0
        %v1413 = vadd.f32 0.0, %v1412
        %v1414 = vpop.f32.mrb[0].mxu0
        %v1415 = vadd.f32 0.0, %v1414
        %v1416 = vpop.f32.mrb[0].mxu0
        %v1417 = vadd.f32 0.0, %v1416
        %1418 = vdwg.mxu0
        %v1419 = vld [vmem:[%s2] sm:$0x3]
        %v1421 = vlaneseq
        %v1422 = vshrl.u32 %v1421, 7
        %v1423 = vsub.s32 0, %v1422
        %v1424 = vrot.slane %v1419, %v1423
        %v1425 = vlaneseq
        %v1426 = vshrl.u32 %v1425, 7
        %v1427 = vsub.s32 1, %v1426
        %v1428 = vrot.slane %v1419, %v1427
        %v1431 = vmul.f32 %v1101, %v1424
        %v1432 = vmul.f32 %v1103, %v1428
        %v1433 = vmul.f32 %v1105, %v1424
        %v1434 = vmul.f32 %v1107, %v1428
        %v1435 = vmul.f32 %v1111, %v1424
        %v1436 = vmul.f32 %v1113, %v1428
        %v1437 = vmul.f32 %v1115, %v1424
        %v1438 = vmul.f32 %v1117, %v1428
        %v1439 = vmul.f32 %v1121, %v1424
        %v1440 = vmul.f32 %v1123, %v1428
        %v1441 = vmul.f32 %v1125, %v1424
        %v1442 = vmul.f32 %v1127, %v1428
        %v1443 = vmul.f32 %v1131, %v1424
        %v1444 = vmul.f32 %v1133, %v1428
        %v1445 = vmul.f32 %v1135, %v1424
        %v1446 = vmul.f32 %v1137, %v1428
        %v1447 = vmul.f32 %v1141, %v1424
        %v1448 = vmul.f32 %v1143, %v1428
        %v1449 = vmul.f32 %v1145, %v1424
        %v1450 = vmul.f32 %v1147, %v1428
        %v1451 = vmul.f32 %v1151, %v1424
        %v1452 = vmul.f32 %v1153, %v1428
        %v1453 = vmul.f32 %v1155, %v1424
        %v1454 = vmul.f32 %v1157, %v1428
        %v1455 = vmul.f32 %v1161, %v1424
        %v1456 = vmul.f32 %v1163, %v1428
        %v1457 = vmul.f32 %v1165, %v1424
        %v1458 = vmul.f32 %v1167, %v1428
        %v1459 = vmul.f32 %v1171, %v1424
        %v1460 = vmul.f32 %v1173, %v1428
        %v1461 = vmul.f32 %v1175, %v1424
        %v1462 = vmul.f32 %v1177, %v1428
        %v1463 = vmul.f32 %v1181, %v1424
        %v1464 = vmul.f32 %v1183, %v1428
        %v1465 = vmul.f32 %v1185, %v1424
        %v1466 = vmul.f32 %v1187, %v1428
        %v1467 = vmul.f32 %v1191, %v1424
        %v1468 = vmul.f32 %v1193, %v1428
        %v1469 = vmul.f32 %v1195, %v1424
        %v1470 = vmul.f32 %v1197, %v1428
        %v1471 = vmul.f32 %v1201, %v1424
        %v1472 = vmul.f32 %v1203, %v1428
        %v1473 = vmul.f32 %v1205, %v1424
        %v1474 = vmul.f32 %v1207, %v1428
        %v1475 = vmul.f32 %v1211, %v1424
        %v1476 = vmul.f32 %v1213, %v1428
        %v1477 = vmul.f32 %v1215, %v1424
        %v1478 = vmul.f32 %v1217, %v1428
        %v1479 = vmul.f32 %v1221, %v1424
        %v1480 = vmul.f32 %v1223, %v1428
        %v1481 = vmul.f32 %v1225, %v1424
        %v1482 = vmul.f32 %v1227, %v1428
        %v1483 = vmul.f32 %v1231, %v1424
        %v1484 = vmul.f32 %v1233, %v1428
        %v1485 = vmul.f32 %v1235, %v1424
        %v1486 = vmul.f32 %v1237, %v1428
        %v1487 = vmul.f32 %v1241, %v1424
        %v1488 = vmul.f32 %v1243, %v1428
        %v1489 = vmul.f32 %v1245, %v1424
        %v1490 = vmul.f32 %v1247, %v1428
        %v1491 = vmul.f32 %v1251, %v1424
        %v1492 = vmul.f32 %v1253, %v1428
        %v1493 = vmul.f32 %v1255, %v1424
        %v1494 = vmul.f32 %v1257, %v1428
        %v1495 = vmul.f32 %v1261, %v1424
        %v1496 = vmul.f32 %v1263, %v1428
        %v1497 = vmul.f32 %v1265, %v1424
        %v1498 = vmul.f32 %v1267, %v1428
        %v1499 = vmul.f32 %v1271, %v1424
        %v1500 = vmul.f32 %v1273, %v1428
        %v1501 = vmul.f32 %v1275, %v1424
        %v1502 = vmul.f32 %v1277, %v1428
        %v1503 = vmul.f32 %v1281, %v1424
        %v1504 = vmul.f32 %v1283, %v1428
        %v1505 = vmul.f32 %v1285, %v1424
        %v1506 = vmul.f32 %v1287, %v1428
        %v1507 = vmul.f32 %v1291, %v1424
        %v1508 = vmul.f32 %v1293, %v1428
        %v1509 = vmul.f32 %v1295, %v1424
        %v1510 = vmul.f32 %v1297, %v1428
        %v1511 = vmul.f32 %v1301, %v1424
        %v1512 = vmul.f32 %v1303, %v1428
        %v1513 = vmul.f32 %v1305, %v1424
        %v1514 = vmul.f32 %v1307, %v1428
        %v1515 = vmul.f32 %v1311, %v1424
        %v1516 = vmul.f32 %v1313, %v1428
        %v1517 = vmul.f32 %v1315, %v1424
        %v1518 = vmul.f32 %v1317, %v1428
        %v1519 = vmul.f32 %v1321, %v1424
        %v1520 = vmul.f32 %v1323, %v1428
        %v1521 = vmul.f32 %v1325, %v1424
        %v1522 = vmul.f32 %v1327, %v1428
        %v1523 = vmul.f32 %v1331, %v1424
        %v1524 = vmul.f32 %v1333, %v1428
        %v1525 = vmul.f32 %v1335, %v1424
        %v1526 = vmul.f32 %v1337, %v1428
        %v1527 = vmul.f32 %v1341, %v1424
        %v1528 = vmul.f32 %v1343, %v1428
        %v1529 = vmul.f32 %v1345, %v1424
        %v1530 = vmul.f32 %v1347, %v1428
        %v1531 = vmul.f32 %v1351, %v1424
        %v1532 = vmul.f32 %v1353, %v1428
        %v1533 = vmul.f32 %v1355, %v1424
        %v1534 = vmul.f32 %v1357, %v1428
        %v1535 = vmul.f32 %v1361, %v1424
        %v1536 = vmul.f32 %v1363, %v1428
        %v1537 = vmul.f32 %v1365, %v1424
        %v1538 = vmul.f32 %v1367, %v1428
        %v1539 = vmul.f32 %v1371, %v1424
        %v1540 = vmul.f32 %v1373, %v1428
        %v1541 = vmul.f32 %v1375, %v1424
        %v1542 = vmul.f32 %v1377, %v1428
        %v1543 = vmul.f32 %v1381, %v1424
        %v1544 = vmul.f32 %v1383, %v1428
        %v1545 = vmul.f32 %v1385, %v1424
        %v1546 = vmul.f32 %v1387, %v1428
        %v1547 = vmul.f32 %v1391, %v1424
        %v1548 = vmul.f32 %v1393, %v1428
        %v1549 = vmul.f32 %v1395, %v1424
        %v1550 = vmul.f32 %v1397, %v1428
        %v1551 = vmul.f32 %v1401, %v1424
        %v1552 = vmul.f32 %v1403, %v1428
        %v1553 = vmul.f32 %v1405, %v1424
        %v1554 = vmul.f32 %v1407, %v1428
        %v1555 = vmul.f32 %v1411, %v1424
        %v1556 = vmul.f32 %v1413, %v1428
        %v1557 = vmul.f32 %v1415, %v1424
        %v1558 = vmul.f32 %v1417, %v1428
        %v1559 = vld [vmem:[%s3] sm:$0x3]
        %v1561 = vlaneseq
        %v1562 = vshrl.u32 %v1561, 7
        %v1563 = vsub.s32 0, %v1562
        %v1564 = vrot.slane %v1559, %v1563
        %v1565 = vlaneseq
        %v1566 = vshrl.u32 %v1565, 7
        %v1567 = vsub.s32 1, %v1566
        %v1568 = vrot.slane %v1559, %v1567
        %v1571 = vadd.f32 %v1431, %v1564
        %v1572 = vadd.f32 %v1432, %v1568
        %v1573 = vadd.f32 %v1433, %v1564
        %v1574 = vadd.f32 %v1434, %v1568
        %v1575 = vadd.f32 %v1435, %v1564
        %v1576 = vadd.f32 %v1436, %v1568
        %v1577 = vadd.f32 %v1437, %v1564
        %v1578 = vadd.f32 %v1438, %v1568
        %v1579 = vadd.f32 %v1439, %v1564
        %v1580 = vadd.f32 %v1440, %v1568
        %v1581 = vadd.f32 %v1441, %v1564
        %v1582 = vadd.f32 %v1442, %v1568
        %v1583 = vadd.f32 %v1443, %v1564
        %v1584 = vadd.f32 %v1444, %v1568
        %v1585 = vadd.f32 %v1445, %v1564
        %v1586 = vadd.f32 %v1446, %v1568
        %v1587 = vadd.f32 %v1447, %v1564
        %v1588 = vadd.f32 %v1448, %v1568
        %v1589 = vadd.f32 %v1449, %v1564
        %v1590 = vadd.f32 %v1450, %v1568
        %v1591 = vadd.f32 %v1451, %v1564
        %v1592 = vadd.f32 %v1452, %v1568
        %v1593 = vadd.f32 %v1453, %v1564
        %v1594 = vadd.f32 %v1454, %v1568
        %v1595 = vadd.f32 %v1455, %v1564
        %v1596 = vadd.f32 %v1456, %v1568
        %v1597 = vadd.f32 %v1457, %v1564
        %v1598 = vadd.f32 %v1458, %v1568
        %v1599 = vadd.f32 %v1459, %v1564
        %v1600 = vadd.f32 %v1460, %v1568
        %v1601 = vadd.f32 %v1461, %v1564
        %v1602 = vadd.f32 %v1462, %v1568
        %v1603 = vadd.f32 %v1463, %v1564
        %v1604 = vadd.f32 %v1464, %v1568
        %v1605 = vadd.f32 %v1465, %v1564
        %v1606 = vadd.f32 %v1466, %v1568
        %v1607 = vadd.f32 %v1467, %v1564
        %v1608 = vadd.f32 %v1468, %v1568
        %v1609 = vadd.f32 %v1469, %v1564
        %v1610 = vadd.f32 %v1470, %v1568
        %v1611 = vadd.f32 %v1471, %v1564
        %v1612 = vadd.f32 %v1472, %v1568
        %v1613 = vadd.f32 %v1473, %v1564
        %v1614 = vadd.f32 %v1474, %v1568
        %v1615 = vadd.f32 %v1475, %v1564
        %v1616 = vadd.f32 %v1476, %v1568
        %v1617 = vadd.f32 %v1477, %v1564
        %v1618 = vadd.f32 %v1478, %v1568
        %v1619 = vadd.f32 %v1479, %v1564
        %v1620 = vadd.f32 %v1480, %v1568
        %v1621 = vadd.f32 %v1481, %v1564
        %v1622 = vadd.f32 %v1482, %v1568
        %v1623 = vadd.f32 %v1483, %v1564
        %v1624 = vadd.f32 %v1484, %v1568
        %v1625 = vadd.f32 %v1485, %v1564
        %v1626 = vadd.f32 %v1486, %v1568
        %v1627 = vadd.f32 %v1487, %v1564
        %v1628 = vadd.f32 %v1488, %v1568
        %v1629 = vadd.f32 %v1489, %v1564
        %v1630 = vadd.f32 %v1490, %v1568
        %v1631 = vadd.f32 %v1491, %v1564
        %v1632 = vadd.f32 %v1492, %v1568
        %v1633 = vadd.f32 %v1493, %v1564
        %v1634 = vadd.f32 %v1494, %v1568
        %v1635 = vadd.f32 %v1495, %v1564
        %v1636 = vadd.f32 %v1496, %v1568
        %v1637 = vadd.f32 %v1497, %v1564
        %v1638 = vadd.f32 %v1498, %v1568
        %v1639 = vadd.f32 %v1499, %v1564
        %v1640 = vadd.f32 %v1500, %v1568
        %v1641 = vadd.f32 %v1501, %v1564
        %v1642 = vadd.f32 %v1502, %v1568
        %v1643 = vadd.f32 %v1503, %v1564
        %v1644 = vadd.f32 %v1504, %v1568
        %v1645 = vadd.f32 %v1505, %v1564
        %v1646 = vadd.f32 %v1506, %v1568
        %v1647 = vadd.f32 %v1507, %v1564
        %v1648 = vadd.f32 %v1508, %v1568
        %v1649 = vadd.f32 %v1509, %v1564
        %v1650 = vadd.f32 %v1510, %v1568
        %v1651 = vadd.f32 %v1511, %v1564
        %v1652 = vadd.f32 %v1512, %v1568
        %v1653 = vadd.f32 %v1513, %v1564
        %v1654 = vadd.f32 %v1514, %v1568
        %v1655 = vadd.f32 %v1515, %v1564
        %v1656 = vadd.f32 %v1516, %v1568
        %v1657 = vadd.f32 %v1517, %v1564
        %v1658 = vadd.f32 %v1518, %v1568
        %v1659 = vadd.f32 %v1519, %v1564
        %v1660 = vadd.f32 %v1520, %v1568
        %v1661 = vadd.f32 %v1521, %v1564
        %v1662 = vadd.f32 %v1522, %v1568
        %v1663 = vadd.f32 %v1523, %v1564
        %v1664 = vadd.f32 %v1524, %v1568
        %v1665 = vadd.f32 %v1525, %v1564
        %v1666 = vadd.f32 %v1526, %v1568
        %v1667 = vadd.f32 %v1527, %v1564
        %v1668 = vadd.f32 %v1528, %v1568
        %v1669 = vadd.f32 %v1529, %v1564
        %v1670 = vadd.f32 %v1530, %v1568
        %v1671 = vadd.f32 %v1531, %v1564
        %v1672 = vadd.f32 %v1532, %v1568
        %v1673 = vadd.f32 %v1533, %v1564
        %v1674 = vadd.f32 %v1534, %v1568
        %v1675 = vadd.f32 %v1535, %v1564
        %v1676 = vadd.f32 %v1536, %v1568
        %v1677 = vadd.f32 %v1537, %v1564
        %v1678 = vadd.f32 %v1538, %v1568
        %v1679 = vadd.f32 %v1539, %v1564
        %v1680 = vadd.f32 %v1540, %v1568
        %v1681 = vadd.f32 %v1541, %v1564
        %v1682 = vadd.f32 %v1542, %v1568
        %v1683 = vadd.f32 %v1543, %v1564
        %v1684 = vadd.f32 %v1544, %v1568
        %v1685 = vadd.f32 %v1545, %v1564
        %v1686 = vadd.f32 %v1546, %v1568
        %v1687 = vadd.f32 %v1547, %v1564
        %v1688 = vadd.f32 %v1548, %v1568
        %v1689 = vadd.f32 %v1549, %v1564
        %v1690 = vadd.f32 %v1550, %v1568
        %v1691 = vadd.f32 %v1551, %v1564
        %v1692 = vadd.f32 %v1552, %v1568
        %v1693 = vadd.f32 %v1553, %v1564
        %v1694 = vadd.f32 %v1554, %v1568
        %v1695 = vadd.f32 %v1555, %v1564
        %v1696 = vadd.f32 %v1556, %v1568
        %v1697 = vadd.f32 %v1557, %v1564
        %v1698 = vadd.f32 %v1558, %v1568
        %vm1699 = vcmp.gt.f32.partialorder %v1571, 0.0
        %vm1700 = vcmp.gt.f32.partialorder %v1572, 0.0
        %vm1701 = vcmp.gt.f32.partialorder %v1573, 0.0
        %vm1702 = vcmp.gt.f32.partialorder %v1574, 0.0
        %vm1703 = vcmp.gt.f32.partialorder %v1575, 0.0
        %vm1704 = vcmp.gt.f32.partialorder %v1576, 0.0
        %vm1705 = vcmp.gt.f32.partialorder %v1577, 0.0
        %vm1706 = vcmp.gt.f32.partialorder %v1578, 0.0
        %vm1707 = vcmp.gt.f32.partialorder %v1579, 0.0
        %vm1708 = vcmp.gt.f32.partialorder %v1580, 0.0
        %vm1709 = vcmp.gt.f32.partialorder %v1581, 0.0
        %vm1710 = vcmp.gt.f32.partialorder %v1582, 0.0
        %vm1711 = vcmp.gt.f32.partialorder %v1583, 0.0
        %vm1712 = vcmp.gt.f32.partialorder %v1584, 0.0
        %vm1713 = vcmp.gt.f32.partialorder %v1585, 0.0
        %vm1714 = vcmp.gt.f32.partialorder %v1586, 0.0
        %vm1715 = vcmp.gt.f32.partialorder %v1587, 0.0
        %vm1716 = vcmp.gt.f32.partialorder %v1588, 0.0
        %vm1717 = vcmp.gt.f32.partialorder %v1589, 0.0
        %vm1718 = vcmp.gt.f32.partialorder %v1590, 0.0
        %vm1719 = vcmp.gt.f32.partialorder %v1591, 0.0
        %vm1720 = vcmp.gt.f32.partialorder %v1592, 0.0
        %vm1721 = vcmp.gt.f32.partialorder %v1593, 0.0
        %vm1722 = vcmp.gt.f32.partialorder %v1594, 0.0
        %vm1723 = vcmp.gt.f32.partialorder %v1595, 0.0
        %vm1724 = vcmp.gt.f32.partialorder %v1596, 0.0
        %vm1725 = vcmp.gt.f32.partialorder %v1597, 0.0
        %vm1726 = vcmp.gt.f32.partialorder %v1598, 0.0
        %vm1727 = vcmp.gt.f32.partialorder %v1599, 0.0
        %vm1728 = vcmp.gt.f32.partialorder %v1600, 0.0
        %vm1729 = vcmp.gt.f32.partialorder %v1601, 0.0
        %vm1730 = vcmp.gt.f32.partialorder %v1602, 0.0
        %vm1731 = vcmp.gt.f32.partialorder %v1603, 0.0
        %vm1732 = vcmp.gt.f32.partialorder %v1604, 0.0
        %vm1733 = vcmp.gt.f32.partialorder %v1605, 0.0
        %vm1734 = vcmp.gt.f32.partialorder %v1606, 0.0
        %vm1735 = vcmp.gt.f32.partialorder %v1607, 0.0
        %vm1736 = vcmp.gt.f32.partialorder %v1608, 0.0
        %vm1737 = vcmp.gt.f32.partialorder %v1609, 0.0
        %vm1738 = vcmp.gt.f32.partialorder %v1610, 0.0
        %vm1739 = vcmp.gt.f32.partialorder %v1611, 0.0
        %vm1740 = vcmp.gt.f32.partialorder %v1612, 0.0
        %vm1741 = vcmp.gt.f32.partialorder %v1613, 0.0
        %vm1742 = vcmp.gt.f32.partialorder %v1614, 0.0
        %vm1743 = vcmp.gt.f32.partialorder %v1615, 0.0
        %vm1744 = vcmp.gt.f32.partialorder %v1616, 0.0
        %vm1745 = vcmp.gt.f32.partialorder %v1617, 0.0
        %vm1746 = vcmp.gt.f32.partialorder %v1618, 0.0
        %vm1747 = vcmp.gt.f32.partialorder %v1619, 0.0
        %vm1748 = vcmp.gt.f32.partialorder %v1620, 0.0
        %vm1749 = vcmp.gt.f32.partialorder %v1621, 0.0
        %vm1750 = vcmp.gt.f32.partialorder %v1622, 0.0
        %vm1751 = vcmp.gt.f32.partialorder %v1623, 0.0
        %vm1752 = vcmp.gt.f32.partialorder %v1624, 0.0
        %vm1753 = vcmp.gt.f32.partialorder %v1625, 0.0
        %vm1754 = vcmp.gt.f32.partialorder %v1626, 0.0
        %vm1755 = vcmp.gt.f32.partialorder %v1627, 0.0
        %vm1756 = vcmp.gt.f32.partialorder %v1628, 0.0
        %vm1757 = vcmp.gt.f32.partialorder %v1629, 0.0
        %vm1758 = vcmp.gt.f32.partialorder %v1630, 0.0
        %vm1759 = vcmp.gt.f32.partialorder %v1631, 0.0
        %vm1760 = vcmp.gt.f32.partialorder %v1632, 0.0
        %vm1761 = vcmp.gt.f32.partialorder %v1633, 0.0
        %vm1762 = vcmp.gt.f32.partialorder %v1634, 0.0
        %vm1763 = vcmp.gt.f32.partialorder %v1635, 0.0
        %vm1764 = vcmp.gt.f32.partialorder %v1636, 0.0
        %vm1765 = vcmp.gt.f32.partialorder %v1637, 0.0
        %vm1766 = vcmp.gt.f32.partialorder %v1638, 0.0
        %vm1767 = vcmp.gt.f32.partialorder %v1639, 0.0
        %vm1768 = vcmp.gt.f32.partialorder %v1640, 0.0
        %vm1769 = vcmp.gt.f32.partialorder %v1641, 0.0
        %vm1770 = vcmp.gt.f32.partialorder %v1642, 0.0
        %vm1771 = vcmp.gt.f32.partialorder %v1643, 0.0
        %vm1772 = vcmp.gt.f32.partialorder %v1644, 0.0
        %vm1773 = vcmp.gt.f32.partialorder %v1645, 0.0
        %vm1774 = vcmp.gt.f32.partialorder %v1646, 0.0
        %vm1775 = vcmp.gt.f32.partialorder %v1647, 0.0
        %vm1776 = vcmp.gt.f32.partialorder %v1648, 0.0
        %vm1777 = vcmp.gt.f32.partialorder %v1649, 0.0
        %vm1778 = vcmp.gt.f32.partialorder %v1650, 0.0
        %vm1779 = vcmp.gt.f32.partialorder %v1651, 0.0
        %vm1780 = vcmp.gt.f32.partialorder %v1652, 0.0
        %vm1781 = vcmp.gt.f32.partialorder %v1653, 0.0
        %vm1782 = vcmp.gt.f32.partialorder %v1654, 0.0
        %vm1783 = vcmp.gt.f32.partialorder %v1655, 0.0
        %vm1784 = vcmp.gt.f32.partialorder %v1656, 0.0
        %vm1785 = vcmp.gt.f32.partialorder %v1657, 0.0
        %vm1786 = vcmp.gt.f32.partialorder %v1658, 0.0
        %vm1787 = vcmp.gt.f32.partialorder %v1659, 0.0
        %vm1788 = vcmp.gt.f32.partialorder %v1660, 0.0
        %vm1789 = vcmp.gt.f32.partialorder %v1661, 0.0
        %vm1790 = vcmp.gt.f32.partialorder %v1662, 0.0
        %vm1791 = vcmp.gt.f32.partialorder %v1663, 0.0
        %vm1792 = vcmp.gt.f32.partialorder %v1664, 0.0
        %vm1793 = vcmp.gt.f32.partialorder %v1665, 0.0
        %vm1794 = vcmp.gt.f32.partialorder %v1666, 0.0
        %vm1795 = vcmp.gt.f32.partialorder %v1667, 0.0
        %vm1796 = vcmp.gt.f32.partialorder %v1668, 0.0
        %vm1797 = vcmp.gt.f32.partialorder %v1669, 0.0
        %vm1798 = vcmp.gt.f32.partialorder %v1670, 0.0
        %vm1799 = vcmp.gt.f32.partialorder %v1671, 0.0
        %vm1800 = vcmp.gt.f32.partialorder %v1672, 0.0
        %vm1801 = vcmp.gt.f32.partialorder %v1673, 0.0
        %vm1802 = vcmp.gt.f32.partialorder %v1674, 0.0
        %vm1803 = vcmp.gt.f32.partialorder %v1675, 0.0
        %vm1804 = vcmp.gt.f32.partialorder %v1676, 0.0
        %vm1805 = vcmp.gt.f32.partialorder %v1677, 0.0
        %vm1806 = vcmp.gt.f32.partialorder %v1678, 0.0
        %vm1807 = vcmp.gt.f32.partialorder %v1679, 0.0
        %vm1808 = vcmp.gt.f32.partialorder %v1680, 0.0
        %vm1809 = vcmp.gt.f32.partialorder %v1681, 0.0
        %vm1810 = vcmp.gt.f32.partialorder %v1682, 0.0
        %vm1811 = vcmp.gt.f32.partialorder %v1683, 0.0
        %vm1812 = vcmp.gt.f32.partialorder %v1684, 0.0
        %vm1813 = vcmp.gt.f32.partialorder %v1685, 0.0
        %vm1814 = vcmp.gt.f32.partialorder %v1686, 0.0
        %vm1815 = vcmp.gt.f32.partialorder %v1687, 0.0
        %vm1816 = vcmp.gt.f32.partialorder %v1688, 0.0
        %vm1817 = vcmp.gt.f32.partialorder %v1689, 0.0
        %vm1818 = vcmp.gt.f32.partialorder %v1690, 0.0
        %vm1819 = vcmp.gt.f32.partialorder %v1691, 0.0
        %vm1820 = vcmp.gt.f32.partialorder %v1692, 0.0
        %vm1821 = vcmp.gt.f32.partialorder %v1693, 0.0
        %vm1822 = vcmp.gt.f32.partialorder %v1694, 0.0
        %vm1823 = vcmp.gt.f32.partialorder %v1695, 0.0
        %vm1824 = vcmp.gt.f32.partialorder %v1696, 0.0
        %vm1825 = vcmp.gt.f32.partialorder %v1697, 0.0
        %vm1826 = vcmp.gt.f32.partialorder %v1698, 0.0
        %v1827 = vmul.f32 %v1571, 0.2
        %v1828 = vmul.f32 %v1572, 0.2
        %v1829 = vmul.f32 %v1573, 0.2
        %v1830 = vmul.f32 %v1574, 0.2
        %v1831 = vmul.f32 %v1575, 0.2
        %v1832 = vmul.f32 %v1576, 0.2
        %v1833 = vmul.f32 %v1577, 0.2
        %v1834 = vmul.f32 %v1578, 0.2
        %v1835 = vmul.f32 %v1579, 0.2
        %v1836 = vmul.f32 %v1580, 0.2
        %v1837 = vmul.f32 %v1581, 0.2
        %v1838 = vmul.f32 %v1582, 0.2
        %v1839 = vmul.f32 %v1583, 0.2
        %v1840 = vmul.f32 %v1584, 0.2
        %v1841 = vmul.f32 %v1585, 0.2
        %v1842 = vmul.f32 %v1586, 0.2
        %v1843 = vmul.f32 %v1587, 0.2
        %v1844 = vmul.f32 %v1588, 0.2
        %v1845 = vmul.f32 %v1589, 0.2
        %v1846 = vmul.f32 %v1590, 0.2
        %v1847 = vmul.f32 %v1591, 0.2
        %v1848 = vmul.f32 %v1592, 0.2
        %v1849 = vmul.f32 %v1593, 0.2
        %v1850 = vmul.f32 %v1594, 0.2
        %v1851 = vmul.f32 %v1595, 0.2
        %v1852 = vmul.f32 %v1596, 0.2
        %v1853 = vmul.f32 %v1597, 0.2
        %v1854 = vmul.f32 %v1598, 0.2
        %v1855 = vmul.f32 %v1599, 0.2
        %v1856 = vmul.f32 %v1600, 0.2
        %v1857 = vmul.f32 %v1601, 0.2
        %v1858 = vmul.f32 %v1602, 0.2
        %v1859 = vmul.f32 %v1603, 0.2
        %v1860 = vmul.f32 %v1604, 0.2
        %v1861 = vmul.f32 %v1605, 0.2
        %v1862 = vmul.f32 %v1606, 0.2
        %v1863 = vmul.f32 %v1607, 0.2
        %v1864 = vmul.f32 %v1608, 0.2
        %v1865 = vmul.f32 %v1609, 0.2
        %v1866 = vmul.f32 %v1610, 0.2
        %v1867 = vmul.f32 %v1611, 0.2
        %v1868 = vmul.f32 %v1612, 0.2
        %v1869 = vmul.f32 %v1613, 0.2
        %v1870 = vmul.f32 %v1614, 0.2
        %v1871 = vmul.f32 %v1615, 0.2
        %v1872 = vmul.f32 %v1616, 0.2
        %v1873 = vmul.f32 %v1617, 0.2
        %v1874 = vmul.f32 %v1618, 0.2
        %v1875 = vmul.f32 %v1619, 0.2
        %v1876 = vmul.f32 %v1620, 0.2
        %v1877 = vmul.f32 %v1621, 0.2
        %v1878 = vmul.f32 %v1622, 0.2
        %v1879 = vmul.f32 %v1623, 0.2
        %v1880 = vmul.f32 %v1624, 0.2
        %v1881 = vmul.f32 %v1625, 0.2
        %v1882 = vmul.f32 %v1626, 0.2
        %v1883 = vmul.f32 %v1627, 0.2
        %v1884 = vmul.f32 %v1628, 0.2
        %v1885 = vmul.f32 %v1629, 0.2
        %v1886 = vmul.f32 %v1630, 0.2
        %v1887 = vmul.f32 %v1631, 0.2
        %v1888 = vmul.f32 %v1632, 0.2
        %v1889 = vmul.f32 %v1633, 0.2
        %v1890 = vmul.f32 %v1634, 0.2
        %v1891 = vmul.f32 %v1635, 0.2
        %v1892 = vmul.f32 %v1636, 0.2
        %v1893 = vmul.f32 %v1637, 0.2
        %v1894 = vmul.f32 %v1638, 0.2
        %v1895 = vmul.f32 %v1639, 0.2
        %v1896 = vmul.f32 %v1640, 0.2
        %v1897 = vmul.f32 %v1641, 0.2
        %v1898 = vmul.f32 %v1642, 0.2
        %v1899 = vmul.f32 %v1643, 0.2
        %v1900 = vmul.f32 %v1644, 0.2
        %v1901 = vmul.f32 %v1645, 0.2
        %v1902 = vmul.f32 %v1646, 0.2
        %v1903 = vmul.f32 %v1647, 0.2
        %v1904 = vmul.f32 %v1648, 0.2
        %v1905 = vmul.f32 %v1649, 0.2
        %v1906 = vmul.f32 %v1650, 0.2
        %v1907 = vmul.f32 %v1651, 0.2
        %v1908 = vmul.f32 %v1652, 0.2
        %v1909 = vmul.f32 %v1653, 0.2
        %v1910 = vmul.f32 %v1654, 0.2
        %v1911 = vmul.f32 %v1655, 0.2
        %v1912 = vmul.f32 %v1656, 0.2
        %v1913 = vmul.f32 %v1657, 0.2
        %v1914 = vmul.f32 %v1658, 0.2
        %v1915 = vmul.f32 %v1659, 0.2
        %v1916 = vmul.f32 %v1660, 0.2
        %v1917 = vmul.f32 %v1661, 0.2
        %v1918 = vmul.f32 %v1662, 0.2
        %v1919 = vmul.f32 %v1663, 0.2
        %v1920 = vmul.f32 %v1664, 0.2
        %v1921 = vmul.f32 %v1665, 0.2
        %v1922 = vmul.f32 %v1666, 0.2
        %v1923 = vmul.f32 %v1667, 0.2
        %v1924 = vmul.f32 %v1668, 0.2
        %v1925 = vmul.f32 %v1669, 0.2
        %v1926 = vmul.f32 %v1670, 0.2
        %v1927 = vmul.f32 %v1671, 0.2
        %v1928 = vmul.f32 %v1672, 0.2
        %v1929 = vmul.f32 %v1673, 0.2
        %v1930 = vmul.f32 %v1674, 0.2
        %v1931 = vmul.f32 %v1675, 0.2
        %v1932 = vmul.f32 %v1676, 0.2
        %v1933 = vmul.f32 %v1677, 0.2
        %v1934 = vmul.f32 %v1678, 0.2
        %v1935 = vmul.f32 %v1679, 0.2
        %v1936 = vmul.f32 %v1680, 0.2
        %v1937 = vmul.f32 %v1681, 0.2
        %v1938 = vmul.f32 %v1682, 0.2
        %v1939 = vmul.f32 %v1683, 0.2
        %v1940 = vmul.f32 %v1684, 0.2
        %v1941 = vmul.f32 %v1685, 0.2
        %v1942 = vmul.f32 %v1686, 0.2
        %v1943 = vmul.f32 %v1687, 0.2
        %v1944 = vmul.f32 %v1688, 0.2
        %v1945 = vmul.f32 %v1689, 0.2
        %v1946 = vmul.f32 %v1690, 0.2
        %v1947 = vmul.f32 %v1691, 0.2
        %v1948 = vmul.f32 %v1692, 0.2
        %v1949 = vmul.f32 %v1693, 0.2
        %v1950 = vmul.f32 %v1694, 0.2
        %v1951 = vmul.f32 %v1695, 0.2
        %v1952 = vmul.f32 %v1696, 0.2
        %v1953 = vmul.f32 %v1697, 0.2
        %v1954 = vmul.f32 %v1698, 0.2
        %v1955 = vsel %vm1699, %v1571, %v1827
        %v1956 = vsel %vm1700, %v1572, %v1828
        %v1957 = vsel %vm1701, %v1573, %v1829
        %v1958 = vsel %vm1702, %v1574, %v1830
        %v1959 = vsel %vm1703, %v1575, %v1831
        %v1960 = vsel %vm1704, %v1576, %v1832
        %v1961 = vsel %vm1705, %v1577, %v1833
        %v1962 = vsel %vm1706, %v1578, %v1834
        %v1963 = vsel %vm1707, %v1579, %v1835
        %v1964 = vsel %vm1708, %v1580, %v1836
        %v1965 = vsel %vm1709, %v1581, %v1837
        %v1966 = vsel %vm1710, %v1582, %v1838
        %v1967 = vsel %vm1711, %v1583, %v1839
        %v1968 = vsel %vm1712, %v1584, %v1840
        %v1969 = vsel %vm1713, %v1585, %v1841
        %v1970 = vsel %vm1714, %v1586, %v1842
        %v1971 = vsel %vm1715, %v1587, %v1843
        %v1972 = vsel %vm1716, %v1588, %v1844
        %v1973 = vsel %vm1717, %v1589, %v1845
        %v1974 = vsel %vm1718, %v1590, %v1846
        %v1975 = vsel %vm1719, %v1591, %v1847
        %v1976 = vsel %vm1720, %v1592, %v1848
        %v1977 = vsel %vm1721, %v1593, %v1849
        %v1978 = vsel %vm1722, %v1594, %v1850
        %v1979 = vsel %vm1723, %v1595, %v1851
        %v1980 = vsel %vm1724, %v1596, %v1852
        %v1981 = vsel %vm1725, %v1597, %v1853
        %v1982 = vsel %vm1726, %v1598, %v1854
        %v1983 = vsel %vm1727, %v1599, %v1855
        %v1984 = vsel %vm1728, %v1600, %v1856
        %v1985 = vsel %vm1729, %v1601, %v1857
        %v1986 = vsel %vm1730, %v1602, %v1858
        %v1987 = vsel %vm1731, %v1603, %v1859
        %v1988 = vsel %vm1732, %v1604, %v1860
        %v1989 = vsel %vm1733, %v1605, %v1861
        %v1990 = vsel %vm1734, %v1606, %v1862
        %v1991 = vsel %vm1735, %v1607, %v1863
        %v1992 = vsel %vm1736, %v1608, %v1864
        %v1993 = vsel %vm1737, %v1609, %v1865
        %v1994 = vsel %vm1738, %v1610, %v1866
        %v1995 = vsel %vm1739, %v1611, %v1867
        %v1996 = vsel %vm1740, %v1612, %v1868
        %v1997 = vsel %vm1741, %v1613, %v1869
        %v1998 = vsel %vm1742, %v1614, %v1870
        %v1999 = vsel %vm1743, %v1615, %v1871
        %v2000 = vsel %vm1744, %v1616, %v1872
        %v2001 = vsel %vm1745, %v1617, %v1873
        %v2002 = vsel %vm1746, %v1618, %v1874
        %v2003 = vsel %vm1747, %v1619, %v1875
        %v2004 = vsel %vm1748, %v1620, %v1876
        %v2005 = vsel %vm1749, %v1621, %v1877
        %v2006 = vsel %vm1750, %v1622, %v1878
        %v2007 = vsel %vm1751, %v1623, %v1879
        %v2008 = vsel %vm1752, %v1624, %v1880
        %v2009 = vsel %vm1753, %v1625, %v1881
        %v2010 = vsel %vm1754, %v1626, %v1882
        %v2011 = vsel %vm1755, %v1627, %v1883
        %v2012 = vsel %vm1756, %v1628, %v1884
        %v2013 = vsel %vm1757, %v1629, %v1885
        %v2014 = vsel %vm1758, %v1630, %v1886
        %v2015 = vsel %vm1759, %v1631, %v1887
        %v2016 = vsel %vm1760, %v1632, %v1888
        %v2017 = vsel %vm1761, %v1633, %v1889
        %v2018 = vsel %vm1762, %v1634, %v1890
        %v2019 = vsel %vm1763, %v1635, %v1891
        %v2020 = vsel %vm1764, %v1636, %v1892
        %v2021 = vsel %vm1765, %v1637, %v1893
        %v2022 = vsel %vm1766, %v1638, %v1894
        %v2023 = vsel %vm1767, %v1639, %v1895
        %v2024 = vsel %vm1768, %v1640, %v1896
        %v2025 = vsel %vm1769, %v1641, %v1897
        %v2026 = vsel %vm1770, %v1642, %v1898
        %v2027 = vsel %vm1771, %v1643, %v1899
        %v2028 = vsel %vm1772, %v1644, %v1900
        %v2029 = vsel %vm1773, %v1645, %v1901
        %v2030 = vsel %vm1774, %v1646, %v1902
        %v2031 = vsel %vm1775, %v1647, %v1903
        %v2032 = vsel %vm1776, %v1648, %v1904
        %v2033 = vsel %vm1777, %v1649, %v1905
        %v2034 = vsel %vm1778, %v1650, %v1906
        %v2035 = vsel %vm1779, %v1651, %v1907
        %v2036 = vsel %vm1780, %v1652, %v1908
        %v2037 = vsel %vm1781, %v1653, %v1909
        %v2038 = vsel %vm1782, %v1654, %v1910
        %v2039 = vsel %vm1783, %v1655, %v1911
        %v2040 = vsel %vm1784, %v1656, %v1912
        %v2041 = vsel %vm1785, %v1657, %v1913
        %v2042 = vsel %vm1786, %v1658, %v1914
        %v2043 = vsel %vm1787, %v1659, %v1915
        %v2044 = vsel %vm1788, %v1660, %v1916
        %v2045 = vsel %vm1789, %v1661, %v1917
        %v2046 = vsel %vm1790, %v1662, %v1918
        %v2047 = vsel %vm1791, %v1663, %v1919
        %v2048 = vsel %vm1792, %v1664, %v1920
        %v2049 = vsel %vm1793, %v1665, %v1921
        %v2050 = vsel %vm1794, %v1666, %v1922
        %v2051 = vsel %vm1795, %v1667, %v1923
        %v2052 = vsel %vm1796, %v1668, %v1924
        %v2053 = vsel %vm1797, %v1669, %v1925
        %v2054 = vsel %vm1798, %v1670, %v1926
        %v2055 = vsel %vm1799, %v1671, %v1927
        %v2056 = vsel %vm1800, %v1672, %v1928
        %v2057 = vsel %vm1801, %v1673, %v1929
        %v2058 = vsel %vm1802, %v1674, %v1930
        %v2059 = vsel %vm1803, %v1675, %v1931
        %v2060 = vsel %vm1804, %v1676, %v1932
        %v2061 = vsel %vm1805, %v1677, %v1933
        %v2062 = vsel %vm1806, %v1678, %v1934
        %v2063 = vsel %vm1807, %v1679, %v1935
        %v2064 = vsel %vm1808, %v1680, %v1936
        %v2065 = vsel %vm1809, %v1681, %v1937
        %v2066 = vsel %vm1810, %v1682, %v1938
        %v2067 = vsel %vm1811, %v1683, %v1939
        %v2068 = vsel %vm1812, %v1684, %v1940
        %v2069 = vsel %vm1813, %v1685, %v1941
        %v2070 = vsel %vm1814, %v1686, %v1942
        %v2071 = vsel %vm1815, %v1687, %v1943
        %v2072 = vsel %vm1816, %v1688, %v1944
        %v2073 = vsel %vm1817, %v1689, %v1945
        %v2074 = vsel %vm1818, %v1690, %v1946
        %v2075 = vsel %vm1819, %v1691, %v1947
        %v2076 = vsel %vm1820, %v1692, %v1948
        %v2077 = vsel %vm1821, %v1693, %v1949
        %v2078 = vsel %vm1822, %v1694, %v1950
        %v2079 = vsel %vm1823, %v1695, %v1951
        %v2080 = vsel %vm1824, %v1696, %v1952
        %v2081 = vsel %vm1825, %v1697, %v1953
        %v2082 = vsel %vm1826, %v1698, %v1954
        %v2083 = vmax.f32 %v1955, %v1971
        %v2084 = vmax.f32 %v2083, %v1987
        %v2085 = vmax.f32 %v2084, %v2003
        %v2086 = vmax.f32 %v2085, %v2019
        %v2087 = vmax.f32 %v2086, %v2035
        %v2088 = vmax.f32 %v2087, %v2051
        %v2089 = vmax.f32 %v2088, %v2067
        %v2090 = vmax.f32 %v1956, %v1972
        %v2091 = vmax.f32 %v2090, %v1988
        %v2092 = vmax.f32 %v2091, %v2004
        %v2093 = vmax.f32 %v2092, %v2020
        %v2094 = vmax.f32 %v2093, %v2036
        %v2095 = vmax.f32 %v2094, %v2052
        %v2096 = vmax.f32 %v2095, %v2068
        %v2097 = vmax.f32 %v1957, %v1973
        %v2098 = vmax.f32 %v2097, %v1989
        %v2099 = vmax.f32 %v2098, %v2005
        %v2100 = vmax.f32 %v2099, %v2021
        %v2101 = vmax.f32 %v2100, %v2037
        %v2102 = vmax.f32 %v2101, %v2053
        %v2103 = vmax.f32 %v2102, %v2069
        %v2104 = vmax.f32 %v1958, %v1974
        %v2105 = vmax.f32 %v2104, %v1990
        %v2106 = vmax.f32 %v2105, %v2006
        %v2107 = vmax.f32 %v2106, %v2022
        %v2108 = vmax.f32 %v2107, %v2038
        %v2109 = vmax.f32 %v2108, %v2054
        %v2110 = vmax.f32 %v2109, %v2070
        %v2111 = vmax.f32 %v1959, %v1975
        %v2112 = vmax.f32 %v2111, %v1991
        %v2113 = vmax.f32 %v2112, %v2007
        %v2114 = vmax.f32 %v2113, %v2023
        %v2115 = vmax.f32 %v2114, %v2039
        %v2116 = vmax.f32 %v2115, %v2055
        %v2117 = vmax.f32 %v2116, %v2071
        %v2118 = vmax.f32 %v1960, %v1976
        %v2119 = vmax.f32 %v2118, %v1992
        %v2120 = vmax.f32 %v2119, %v2008
        %v2121 = vmax.f32 %v2120, %v2024
        %v2122 = vmax.f32 %v2121, %v2040
        %v2123 = vmax.f32 %v2122, %v2056
        %v2124 = vmax.f32 %v2123, %v2072
        %v2125 = vmax.f32 %v1961, %v1977
        %v2126 = vmax.f32 %v2125, %v1993
        %v2127 = vmax.f32 %v2126, %v2009
        %v2128 = vmax.f32 %v2127, %v2025
        %v2129 = vmax.f32 %v2128, %v2041
        %v2130 = vmax.f32 %v2129, %v2057
        %v2131 = vmax.f32 %v2130, %v2073
        %v2132 = vmax.f32 %v1962, %v1978
        %v2133 = vmax.f32 %v2132, %v1994
        %v2134 = vmax.f32 %v2133, %v2010
        %v2135 = vmax.f32 %v2134, %v2026
        %v2136 = vmax.f32 %v2135, %v2042
        %v2137 = vmax.f32 %v2136, %v2058
        %v2138 = vmax.f32 %v2137, %v2074
        %v2139 = vmax.f32 %v1963, %v1979
        %v2140 = vmax.f32 %v2139, %v1995
        %v2141 = vmax.f32 %v2140, %v2011
        %v2142 = vmax.f32 %v2141, %v2027
        %v2143 = vmax.f32 %v2142, %v2043
        %v2144 = vmax.f32 %v2143, %v2059
        %v2145 = vmax.f32 %v2144, %v2075
        %v2146 = vmax.f32 %v1964, %v1980
        %v2147 = vmax.f32 %v2146, %v1996
        %v2148 = vmax.f32 %v2147, %v2012
        %v2149 = vmax.f32 %v2148, %v2028
        %v2150 = vmax.f32 %v2149, %v2044
        %v2151 = vmax.f32 %v2150, %v2060
        %v2152 = vmax.f32 %v2151, %v2076
        %v2153 = vmax.f32 %v1965, %v1981
        %v2154 = vmax.f32 %v2153, %v1997
        %v2155 = vmax.f32 %v2154, %v2013
        %v2156 = vmax.f32 %v2155, %v2029
        %v2157 = vmax.f32 %v2156, %v2045
        %v2158 = vmax.f32 %v2157, %v2061
        %v2159 = vmax.f32 %v2158, %v2077
        %v2160 = vmax.f32 %v1966, %v1982
        %v2161 = vmax.f32 %v2160, %v1998
        %v2162 = vmax.f32 %v2161, %v2014
        %v2163 = vmax.f32 %v2162, %v2030
        %v2164 = vmax.f32 %v2163, %v2046
        %v2165 = vmax.f32 %v2164, %v2062
        %v2166 = vmax.f32 %v2165, %v2078
        %v2167 = vmax.f32 %v1967, %v1983
        %v2168 = vmax.f32 %v2167, %v1999
        %v2169 = vmax.f32 %v2168, %v2015
        %v2170 = vmax.f32 %v2169, %v2031
        %v2171 = vmax.f32 %v2170, %v2047
        %v2172 = vmax.f32 %v2171, %v2063
        %v2173 = vmax.f32 %v2172, %v2079
        %v2174 = vmax.f32 %v1968, %v1984
        %v2175 = vmax.f32 %v2174, %v2000
        %v2176 = vmax.f32 %v2175, %v2016
        %v2177 = vmax.f32 %v2176, %v2032
        %v2178 = vmax.f32 %v2177, %v2048
        %v2179 = vmax.f32 %v2178, %v2064
        %v2180 = vmax.f32 %v2179, %v2080
        %v2181 = vmax.f32 %v1969, %v1985
        %v2182 = vmax.f32 %v2181, %v2001
        %v2183 = vmax.f32 %v2182, %v2017
        %v2184 = vmax.f32 %v2183, %v2033
        %v2185 = vmax.f32 %v2184, %v2049
        %v2186 = vmax.f32 %v2185, %v2065
        %v2187 = vmax.f32 %v2186, %v2081
        %v2188 = vmax.f32 %v1970, %v1986
        %v2189 = vmax.f32 %v2188, %v2002
        %v2190 = vmax.f32 %v2189, %v2018
        %v2191 = vmax.f32 %v2190, %v2034
        %v2192 = vmax.f32 %v2191, %v2050
        %v2193 = vmax.f32 %v2192, %v2066
        %v2194 = vmax.f32 %v2193, %v2082
        %2195 = vst [vmem:[%s488] sm:$0xff] %v2089
        %2196 = vst [vmem:[%s488 + $0x8] sm:$0xff] %v2096
        %2197 = vst [vmem:[%s488 + $0x10] sm:$0xff] %v2103
        %2198 = vst [vmem:[%s488 + $0x18] sm:$0xff] %v2110
        %2199 = vst [vmem:[%s488 + $0x20] sm:$0xff] %v2117
        %2200 = vst [vmem:[%s488 + $0x28] sm:$0xff] %v2124
        %2201 = vst [vmem:[%s488 + $0x30] sm:$0xff] %v2131
        %2202 = vst [vmem:[%s488 + $0x38] sm:$0xff] %v2138
        %2203 = vst [vmem:[%s488 + $0x40] sm:$0xff] %v2145
        %2204 = vst [vmem:[%s488 + $0x48] sm:$0xff] %v2152
        %2205 = vst [vmem:[%s488 + $0x50] sm:$0xff] %v2159
        %2206 = vst [vmem:[%s488 + $0x58] sm:$0xff] %v2166
        %2207 = vst [vmem:[%s488 + $0x60] sm:$0xff] %v2173
        %2208 = vst [vmem:[%s488 + $0x68] sm:$0xff] %v2180
        %2209 = vst [vmem:[%s488 + $0x70] sm:$0xff] %v2187
        %2210 = vst [vmem:[%s488 + $0x78] sm:$0xff] %v2194
        %s2211 = smul.u32 8, %s15
        %p2212 = scmp.lt.s32.totalorder %s2211, 15
        %s2213 = scalar_select %p2212, %s2211, 15
        %s2214 = smul.addr %s2213, 2
        %s2215 = smul.addr %s2214, 8
        %s2216 = scalar_lea.vmem %s4, %s2215
        // Predicated region
        $region75: #{grasp_evaluator2_forward.8} parent=69 // pred_check
          %p2217 = pneg %p122
        $region76: #{grasp_evaluator2_forward.8} parent=69 // pred_check_branch
          %2219 = sbr.rel (%p2217) target = $region78
        $region77: #{grasp_evaluator2_forward.8} parent=69 // pred_region
          %s2220 = smul.u32 8, %s15
        $region78: #{grasp_evaluator2_forward.8} parent=69 // pred_fallthru
          _
      $region70: #{grasp_evaluator2_forward.8} parent=5 // pred_fallthru
        _
      %p2221 = scmp.le.s32.totalorder 2, %s10
      // Predicated region
      $region79: #{grasp_evaluator2_forward.8} parent=5 // pred_check
        %p2222 = pneg %p2221
      $region80: #{grasp_evaluator2_forward.8} parent=5 // pred_check_branch
        %2224 = sbr.rel (%p2222) target = $region82
      $region81: #{grasp_evaluator2_forward.8} parent=5 // pred_region
        %s2225 = ssub.s32 %s10, 2
        // Predicated region
        $region83: #{grasp_evaluator2_forward.8} parent=81 // pred_check
          %p2226 = pneg %p128
        $region84: #{grasp_evaluator2_forward.8} parent=81 // pred_check_branch
          %2228 = sbr.rel (%p2226) target = $region86
        $region85: #{grasp_evaluator2_forward.8} parent=81 // pred_region
          %s2229 = smul.u32 8, %s16
          %p2230 = scmp.lt.s32.totalorder %s2229, 15
          %s2231 = scalar_select %p2230, %s2229, 15
          %s2232 = smul.addr %s2231, 2
          %s2233 = smul.addr %s2232, 8
          %s2234 = scalar_lea.vmem %s4, %s2233
        $region86: #{grasp_evaluator2_forward.8} parent=81 // pred_fallthru
          _
      $region82: #{grasp_evaluator2_forward.8} parent=5 // pred_fallthru
        _
    $region6: #{grasp_evaluator2_forward.8} parent=1 // loop_footer
      %s14 = sadd.s32 1, %s10
    $region7: #{grasp_evaluator2_forward.8} parent=1 // loop_footer_branch
      %9 = sbr.rel target = $region3
    $region8: #{grasp_evaluator2_forward.8} parent=1 // loop_exit
      _

// kernel: grasp_evaluator2_forward.9
$region0: #{grasp_evaluator2_forward.9}
  #allocation0 [shape = 'u32[]', space=smem, size = 0x4, offset = 0x4, fixed_abs, tag = 'smem constant byte address 0x4 - core index']
  #allocation1 [shape = 'u32[144,128]{1,0:T(1,128)}', space=vmem, size = 0x12000, scoped, tag = 'internal scratch']
  %s0 = inlined_call_operand.vmem [shape: bf16[128,512], index: 0, kind: input, shape index: {}]
  %s1 = inlined_call_operand.vmem [shape: bf16[512,64], index: 1, kind: input, shape index: {}]
  %s2 = inlined_call_operand.vmem [shape: f32[1,64], index: 2, kind: input, shape index: {}]
  %s3 = inlined_call_operand.vmem [shape: f32[1,64], index: 3, kind: input, shape index: {}]
  %s4 = inlined_call_operand.vmem [shape: bf16[64,512], index: 4, kind: input, shape index: {}]
  %s5 = inlined_call_operand.vmem [shape: bf16[64,512], index: 5, kind: input, shape index: {}]
  %s6 = inlined_call_operand.vmem [shape: f32[1,512], index: 6, kind: input, shape index: {}]
  %s7 = inlined_call_operand.vmem [shape: f32[1,512], index: 7, kind: input, shape index: {}]
  %s8 = inlined_call_operand.vmem [shape: bf16[512,384], index: 8, kind: input, shape index: {}]
  %s9 = inlined_call_operand.vmem [shape: f32[1,384], index: 9, kind: input, shape index: {}]
  %s10 = inlined_call_operand.vmem [shape: f32[1,384], index: 10, kind: input, shape index: {}]
  %s11 = inlined_call_operand.vmem [shape: bf16[256,128], index: 11, kind: input, shape index: {}]
  %s12 = inlined_call_operand.vmem [shape: f32[1,128], index: 12, kind: input, shape index: {}]
  %s13 = inlined_call_operand.vmem [shape: bf16[128,128], index: 13, kind: input, shape index: {}]
  %s14 = inlined_call_operand.vmem [shape: f32[1,128], index: 14, kind: input, shape index: {}]
  %s15 = inlined_call_operand.vmem [shape: f32[2,256], index: 15, kind: output, shape index: {}]
  %s16 = sld [smem:[#allocation0]]
  $region70: #{grasp_evaluator2_forward.9} parent=0
    _
  %s18 = ssub.s32 1, %s16
  %s19 = scalar_select 0, %s18, %s16
  // Predicated region
  $region2: #{grasp_evaluator2_forward.9} parent=0 // pred_check
    _
  $region3: #{grasp_evaluator2_forward.9} parent=0 // pred_check_branch
    %21 = sbr.rel (0) target = $region5
  $region4: #{grasp_evaluator2_forward.9} parent=0 // pred_region
    _
  $region5: #{grasp_evaluator2_forward.9} parent=0 // pred_fallthru
    _
  // Predicated region
  $region6: #{grasp_evaluator2_forward.9} parent=0 // pred_check
    _
  $region7: #{grasp_evaluator2_forward.9} parent=0 // pred_check_branch
    %23 = sbr.rel (0) target = $region9
  $region8: #{grasp_evaluator2_forward.9} parent=0 // pred_region
    _
  $region9: #{grasp_evaluator2_forward.9} parent=0 // pred_fallthru
    _
  // Predicated region
  $region10: #{grasp_evaluator2_forward.9} parent=0 // pred_check
    _
  $region11: #{grasp_evaluator2_forward.9} parent=0 // pred_check_branch
    %25 = sbr.rel (0) target = $region13
  $region12: #{grasp_evaluator2_forward.9} parent=0 // pred_region
    _
  $region13: #{grasp_evaluator2_forward.9} parent=0 // pred_fallthru
    _
  // Predicated region
  $region14: #{grasp_evaluator2_forward.9} parent=0 // pred_check
    _
  $region15: #{grasp_evaluator2_forward.9} parent=0 // pred_check_branch
    %27 = sbr.rel (0) target = $region17
  $region16: #{grasp_evaluator2_forward.9} parent=0 // pred_region
    _
  $region17: #{grasp_evaluator2_forward.9} parent=0 // pred_fallthru
    _
  // Predicated region
  $region18: #{grasp_evaluator2_forward.9} parent=0 // pred_check
    _
  $region19: #{grasp_evaluator2_forward.9} parent=0 // pred_check_branch
    %29 = sbr.rel (0) target = $region21
  $region20: #{grasp_evaluator2_forward.9} parent=0 // pred_region
    _
  $region21: #{grasp_evaluator2_forward.9} parent=0 // pred_fallthru
    _
  // Predicated region
  $region22: #{grasp_evaluator2_forward.9} parent=0 // pred_check
    _
  $region23: #{grasp_evaluator2_forward.9} parent=0 // pred_check_branch
    %31 = sbr.rel (0) target = $region25
  $region24: #{grasp_evaluator2_forward.9} parent=0 // pred_region
    _
  $region25: #{grasp_evaluator2_forward.9} parent=0 // pred_fallthru
    _
  // Predicated region
  $region26: #{grasp_evaluator2_forward.9} parent=0 // pred_check
    _
  $region27: #{grasp_evaluator2_forward.9} parent=0 // pred_check_branch
    %33 = sbr.rel (0) target = $region29
  $region28: #{grasp_evaluator2_forward.9} parent=0 // pred_region
    _
  $region29: #{grasp_evaluator2_forward.9} parent=0 // pred_fallthru
    _
  // Predicated region
  $region30: #{grasp_evaluator2_forward.9} parent=0 // pred_check
    _
  $region31: #{grasp_evaluator2_forward.9} parent=0 // pred_check_branch
    %35 = sbr.rel (0) target = $region33
  $region32: #{grasp_evaluator2_forward.9} parent=0 // pred_region
    _
  $region33: #{grasp_evaluator2_forward.9} parent=0 // pred_fallthru
    _
  // Predicated region
  $region34: #{grasp_evaluator2_forward.9} parent=0 // pred_check
    _
  $region35: #{grasp_evaluator2_forward.9} parent=0 // pred_check_branch
    %37 = sbr.rel (0) target = $region37
  $region36: #{grasp_evaluator2_forward.9} parent=0 // pred_region
    _
  $region37: #{grasp_evaluator2_forward.9} parent=0 // pred_fallthru
    _
  // Predicated region
  $region38: #{grasp_evaluator2_forward.9} parent=0 // pred_check
    _
  $region39: #{grasp_evaluator2_forward.9} parent=0 // pred_check_branch
    %39 = sbr.rel (0) target = $region41
  $region40: #{grasp_evaluator2_forward.9} parent=0 // pred_region
    _
  $region41: #{grasp_evaluator2_forward.9} parent=0 // pred_fallthru
    _
  // Predicated region
  $region42: #{grasp_evaluator2_forward.9} parent=0 // pred_check
    _
  $region43: #{grasp_evaluator2_forward.9} parent=0 // pred_check_branch
    %41 = sbr.rel (0) target = $region45
  $region44: #{grasp_evaluator2_forward.9} parent=0 // pred_region
    _
  $region45: #{grasp_evaluator2_forward.9} parent=0 // pred_fallthru
    _
  // Predicated region
  $region46: #{grasp_evaluator2_forward.9} parent=0 // pred_check
    _
  $region47: #{grasp_evaluator2_forward.9} parent=0 // pred_check_branch
    %43 = sbr.rel (0) target = $region49
  $region48: #{grasp_evaluator2_forward.9} parent=0 // pred_region
    _
  $region49: #{grasp_evaluator2_forward.9} parent=0 // pred_fallthru
    _
  // Predicated region
  $region50: #{grasp_evaluator2_forward.9} parent=0 // pred_check
    _
  $region51: #{grasp_evaluator2_forward.9} parent=0 // pred_check_branch
    %45 = sbr.rel (0) target = $region53
  $region52: #{grasp_evaluator2_forward.9} parent=0 // pred_region
    _
  $region53: #{grasp_evaluator2_forward.9} parent=0 // pred_fallthru
    _
  // Predicated region
  $region54: #{grasp_evaluator2_forward.9} parent=0 // pred_check
    _
  $region55: #{grasp_evaluator2_forward.9} parent=0 // pred_check_branch
    %47 = sbr.rel (0) target = $region57
  $region56: #{grasp_evaluator2_forward.9} parent=0 // pred_region
    _
  $region57: #{grasp_evaluator2_forward.9} parent=0 // pred_fallthru
    _
  // Predicated region
  $region58: #{grasp_evaluator2_forward.9} parent=0 // pred_check
    _
  $region59: #{grasp_evaluator2_forward.9} parent=0 // pred_check_branch
    %49 = sbr.rel (0) target = $region61
  $region60: #{grasp_evaluator2_forward.9} parent=0 // pred_region
    _
  $region61: #{grasp_evaluator2_forward.9} parent=0 // pred_fallthru
    _
  %v51 = vld [vmem:[%s0] sm:$0xff]
  %v52 = vld [vmem:[%s0 + $0x8] sm:$0xff]
  %v53 = vld [vmem:[%s0 + $0x10] sm:$0xff]
  %v54 = vld [vmem:[%s0 + $0x18] sm:$0xff]
  %v55 = vld [vmem:[%s0 + $0x20] sm:$0xff]
  %v56 = vld [vmem:[%s0 + $0x28] sm:$0xff]
  %v57 = vld [vmem:[%s0 + $0x30] sm:$0xff]
  %v58 = vld [vmem:[%s0 + $0x38] sm:$0xff]
  %v59 = vld [vmem:[%s0 + $0x40] sm:$0xff]
  %v60 = vld [vmem:[%s0 + $0x48] sm:$0xff]
  %v61 = vld [vmem:[%s0 + $0x50] sm:$0xff]
  %v62 = vld [vmem:[%s0 + $0x58] sm:$0xff]
  %v63 = vld [vmem:[%s0 + $0x60] sm:$0xff]
  %v64 = vld [vmem:[%s0 + $0x68] sm:$0xff]
  %v65 = vld [vmem:[%s0 + $0x70] sm:$0xff]
  %v66 = vld [vmem:[%s0 + $0x78] sm:$0xff]
  %v67 = vld [vmem:[%s0 + $0x80] sm:$0xff]
  %v68 = vld [vmem:[%s0 + $0x88] sm:$0xff]
  %v69 = vld [vmem:[%s0 + $0x90] sm:$0xff]
  %v70 = vld [vmem:[%s0 + $0x98] sm:$0xff]
  %v71 = vld [vmem:[%s0 + $0xa0] sm:$0xff]
  %v72 = vld [vmem:[%s0 + $0xa8] sm:$0xff]
  %v73 = vld [vmem:[%s0 + $0xb0] sm:$0xff]
  %v74 = vld [vmem:[%s0 + $0xb8] sm:$0xff]
  %v75 = vld [vmem:[%s0 + $0xc0] sm:$0xff]
  %v76 = vld [vmem:[%s0 + $0xc8] sm:$0xff]
  %v77 = vld [vmem:[%s0 + $0xd0] sm:$0xff]
  %v78 = vld [vmem:[%s0 + $0xd8] sm:$0xff]
  %v79 = vld [vmem:[%s0 + $0xe0] sm:$0xff]
  %v80 = vld [vmem:[%s0 + $0xe8] sm:$0xff]
  %v81 = vld [vmem:[%s0 + $0xf0] sm:$0xff]
  %v82 = vld [vmem:[%s0 + $0xf8] sm:$0xff]
  %v83 = vld [vmem:[%s1] sm:$0xf]
  %v84 = vld [vmem:[%s1 + $0x4] sm:$0xf]
  %v85 = vld [vmem:[%s1 + $0x8] sm:$0xf]
  %v86 = vld [vmem:[%s1 + $0xc] sm:$0xf]
  %v87 = vld [vmem:[%s1 + $0x10] sm:$0xf]
  %v88 = vld [vmem:[%s1 + $0x14] sm:$0xf]
  %v89 = vld [vmem:[%s1 + $0x18] sm:$0xf]
  %v90 = vld [vmem:[%s1 + $0x1c] sm:$0xf]
  %v91 = vld [vmem:[%s1 + $0x20] sm:$0xf]
  %v92 = vld [vmem:[%s1 + $0x24] sm:$0xf]
  %v93 = vld [vmem:[%s1 + $0x28] sm:$0xf]
  %v94 = vld [vmem:[%s1 + $0x2c] sm:$0xf]
  %v95 = vld [vmem:[%s1 + $0x30] sm:$0xf]
  %v96 = vld [vmem:[%s1 + $0x34] sm:$0xf]
  %v97 = vld [vmem:[%s1 + $0x38] sm:$0xf]
  %v98 = vld [vmem:[%s1 + $0x3c] sm:$0xf]
  %v99 = vld [vmem:[%s1 + $0x40] sm:$0xf]
  %v100 = vld [vmem:[%s1 + $0x44] sm:$0xf]
  %v101 = vld [vmem:[%s1 + $0x48] sm:$0xf]
  %v102 = vld [vmem:[%s1 + $0x4c] sm:$0xf]
  %v103 = vld [vmem:[%s1 + $0x50] sm:$0xf]
  %v104 = vld [vmem:[%s1 + $0x54] sm:$0xf]
  %v105 = vld [vmem:[%s1 + $0x58] sm:$0xf]
  %v106 = vld [vmem:[%s1 + $0x5c] sm:$0xf]
  %v107 = vld [vmem:[%s1 + $0x60] sm:$0xf]
  %v108 = vld [vmem:[%s1 + $0x64] sm:$0xf]
  %v109 = vld [vmem:[%s1 + $0x68] sm:$0xf]
  %v110 = vld [vmem:[%s1 + $0x6c] sm:$0xf]
  %v111 = vld [vmem:[%s1 + $0x70] sm:$0xf]
  %v112 = vld [vmem:[%s1 + $0x74] sm:$0xf]
  %v113 = vld [vmem:[%s1 + $0x78] sm:$0xf]
  %v114 = vld [vmem:[%s1 + $0x7c] sm:$0xf]
  %v115 = vld [vmem:[%s1 + $0x80] sm:$0xf]
  %v116 = vld [vmem:[%s1 + $0x84] sm:$0xf]
  %v117 = vld [vmem:[%s1 + $0x88] sm:$0xf]
  %v118 = vld [vmem:[%s1 + $0x8c] sm:$0xf]
  %v119 = vld [vmem:[%s1 + $0x90] sm:$0xf]
  %v120 = vld [vmem:[%s1 + $0x94] sm:$0xf]
  %v121 = vld [vmem:[%s1 + $0x98] sm:$0xf]
  %v122 = vld [vmem:[%s1 + $0x9c] sm:$0xf]
  %v123 = vld [vmem:[%s1 + $0xa0] sm:$0xf]
  %v124 = vld [vmem:[%s1 + $0xa4] sm:$0xf]
  %v125 = vld [vmem:[%s1 + $0xa8] sm:$0xf]
  %v126 = vld [vmem:[%s1 + $0xac] sm:$0xf]
  %v127 = vld [vmem:[%s1 + $0xb0] sm:$0xf]
  %v128 = vld [vmem:[%s1 + $0xb4] sm:$0xf]
  %v129 = vld [vmem:[%s1 + $0xb8] sm:$0xf]
  %v130 = vld [vmem:[%s1 + $0xbc] sm:$0xf]
  %v131 = vld [vmem:[%s1 + $0xc0] sm:$0xf]
  %v132 = vld [vmem:[%s1 + $0xc4] sm:$0xf]
  %v133 = vld [vmem:[%s1 + $0xc8] sm:$0xf]
  %v134 = vld [vmem:[%s1 + $0xcc] sm:$0xf]
  %v135 = vld [vmem:[%s1 + $0xd0] sm:$0xf]
  %v136 = vld [vmem:[%s1 + $0xd4] sm:$0xf]
  %v137 = vld [vmem:[%s1 + $0xd8] sm:$0xf]
  %v138 = vld [vmem:[%s1 + $0xdc] sm:$0xf]
  %v139 = vld [vmem:[%s1 + $0xe0] sm:$0xf]
  %v140 = vld [vmem:[%s1 + $0xe4] sm:$0xf]
  %v141 = vld [vmem:[%s1 + $0xe8] sm:$0xf]
  %v142 = vld [vmem:[%s1 + $0xec] sm:$0xf]
  %v143 = vld [vmem:[%s1 + $0xf0] sm:$0xf]
  %v144 = vld [vmem:[%s1 + $0xf4] sm:$0xf]
  %v145 = vld [vmem:[%s1 + $0xf8] sm:$0xf]
  %v146 = vld [vmem:[%s1 + $0xfc] sm:$0xf]
  %v179 = vunpack.c.l.b16 %v51
  %v180 = vunpack.c.h.b16 %v51
  %v181 = vunpack.c.l.b16 %v52
  %v182 = vunpack.c.h.b16 %v52
  %v183 = vunpack.c.l.b16 %v53
  %v184 = vunpack.c.h.b16 %v53
  %v185 = vunpack.c.l.b16 %v54
  %v186 = vunpack.c.h.b16 %v54
  %v187 = vunpack.c.l.b16 %v55
  %v188 = vunpack.c.h.b16 %v55
  %v189 = vunpack.c.l.b16 %v56
  %v190 = vunpack.c.h.b16 %v56
  %v191 = vunpack.c.l.b16 %v57
  %v192 = vunpack.c.h.b16 %v57
  %v193 = vunpack.c.l.b16 %v58
  %v194 = vunpack.c.h.b16 %v58
  %v195 = vunpack.c.l.b16 %v59
  %v196 = vunpack.c.h.b16 %v59
  %v197 = vunpack.c.l.b16 %v60
  %v198 = vunpack.c.h.b16 %v60
  %v199 = vunpack.c.l.b16 %v61
  %v200 = vunpack.c.h.b16 %v61
  %v201 = vunpack.c.l.b16 %v62
  %v202 = vunpack.c.h.b16 %v62
  %v203 = vunpack.c.l.b16 %v63
  %v204 = vunpack.c.h.b16 %v63
  %v205 = vunpack.c.l.b16 %v64
  %v206 = vunpack.c.h.b16 %v64
  %v207 = vunpack.c.l.b16 %v65
  %v208 = vunpack.c.h.b16 %v65
  %v209 = vunpack.c.l.b16 %v66
  %v210 = vunpack.c.h.b16 %v66
  %v211 = vunpack.c.l.b16 %v67
  %v212 = vunpack.c.h.b16 %v67
  %v213 = vunpack.c.l.b16 %v68
  %v214 = vunpack.c.h.b16 %v68
  %v215 = vunpack.c.l.b16 %v69
  %v216 = vunpack.c.h.b16 %v69
  %v217 = vunpack.c.l.b16 %v70
  %v218 = vunpack.c.h.b16 %v70
  %v219 = vunpack.c.l.b16 %v71
  %v220 = vunpack.c.h.b16 %v71
  %v221 = vunpack.c.l.b16 %v72
  %v222 = vunpack.c.h.b16 %v72
  %v223 = vunpack.c.l.b16 %v73
  %v224 = vunpack.c.h.b16 %v73
  %v225 = vunpack.c.l.b16 %v74
  %v226 = vunpack.c.h.b16 %v74
  %v227 = vunpack.c.l.b16 %v75
  %v228 = vunpack.c.h.b16 %v75
  %v229 = vunpack.c.l.b16 %v76
  %v230 = vunpack.c.h.b16 %v76
  %v231 = vunpack.c.l.b16 %v77
  %v232 = vunpack.c.h.b16 %v77
  %v233 = vunpack.c.l.b16 %v78
  %v234 = vunpack.c.h.b16 %v78
  %v235 = vunpack.c.l.b16 %v79
  %v236 = vunpack.c.h.b16 %v79
  %v237 = vunpack.c.l.b16 %v80
  %v238 = vunpack.c.h.b16 %v80
  %v239 = vunpack.c.l.b16 %v81
  %v240 = vunpack.c.h.b16 %v81
  %v241 = vunpack.c.l.b16 %v82
  %v242 = vunpack.c.h.b16 %v82
  %v243 = vpack.c.b16 %v183, %v179
  %v244 = vpack.c.b16 %v184, %v180
  %v245 = vpack.c.b16 %v185, %v181
  %v246 = vpack.c.b16 %v186, %v182
  %v247 = vpack.c.b16 %v191, %v187
  %v248 = vpack.c.b16 %v192, %v188
  %v249 = vpack.c.b16 %v193, %v189
  %v250 = vpack.c.b16 %v194, %v190
  %v251 = vpack.c.b16 %v199, %v195
  %v252 = vpack.c.b16 %v200, %v196
  %v253 = vpack.c.b16 %v201, %v197
  %v254 = vpack.c.b16 %v202, %v198
  %v255 = vpack.c.b16 %v207, %v203
  %v256 = vpack.c.b16 %v208, %v204
  %v257 = vpack.c.b16 %v209, %v205
  %v258 = vpack.c.b16 %v210, %v206
  %v259 = vpack.c.b16 %v215, %v211
  %v260 = vpack.c.b16 %v216, %v212
  %v261 = vpack.c.b16 %v217, %v213
  %v262 = vpack.c.b16 %v218, %v214
  %v263 = vpack.c.b16 %v223, %v219
  %v264 = vpack.c.b16 %v224, %v220
  %v265 = vpack.c.b16 %v225, %v221
  %v266 = vpack.c.b16 %v226, %v222
  %v267 = vpack.c.b16 %v231, %v227
  %v268 = vpack.c.b16 %v232, %v228
  %v269 = vpack.c.b16 %v233, %v229
  %v270 = vpack.c.b16 %v234, %v230
  %v271 = vpack.c.b16 %v239, %v235
  %v272 = vpack.c.b16 %v240, %v236
  %v273 = vpack.c.b16 %v241, %v237
  %v274 = vpack.c.b16 %v242, %v238
  %v371 = vunpack.c.l.b16 %v83
  %v372 = vunpack.c.l.b16 %v84
  %v373 = vunpack.c.l.b16 %v85
  %v374 = vunpack.c.l.b16 %v86
  %v375 = vunpack.c.l.b16 %v87
  %v376 = vunpack.c.l.b16 %v88
  %v377 = vunpack.c.l.b16 %v89
  %v378 = vunpack.c.l.b16 %v90
  %v379 = vunpack.c.l.b16 %v91
  %v380 = vunpack.c.l.b16 %v92
  %v381 = vunpack.c.l.b16 %v93
  %v382 = vunpack.c.l.b16 %v94
  %v383 = vunpack.c.l.b16 %v95
  %v384 = vunpack.c.l.b16 %v96
  %v385 = vunpack.c.l.b16 %v97
  %v386 = vunpack.c.l.b16 %v98
  %v387 = vunpack.c.l.b16 %v99
  %v388 = vunpack.c.l.b16 %v100
  %v389 = vunpack.c.l.b16 %v101
  %v390 = vunpack.c.l.b16 %v102
  %v391 = vunpack.c.l.b16 %v103
  %v392 = vunpack.c.l.b16 %v104
  %v393 = vunpack.c.l.b16 %v105
  %v394 = vunpack.c.l.b16 %v106
  %v395 = vunpack.c.l.b16 %v107
  %v396 = vunpack.c.l.b16 %v108
  %v397 = vunpack.c.l.b16 %v109
  %v398 = vunpack.c.l.b16 %v110
  %v399 = vunpack.c.l.b16 %v111
  %v400 = vunpack.c.l.b16 %v112
  %v401 = vunpack.c.l.b16 %v113
  %v402 = vunpack.c.l.b16 %v114
  %v403 = vunpack.c.l.b16 %v115
  %v404 = vunpack.c.l.b16 %v116
  %v405 = vunpack.c.l.b16 %v117
  %v406 = vunpack.c.l.b16 %v118
  %v407 = vunpack.c.l.b16 %v119
  %v408 = vunpack.c.l.b16 %v120
  %v409 = vunpack.c.l.b16 %v121
  %v410 = vunpack.c.l.b16 %v122
  %v411 = vunpack.c.l.b16 %v123
  %v412 = vunpack.c.l.b16 %v124
  %v413 = vunpack.c.l.b16 %v125
  %v414 = vunpack.c.l.b16 %v126
  %v415 = vunpack.c.l.b16 %v127
  %v416 = vunpack.c.l.b16 %v128
  %v417 = vunpack.c.l.b16 %v129
  %v418 = vunpack.c.l.b16 %v130
  %v419 = vunpack.c.l.b16 %v131
  %v420 = vunpack.c.l.b16 %v132
  %v421 = vunpack.c.l.b16 %v133
  %v422 = vunpack.c.l.b16 %v134
  %v423 = vunpack.c.l.b16 %v135
  %v424 = vunpack.c.l.b16 %v136
  %v425 = vunpack.c.l.b16 %v137
  %v426 = vunpack.c.l.b16 %v138
  %v427 = vunpack.c.l.b16 %v139
  %v428 = vunpack.c.l.b16 %v140
  %v429 = vunpack.c.l.b16 %v141
  %v430 = vunpack.c.l.b16 %v142
  %v431 = vunpack.c.l.b16 %v143
  %v432 = vunpack.c.l.b16 %v144
  %v433 = vunpack.c.l.b16 %v145
  %v434 = vunpack.c.l.b16 %v146
  %v435 = vpack.c.b16 %v372, %v371
  %v436 = vpack.c.b16 %v374, %v373
  %v437 = vpack.c.b16 %v376, %v375
  %v438 = vpack.c.b16 %v378, %v377
  %v439 = vpack.c.b16 %v380, %v379
  %v440 = vpack.c.b16 %v382, %v381
  %v441 = vpack.c.b16 %v384, %v383
  %v442 = vpack.c.b16 %v386, %v385
  %v443 = vpack.c.b16 %v388, %v387
  %v444 = vpack.c.b16 %v390, %v389
  %v445 = vpack.c.b16 %v392, %v391
  %v446 = vpack.c.b16 %v394, %v393
  %v447 = vpack.c.b16 %v396, %v395
  %v448 = vpack.c.b16 %v398, %v397
  %v449 = vpack.c.b16 %v400, %v399
  %v450 = vpack.c.b16 %v402, %v401
  %v451 = vpack.c.b16 %v404, %v403
  %v452 = vpack.c.b16 %v406, %v405
  %v453 = vpack.c.b16 %v408, %v407
  %v454 = vpack.c.b16 %v410, %v409
  %v455 = vpack.c.b16 %v412, %v411
  %v456 = vpack.c.b16 %v414, %v413
  %v457 = vpack.c.b16 %v416, %v415
  %v458 = vpack.c.b16 %v418, %v417
  %v459 = vpack.c.b16 %v420, %v419
  %v460 = vpack.c.b16 %v422, %v421
  %v461 = vpack.c.b16 %v424, %v423
  %v462 = vpack.c.b16 %v426, %v425
  %v463 = vpack.c.b16 %v428, %v427
  %v464 = vpack.c.b16 %v430, %v429
  %v465 = vpack.c.b16 %v432, %v431
  %v466 = vpack.c.b16 %v434, %v433
  %499 = vmatprep.subr.bf16.mxu0 0
  %500 = vmatpush1.bf16.msra.mxu0 %v435
  %501 = vmatprep.subr.bf16.mxu0 0
  %502 = vmatpush1.bf16.msra.mxu0 %v436
  %503 = vmatprep.subr.bf16.mxu0 0
  %504 = vmatpush1.bf16.msra.mxu0 %v437
  %505 = vmatprep.subr.bf16.mxu0 0
  %506 = vmatpush1.bf16.msra.mxu0 %v438
  %507 = vmatprep.subr.bf16.mxu0 0
  %508 = vmatpush1.bf16.msra.mxu0 %v439
  %509 = vmatprep.subr.bf16.mxu0 0
  %510 = vmatpush1.bf16.msra.mxu0 %v440
  %511 = vmatprep.subr.bf16.mxu0 0
  %512 = vmatpush1.bf16.msra.mxu0 %v441
  %513 = vmatprep.subr.bf16.mxu0 0
  %514 = vmatpush1.bf16.msra.mxu0 %v442
  %515 = vmatprep.subr.bf16.mxu0 0
  %516 = vmatpush1.bf16.msra.mxu0 %v443
  %517 = vmatprep.subr.bf16.mxu0 0
  %518 = vmatpush1.bf16.msra.mxu0 %v444
  %519 = vmatprep.subr.bf16.mxu0 0
  %520 = vmatpush1.bf16.msra.mxu0 %v445
  %521 = vmatprep.subr.bf16.mxu0 0
  %522 = vmatpush1.bf16.msra.mxu0 %v446
  %523 = vmatprep.subr.bf16.mxu0 0
  %524 = vmatpush1.bf16.msra.mxu0 %v447
  %525 = vmatprep.subr.bf16.mxu0 0
  %526 = vmatpush1.bf16.msra.mxu0 %v448
  %527 = vmatprep.subr.bf16.mxu0 0
  %528 = vmatpush1.bf16.msra.mxu0 %v449
  %529 = vmatprep.subr.bf16.mxu0 0
  %530 = vmatpush1.bf16.msra.mxu0 %v450
  %531 = vmatprep.mubr.bf16.mxu0 %v244
  %532 = vmatmul.mubr.bf16.gmra.mrb[0].mxu0 %v243
  %v533 = vpop.f32.mrb[0].mxu0
  %v534 = vadd.f32 0.0, %v533
  %v535 = vpop.f32.mrb[0].mxu0
  %v536 = vpop.f32.mrb[0].mxu0
  %v537 = vadd.f32 0.0, %v536
  %v538 = vpop.f32.mrb[0].mxu0
  %539 = vmatprep.mubr.bf16.mxu0 %v248
  %540 = vmatmul.mubr.bf16.gmra.mrb[0].mxu0 %v247
  %v541 = vpop.f32.mrb[0].mxu0
  %v542 = vadd.f32 0.0, %v541
  %v543 = vpop.f32.mrb[0].mxu0
  %v544 = vpop.f32.mrb[0].mxu0
  %v545 = vadd.f32 0.0, %v544
  %v546 = vpop.f32.mrb[0].mxu0
  %547 = vmatprep.mubr.bf16.mxu0 %v252
  %548 = vmatmul.mubr.bf16.gmra.mrb[0].mxu0 %v251
  %v549 = vpop.f32.mrb[0].mxu0
  %v550 = vadd.f32 0.0, %v549
  %v551 = vpop.f32.mrb[0].mxu0
  %v552 = vpop.f32.mrb[0].mxu0
  %v553 = vadd.f32 0.0, %v552
  %v554 = vpop.f32.mrb[0].mxu0
  %555 = vmatprep.mubr.bf16.mxu0 %v256
  %556 = vmatmul.mubr.bf16.gmra.mrb[0].mxu0 %v255
  %v557 = vpop.f32.mrb[0].mxu0
  %v558 = vadd.f32 0.0, %v557
  %v559 = vpop.f32.mrb[0].mxu0
  %v560 = vpop.f32.mrb[0].mxu0
  %v561 = vadd.f32 0.0, %v560
  %v562 = vpop.f32.mrb[0].mxu0
  %563 = vmatprep.mubr.bf16.mxu0 %v260
  %564 = vmatmul.mubr.bf16.gmra.mrb[0].mxu0 %v259
  %v565 = vpop.f32.mrb[0].mxu0
  %v566 = vadd.f32 0.0, %v565
  %v567 = vpop.f32.mrb[0].mxu0
  %v568 = vpop.f32.mrb[0].mxu0
  %v569 = vadd.f32 0.0, %v568
  %v570 = vpop.f32.mrb[0].mxu0
  %571 = vmatprep.mubr.bf16.mxu0 %v264
  %572 = vmatmul.mubr.bf16.gmra.mrb[0].mxu0 %v263
  %v573 = vpop.f32.mrb[0].mxu0
  %v574 = vadd.f32 0.0, %v573
  %v575 = vpop.f32.mrb[0].mxu0
  %v576 = vpop.f32.mrb[0].mxu0
  %v577 = vadd.f32 0.0, %v576
  %v578 = vpop.f32.mrb[0].mxu0
  %579 = vmatprep.mubr.bf16.mxu0 %v268
  %580 = vmatmul.mubr.bf16.gmra.mrb[0].mxu0 %v267
  %v581 = vpop.f32.mrb[0].mxu0
  %v582 = vadd.f32 0.0, %v581
  %v583 = vpop.f32.mrb[0].mxu0
  %v584 = vpop.f32.mrb[0].mxu0
  %v585 = vadd.f32 0.0, %v584
  %v586 = vpop.f32.mrb[0].mxu0
  %587 = vmatprep.mubr.bf16.mxu0 %v272
  %588 = vmatmul.mubr.bf16.gmra.mrb[0].mxu0 %v271
  %v589 = vpop.f32.mrb[0].mxu0
  %v590 = vadd.f32 0.0, %v589
  %v591 = vpop.f32.mrb[0].mxu0
  %v592 = vpop.f32.mrb[0].mxu0
  %v593 = vadd.f32 0.0, %v592
  %v594 = vpop.f32.mrb[0].mxu0
  %595 = vdwg.mxu0
  %596 = vmatprep.subr.bf16.mxu0 0
  %597 = vmatpush1.bf16.msra.mxu0 %v451
  %598 = vmatprep.subr.bf16.mxu0 0
  %599 = vmatpush1.bf16.msra.mxu0 %v452
  %600 = vmatprep.subr.bf16.mxu0 0
  %601 = vmatpush1.bf16.msra.mxu0 %v453
  %602 = vmatprep.subr.bf16.mxu0 0
  %603 = vmatpush1.bf16.msra.mxu0 %v454
  %604 = vmatprep.subr.bf16.mxu0 0
  %605 = vmatpush1.bf16.msra.mxu0 %v455
  %606 = vmatprep.subr.bf16.mxu0 0
  %607 = vmatpush1.bf16.msra.mxu0 %v456
  %608 = vmatprep.subr.bf16.mxu0 0
  %609 = vmatpush1.bf16.msra.mxu0 %v457
  %610 = vmatprep.subr.bf16.mxu0 0
  %611 = vmatpush1.bf16.msra.mxu0 %v458
  %612 = vmatprep.subr.bf16.mxu0 0
  %613 = vmatpush1.bf16.msra.mxu0 %v459
  %614 = vmatprep.subr.bf16.mxu0 0
  %615 = vmatpush1.bf16.msra.mxu0 %v460
  %616 = vmatprep.subr.bf16.mxu0 0
  %617 = vmatpush1.bf16.msra.mxu0 %v461
  %618 = vmatprep.subr.bf16.mxu0 0
  %619 = vmatpush1.bf16.msra.mxu0 %v462
  %620 = vmatprep.subr.bf16.mxu0 0
  %621 = vmatpush1.bf16.msra.mxu0 %v463
  %622 = vmatprep.subr.bf16.mxu0 0
  %623 = vmatpush1.bf16.msra.mxu0 %v464
  %624 = vmatprep.subr.bf16.mxu0 0
  %625 = vmatpush1.bf16.msra.mxu0 %v465
  %626 = vmatprep.subr.bf16.mxu0 0
  %627 = vmatpush1.bf16.msra.mxu0 %v466
  %628 = vmatprep.mubr.bf16.mxu0 %v246
  %629 = vmatmul.mubr.bf16.gmra.mrb[0].mxu0 %v245
  %v630 = vpop.f32.mrb[0].mxu0
  %v631 = vadd.f32 %v534, %v630
  %v632 = vpop.f32.mrb[0].mxu0
  %v633 = vpop.f32.mrb[0].mxu0
  %v634 = vadd.f32 %v537, %v633
  %v635 = vpop.f32.mrb[0].mxu0
  %636 = vmatprep.mubr.bf16.mxu0 %v250
  %637 = vmatmul.mubr.bf16.gmra.mrb[0].mxu0 %v249
  %v638 = vpop.f32.mrb[0].mxu0
  %v639 = vadd.f32 %v542, %v638
  %v640 = vpop.f32.mrb[0].mxu0
  %v641 = vpop.f32.mrb[0].mxu0
  %v642 = vadd.f32 %v545, %v641
  %v643 = vpop.f32.mrb[0].mxu0
  %644 = vmatprep.mubr.bf16.mxu0 %v254
  %645 = vmatmul.mubr.bf16.gmra.mrb[0].mxu0 %v253
  %v646 = vpop.f32.mrb[0].mxu0
  %v647 = vadd.f32 %v550, %v646
  %v648 = vpop.f32.mrb[0].mxu0
  %v649 = vpop.f32.mrb[0].mxu0
  %v650 = vadd.f32 %v553, %v649
  %v651 = vpop.f32.mrb[0].mxu0
  %652 = vmatprep.mubr.bf16.mxu0 %v258
  %653 = vmatmul.mubr.bf16.gmra.mrb[0].mxu0 %v257
  %v654 = vpop.f32.mrb[0].mxu0
  %v655 = vadd.f32 %v558, %v654
  %v656 = vpop.f32.mrb[0].mxu0
  %v657 = vpop.f32.mrb[0].mxu0
  %v658 = vadd.f32 %v561, %v657
  %v659 = vpop.f32.mrb[0].mxu0
  %660 = vmatprep.mubr.bf16.mxu0 %v262
  %661 = vmatmul.mubr.bf16.gmra.mrb[0].mxu0 %v261
  %v662 = vpop.f32.mrb[0].mxu0
  %v663 = vadd.f32 %v566, %v662
  %v664 = vpop.f32.mrb[0].mxu0
  %v665 = vpop.f32.mrb[0].mxu0
  %v666 = vadd.f32 %v569, %v665
  %v667 = vpop.f32.mrb[0].mxu0
  %668 = vmatprep.mubr.bf16.mxu0 %v266
  %669 = vmatmul.mubr.bf16.gmra.mrb[0].mxu0 %v265
  %v670 = vpop.f32.mrb[0].mxu0
  %v671 = vadd.f32 %v574, %v670
  %v672 = vpop.f32.mrb[0].mxu0
  %v673 = vpop.f32.mrb[0].mxu0
  %v674 = vadd.f32 %v577, %v673
  %v675 = vpop.f32.mrb[0].mxu0
  %676 = vmatprep.mubr.bf16.mxu0 %v270
  %677 = vmatmul.mubr.bf16.gmra.mrb[0].mxu0 %v269
  %v678 = vpop.f32.mrb[0].mxu0
  %v679 = vadd.f32 %v582, %v678
  %v680 = vpop.f32.mrb[0].mxu0
  %v681 = vpop.f32.mrb[0].mxu0
  %v682 = vadd.f32 %v585, %v681
  %v683 = vpop.f32.mrb[0].mxu0
  %684 = vmatprep.mubr.bf16.mxu0 %v274
  %685 = vmatmul.mubr.bf16.gmra.mrb[0].mxu0 %v273
  %v686 = vpop.f32.mrb[0].mxu0
  %v687 = vadd.f32 %v590, %v686
  %v688 = vpop.f32.mrb[0].mxu0
  %v689 = vpop.f32.mrb[0].mxu0
  %v690 = vadd.f32 %v593, %v689
  %v691 = vpop.f32.mrb[0].mxu0
  %692 = vdwg.mxu0
  %v693 = vld [vmem:[%s2] sm:$0x1]
  %v695 = vlaneseq
  %v696 = vshrl.u32 %v695, 7
  %v697 = vsub.s32 0, %v696
  %v698 = vrot.slane %v693, %v697
  %v700 = vmul.f32 %v631, %v698
  %v701 = vmul.f32 %v634, %v698
  %v702 = vmul.f32 %v639, %v698
  %v703 = vmul.f32 %v642, %v698
  %v704 = vmul.f32 %v647, %v698
  %v705 = vmul.f32 %v650, %v698
  %v706 = vmul.f32 %v655, %v698
  %v707 = vmul.f32 %v658, %v698
  %v708 = vmul.f32 %v663, %v698
  %v709 = vmul.f32 %v666, %v698
  %v710 = vmul.f32 %v671, %v698
  %v711 = vmul.f32 %v674, %v698
  %v712 = vmul.f32 %v679, %v698
  %v713 = vmul.f32 %v682, %v698
  %v714 = vmul.f32 %v687, %v698
  %v715 = vmul.f32 %v690, %v698
  %v716 = vld [vmem:[%s3] sm:$0x1]
  %v718 = vlaneseq
  %v719 = vshrl.u32 %v718, 7
  %v720 = vsub.s32 0, %v719
  %v721 = vrot.slane %v716, %v720
  %v723 = vadd.f32 %v700, %v721
  %v724 = vadd.f32 %v701, %v721
  %v725 = vadd.f32 %v702, %v721
  %v726 = vadd.f32 %v703, %v721
  %v727 = vadd.f32 %v704, %v721
  %v728 = vadd.f32 %v705, %v721
  %v729 = vadd.f32 %v706, %v721
  %v730 = vadd.f32 %v707, %v721
  %v731 = vadd.f32 %v708, %v721
  %v732 = vadd.f32 %v709, %v721
  %v733 = vadd.f32 %v710, %v721
  %v734 = vadd.f32 %v711, %v721
  %v735 = vadd.f32 %v712, %v721
  %v736 = vadd.f32 %v713, %v721
  %v737 = vadd.f32 %v714, %v721
  %v738 = vadd.f32 %v715, %v721
  %vm739 = vcmp.gt.f32.partialorder %v723, 0.0
  %vm740 = vcmp.gt.f32.partialorder %v724, 0.0
  %vm741 = vcmp.gt.f32.partialorder %v725, 0.0
  %vm742 = vcmp.gt.f32.partialorder %v726, 0.0
  %vm743 = vcmp.gt.f32.partialorder %v727, 0.0
  %vm744 = vcmp.gt.f32.partialorder %v728, 0.0
  %vm745 = vcmp.gt.f32.partialorder %v729, 0.0
  %vm746 = vcmp.gt.f32.partialorder %v730, 0.0
  %vm747 = vcmp.gt.f32.partialorder %v731, 0.0
  %vm748 = vcmp.gt.f32.partialorder %v732, 0.0
  %vm749 = vcmp.gt.f32.partialorder %v733, 0.0
  %vm750 = vcmp.gt.f32.partialorder %v734, 0.0
  %vm751 = vcmp.gt.f32.partialorder %v735, 0.0
  %vm752 = vcmp.gt.f32.partialorder %v736, 0.0
  %vm753 = vcmp.gt.f32.partialorder %v737, 0.0
  %vm754 = vcmp.gt.f32.partialorder %v738, 0.0
  %v755 = vmul.f32 %v723, 0.2
  %v756 = vmul.f32 %v724, 0.2
  %v757 = vmul.f32 %v725, 0.2
  %v758 = vmul.f32 %v726, 0.2
  %v759 = vmul.f32 %v727, 0.2
  %v760 = vmul.f32 %v728, 0.2
  %v761 = vmul.f32 %v729, 0.2
  %v762 = vmul.f32 %v730, 0.2
  %v763 = vmul.f32 %v731, 0.2
  %v764 = vmul.f32 %v732, 0.2
  %v765 = vmul.f32 %v733, 0.2
  %v766 = vmul.f32 %v734, 0.2
  %v767 = vmul.f32 %v735, 0.2
  %v768 = vmul.f32 %v736, 0.2
  %v769 = vmul.f32 %v737, 0.2
  %v770 = vmul.f32 %v738, 0.2
  %v771 = vsel %vm739, %v723, %v755
  %v772 = vsel %vm740, %v724, %v756
  %v773 = vsel %vm741, %v725, %v757
  %v774 = vsel %vm742, %v726, %v758
  %v775 = vsel %vm743, %v727, %v759
  %v776 = vsel %vm744, %v728, %v760
  %v777 = vsel %vm745, %v729, %v761
  %v778 = vsel %vm746, %v730, %v762
  %v779 = vsel %vm747, %v731, %v763
  %v780 = vsel %vm748, %v732, %v764
  %v781 = vsel %vm749, %v733, %v765
  %v782 = vsel %vm750, %v734, %v766
  %v783 = vsel %vm751, %v735, %v767
  %v784 = vsel %vm752, %v736, %v768
  %v785 = vsel %vm753, %v737, %v769
  %v786 = vsel %vm754, %v738, %v770
  %vm787 = vcmask 523264
  %v788 = vsel %vm787, %v771, -inf
  %v789 = vsel %vm787, %v772, -inf
  %v790 = vsel %vm787, %v773, -inf
  %v791 = vmax.f32 %v788, %v790
  %v792 = vsel %vm787, %v774, -inf
  %v793 = vmax.f32 %v789, %v792
  %v794 = vsel %vm787, %v775, -inf
  %v795 = vmax.f32 %v791, %v794
  %v796 = vsel %vm787, %v776, -inf
  %v797 = vmax.f32 %v793, %v796
  %v798 = vsel %vm787, %v777, -inf
  %v799 = vmax.f32 %v795, %v798
  %v800 = vsel %vm787, %v778, -inf
  %v801 = vmax.f32 %v797, %v800
  %v802 = vmax.f32 %v799, %v801
  %v803 = vrot.slane %v802, 4
  %v804 = vmax.f32 %v802, %v803
  %v805 = vrot.slane %v804, 2
  %v806 = vmax.f32 %v804, %v805
  %v807 = vrot.slane %v806, 1
  %v808 = vmax.f32 %v806, %v807
  %v809 = vsel %vm787, %v779, -inf
  %v810 = vsel %vm787, %v780, -inf
  %v811 = vsel %vm787, %v781, -inf
  %v812 = vmax.f32 %v809, %v811
  %v813 = vsel %vm787, %v782, -inf
  %v814 = vmax.f32 %v810, %v813
  %v815 = vsel %vm787, %v783, -inf
  %v816 = vmax.f32 %v812, %v815
  %v817 = vsel %vm787, %v784, -inf
  %v818 = vmax.f32 %v814, %v817
  %v819 = vsel %vm787, %v785, -inf
  %v820 = vmax.f32 %v816, %v819
  %v821 = vsel %vm787, %v786, -inf
  %v822 = vmax.f32 %v818, %v821
  %v823 = vmax.f32 %v820, %v822
  %v824 = vrot.slane %v823, 4
  %v825 = vmax.f32 %v823, %v824
  %v826 = vrot.slane %v825, 2
  %v827 = vmax.f32 %v825, %v826
  %v828 = vrot.slane %v827, 1
  %v829 = vmax.f32 %v827, %v828
  %v830 = vsel %vm787, %v771, 0.0
  %v831 = vsel %vm787, %v772, 0.0
  %v832 = vadd.f32 %v830, %v831
  %v833 = vsel %vm787, %v773, 0.0
  %v834 = vadd.f32 %v832, %v833
  %v835 = vsel %vm787, %v774, 0.0
  %v836 = vadd.f32 %v834, %v835
  %v837 = vsel %vm787, %v775, 0.0
  %v838 = vadd.f32 %v836, %v837
  %v839 = vsel %vm787, %v776, 0.0
  %v840 = vadd.f32 %v838, %v839
  %v841 = vsel %vm787, %v777, 0.0
  %v842 = vadd.f32 %v840, %v841
  %v843 = vsel %vm787, %v778, 0.0
  %v844 = vadd.f32 %v842, %v843
  %v845 = vrot.slane %v844, 4
  %v846 = vadd.f32 %v844, %v845
  %v847 = vrot.slane %v846, 2
  %v848 = vadd.f32 %v846, %v847
  %v849 = vrot.slane %v848, 1
  %v850 = vadd.f32 %v848, %v849
  %v851 = vsel %vm787, %v779, 0.0
  %v852 = vsel %vm787, %v780, 0.0
  %v853 = vadd.f32 %v851, %v852
  %v854 = vsel %vm787, %v781, 0.0
  %v855 = vadd.f32 %v853, %v854
  %v856 = vsel %vm787, %v782, 0.0
  %v857 = vadd.f32 %v855, %v856
  %v858 = vsel %vm787, %v783, 0.0
  %v859 = vadd.f32 %v857, %v858
  %v860 = vsel %vm787, %v784, 0.0
  %v861 = vadd.f32 %v859, %v860
  %v862 = vsel %vm787, %v785, 0.0
  %v863 = vadd.f32 %v861, %v862
  %v864 = vsel %vm787, %v786, 0.0
  %v865 = vadd.f32 %v863, %v864
  %v866 = vrot.slane %v865, 4
  %v867 = vadd.f32 %v865, %v866
  %v868 = vrot.slane %v867, 2
  %v869 = vadd.f32 %v867, %v868
  %v870 = vrot.slane %v869, 1
  %v871 = vadd.f32 %v869, %v870
  %v872 = vmul.f32 %v850, 0.015625
  %v873 = vmul.f32 %v871, 0.015625
  %v874 = vld [vmem:[%s4] sm:$0xff]
  %v875 = vld [vmem:[%s4 + $0x8] sm:$0xff]
  %v876 = vld [vmem:[%s4 + $0x10] sm:$0xff]
  %v877 = vld [vmem:[%s4 + $0x18] sm:$0xff]
  %v878 = vld [vmem:[%s4 + $0x20] sm:$0xff]
  %v879 = vld [vmem:[%s4 + $0x28] sm:$0xff]
  %v880 = vld [vmem:[%s4 + $0x30] sm:$0xff]
  %v881 = vld [vmem:[%s4 + $0x38] sm:$0xff]
  %v882 = vld [vmem:[%s4 + $0x40] sm:$0xff]
  %v883 = vld [vmem:[%s4 + $0x48] sm:$0xff]
  %v884 = vld [vmem:[%s4 + $0x50] sm:$0xff]
  %v885 = vld [vmem:[%s4 + $0x58] sm:$0xff]
  %v886 = vld [vmem:[%s4 + $0x60] sm:$0xff]
  %v887 = vld [vmem:[%s4 + $0x68] sm:$0xff]
  %v888 = vld [vmem:[%s4 + $0x70] sm:$0xff]
  %v889 = vld [vmem:[%s4 + $0x78] sm:$0xff]
  %v890 = vpack.c.bf16 %v808, %v808
  %v891 = vpack.c.bf16 %v829, %v829
  %v892 = vld [vmem:[%s5] sm:$0xff]
  %v893 = vld [vmem:[%s5 + $0x8] sm:$0xff]
  %v894 = vld [vmem:[%s5 + $0x10] sm:$0xff]
  %v895 = vld [vmem:[%s5 + $0x18] sm:$0xff]
  %v896 = vld [vmem:[%s5 + $0x20] sm:$0xff]
  %v897 = vld [vmem:[%s5 + $0x28] sm:$0xff]
  %v898 = vld [vmem:[%s5 + $0x30] sm:$0xff]
  %v899 = vld [vmem:[%s5 + $0x38] sm:$0xff]
  %v900 = vld [vmem:[%s5 + $0x40] sm:$0xff]
  %v901 = vld [vmem:[%s5 + $0x48] sm:$0xff]
  %v902 = vld [vmem:[%s5 + $0x50] sm:$0xff]
  %v903 = vld [vmem:[%s5 + $0x58] sm:$0xff]
  %v904 = vld [vmem:[%s5 + $0x60] sm:$0xff]
  %v905 = vld [vmem:[%s5 + $0x68] sm:$0xff]
  %v906 = vld [vmem:[%s5 + $0x70] sm:$0xff]
  %v907 = vld [vmem:[%s5 + $0x78] sm:$0xff]
  %v908 = vpack.c.bf16 %v872, %v872
  %v909 = vpack.c.bf16 %v873, %v873
  %v912 = vunpack.c.l.b16 %v908
  %v913 = vunpack.c.l.b16 %v909
  %vm914 = vcmask 1041409
  %v915 = vsel %vm914, %v913, %v912
  %v916 = vpack.c.b16 %v915, %v915
  %v933 = vunpack.c.l.b16 %v892
  %v934 = vunpack.c.h.b16 %v892
  %v935 = vunpack.c.l.b16 %v893
  %v936 = vunpack.c.h.b16 %v893
  %v937 = vunpack.c.l.b16 %v894
  %v938 = vunpack.c.h.b16 %v894
  %v939 = vunpack.c.l.b16 %v895
  %v940 = vunpack.c.h.b16 %v895
  %v941 = vunpack.c.l.b16 %v896
  %v942 = vunpack.c.h.b16 %v896
  %v943 = vunpack.c.l.b16 %v897
  %v944 = vunpack.c.h.b16 %v897
  %v945 = vunpack.c.l.b16 %v898
  %v946 = vunpack.c.h.b16 %v898
  %v947 = vunpack.c.l.b16 %v899
  %v948 = vunpack.c.h.b16 %v899
  %v949 = vunpack.c.l.b16 %v900
  %v950 = vunpack.c.h.b16 %v900
  %v951 = vunpack.c.l.b16 %v901
  %v952 = vunpack.c.h.b16 %v901
  %v953 = vunpack.c.l.b16 %v902
  %v954 = vunpack.c.h.b16 %v902
  %v955 = vunpack.c.l.b16 %v903
  %v956 = vunpack.c.h.b16 %v903
  %v957 = vunpack.c.l.b16 %v904
  %v958 = vunpack.c.h.b16 %v904
  %v959 = vunpack.c.l.b16 %v905
  %v960 = vunpack.c.h.b16 %v905
  %v961 = vunpack.c.l.b16 %v906
  %v962 = vunpack.c.h.b16 %v906
  %v963 = vunpack.c.l.b16 %v907
  %v964 = vunpack.c.h.b16 %v907
  %v965 = vpack.c.b16 %v937, %v933
  %v966 = vpack.c.b16 %v938, %v934
  %v967 = vpack.c.b16 %v939, %v935
  %v968 = vpack.c.b16 %v940, %v936
  %v969 = vpack.c.b16 %v945, %v941
  %v970 = vpack.c.b16 %v946, %v942
  %v971 = vpack.c.b16 %v947, %v943
  %v972 = vpack.c.b16 %v948, %v944
  %v973 = vpack.c.b16 %v953, %v949
  %v974 = vpack.c.b16 %v954, %v950
  %v975 = vpack.c.b16 %v955, %v951
  %v976 = vpack.c.b16 %v956, %v952
  %v977 = vpack.c.b16 %v961, %v957
  %v978 = vpack.c.b16 %v962, %v958
  %v979 = vpack.c.b16 %v963, %v959
  %v980 = vpack.c.b16 %v964, %v960
  %v998 = vsel %vm787, %v916, 0
  %1000 = vmatprep.subr.bf16.mxu0 %v966
  %1001 = vmatpush1.bf16.msra.mxu0 %v965
  %1002 = vmatprep.subr.bf16.mxu0 %v970
  %1003 = vmatpush1.bf16.msra.mxu0 %v969
  %1004 = vmatprep.subr.bf16.mxu0 %v974
  %1005 = vmatpush1.bf16.msra.mxu0 %v973
  %1006 = vmatprep.subr.bf16.mxu0 %v978
  %1007 = vmatpush1.bf16.msra.mxu0 %v977
  %1008 = vmatprep.subr.bf16.mxu0 0
  %1009 = vmatpush1.bf16.msra.mxu0 0
  %1010 = vmatprep.subr.bf16.mxu0 0
  %1011 = vmatpush1.bf16.msra.mxu0 0
  %1012 = vmatprep.subr.bf16.mxu0 0
  %1013 = vmatpush1.bf16.msra.mxu0 0
  %1014 = vmatprep.subr.bf16.mxu0 0
  %1015 = vmatpush1.bf16.msra.mxu0 0
  %1016 = vmatprep.subr.bf16.mxu0 0
  %1017 = vmatpush1.bf16.msra.mxu0 0
  %1018 = vmatprep.subr.bf16.mxu0 0
  %1019 = vmatpush1.bf16.msra.mxu0 0
  %1020 = vmatprep.subr.bf16.mxu0 0
  %1021 = vmatpush1.bf16.msra.mxu0 0
  %1022 = vmatprep.subr.bf16.mxu0 0
  %1023 = vmatpush1.bf16.msra.mxu0 0
  %1024 = vmatprep.subr.bf16.mxu0 0
  %1025 = vmatpush1.bf16.msra.mxu0 0
  %1026 = vmatprep.subr.bf16.mxu0 0
  %1027 = vmatpush1.bf16.msra.mxu0 0
  %1028 = vmatprep.subr.bf16.mxu0 0
  %1029 = vmatpush1.bf16.msra.mxu0 0
  %1030 = vmatprep.subr.bf16.mxu0 0
  %1031 = vmatpush1.bf16.msra.mxu0 0
  %1032 = vmatprep.mubr.bf16.mxu0 0
  %1033 = vmatmul.mubr.bf16.gmra.mrb[0].mxu0 %v998
  %v1034 = vpop.f32.mrb[0].mxu0
  %v1035 = vadd.f32 0.0, %v1034
  %v1036 = vpop.f32.mrb[0].mxu0
  %v1037 = vadd.f32 0.0, %v1036
  %v1038 = vpop.f32.mrb[0].mxu0
  %v1039 = vpop.f32.mrb[0].mxu0
  %1040 = vdwg.mxu0
  %1041 = vmatprep.subr.bf16.mxu0 %v968
  %1042 = vmatpush1.bf16.msra.mxu0 %v967
  %1043 = vmatprep.subr.bf16.mxu0 %v972
  %1044 = vmatpush1.bf16.msra.mxu0 %v971
  %1045 = vmatprep.subr.bf16.mxu0 %v976
  %1046 = vmatpush1.bf16.msra.mxu0 %v975
  %1047 = vmatprep.subr.bf16.mxu0 %v980
  %1048 = vmatpush1.bf16.msra.mxu0 %v979
  %1049 = vmatprep.subr.bf16.mxu0 0
  %1050 = vmatpush1.bf16.msra.mxu0 0
  %1051 = vmatprep.subr.bf16.mxu0 0
  %1052 = vmatpush1.bf16.msra.mxu0 0
  %1053 = vmatprep.subr.bf16.mxu0 0
  %1054 = vmatpush1.bf16.msra.mxu0 0
  %1055 = vmatprep.subr.bf16.mxu0 0
  %1056 = vmatpush1.bf16.msra.mxu0 0
  %1057 = vmatprep.subr.bf16.mxu0 0
  %1058 = vmatpush1.bf16.msra.mxu0 0
  %1059 = vmatprep.subr.bf16.mxu0 0
  %1060 = vmatpush1.bf16.msra.mxu0 0
  %1061 = vmatprep.subr.bf16.mxu0 0
  %1062 = vmatpush1.bf16.msra.mxu0 0
  %1063 = vmatprep.subr.bf16.mxu0 0
  %1064 = vmatpush1.bf16.msra.mxu0 0
  %1065 = vmatprep.subr.bf16.mxu0 0
  %1066 = vmatpush1.bf16.msra.mxu0 0
  %1067 = vmatprep.subr.bf16.mxu0 0
  %1068 = vmatpush1.bf16.msra.mxu0 0
  %1069 = vmatprep.subr.bf16.mxu0 0
  %1070 = vmatpush1.bf16.msra.mxu0 0
  %1071 = vmatprep.subr.bf16.mxu0 0
  %1072 = vmatpush1.bf16.msra.mxu0 0
  %1073 = vmatprep.mubr.bf16.mxu0 0
  %1074 = vmatmul.mubr.bf16.gmra.mrb[0].mxu0 %v998
  %v1075 = vpop.f32.mrb[0].mxu0
  %v1076 = vadd.f32 0.0, %v1075
  %v1077 = vpop.f32.mrb[0].mxu0
  %v1078 = vadd.f32 0.0, %v1077
  %v1079 = vpop.f32.mrb[0].mxu0
  %v1080 = vpop.f32.mrb[0].mxu0
  %1081 = vdwg.mxu0
  %v1084 = vunpack.c.l.b16 %v890
  %v1085 = vunpack.c.l.b16 %v891
  %v1086 = vsel %vm914, %v1085, %v1084
  %v1087 = vpack.c.b16 %v1086, %v1086
  %v1104 = vunpack.c.l.b16 %v874
  %v1105 = vunpack.c.h.b16 %v874
  %v1106 = vunpack.c.l.b16 %v875
  %v1107 = vunpack.c.h.b16 %v875
  %v1108 = vunpack.c.l.b16 %v876
  %v1109 = vunpack.c.h.b16 %v876
  %v1110 = vunpack.c.l.b16 %v877
  %v1111 = vunpack.c.h.b16 %v877
  %v1112 = vunpack.c.l.b16 %v878
  %v1113 = vunpack.c.h.b16 %v878
  %v1114 = vunpack.c.l.b16 %v879
  %v1115 = vunpack.c.h.b16 %v879
  %v1116 = vunpack.c.l.b16 %v880
  %v1117 = vunpack.c.h.b16 %v880
  %v1118 = vunpack.c.l.b16 %v881
  %v1119 = vunpack.c.h.b16 %v881
  %v1120 = vunpack.c.l.b16 %v882
  %v1121 = vunpack.c.h.b16 %v882
  %v1122 = vunpack.c.l.b16 %v883
  %v1123 = vunpack.c.h.b16 %v883
  %v1124 = vunpack.c.l.b16 %v884
  %v1125 = vunpack.c.h.b16 %v884
  %v1126 = vunpack.c.l.b16 %v885
  %v1127 = vunpack.c.h.b16 %v885
  %v1128 = vunpack.c.l.b16 %v886
  %v1129 = vunpack.c.h.b16 %v886
  %v1130 = vunpack.c.l.b16 %v887
  %v1131 = vunpack.c.h.b16 %v887
  %v1132 = vunpack.c.l.b16 %v888
  %v1133 = vunpack.c.h.b16 %v888
  %v1134 = vunpack.c.l.b16 %v889
  %v1135 = vunpack.c.h.b16 %v889
  %v1136 = vpack.c.b16 %v1108, %v1104
  %v1137 = vpack.c.b16 %v1109, %v1105
  %v1138 = vpack.c.b16 %v1110, %v1106
  %v1139 = vpack.c.b16 %v1111, %v1107
  %v1140 = vpack.c.b16 %v1116, %v1112
  %v1141 = vpack.c.b16 %v1117, %v1113
  %v1142 = vpack.c.b16 %v1118, %v1114
  %v1143 = vpack.c.b16 %v1119, %v1115
  %v1144 = vpack.c.b16 %v1124, %v1120
  %v1145 = vpack.c.b16 %v1125, %v1121
  %v1146 = vpack.c.b16 %v1126, %v1122
  %v1147 = vpack.c.b16 %v1127, %v1123
  %v1148 = vpack.c.b16 %v1132, %v1128
  %v1149 = vpack.c.b16 %v1133, %v1129
  %v1150 = vpack.c.b16 %v1134, %v1130
  %v1151 = vpack.c.b16 %v1135, %v1131
  %v1169 = vsel %vm787, %v1087, 0
  %1171 = vmatprep.subr.bf16.mxu0 %v1137
  %1172 = vmatpush1.bf16.msra.mxu0 %v1136
  %1173 = vmatprep.subr.bf16.mxu0 %v1141
  %1174 = vmatpush1.bf16.msra.mxu0 %v1140
  %1175 = vmatprep.subr.bf16.mxu0 %v1145
  %1176 = vmatpush1.bf16.msra.mxu0 %v1144
  %1177 = vmatprep.subr.bf16.mxu0 %v1149
  %1178 = vmatpush1.bf16.msra.mxu0 %v1148
  %1179 = vmatprep.subr.bf16.mxu0 0
  %1180 = vmatpush1.bf16.msra.mxu0 0
  %1181 = vmatprep.subr.bf16.mxu0 0
  %1182 = vmatpush1.bf16.msra.mxu0 0
  %1183 = vmatprep.subr.bf16.mxu0 0
  %1184 = vmatpush1.bf16.msra.mxu0 0
  %1185 = vmatprep.subr.bf16.mxu0 0
  %1186 = vmatpush1.bf16.msra.mxu0 0
  %1187 = vmatprep.subr.bf16.mxu0 0
  %1188 = vmatpush1.bf16.msra.mxu0 0
  %1189 = vmatprep.subr.bf16.mxu0 0
  %1190 = vmatpush1.bf16.msra.mxu0 0
  %1191 = vmatprep.subr.bf16.mxu0 0
  %1192 = vmatpush1.bf16.msra.mxu0 0
  %1193 = vmatprep.subr.bf16.mxu0 0
  %1194 = vmatpush1.bf16.msra.mxu0 0
  %1195 = vmatprep.subr.bf16.mxu0 0
  %1196 = vmatpush1.bf16.msra.mxu0 0
  %1197 = vmatprep.subr.bf16.mxu0 0
  %1198 = vmatpush1.bf16.msra.mxu0 0
  %1199 = vmatprep.subr.bf16.mxu0 0
  %1200 = vmatpush1.bf16.msra.mxu0 0
  %1201 = vmatprep.subr.bf16.mxu0 0
  %1202 = vmatpush1.bf16.msra.mxu0 0
  %1203 = vmatprep.mubr.bf16.mxu0 0
  %1204 = vmatmul.mubr.bf16.gmra.mrb[0].mxu0 %v1169
  %v1205 = vpop.f32.mrb[0].mxu0
  %v1206 = vadd.f32 %v1035, %v1205
  %v1207 = vpop.f32.mrb[0].mxu0
  %v1208 = vadd.f32 %v1037, %v1207
  %v1209 = vpop.f32.mrb[0].mxu0
  %v1210 = vpop.f32.mrb[0].mxu0
  %1211 = vdwg.mxu0
  %1212 = vmatprep.subr.bf16.mxu0 %v1139
  %1213 = vmatpush1.bf16.msra.mxu0 %v1138
  %1214 = vmatprep.subr.bf16.mxu0 %v1143
  %1215 = vmatpush1.bf16.msra.mxu0 %v1142
  %1216 = vmatprep.subr.bf16.mxu0 %v1147
  %1217 = vmatpush1.bf16.msra.mxu0 %v1146
  %1218 = vmatprep.subr.bf16.mxu0 %v1151
  %1219 = vmatpush1.bf16.msra.mxu0 %v1150
  %1220 = vmatprep.subr.bf16.mxu0 0
  %1221 = vmatpush1.bf16.msra.mxu0 0
  %1222 = vmatprep.subr.bf16.mxu0 0
  %1223 = vmatpush1.bf16.msra.mxu0 0
  %1224 = vmatprep.subr.bf16.mxu0 0
  %1225 = vmatpush1.bf16.msra.mxu0 0
  %1226 = vmatprep.subr.bf16.mxu0 0
  %1227 = vmatpush1.bf16.msra.mxu0 0
  %1228 = vmatprep.subr.bf16.mxu0 0
  %1229 = vmatpush1.bf16.msra.mxu0 0
  %1230 = vmatprep.subr.bf16.mxu0 0
  %1231 = vmatpush1.bf16.msra.mxu0 0
  %1232 = vmatprep.subr.bf16.mxu0 0
  %1233 = vmatpush1.bf16.msra.mxu0 0
  %1234 = vmatprep.subr.bf16.mxu0 0
  %1235 = vmatpush1.bf16.msra.mxu0 0
  %1236 = vmatprep.subr.bf16.mxu0 0
  %1237 = vmatpush1.bf16.msra.mxu0 0
  %1238 = vmatprep.subr.bf16.mxu0 0
  %1239 = vmatpush1.bf16.msra.mxu0 0
  %1240 = vmatprep.subr.bf16.mxu0 0
  %1241 = vmatpush1.bf16.msra.mxu0 0
  %1242 = vmatprep.subr.bf16.mxu0 0
  %1243 = vmatpush1.bf16.msra.mxu0 0
  %1244 = vmatprep.mubr.bf16.mxu0 0
  %1245 = vmatmul.mubr.bf16.gmra.mrb[0].mxu0 %v1169
  %v1246 = vpop.f32.mrb[0].mxu0
  %v1247 = vadd.f32 %v1076, %v1246
  %v1248 = vpop.f32.mrb[0].mxu0
  %v1249 = vadd.f32 %v1078, %v1248
  %v1250 = vpop.f32.mrb[0].mxu0
  %v1251 = vpop.f32.mrb[0].mxu0
  %1252 = vdwg.mxu0
  %v1253 = vld [vmem:[%s6] sm:$0xf]
  %v1255 = vlaneseq
  %v1256 = vshrl.u32 %v1255, 7
  %v1257 = vsub.s32 0, %v1256
  %v1258 = vrot.slane %v1253, %v1257
  %v1259 = vlaneseq
  %v1260 = vshrl.u32 %v1259, 7
  %v1261 = vsub.s32 1, %v1260
  %v1262 = vrot.slane %v1253, %v1261
  %v1263 = vlaneseq
  %v1264 = vshrl.u32 %v1263, 7
  %v1265 = vsub.s32 2, %v1264
  %v1266 = vrot.slane %v1253, %v1265
  %v1267 = vlaneseq
  %v1268 = vshrl.u32 %v1267, 7
  %v1269 = vsub.s32 3, %v1268
  %v1270 = vrot.slane %v1253, %v1269
  %v1275 = vmul.f32 %v1206, %v1258
  %v1276 = vmul.f32 %v1208, %v1262
  %v1277 = vmul.f32 %v1247, %v1266
  %v1278 = vmul.f32 %v1249, %v1270
  %v1279 = vld [vmem:[%s7] sm:$0xf]
  %v1281 = vlaneseq
  %v1282 = vshrl.u32 %v1281, 7
  %v1283 = vsub.s32 0, %v1282
  %v1284 = vrot.slane %v1279, %v1283
  %v1285 = vlaneseq
  %v1286 = vshrl.u32 %v1285, 7
  %v1287 = vsub.s32 1, %v1286
  %v1288 = vrot.slane %v1279, %v1287
  %v1289 = vlaneseq
  %v1290 = vshrl.u32 %v1289, 7
  %v1291 = vsub.s32 2, %v1290
  %v1292 = vrot.slane %v1279, %v1291
  %v1293 = vlaneseq
  %v1294 = vshrl.u32 %v1293, 7
  %v1295 = vsub.s32 3, %v1294
  %v1296 = vrot.slane %v1279, %v1295
  %v1301 = vadd.f32 %v1275, %v1284
  %v1302 = vadd.f32 %v1276, %v1288
  %v1303 = vadd.f32 %v1277, %v1292
  %v1304 = vadd.f32 %v1278, %v1296
  %vm1305 = vcmp.gt.f32.partialorder %v1301, 0.0
  %vm1306 = vcmp.gt.f32.partialorder %v1302, 0.0
  %vm1307 = vcmp.gt.f32.partialorder %v1303, 0.0
  %vm1308 = vcmp.gt.f32.partialorder %v1304, 0.0
  %v1309 = vmul.f32 %v1301, 0.2
  %v1310 = vmul.f32 %v1302, 0.2
  %v1311 = vmul.f32 %v1303, 0.2
  %v1312 = vmul.f32 %v1304, 0.2
  %v1313 = vsel %vm1305, %v1301, %v1309
  %v1314 = vsel %vm1306, %v1302, %v1310
  %v1315 = vsel %vm1307, %v1303, %v1311
  %v1316 = vsel %vm1308, %v1304, %v1312
  %v1317 = vld [vmem:[%s8] sm:$0xff]
  %v1318 = vld [vmem:[%s8 + $0x8] sm:$0xf]
  %v1319 = vld [vmem:[%s8 + $0xc] sm:$0xff]
  %v1320 = vld [vmem:[%s8 + $0x14] sm:$0xf]
  %v1321 = vld [vmem:[%s8 + $0x18] sm:$0xff]
  %v1322 = vld [vmem:[%s8 + $0x20] sm:$0xf]
  %v1323 = vld [vmem:[%s8 + $0x24] sm:$0xff]
  %v1324 = vld [vmem:[%s8 + $0x2c] sm:$0xf]
  %v1325 = vld [vmem:[%s8 + $0x30] sm:$0xff]
  %v1326 = vld [vmem:[%s8 + $0x38] sm:$0xf]
  %v1327 = vld [vmem:[%s8 + $0x3c] sm:$0xff]
  %v1328 = vld [vmem:[%s8 + $0x44] sm:$0xf]
  %v1329 = vld [vmem:[%s8 + $0x48] sm:$0xff]
  %v1330 = vld [vmem:[%s8 + $0x50] sm:$0xf]
  %v1331 = vld [vmem:[%s8 + $0x54] sm:$0xff]
  %v1332 = vld [vmem:[%s8 + $0x5c] sm:$0xf]
  %v1333 = vld [vmem:[%s8 + $0x60] sm:$0xff]
  %v1334 = vld [vmem:[%s8 + $0x68] sm:$0xf]
  %v1335 = vld [vmem:[%s8 + $0x6c] sm:$0xff]
  %v1336 = vld [vmem:[%s8 + $0x74] sm:$0xf]
  %v1337 = vld [vmem:[%s8 + $0x78] sm:$0xff]
  %v1338 = vld [vmem:[%s8 + $0x80] sm:$0xf]
  %v1339 = vld [vmem:[%s8 + $0x84] sm:$0xff]
  %v1340 = vld [vmem:[%s8 + $0x8c] sm:$0xf]
  %v1341 = vld [vmem:[%s8 + $0x90] sm:$0xff]
  %v1342 = vld [vmem:[%s8 + $0x98] sm:$0xf]
  %v1343 = vld [vmem:[%s8 + $0x9c] sm:$0xff]
  %v1344 = vld [vmem:[%s8 + $0xa4] sm:$0xf]
  %v1345 = vld [vmem:[%s8 + $0xa8] sm:$0xff]
  %v1346 = vld [vmem:[%s8 + $0xb0] sm:$0xf]
  %v1347 = vld [vmem:[%s8 + $0xb4] sm:$0xff]
  %v1348 = vld [vmem:[%s8 + $0xbc] sm:$0xf]
  %v1349 = vld [vmem:[%s8 + $0xc0] sm:$0xff]
  %v1350 = vld [vmem:[%s8 + $0xc8] sm:$0xf]
  %v1351 = vld [vmem:[%s8 + $0xcc] sm:$0xff]
  %v1352 = vld [vmem:[%s8 + $0xd4] sm:$0xf]
  %v1353 = vld [vmem:[%s8 + $0xd8] sm:$0xff]
  %v1354 = vld [vmem:[%s8 + $0xe0] sm:$0xf]
  %v1355 = vld [vmem:[%s8 + $0xe4] sm:$0xff]
  %v1356 = vld [vmem:[%s8 + $0xec] sm:$0xf]
  %v1357 = vld [vmem:[%s8 + $0xf0] sm:$0xff]
  %v1358 = vld [vmem:[%s8 + $0xf8] sm:$0xf]
  %v1359 = vld [vmem:[%s8 + $0xfc] sm:$0xff]
  %v1360 = vld [vmem:[%s8 + $0x104] sm:$0xf]
  %v1361 = vld [vmem:[%s8 + $0x108] sm:$0xff]
  %v1362 = vld [vmem:[%s8 + $0x110] sm:$0xf]
  %v1363 = vld [vmem:[%s8 + $0x114] sm:$0xff]
  %v1364 = vld [vmem:[%s8 + $0x11c] sm:$0xf]
  %v1365 = vld [vmem:[%s8 + $0x120] sm:$0xff]
  %v1366 = vld [vmem:[%s8 + $0x128] sm:$0xf]
  %v1367 = vld [vmem:[%s8 + $0x12c] sm:$0xff]
  %v1368 = vld [vmem:[%s8 + $0x134] sm:$0xf]
  %v1369 = vld [vmem:[%s8 + $0x138] sm:$0xff]
  %v1370 = vld [vmem:[%s8 + $0x140] sm:$0xf]
  %v1371 = vld [vmem:[%s8 + $0x144] sm:$0xff]
  %v1372 = vld [vmem:[%s8 + $0x14c] sm:$0xf]
  %v1373 = vld [vmem:[%s8 + $0x150] sm:$0xff]
  %v1374 = vld [vmem:[%s8 + $0x158] sm:$0xf]
  %v1375 = vld [vmem:[%s8 + $0x15c] sm:$0xff]
  %v1376 = vld [vmem:[%s8 + $0x164] sm:$0xf]
  %v1377 = vld [vmem:[%s8 + $0x168] sm:$0xff]
  %v1378 = vld [vmem:[%s8 + $0x170] sm:$0xf]
  %v1379 = vld [vmem:[%s8 + $0x174] sm:$0xff]
  %v1380 = vld [vmem:[%s8 + $0x17c] sm:$0xf]
  %v1381 = vld [vmem:[%s8 + $0x180] sm:$0xff]
  %v1382 = vld [vmem:[%s8 + $0x188] sm:$0xf]
  %v1383 = vld [vmem:[%s8 + $0x18c] sm:$0xff]
  %v1384 = vld [vmem:[%s8 + $0x194] sm:$0xf]
  %v1385 = vld [vmem:[%s8 + $0x198] sm:$0xff]
  %v1386 = vld [vmem:[%s8 + $0x1a0] sm:$0xf]
  %v1387 = vld [vmem:[%s8 + $0x1a4] sm:$0xff]
  %v1388 = vld [vmem:[%s8 + $0x1ac] sm:$0xf]
  %v1389 = vld [vmem:[%s8 + $0x1b0] sm:$0xff]
  %v1390 = vld [vmem:[%s8 + $0x1b8] sm:$0xf]
  %v1391 = vld [vmem:[%s8 + $0x1bc] sm:$0xff]
  %v1392 = vld [vmem:[%s8 + $0x1c4] sm:$0xf]
  %v1393 = vld [vmem:[%s8 + $0x1c8] sm:$0xff]
  %v1394 = vld [vmem:[%s8 + $0x1d0] sm:$0xf]
  %v1395 = vld [vmem:[%s8 + $0x1d4] sm:$0xff]
  %v1396 = vld [vmem:[%s8 + $0x1dc] sm:$0xf]
  %v1397 = vld [vmem:[%s8 + $0x1e0] sm:$0xff]
  %v1398 = vld [vmem:[%s8 + $0x1e8] sm:$0xf]
  %v1399 = vld [vmem:[%s8 + $0x1ec] sm:$0xff]
  %v1400 = vld [vmem:[%s8 + $0x1f4] sm:$0xf]
  %v1401 = vld [vmem:[%s8 + $0x1f8] sm:$0xff]
  %v1402 = vld [vmem:[%s8 + $0x200] sm:$0xf]
  %v1403 = vld [vmem:[%s8 + $0x204] sm:$0xff]
  %v1404 = vld [vmem:[%s8 + $0x20c] sm:$0xf]
  %v1405 = vld [vmem:[%s8 + $0x210] sm:$0xff]
  %v1406 = vld [vmem:[%s8 + $0x218] sm:$0xf]
  %v1407 = vld [vmem:[%s8 + $0x21c] sm:$0xff]
  %v1408 = vld [vmem:[%s8 + $0x224] sm:$0xf]
  %v1409 = vld [vmem:[%s8 + $0x228] sm:$0xff]
  %v1410 = vld [vmem:[%s8 + $0x230] sm:$0xf]
  %v1411 = vld [vmem:[%s8 + $0x234] sm:$0xff]
  %v1412 = vld [vmem:[%s8 + $0x23c] sm:$0xf]
  %v1413 = vld [vmem:[%s8 + $0x240] sm:$0xff]
  %v1414 = vld [vmem:[%s8 + $0x248] sm:$0xf]
  %v1415 = vld [vmem:[%s8 + $0x24c] sm:$0xff]
  %v1416 = vld [vmem:[%s8 + $0x254] sm:$0xf]
  %v1417 = vld [vmem:[%s8 + $0x258] sm:$0xff]
  %v1418 = vld [vmem:[%s8 + $0x260] sm:$0xf]
  %v1419 = vld [vmem:[%s8 + $0x264] sm:$0xff]
  %v1420 = vld [vmem:[%s8 + $0x26c] sm:$0xf]
  %v1421 = vld [vmem:[%s8 + $0x270] sm:$0xff]
  %v1422 = vld [vmem:[%s8 + $0x278] sm:$0xf]
  %v1423 = vld [vmem:[%s8 + $0x27c] sm:$0xff]
  %v1424 = vld [vmem:[%s8 + $0x284] sm:$0xf]
  %v1425 = vld [vmem:[%s8 + $0x288] sm:$0xff]
  %v1426 = vld [vmem:[%s8 + $0x290] sm:$0xf]
  %v1427 = vld [vmem:[%s8 + $0x294] sm:$0xff]
  %v1428 = vld [vmem:[%s8 + $0x29c] sm:$0xf]
  %v1429 = vld [vmem:[%s8 + $0x2a0] sm:$0xff]
  %v1430 = vld [vmem:[%s8 + $0x2a8] sm:$0xf]
  %v1431 = vld [vmem:[%s8 + $0x2ac] sm:$0xff]
  %v1432 = vld [vmem:[%s8 + $0x2b4] sm:$0xf]
  %v1433 = vld [vmem:[%s8 + $0x2b8] sm:$0xff]
  %v1434 = vld [vmem:[%s8 + $0x2c0] sm:$0xf]
  %v1435 = vld [vmem:[%s8 + $0x2c4] sm:$0xff]
  %v1436 = vld [vmem:[%s8 + $0x2cc] sm:$0xf]
  %v1437 = vld [vmem:[%s8 + $0x2d0] sm:$0xff]
  %v1438 = vld [vmem:[%s8 + $0x2d8] sm:$0xf]
  %v1439 = vld [vmem:[%s8 + $0x2dc] sm:$0xff]
  %v1440 = vld [vmem:[%s8 + $0x2e4] sm:$0xf]
  %v1441 = vld [vmem:[%s8 + $0x2e8] sm:$0xff]
  %v1442 = vld [vmem:[%s8 + $0x2f0] sm:$0xf]
  %v1443 = vld [vmem:[%s8 + $0x2f4] sm:$0xff]
  %v1444 = vld [vmem:[%s8 + $0x2fc] sm:$0xf]
  %v1445 = vpack.c.bf16 %v1313, %v1313
  %v1446 = vpack.c.bf16 %v1314, %v1314
  %v1447 = vpack.c.bf16 %v1315, %v1315
  %v1448 = vpack.c.bf16 %v1316, %v1316
  %v1577 = vunpack.c.l.b16 %v1317
  %v1578 = vunpack.c.h.b16 %v1317
  %v1579 = vunpack.c.l.b16 %v1318
  %v1580 = vunpack.c.l.b16 %v1319
  %v1581 = vunpack.c.h.b16 %v1319
  %v1582 = vunpack.c.l.b16 %v1320
  %v1583 = vunpack.c.l.b16 %v1321
  %v1584 = vunpack.c.h.b16 %v1321
  %v1585 = vunpack.c.l.b16 %v1322
  %v1586 = vunpack.c.l.b16 %v1323
  %v1587 = vunpack.c.h.b16 %v1323
  %v1588 = vunpack.c.l.b16 %v1324
  %v1589 = vunpack.c.l.b16 %v1325
  %v1590 = vunpack.c.h.b16 %v1325
  %v1591 = vunpack.c.l.b16 %v1326
  %v1592 = vunpack.c.l.b16 %v1327
  %v1593 = vunpack.c.h.b16 %v1327
  %v1594 = vunpack.c.l.b16 %v1328
  %v1595 = vunpack.c.l.b16 %v1329
  %v1596 = vunpack.c.h.b16 %v1329
  %v1597 = vunpack.c.l.b16 %v1330
  %v1598 = vunpack.c.l.b16 %v1331
  %v1599 = vunpack.c.h.b16 %v1331
  %v1600 = vunpack.c.l.b16 %v1332
  %v1601 = vunpack.c.l.b16 %v1333
  %v1602 = vunpack.c.h.b16 %v1333
  %v1603 = vunpack.c.l.b16 %v1334
  %v1604 = vunpack.c.l.b16 %v1335
  %v1605 = vunpack.c.h.b16 %v1335
  %v1606 = vunpack.c.l.b16 %v1336
  %v1607 = vunpack.c.l.b16 %v1337
  %v1608 = vunpack.c.h.b16 %v1337
  %v1609 = vunpack.c.l.b16 %v1338
  %v1610 = vunpack.c.l.b16 %v1339
  %v1611 = vunpack.c.h.b16 %v1339
  %v1612 = vunpack.c.l.b16 %v1340
  %v1613 = vunpack.c.l.b16 %v1341
  %v1614 = vunpack.c.h.b16 %v1341
  %v1615 = vunpack.c.l.b16 %v1342
  %v1616 = vunpack.c.l.b16 %v1343
  %v1617 = vunpack.c.h.b16 %v1343
  %v1618 = vunpack.c.l.b16 %v1344
  %v1619 = vunpack.c.l.b16 %v1345
  %v1620 = vunpack.c.h.b16 %v1345
  %v1621 = vunpack.c.l.b16 %v1346
  %v1622 = vunpack.c.l.b16 %v1347
  %v1623 = vunpack.c.h.b16 %v1347
  %v1624 = vunpack.c.l.b16 %v1348
  %v1625 = vunpack.c.l.b16 %v1349
  %v1626 = vunpack.c.h.b16 %v1349
  %v1627 = vunpack.c.l.b16 %v1350
  %v1628 = vunpack.c.l.b16 %v1351
  %v1629 = vunpack.c.h.b16 %v1351
  %v1630 = vunpack.c.l.b16 %v1352
  %v1631 = vunpack.c.l.b16 %v1353
  %v1632 = vunpack.c.h.b16 %v1353
  %v1633 = vunpack.c.l.b16 %v1354
  %v1634 = vunpack.c.l.b16 %v1355
  %v1635 = vunpack.c.h.b16 %v1355
  %v1636 = vunpack.c.l.b16 %v1356
  %v1637 = vunpack.c.l.b16 %v1357
  %v1638 = vunpack.c.h.b16 %v1357
  %v1639 = vunpack.c.l.b16 %v1358
  %v1640 = vunpack.c.l.b16 %v1359
  %v1641 = vunpack.c.h.b16 %v1359
  %v1642 = vunpack.c.l.b16 %v1360
  %v1643 = vunpack.c.l.b16 %v1361
  %v1644 = vunpack.c.h.b16 %v1361
  %v1645 = vunpack.c.l.b16 %v1362
  %v1646 = vunpack.c.l.b16 %v1363
  %v1647 = vunpack.c.h.b16 %v1363
  %v1648 = vunpack.c.l.b16 %v1364
  %v1649 = vunpack.c.l.b16 %v1365
  %v1650 = vunpack.c.h.b16 %v1365
  %v1651 = vunpack.c.l.b16 %v1366
  %v1652 = vunpack.c.l.b16 %v1367
  %v1653 = vunpack.c.h.b16 %v1367
  %v1654 = vunpack.c.l.b16 %v1368
  %v1655 = vunpack.c.l.b16 %v1369
  %v1656 = vunpack.c.h.b16 %v1369
  %v1657 = vunpack.c.l.b16 %v1370
  %v1658 = vunpack.c.l.b16 %v1371
  %v1659 = vunpack.c.h.b16 %v1371
  %v1660 = vunpack.c.l.b16 %v1372
  %v1661 = vunpack.c.l.b16 %v1373
  %v1662 = vunpack.c.h.b16 %v1373
  %v1663 = vunpack.c.l.b16 %v1374
  %v1664 = vunpack.c.l.b16 %v1375
  %v1665 = vunpack.c.h.b16 %v1375
  %v1666 = vunpack.c.l.b16 %v1376
  %v1667 = vunpack.c.l.b16 %v1377
  %v1668 = vunpack.c.h.b16 %v1377
  %v1669 = vunpack.c.l.b16 %v1378
  %v1670 = vunpack.c.l.b16 %v1379
  %v1671 = vunpack.c.h.b16 %v1379
  %v1672 = vunpack.c.l.b16 %v1380
  %v1673 = vunpack.c.l.b16 %v1381
  %v1674 = vunpack.c.h.b16 %v1381
  %v1675 = vunpack.c.l.b16 %v1382
  %v1676 = vunpack.c.l.b16 %v1383
  %v1677 = vunpack.c.h.b16 %v1383
  %v1678 = vunpack.c.l.b16 %v1384
  %v1679 = vunpack.c.l.b16 %v1385
  %v1680 = vunpack.c.h.b16 %v1385
  %v1681 = vunpack.c.l.b16 %v1386
  %v1682 = vunpack.c.l.b16 %v1387
  %v1683 = vunpack.c.h.b16 %v1387
  %v1684 = vunpack.c.l.b16 %v1388
  %v1685 = vunpack.c.l.b16 %v1389
  %v1686 = vunpack.c.h.b16 %v1389
  %v1687 = vunpack.c.l.b16 %v1390
  %v1688 = vunpack.c.l.b16 %v1391
  %v1689 = vunpack.c.h.b16 %v1391
  %v1690 = vunpack.c.l.b16 %v1392
  %v1691 = vunpack.c.l.b16 %v1393
  %v1692 = vunpack.c.h.b16 %v1393
  %v1693 = vunpack.c.l.b16 %v1394
  %v1694 = vunpack.c.l.b16 %v1395
  %v1695 = vunpack.c.h.b16 %v1395
  %v1696 = vunpack.c.l.b16 %v1396
  %v1697 = vunpack.c.l.b16 %v1397
  %v1698 = vunpack.c.h.b16 %v1397
  %v1699 = vunpack.c.l.b16 %v1398
  %v1700 = vunpack.c.l.b16 %v1399
  %v1701 = vunpack.c.h.b16 %v1399
  %v1702 = vunpack.c.l.b16 %v1400
  %v1703 = vunpack.c.l.b16 %v1401
  %v1704 = vunpack.c.h.b16 %v1401
  %v1705 = vunpack.c.l.b16 %v1402
  %v1706 = vunpack.c.l.b16 %v1403
  %v1707 = vunpack.c.h.b16 %v1403
  %v1708 = vunpack.c.l.b16 %v1404
  %v1709 = vunpack.c.l.b16 %v1405
  %v1710 = vunpack.c.h.b16 %v1405
  %v1711 = vunpack.c.l.b16 %v1406
  %v1712 = vunpack.c.l.b16 %v1407
  %v1713 = vunpack.c.h.b16 %v1407
  %v1714 = vunpack.c.l.b16 %v1408
  %v1715 = vunpack.c.l.b16 %v1409
  %v1716 = vunpack.c.h.b16 %v1409
  %v1717 = vunpack.c.l.b16 %v1410
  %v1718 = vunpack.c.l.b16 %v1411
  %v1719 = vunpack.c.h.b16 %v1411
  %v1720 = vunpack.c.l.b16 %v1412
  %v1721 = vunpack.c.l.b16 %v1413
  %v1722 = vunpack.c.h.b16 %v1413
  %v1723 = vunpack.c.l.b16 %v1414
  %v1724 = vunpack.c.l.b16 %v1415
  %v1725 = vunpack.c.h.b16 %v1415
  %v1726 = vunpack.c.l.b16 %v1416
  %v1727 = vunpack.c.l.b16 %v1417
  %v1728 = vunpack.c.h.b16 %v1417
  %v1729 = vunpack.c.l.b16 %v1418
  %v1730 = vunpack.c.l.b16 %v1419
  %v1731 = vunpack.c.h.b16 %v1419
  %v1732 = vunpack.c.l.b16 %v1420
  %v1733 = vunpack.c.l.b16 %v1421
  %v1734 = vunpack.c.h.b16 %v1421
  %v1735 = vunpack.c.l.b16 %v1422
  %v1736 = vunpack.c.l.b16 %v1423
  %v1737 = vunpack.c.h.b16 %v1423
  %v1738 = vunpack.c.l.b16 %v1424
  %v1739 = vunpack.c.l.b16 %v1425
  %v1740 = vunpack.c.h.b16 %v1425
  %v1741 = vunpack.c.l.b16 %v1426
  %v1742 = vunpack.c.l.b16 %v1427
  %v1743 = vunpack.c.h.b16 %v1427
  %v1744 = vunpack.c.l.b16 %v1428
  %v1745 = vunpack.c.l.b16 %v1429
  %v1746 = vunpack.c.h.b16 %v1429
  %v1747 = vunpack.c.l.b16 %v1430
  %v1748 = vunpack.c.l.b16 %v1431
  %v1749 = vunpack.c.h.b16 %v1431
  %v1750 = vunpack.c.l.b16 %v1432
  %v1751 = vunpack.c.l.b16 %v1433
  %v1752 = vunpack.c.h.b16 %v1433
  %v1753 = vunpack.c.l.b16 %v1434
  %v1754 = vunpack.c.l.b16 %v1435
  %v1755 = vunpack.c.h.b16 %v1435
  %v1756 = vunpack.c.l.b16 %v1436
  %v1757 = vunpack.c.l.b16 %v1437
  %v1758 = vunpack.c.h.b16 %v1437
  %v1759 = vunpack.c.l.b16 %v1438
  %v1760 = vunpack.c.l.b16 %v1439
  %v1761 = vunpack.c.h.b16 %v1439
  %v1762 = vunpack.c.l.b16 %v1440
  %v1763 = vunpack.c.l.b16 %v1441
  %v1764 = vunpack.c.h.b16 %v1441
  %v1765 = vunpack.c.l.b16 %v1442
  %v1766 = vunpack.c.l.b16 %v1443
  %v1767 = vunpack.c.h.b16 %v1443
  %v1768 = vunpack.c.l.b16 %v1444
  %v1769 = vpack.c.b16 %v1580, %v1577
  %v1770 = vpack.c.b16 %v1581, %v1578
  %v1771 = vpack.c.b16 %v1582, %v1579
  %v1772 = vpack.c.b16 %v1586, %v1583
  %v1773 = vpack.c.b16 %v1587, %v1584
  %v1774 = vpack.c.b16 %v1588, %v1585
  %v1775 = vpack.c.b16 %v1592, %v1589
  %v1776 = vpack.c.b16 %v1593, %v1590
  %v1777 = vpack.c.b16 %v1594, %v1591
  %v1778 = vpack.c.b16 %v1598, %v1595
  %v1779 = vpack.c.b16 %v1599, %v1596
  %v1780 = vpack.c.b16 %v1600, %v1597
  %v1781 = vpack.c.b16 %v1604, %v1601
  %v1782 = vpack.c.b16 %v1605, %v1602
  %v1783 = vpack.c.b16 %v1606, %v1603
  %v1784 = vpack.c.b16 %v1610, %v1607
  %v1785 = vpack.c.b16 %v1611, %v1608
  %v1786 = vpack.c.b16 %v1612, %v1609
  %v1787 = vpack.c.b16 %v1616, %v1613
  %v1788 = vpack.c.b16 %v1617, %v1614
  %v1789 = vpack.c.b16 %v1618, %v1615
  %v1790 = vpack.c.b16 %v1622, %v1619
  %v1791 = vpack.c.b16 %v1623, %v1620
  %v1792 = vpack.c.b16 %v1624, %v1621
  %v1793 = vpack.c.b16 %v1628, %v1625
  %v1794 = vpack.c.b16 %v1629, %v1626
  %v1795 = vpack.c.b16 %v1630, %v1627
  %v1796 = vpack.c.b16 %v1634, %v1631
  %v1797 = vpack.c.b16 %v1635, %v1632
  %v1798 = vpack.c.b16 %v1636, %v1633
  %v1799 = vpack.c.b16 %v1640, %v1637
  %v1800 = vpack.c.b16 %v1641, %v1638
  %v1801 = vpack.c.b16 %v1642, %v1639
  %v1802 = vpack.c.b16 %v1646, %v1643
  %v1803 = vpack.c.b16 %v1647, %v1644
  %v1804 = vpack.c.b16 %v1648, %v1645
  %v1805 = vpack.c.b16 %v1652, %v1649
  %v1806 = vpack.c.b16 %v1653, %v1650
  %v1807 = vpack.c.b16 %v1654, %v1651
  %v1808 = vpack.c.b16 %v1658, %v1655
  %v1809 = vpack.c.b16 %v1659, %v1656
  %v1810 = vpack.c.b16 %v1660, %v1657
  %v1811 = vpack.c.b16 %v1664, %v1661
  %v1812 = vpack.c.b16 %v1665, %v1662
  %v1813 = vpack.c.b16 %v1666, %v1663
  %v1814 = vpack.c.b16 %v1670, %v1667
  %v1815 = vpack.c.b16 %v1671, %v1668
  %v1816 = vpack.c.b16 %v1672, %v1669
  %v1817 = vpack.c.b16 %v1676, %v1673
  %v1818 = vpack.c.b16 %v1677, %v1674
  %v1819 = vpack.c.b16 %v1678, %v1675
  %v1820 = vpack.c.b16 %v1682, %v1679
  %v1821 = vpack.c.b16 %v1683, %v1680
  %v1822 = vpack.c.b16 %v1684, %v1681
  %v1823 = vpack.c.b16 %v1688, %v1685
  %v1824 = vpack.c.b16 %v1689, %v1686
  %v1825 = vpack.c.b16 %v1690, %v1687
  %v1826 = vpack.c.b16 %v1694, %v1691
  %v1827 = vpack.c.b16 %v1695, %v1692
  %v1828 = vpack.c.b16 %v1696, %v1693
  %v1829 = vpack.c.b16 %v1700, %v1697
  %v1830 = vpack.c.b16 %v1701, %v1698
  %v1831 = vpack.c.b16 %v1702, %v1699
  %v1832 = vpack.c.b16 %v1706, %v1703
  %v1833 = vpack.c.b16 %v1707, %v1704
  %v1834 = vpack.c.b16 %v1708, %v1705
  %v1835 = vpack.c.b16 %v1712, %v1709
  %v1836 = vpack.c.b16 %v1713, %v1710
  %v1837 = vpack.c.b16 %v1714, %v1711
  %v1838 = vpack.c.b16 %v1718, %v1715
  %v1839 = vpack.c.b16 %v1719, %v1716
  %v1840 = vpack.c.b16 %v1720, %v1717
  %v1841 = vpack.c.b16 %v1724, %v1721
  %v1842 = vpack.c.b16 %v1725, %v1722
  %v1843 = vpack.c.b16 %v1726, %v1723
  %v1844 = vpack.c.b16 %v1730, %v1727
  %v1845 = vpack.c.b16 %v1731, %v1728
  %v1846 = vpack.c.b16 %v1732, %v1729
  %v1847 = vpack.c.b16 %v1736, %v1733
  %v1848 = vpack.c.b16 %v1737, %v1734
  %v1849 = vpack.c.b16 %v1738, %v1735
  %v1850 = vpack.c.b16 %v1742, %v1739
  %v1851 = vpack.c.b16 %v1743, %v1740
  %v1852 = vpack.c.b16 %v1744, %v1741
  %v1853 = vpack.c.b16 %v1748, %v1745
  %v1854 = vpack.c.b16 %v1749, %v1746
  %v1855 = vpack.c.b16 %v1750, %v1747
  %v1856 = vpack.c.b16 %v1754, %v1751
  %v1857 = vpack.c.b16 %v1755, %v1752
  %v1858 = vpack.c.b16 %v1756, %v1753
  %v1859 = vpack.c.b16 %v1760, %v1757
  %v1860 = vpack.c.b16 %v1761, %v1758
  %v1861 = vpack.c.b16 %v1762, %v1759
  %v1862 = vpack.c.b16 %v1766, %v1763
  %v1863 = vpack.c.b16 %v1767, %v1764
  %v1864 = vpack.c.b16 %v1768, %v1765
  %1961 = vmatprep.subr.bf16.mxu0 %v1770
  %1962 = vmatpush1.bf16.msra.mxu0 %v1769
  %1963 = vmatprep.subr.bf16.mxu0 %v1773
  %1964 = vmatpush1.bf16.msra.mxu0 %v1772
  %1965 = vmatprep.subr.bf16.mxu0 %v1776
  %1966 = vmatpush1.bf16.msra.mxu0 %v1775
  %1967 = vmatprep.subr.bf16.mxu0 %v1779
  %1968 = vmatpush1.bf16.msra.mxu0 %v1778
  %1969 = vmatprep.subr.bf16.mxu0 %v1782
  %1970 = vmatpush1.bf16.msra.mxu0 %v1781
  %1971 = vmatprep.subr.bf16.mxu0 %v1785
  %1972 = vmatpush1.bf16.msra.mxu0 %v1784
  %1973 = vmatprep.subr.bf16.mxu0 %v1788
  %1974 = vmatpush1.bf16.msra.mxu0 %v1787
  %1975 = vmatprep.subr.bf16.mxu0 %v1791
  %1976 = vmatpush1.bf16.msra.mxu0 %v1790
  %1977 = vmatprep.subr.bf16.mxu0 %v1794
  %1978 = vmatpush1.bf16.msra.mxu0 %v1793
  %1979 = vmatprep.subr.bf16.mxu0 %v1797
  %1980 = vmatpush1.bf16.msra.mxu0 %v1796
  %1981 = vmatprep.subr.bf16.mxu0 %v1800
  %1982 = vmatpush1.bf16.msra.mxu0 %v1799
  %1983 = vmatprep.subr.bf16.mxu0 %v1803
  %1984 = vmatpush1.bf16.msra.mxu0 %v1802
  %1985 = vmatprep.subr.bf16.mxu0 %v1806
  %1986 = vmatpush1.bf16.msra.mxu0 %v1805
  %1987 = vmatprep.subr.bf16.mxu0 %v1809
  %1988 = vmatpush1.bf16.msra.mxu0 %v1808
  %1989 = vmatprep.subr.bf16.mxu0 %v1812
  %1990 = vmatpush1.bf16.msra.mxu0 %v1811
  %1991 = vmatprep.subr.bf16.mxu0 %v1815
  %1992 = vmatpush1.bf16.msra.mxu0 %v1814
  %1993 = vmatprep.mubr.bf16.mxu0 %v1446
  %1994 = vmatmul.mubr.bf16.gmra.mrb[0].mxu0 %v1445
  %v1995 = vpop.f32.mrb[0].mxu0
  %v1996 = vadd.f32 0.0, %v1995
  %v1997 = vpop.f32.mrb[0].mxu0
  %v1998 = vadd.f32 0.0, %v1997
  %v1999 = vpop.f32.mrb[0].mxu0
  %v2000 = vpop.f32.mrb[0].mxu0
  %2001 = vdwg.mxu0
  %2002 = vmatprep.subr.bf16.mxu0 %v1818
  %2003 = vmatpush1.bf16.msra.mxu0 %v1817
  %2004 = vmatprep.subr.bf16.mxu0 %v1821
  %2005 = vmatpush1.bf16.msra.mxu0 %v1820
  %2006 = vmatprep.subr.bf16.mxu0 %v1824
  %2007 = vmatpush1.bf16.msra.mxu0 %v1823
  %2008 = vmatprep.subr.bf16.mxu0 %v1827
  %2009 = vmatpush1.bf16.msra.mxu0 %v1826
  %2010 = vmatprep.subr.bf16.mxu0 %v1830
  %2011 = vmatpush1.bf16.msra.mxu0 %v1829
  %2012 = vmatprep.subr.bf16.mxu0 %v1833
  %2013 = vmatpush1.bf16.msra.mxu0 %v1832
  %2014 = vmatprep.subr.bf16.mxu0 %v1836
  %2015 = vmatpush1.bf16.msra.mxu0 %v1835
  %2016 = vmatprep.subr.bf16.mxu0 %v1839
  %2017 = vmatpush1.bf16.msra.mxu0 %v1838
  %2018 = vmatprep.subr.bf16.mxu0 %v1842
  %2019 = vmatpush1.bf16.msra.mxu0 %v1841
  %2020 = vmatprep.subr.bf16.mxu0 %v1845
  %2021 = vmatpush1.bf16.msra.mxu0 %v1844
  %2022 = vmatprep.subr.bf16.mxu0 %v1848
  %2023 = vmatpush1.bf16.msra.mxu0 %v1847
  %2024 = vmatprep.subr.bf16.mxu0 %v1851
  %2025 = vmatpush1.bf16.msra.mxu0 %v1850
  %2026 = vmatprep.subr.bf16.mxu0 %v1854
  %2027 = vmatpush1.bf16.msra.mxu0 %v1853
  %2028 = vmatprep.subr.bf16.mxu0 %v1857
  %2029 = vmatpush1.bf16.msra.mxu0 %v1856
  %2030 = vmatprep.subr.bf16.mxu0 %v1860
  %2031 = vmatpush1.bf16.msra.mxu0 %v1859
  %2032 = vmatprep.subr.bf16.mxu0 %v1863
  %2033 = vmatpush1.bf16.msra.mxu0 %v1862
  %2034 = vmatprep.mubr.bf16.mxu0 %v1448
  %2035 = vmatmul.mubr.bf16.gmra.mrb[0].mxu0 %v1447
  %v2036 = vpop.f32.mrb[0].mxu0
  %v2037 = vadd.f32 %v1996, %v2036
  %v2038 = vpop.f32.mrb[0].mxu0
  %v2039 = vadd.f32 %v1998, %v2038
  %v2040 = vpop.f32.mrb[0].mxu0
  %v2041 = vpop.f32.mrb[0].mxu0
  %2042 = vdwg.mxu0
  %2043 = vmatprep.subr.bf16.mxu0 0
  %2044 = vmatpush1.bf16.msra.mxu0 %v1771
  %2045 = vmatprep.subr.bf16.mxu0 0
  %2046 = vmatpush1.bf16.msra.mxu0 %v1774
  %2047 = vmatprep.subr.bf16.mxu0 0
  %2048 = vmatpush1.bf16.msra.mxu0 %v1777
  %2049 = vmatprep.subr.bf16.mxu0 0
  %2050 = vmatpush1.bf16.msra.mxu0 %v1780
  %2051 = vmatprep.subr.bf16.mxu0 0
  %2052 = vmatpush1.bf16.msra.mxu0 %v1783
  %2053 = vmatprep.subr.bf16.mxu0 0
  %2054 = vmatpush1.bf16.msra.mxu0 %v1786
  %2055 = vmatprep.subr.bf16.mxu0 0
  %2056 = vmatpush1.bf16.msra.mxu0 %v1789
  %2057 = vmatprep.subr.bf16.mxu0 0
  %2058 = vmatpush1.bf16.msra.mxu0 %v1792
  %2059 = vmatprep.subr.bf16.mxu0 0
  %2060 = vmatpush1.bf16.msra.mxu0 %v1795
  %2061 = vmatprep.subr.bf16.mxu0 0
  %2062 = vmatpush1.bf16.msra.mxu0 %v1798
  %2063 = vmatprep.subr.bf16.mxu0 0
  %2064 = vmatpush1.bf16.msra.mxu0 %v1801
  %2065 = vmatprep.subr.bf16.mxu0 0
  %2066 = vmatpush1.bf16.msra.mxu0 %v1804
  %2067 = vmatprep.subr.bf16.mxu0 0
  %2068 = vmatpush1.bf16.msra.mxu0 %v1807
  %2069 = vmatprep.subr.bf16.mxu0 0
  %2070 = vmatpush1.bf16.msra.mxu0 %v1810
  %2071 = vmatprep.subr.bf16.mxu0 0
  %2072 = vmatpush1.bf16.msra.mxu0 %v1813
  %2073 = vmatprep.subr.bf16.mxu0 0
  %2074 = vmatpush1.bf16.msra.mxu0 %v1816
  %2075 = vmatprep.mubr.bf16.mxu0 %v1446
  %2076 = vmatmul.mubr.bf16.gmra.mrb[0].mxu0 %v1445
  %v2077 = vpop.f32.mrb[0].mxu0
  %v2078 = vadd.f32 0.0, %v2077
  %v2079 = vpop.f32.mrb[0].mxu0
  %v2080 = vpop.f32.mrb[0].mxu0
  %v2081 = vpop.f32.mrb[0].mxu0
  %2082 = vdwg.mxu0
  %2083 = vmatprep.subr.bf16.mxu0 0
  %2084 = vmatpush1.bf16.msra.mxu0 %v1819
  %2085 = vmatprep.subr.bf16.mxu0 0
  %2086 = vmatpush1.bf16.msra.mxu0 %v1822
  %2087 = vmatprep.subr.bf16.mxu0 0
  %2088 = vmatpush1.bf16.msra.mxu0 %v1825
  %2089 = vmatprep.subr.bf16.mxu0 0
  %2090 = vmatpush1.bf16.msra.mxu0 %v1828
  %2091 = vmatprep.subr.bf16.mxu0 0
  %2092 = vmatpush1.bf16.msra.mxu0 %v1831
  %2093 = vmatprep.subr.bf16.mxu0 0
  %2094 = vmatpush1.bf16.msra.mxu0 %v1834
  %2095 = vmatprep.subr.bf16.mxu0 0
  %2096 = vmatpush1.bf16.msra.mxu0 %v1837
  %2097 = vmatprep.subr.bf16.mxu0 0
  %2098 = vmatpush1.bf16.msra.mxu0 %v1840
  %2099 = vmatprep.subr.bf16.mxu0 0
  %2100 = vmatpush1.bf16.msra.mxu0 %v1843
  %2101 = vmatprep.subr.bf16.mxu0 0
  %2102 = vmatpush1.bf16.msra.mxu0 %v1846
  %2103 = vmatprep.subr.bf16.mxu0 0
  %2104 = vmatpush1.bf16.msra.mxu0 %v1849
  %2105 = vmatprep.subr.bf16.mxu0 0
  %2106 = vmatpush1.bf16.msra.mxu0 %v1852
  %2107 = vmatprep.subr.bf16.mxu0 0
  %2108 = vmatpush1.bf16.msra.mxu0 %v1855
  %2109 = vmatprep.subr.bf16.mxu0 0
  %2110 = vmatpush1.bf16.msra.mxu0 %v1858
  %2111 = vmatprep.subr.bf16.mxu0 0
  %2112 = vmatpush1.bf16.msra.mxu0 %v1861
  %2113 = vmatprep.subr.bf16.mxu0 0
  %2114 = vmatpush1.bf16.msra.mxu0 %v1864
  %2115 = vmatprep.mubr.bf16.mxu0 %v1448
  %2116 = vmatmul.mubr.bf16.gmra.mrb[0].mxu0 %v1447
  %v2117 = vpop.f32.mrb[0].mxu0
  %v2118 = vadd.f32 %v2078, %v2117
  %v2119 = vpop.f32.mrb[0].mxu0
  %v2120 = vpop.f32.mrb[0].mxu0
  %v2121 = vpop.f32.mrb[0].mxu0
  %2122 = vdwg.mxu0
  %v2123 = vld [vmem:[%s9] sm:$0x7]
  %v2125 = vlaneseq
  %v2126 = vshrl.u32 %v2125, 7
  %v2127 = vsub.s32 0, %v2126
  %v2128 = vrot.slane %v2123, %v2127
  %v2129 = vlaneseq
  %v2130 = vshrl.u32 %v2129, 7
  %v2131 = vsub.s32 1, %v2130
  %v2132 = vrot.slane %v2123, %v2131
  %v2133 = vlaneseq
  %v2134 = vshrl.u32 %v2133, 7
  %v2135 = vsub.s32 2, %v2134
  %v2136 = vrot.slane %v2123, %v2135
  %v2140 = vmul.f32 %v2037, %v2128
  %v2141 = vmul.f32 %v2039, %v2132
  %v2142 = vmul.f32 %v2118, %v2136
  %v2143 = vld [vmem:[%s10] sm:$0x7]
  %v2145 = vlaneseq
  %v2146 = vshrl.u32 %v2145, 7
  %v2147 = vsub.s32 0, %v2146
  %v2148 = vrot.slane %v2143, %v2147
  %v2149 = vlaneseq
  %v2150 = vshrl.u32 %v2149, 7
  %v2151 = vsub.s32 1, %v2150
  %v2152 = vrot.slane %v2143, %v2151
  %v2153 = vlaneseq
  %v2154 = vshrl.u32 %v2153, 7
  %v2155 = vsub.s32 2, %v2154
  %v2156 = vrot.slane %v2143, %v2155
  %v2160 = vadd.f32 %v2140, %v2148
  %v2161 = vadd.f32 %v2141, %v2152
  %v2162 = vadd.f32 %v2142, %v2156
  %vm2163 = vcmp.gt.f32.partialorder %v2160, 0.0
  %vm2164 = vcmp.gt.f32.partialorder %v2161, 0.0
  %vm2165 = vcmp.gt.f32.partialorder %v2162, 0.0
  %v2166 = vmul.f32 %v2160, 0.2
  %v2167 = vmul.f32 %v2161, 0.2
  %v2168 = vmul.f32 %v2162, 0.2
  %v2169 = vsel %vm2163, %v2160, %v2166
  %v2170 = vsel %vm2164, %v2161, %v2167
  %v2171 = vsel %vm2165, %v2162, %v2168
  %v2172 = vld [vmem:[%s11] sm:$0xf]
  %v2173 = vld [vmem:[%s11 + $0x4] sm:$0xf]
  %v2174 = vld [vmem:[%s11 + $0x8] sm:$0xf]
  %v2175 = vld [vmem:[%s11 + $0xc] sm:$0xf]
  %v2176 = vld [vmem:[%s11 + $0x10] sm:$0xf]
  %v2177 = vld [vmem:[%s11 + $0x14] sm:$0xf]
  %v2178 = vld [vmem:[%s11 + $0x18] sm:$0xf]
  %v2179 = vld [vmem:[%s11 + $0x1c] sm:$0xf]
  %v2180 = vld [vmem:[%s11 + $0x20] sm:$0xf]
  %v2181 = vld [vmem:[%s11 + $0x24] sm:$0xf]
  %v2182 = vld [vmem:[%s11 + $0x28] sm:$0xf]
  %v2183 = vld [vmem:[%s11 + $0x2c] sm:$0xf]
  %v2184 = vld [vmem:[%s11 + $0x30] sm:$0xf]
  %v2185 = vld [vmem:[%s11 + $0x34] sm:$0xf]
  %v2186 = vld [vmem:[%s11 + $0x38] sm:$0xf]
  %v2187 = vld [vmem:[%s11 + $0x3c] sm:$0xf]
  %v2188 = vld [vmem:[%s11 + $0x40] sm:$0xf]
  %v2189 = vld [vmem:[%s11 + $0x44] sm:$0xf]
  %v2190 = vld [vmem:[%s11 + $0x48] sm:$0xf]
  %v2191 = vld [vmem:[%s11 + $0x4c] sm:$0xf]
  %v2192 = vld [vmem:[%s11 + $0x50] sm:$0xf]
  %v2193 = vld [vmem:[%s11 + $0x54] sm:$0xf]
  %v2194 = vld [vmem:[%s11 + $0x58] sm:$0xf]
  %v2195 = vld [vmem:[%s11 + $0x5c] sm:$0xf]
  %v2196 = vld [vmem:[%s11 + $0x60] sm:$0xf]
  %v2197 = vld [vmem:[%s11 + $0x64] sm:$0xf]
  %v2198 = vld [vmem:[%s11 + $0x68] sm:$0xf]
  %v2199 = vld [vmem:[%s11 + $0x6c] sm:$0xf]
  %v2200 = vld [vmem:[%s11 + $0x70] sm:$0xf]
  %v2201 = vld [vmem:[%s11 + $0x74] sm:$0xf]
  %v2202 = vld [vmem:[%s11 + $0x78] sm:$0xf]
  %v2203 = vld [vmem:[%s11 + $0x7c] sm:$0xf]
  %v2204 = vpack.c.bf16 %v2169, %v2169
  %v2205 = vpack.c.bf16 %v2170, %v2170
  %v2206 = vld [vmem:[%s12] sm:$0x1]
  %v2208 = vlaneseq
  %v2209 = vshrl.u32 %v2208, 7
  %v2210 = vsub.s32 0, %v2209
  %v2211 = vrot.slane %v2206, %v2210
  %v2245 = vunpack.c.l.b16 %v2172
  %v2246 = vunpack.c.l.b16 %v2173
  %v2247 = vunpack.c.l.b16 %v2174
  %v2248 = vunpack.c.l.b16 %v2175
  %v2249 = vunpack.c.l.b16 %v2176
  %v2250 = vunpack.c.l.b16 %v2177
  %v2251 = vunpack.c.l.b16 %v2178
  %v2252 = vunpack.c.l.b16 %v2179
  %v2253 = vunpack.c.l.b16 %v2180
  %v2254 = vunpack.c.l.b16 %v2181
  %v2255 = vunpack.c.l.b16 %v2182
  %v2256 = vunpack.c.l.b16 %v2183
  %v2257 = vunpack.c.l.b16 %v2184
  %v2258 = vunpack.c.l.b16 %v2185
  %v2259 = vunpack.c.l.b16 %v2186
  %v2260 = vunpack.c.l.b16 %v2187
  %v2261 = vunpack.c.l.b16 %v2188
  %v2262 = vunpack.c.l.b16 %v2189
  %v2263 = vunpack.c.l.b16 %v2190
  %v2264 = vunpack.c.l.b16 %v2191
  %v2265 = vunpack.c.l.b16 %v2192
  %v2266 = vunpack.c.l.b16 %v2193
  %v2267 = vunpack.c.l.b16 %v2194
  %v2268 = vunpack.c.l.b16 %v2195
  %v2269 = vunpack.c.l.b16 %v2196
  %v2270 = vunpack.c.l.b16 %v2197
  %v2271 = vunpack.c.l.b16 %v2198
  %v2272 = vunpack.c.l.b16 %v2199
  %v2273 = vunpack.c.l.b16 %v2200
  %v2274 = vunpack.c.l.b16 %v2201
  %v2275 = vunpack.c.l.b16 %v2202
  %v2276 = vunpack.c.l.b16 %v2203
  %v2277 = vpack.c.b16 %v2246, %v2245
  %v2278 = vpack.c.b16 %v2248, %v2247
  %v2279 = vpack.c.b16 %v2250, %v2249
  %v2280 = vpack.c.b16 %v2252, %v2251
  %v2281 = vpack.c.b16 %v2254, %v2253
  %v2282 = vpack.c.b16 %v2256, %v2255
  %v2283 = vpack.c.b16 %v2258, %v2257
  %v2284 = vpack.c.b16 %v2260, %v2259
  %v2285 = vpack.c.b16 %v2262, %v2261
  %v2286 = vpack.c.b16 %v2264, %v2263
  %v2287 = vpack.c.b16 %v2266, %v2265
  %v2288 = vpack.c.b16 %v2268, %v2267
  %v2289 = vpack.c.b16 %v2270, %v2269
  %v2290 = vpack.c.b16 %v2272, %v2271
  %v2291 = vpack.c.b16 %v2274, %v2273
  %v2292 = vpack.c.b16 %v2276, %v2275
  %2309 = vmatprep.subr.bf16.mxu0 0
  %2310 = vmatpush1.bf16.msra.mxu0 %v2277
  %2311 = vmatprep.subr.bf16.mxu0 0
  %2312 = vmatpush1.bf16.msra.mxu0 %v2278
  %2313 = vmatprep.subr.bf16.mxu0 0
  %2314 = vmatpush1.bf16.msra.mxu0 %v2279
  %2315 = vmatprep.subr.bf16.mxu0 0
  %2316 = vmatpush1.bf16.msra.mxu0 %v2280
  %2317 = vmatprep.subr.bf16.mxu0 0
  %2318 = vmatpush1.bf16.msra.mxu0 %v2281
  %2319 = vmatprep.subr.bf16.mxu0 0
  %2320 = vmatpush1.bf16.msra.mxu0 %v2282
  %2321 = vmatprep.subr.bf16.mxu0 0
  %2322 = vmatpush1.bf16.msra.mxu0 %v2283
  %2323 = vmatprep.subr.bf16.mxu0 0
  %2324 = vmatpush1.bf16.msra.mxu0 %v2284
  %2325 = vmatprep.subr.bf16.mxu0 0
  %2326 = vmatpush1.bf16.msra.mxu0 %v2285
  %2327 = vmatprep.subr.bf16.mxu0 0
  %2328 = vmatpush1.bf16.msra.mxu0 %v2286
  %2329 = vmatprep.subr.bf16.mxu0 0
  %2330 = vmatpush1.bf16.msra.mxu0 %v2287
  %2331 = vmatprep.subr.bf16.mxu0 0
  %2332 = vmatpush1.bf16.msra.mxu0 %v2288
  %2333 = vmatprep.subr.bf16.mxu0 0
  %2334 = vmatpush1.bf16.msra.mxu0 %v2289
  %2335 = vmatprep.subr.bf16.mxu0 0
  %2336 = vmatpush1.bf16.msra.mxu0 %v2290
  %2337 = vmatprep.subr.bf16.mxu0 0
  %2338 = vmatpush1.bf16.msra.mxu0 %v2291
  %2339 = vmatprep.subr.bf16.mxu0 0
  %2340 = vmatpush1.bf16.msra.mxu0 %v2292
  %2341 = vmatprep.mubr.bf16.mxu0 %v2205
  %2342 = vmatmul.mubr.bf16.gmra.mrb[0].mxu0 %v2204
  %v2343 = vpop.f32.mrb[0].mxu0
  %v2344 = vadd.f32 %v2211, %v2343
  %v2345 = vpop.f32.mrb[0].mxu0
  %v2346 = vpop.f32.mrb[0].mxu0
  %v2347 = vpop.f32.mrb[0].mxu0
  %2348 = vdwg.mxu0
  %2349 = vst [vmem:[%s15] sm:$0x3] %v2344
  %v2350 = vld [vmem:[%s13] sm:$0xf]
  %v2351 = vld [vmem:[%s13 + $0x4] sm:$0xf]
  %v2352 = vld [vmem:[%s13 + $0x8] sm:$0xf]
  %v2353 = vld [vmem:[%s13 + $0xc] sm:$0xf]
  %v2354 = vld [vmem:[%s13 + $0x10] sm:$0xf]
  %v2355 = vld [vmem:[%s13 + $0x14] sm:$0xf]
  %v2356 = vld [vmem:[%s13 + $0x18] sm:$0xf]
  %v2357 = vld [vmem:[%s13 + $0x1c] sm:$0xf]
  %v2358 = vld [vmem:[%s13 + $0x20] sm:$0xf]
  %v2359 = vld [vmem:[%s13 + $0x24] sm:$0xf]
  %v2360 = vld [vmem:[%s13 + $0x28] sm:$0xf]
  %v2361 = vld [vmem:[%s13 + $0x2c] sm:$0xf]
  %v2362 = vld [vmem:[%s13 + $0x30] sm:$0xf]
  %v2363 = vld [vmem:[%s13 + $0x34] sm:$0xf]
  %v2364 = vld [vmem:[%s13 + $0x38] sm:$0xf]
  %v2365 = vld [vmem:[%s13 + $0x3c] sm:$0xf]
  %v2366 = vpack.c.bf16 %v2171, %v2171
  %v2367 = vld [vmem:[%s14] sm:$0x1]
  %v2369 = vlaneseq
  %v2370 = vshrl.u32 %v2369, 7
  %v2371 = vsub.s32 0, %v2370
  %v2372 = vrot.slane %v2367, %v2371
  %v2390 = vunpack.c.l.b16 %v2350
  %v2391 = vunpack.c.l.b16 %v2351
  %v2392 = vunpack.c.l.b16 %v2352
  %v2393 = vunpack.c.l.b16 %v2353
  %v2394 = vunpack.c.l.b16 %v2354
  %v2395 = vunpack.c.l.b16 %v2355
  %v2396 = vunpack.c.l.b16 %v2356
  %v2397 = vunpack.c.l.b16 %v2357
  %v2398 = vunpack.c.l.b16 %v2358
  %v2399 = vunpack.c.l.b16 %v2359
  %v2400 = vunpack.c.l.b16 %v2360
  %v2401 = vunpack.c.l.b16 %v2361
  %v2402 = vunpack.c.l.b16 %v2362
  %v2403 = vunpack.c.l.b16 %v2363
  %v2404 = vunpack.c.l.b16 %v2364
  %v2405 = vunpack.c.l.b16 %v2365
  %v2406 = vpack.c.b16 %v2391, %v2390
  %v2407 = vpack.c.b16 %v2393, %v2392
  %v2408 = vpack.c.b16 %v2395, %v2394
  %v2409 = vpack.c.b16 %v2397, %v2396
  %v2410 = vpack.c.b16 %v2399, %v2398
  %v2411 = vpack.c.b16 %v2401, %v2400
  %v2412 = vpack.c.b16 %v2403, %v2402
  %v2413 = vpack.c.b16 %v2405, %v2404
  %2422 = vmatprep.subr.bf16.mxu0 0
  %2423 = vmatpush1.bf16.msra.mxu0 %v2406
  %2424 = vmatprep.subr.bf16.mxu0 0
  %2425 = vmatpush1.bf16.msra.mxu0 %v2407
  %2426 = vmatprep.subr.bf16.mxu0 0
  %2427 = vmatpush1.bf16.msra.mxu0 %v2408
  %2428 = vmatprep.subr.bf16.mxu0 0
  %2429 = vmatpush1.bf16.msra.mxu0 %v2409
  %2430 = vmatprep.subr.bf16.mxu0 0
  %2431 = vmatpush1.bf16.msra.mxu0 %v2410
  %2432 = vmatprep.subr.bf16.mxu0 0
  %2433 = vmatpush1.bf16.msra.mxu0 %v2411
  %2434 = vmatprep.subr.bf16.mxu0 0
  %2435 = vmatpush1.bf16.msra.mxu0 %v2412
  %2436 = vmatprep.subr.bf16.mxu0 0
  %2437 = vmatpush1.bf16.msra.mxu0 %v2413
  %2438 = vmatprep.subr.bf16.mxu0 0
  %2439 = vmatpush1.bf16.msra.mxu0 0
  %2440 = vmatprep.subr.bf16.mxu0 0
  %2441 = vmatpush1.bf16.msra.mxu0 0
  %2442 = vmatprep.subr.bf16.mxu0 0
  %2443 = vmatpush1.bf16.msra.mxu0 0
  %2444 = vmatprep.subr.bf16.mxu0 0
  %2445 = vmatpush1.bf16.msra.mxu0 0
  %2446 = vmatprep.subr.bf16.mxu0 0
  %2447 = vmatpush1.bf16.msra.mxu0 0
  %2448 = vmatprep.subr.bf16.mxu0 0
  %2449 = vmatpush1.bf16.msra.mxu0 0
  %2450 = vmatprep.subr.bf16.mxu0 0
  %2451 = vmatpush1.bf16.msra.mxu0 0
  %2452 = vmatprep.subr.bf16.mxu0 0
  %2453 = vmatpush1.bf16.msra.mxu0 0
  %2454 = vmatprep.mubr.bf16.mxu0 0
  %2455 = vmatmul.mubr.bf16.gmra.mrb[0].mxu0 %v2366
  %v2456 = vpop.f32.mrb[0].mxu0
  %v2457 = vadd.f32 %v2372, %v2456
  %v2458 = vpop.f32.mrb[0].mxu0
  %v2459 = vpop.f32.mrb[0].mxu0
  %v2460 = vpop.f32.mrb[0].mxu0
  %2461 = vdwg.mxu0
  %2462 = vst [vmem:[%s15 + $0x2] sm:$0x3] %v2457
  // Predicated region
  $region62: #{grasp_evaluator2_forward.9} parent=0 // pred_check
    _
  $region63: #{grasp_evaluator2_forward.9} parent=0 // pred_check_branch
    %2464 = sbr.rel (0) target = $region65
  $region64: #{grasp_evaluator2_forward.9} parent=0 // pred_region
    _
  $region65: #{grasp_evaluator2_forward.9} parent=0 // pred_fallthru
    _
  // Predicated region
  $region66: #{grasp_evaluator2_forward.9} parent=0 // pred_check
    _
  $region67: #{grasp_evaluator2_forward.9} parent=0 // pred_check_branch
    %2466 = sbr.rel (0) target = $region69
  $region68: #{grasp_evaluator2_forward.9} parent=0 // pred_region
    _
  $region69: #{grasp_evaluator2_forward.9} parent=0 // pred_fallthru
    _

</llo_original>
